<compile_context>
chip_gen: v5e
topology: v5e:2x2
jax: 0.10.0
libtpu: 0.0.40
codegen_flags: <defaults>
</compile_context>

<pallas_src>
import functools

import jax
import jax.numpy as jnp
from jax import lax
from jax.experimental import pallas as pl
from jax.experimental.pallas import tpu as pltpu

DILATIONS = (6, 12, 18, 24)


def _round_up(v, m):
    return -(-v // m) * m


def _decoder_kernel(nc, nc_pad, cproj, w_img, shifts,
                    x_ref, w_ref, bproj_ref, baspp_ref, mask_ref,
                    feat_ref, out_ref):
    """One grid step == one image of the batch.

    x_ref     : (1, Cin, HW)   f32   image in (channel, flat-pixel) layout
    w_ref     : (L, Cin)       bf16  fused LHS: [proj(256); tap0(nc_pad); ...]
    bproj_ref : (cproj, 1)     f32
    baspp_ref : (nc_pad, 1)    f32   summed ASPP biases (zero-padded)
    mask_ref  : (T, HW)        f32   per-tap validity masks (conv zero padding)
    feat_ref  : (1, cproj, HW) f32
    out_ref   : (1, nc, HW)    f32
    """
    hw = x_ref.shape[2]

    # Single fused MXU matmul: (L, Cin) x (Cin, HW) -> (L, HW), f32 accumulate.
    xb = x_ref[0].astype(jnp.bfloat16)
    p = jnp.dot(w_ref[...], xb, preferred_element_type=jnp.float32)

    # proj head: rows [0, cproj) are already in (C, HW) order -> full-width store.
    feat_ref[0] = p[:cproj, :] + bproj_ref[...]

    # ASPP head.  Tap 0 is the pre-summed zero-shift center tap of all four
    # dilations; it initializes the accumulator together with the summed biases.
    acc = p[cproj:cproj + nc_pad, :] + baspp_ref[...]

    # Remaining taps: spatial shift (dy,dx) == lane roll by dy*W+dx over the
    # flattened pixels; border clipping (zero padding) == 0/1 mask multiply.
    # All shifts are static; all slices of p are sublane-aligned (nc_pad % 8 == 0).
    for t in range(1, len(shifts)):
        dy, dx = shifts[t]
        s = dy * w_img + dx                        # |s| < HW by construction
        off = cproj + t * nc_pad
        rolled = pltpu.roll(p[off:off + nc_pad, :], shift=(-s) % hw, axis=1)
        acc = acc + rolled * mask_ref[t].reshape(1, hw)

    # Single final, lane-dense store of the ASPP output.
    out_ref[0] = acc[:nc, :]


def _chip_vmem_bytes():
    # v7x has 64 MiB per TensorCore; v5e/v6e have 128 MiB.
    try:
        return int(pltpu.get_tpu_info().vmem_capacity_bytes)
    except Exception:
        return 64 << 20


def _vmem_limit_bytes(cin, hw, l_rows, cproj, nc_pad, n_taps):
    b = 0
    b += 2 * cin * hw * 4                     # x block (f32, double-buffered)
    b += cin * hw * 2                         # in-kernel bf16 copy of x
    b += 2 * l_rows * cin * 2                 # fused weights (bf16, 2 bufs)
    b += l_rows * hw * 4                      # matmul result p
    b += 2 * cproj * hw * 4                   # feat out block (2 bufs)
    b += 2 * _round_up(nc_pad, 8) * hw * 4    # out block (2 bufs)
    b += 2 * _round_up(n_taps, 8) * hw * 4    # tap masks (2 bufs)
    b += 4 * nc_pad * hw * 4                  # roll / accumulate temporaries
    b += 4 * (cproj + nc_pad) * 128 * 4       # lane-padded bias blocks
    want = int(1.25 * b) + (8 << 20)
    cap = _chip_vmem_bytes() - (8 << 20)      # leave headroom for the compiler
    return max(min(want, cap), 16 << 20)


def decoder_forward(x_nchw, params, *, compute_dtype=jnp.bfloat16):
    """x_nchw: (N, 2048, H, W) f32 -> (feat (N,256,H,W), out (N,nc,H,W))."""
    n, cin, h, w = x_nchw.shape
    hw = h * w

    wproj = params["wproj"]                   # (cproj, cin)
    bproj = params["bproj"]                   # (cproj,)
    wtap = params["wtap"]                     # (33, nc, cin)
    baspp = params["baspp"]                   # (nc,)
    shifts = params["tap_shifts"]             # static tuple of (dy, dx)
    cproj = wproj.shape[0]
    nc = wtap.shape[1]
    nc_pad = _round_up(nc, 8)                 # sublane-aligned per-tap stride

    # Drop taps that are fully clipped at this (H, W); the pre-summed (0,0)
    # center tap always survives and stays first.
    alive = [t for t, (dy, dx) in enumerate(shifts)
             if abs(dy) < h and abs(dx) < w]
    alive_shifts = tuple(shifts[t] for t in alive)
    assert alive_shifts[0] == (0, 0)

    # Fused matmul LHS: [proj rows; per-tap (nc_pad, cin) rows].
    wtap_p = (wtap if nc_pad == nc
              else jnp.pad(wtap, ((0, 0), (0, nc_pad - nc), (0, 0))))
    w_all = jnp.concatenate([wproj] + [wtap_p[t] for t in alive],
                            axis=0).astype(compute_dtype)          # (L, cin)
    l_rows = cproj + len(alive) * nc_pad

    bproj_col = bproj.reshape(cproj, 1).astype(jnp.float32)
    baspp_col = jnp.pad(baspp, (0, nc_pad - nc)).reshape(nc_pad, 1).astype(jnp.float32)

    # Per-tap 0/1 validity masks over flat pixels (== the conv's zero padding).
    ys = jnp.arange(h).reshape(h, 1)
    xs = jnp.arange(w).reshape(1, w)
    masks = jnp.stack(
        [((ys + dy >= 0) & (ys + dy < h) & (xs + dx >= 0) & (xs + dx < w))
         .reshape(hw) for (dy, dx) in alive_shifts]).astype(jnp.float32)

    # NCHW -> (N, Cin, H*W) is a free row-major reshape (no transpose, no cast).
    x = x_nchw.reshape(n, cin, hw)

    kernel = functools.partial(_decoder_kernel, nc, nc_pad, cproj, w, alive_shifts)
    feat, out = pl.pallas_call(
        kernel,
        out_shape=(jax.ShapeDtypeStruct((n, cproj, hw), jnp.float32),
                   jax.ShapeDtypeStruct((n, nc, hw), jnp.float32)),
        grid=(n,),
        in_specs=[
            pl.BlockSpec((1, cin, hw), lambda i: (i, 0, 0)),
            pl.BlockSpec((l_rows, cin), lambda i: (0, 0)),
            pl.BlockSpec((cproj, 1), lambda i: (0, 0)),
            pl.BlockSpec((nc_pad, 1), lambda i: (0, 0)),
            pl.BlockSpec((len(alive), hw), lambda i: (0, 0)),
        ],
        out_specs=(
            pl.BlockSpec((1, cproj, hw), lambda i: (i, 0, 0)),
            pl.BlockSpec((1, nc, hw), lambda i: (i, 0, 0)),
        ),
        compiler_params=pltpu.CompilerParams(
            dimension_semantics=("parallel",),
            vmem_limit_bytes=_vmem_limit_bytes(cin, hw, l_rows, cproj, nc_pad,
                                               len(alive))),
    )(x, w_all, bproj_col, baspp_col, masks)

    # (N, C, H*W) -> NCHW is again a free reshape: no post-kernel transposes.
    return feat.reshape(n, cproj, h, w), out.reshape(n, nc, h, w)


def init_params(key, num_classes, cin=2048, cproj=256):
    """Deterministic synthetic init mirroring the module's shapes/kaiming init."""
    keys = jax.random.split(key, 10)
    # proj: Conv2d(cin, cproj, 1), kaiming_normal_ (fan_in = cin)
    wproj_oihw = (jax.random.normal(keys[0], (cproj, cin, 1, 1), jnp.float32)
                  * jnp.sqrt(2.0 / cin))
    bproj = jax.random.uniform(keys[1], (cproj,), jnp.float32, -0.01, 0.01)

    ws, bs = [], []
    for i, _d in enumerate(DILATIONS):
        fan_in = cin * 9
        wconv = (jax.random.normal(keys[2 + i], (num_classes, cin, 3, 3),
                                   jnp.float32) * jnp.sqrt(2.0 / fan_in))
        bconv = jax.random.uniform(keys[6 + i], (num_classes,), jnp.float32,
                                   -0.01, 0.01)
        ws.append(wconv)
        bs.append(bconv)

    # ---- kernel-facing layouts --------------------------------------------
    # Pre-sum the four zero-shift center taps (ky=kx=1) into one leading tap,
    # then append the 32 off-center taps with their (dy, dx) shifts.
    center = sum(wc[:, :, 1, 1] for wc in ws)                       # (nc, cin)
    tap_ws = [center]
    tap_shifts = [(0, 0)]
    for di, d in enumerate(DILATIONS):
        for ky in range(3):
            for kx in range(3):
                if ky == 1 and kx == 1:
                    continue
                tap_ws.append(ws[di][:, :, ky, kx])                 # (nc, cin)
                tap_shifts.append(((ky - 1) * d, (kx - 1) * d))
    wtap = jnp.stack(tap_ws, axis=0)                                # (33, nc, cin)
    baspp = bs[0] + bs[1] + bs[2] + bs[3]

    params = dict(wproj=wproj_oihw[:, :, 0, 0], bproj=bproj, wtap=wtap,
                  baspp=baspp, tap_shifts=tuple(tap_shifts))
    torch_params = dict(wproj_oihw=wproj_oihw, bproj=bproj, ws=ws, bs=bs)
    return params, torch_params


def reference_forward(x_nchw, torch_params):
    """Pure-JAX reference matching the PyTorch forward (NCHW, f32 HIGHEST)."""
    dn = ("NCHW", "OIHW", "NCHW")
    feat = lax.conv_general_dilated(
        x_nchw, torch_params["wproj_oihw"], (1, 1), "VALID",
        dimension_numbers=dn, precision=lax.Precision.HIGHEST)
    feat = feat + torch_params["bproj"].reshape(1, -1, 1, 1)
    out = None
    for wc, bc, d in zip(torch_params["ws"], torch_params["bs"], DILATIONS):
        o = lax.conv_general_dilated(
            x_nchw, wc, (1, 1), [(d, d), (d, d)], rhs_dilation=(d, d),
            dimension_numbers=dn, precision=lax.Precision.HIGHEST)
        o = o + bc.reshape(1, -1, 1, 1)
        out = o if out is None else out + o
    return feat, out


def _run_case(case_key, n, h, w, num_classes):
    kx, kp = jax.random.split(case_key)
    x = jax.random.normal(kx, (n, 2048, h, w), jnp.float32)
    params, torch_params = init_params(kp, num_classes)

    feat, out = decoder_forward(x, params)
    jax.block_until_ready((feat, out))

    assert feat.shape == (n, 256, h, w)
    assert out.shape == (n, num_classes, h, w)

    feat_ref, out_ref = reference_forward(x, torch_params)
    # bf16 inputs + f32 accumulation vs an f32-HIGHEST reference: expected
    # relative Frobenius error is a few 1e-3, worst elementwise tails ~1e-2.
    for a, b, name in ((feat, feat_ref, "feat"), (out, out_ref, "out")):
        rel = jnp.linalg.norm(a - b) / jnp.linalg.norm(b)
        assert rel < 1.5e-2, (name, float(rel))
        assert jnp.allclose(a, b, atol=6e-2, rtol=6e-2), name


if __name__ == "__main__":
    key = jax.random.PRNGKey(0)
    k1, k2 = jax.random.split(key)

    # Case 1: batch-parallel grid (2 TC on v7x); exercises d=6 and d=12 taps.
    _run_case(k1, n=2, h=16, w=16, num_classes=8)
    # Case 2: H, W > max dilation so all 33 taps (incl. d=18, 24 shifts) run.
    _run_case(k2, n=1, h=32, w=32, num_classes=21)

    print("KERNEL_OK")
</pallas_src>

<mosaic_0001>
module attributes {stable_mosaic.version = 11 : i64} {
  func.func @_decoder_kernel(%arg0: i32, %arg1: memref<1x2048x256xf32, #tpu.memory_space<vmem>>, %arg2: memref<392x2048xbf16, #tpu.memory_space<vmem>>, %arg3: memref<256x1xf32, #tpu.memory_space<vmem>>, %arg4: memref<8x1xf32, #tpu.memory_space<vmem>>, %arg5: memref<17x256xf32, #tpu.memory_space<vmem>>, %arg6: memref<1x256x256xf32, #tpu.memory_space<vmem>>, %arg7: memref<1x8x256xf32, #tpu.memory_space<vmem>>) attributes {dimension_semantics = [#tpu.dimension_semantics<parallel>], iteration_bounds = array<i64: 2>, scalar_prefetch = 0 : i64, scratch_operands = 0 : i64, tpu.core_type = #tpu.core_type<tc>, window_params = [{transform_indices = @transform_0, window_bounds = array<i64: 1, 2048, 256>}, {pipeline_mode = #tpu.pipeline_mode<synchronous>, transform_indices = @transform_1, window_bounds = array<i64: 392, 2048>}, {pipeline_mode = #tpu.pipeline_mode<synchronous>, transform_indices = @transform_2, window_bounds = array<i64: 256, 1>}, {pipeline_mode = #tpu.pipeline_mode<synchronous>, transform_indices = @transform_3, window_bounds = array<i64: 8, 1>}, {pipeline_mode = #tpu.pipeline_mode<synchronous>, transform_indices = @transform_4, window_bounds = array<i64: 17, 256>}, {transform_indices = @transform_5, window_bounds = array<i64: 1, 256, 256>}, {transform_indices = @transform_6, window_bounds = array<i64: 1, 8, 256>}]} {
    %c0 = arith.constant 0 : index
    %c0_0 = arith.constant 0 : index
    %c0_1 = arith.constant 0 : index
    %0 = vector.load %arg1[%c0, %c0_0, %c0_1] : memref<1x2048x256xf32, #tpu.memory_space<vmem>>, vector<1x2048x256xf32>
    %1 = vector.shape_cast %0 : vector<1x2048x256xf32> to vector<2048x256xf32>
    %2 = arith.truncf %1 : vector<2048x256xf32> to vector<2048x256xbf16>
    %c0_2 = arith.constant 0 : index
    %c0_3 = arith.constant 0 : index
    %3 = vector.load %arg2[%c0_2, %c0_3] : memref<392x2048xbf16, #tpu.memory_space<vmem>>, vector<392x2048xbf16>
    %cst = arith.constant dense<0.000000e+00> : vector<392x256xf32>
    %4 = tpu.matmul %3, %2, %cst {dimension_numbers = #tpu.dot_dimension_numbers<[1], [0], [0], [1], [0, 0, 1, 1], [], []>} : vector<392x2048xbf16>, vector<2048x256xbf16>, vector<392x256xf32> -> vector<392x256xf32>
    %5 = vector.extract_strided_slice %4 {offsets = [0, 0], sizes = [256, 256], strides = [1, 1]} : vector<392x256xf32> to vector<256x256xf32>
    %c0_4 = arith.constant 0 : index
    %c0_5 = arith.constant 0 : index
    %6 = vector.load %arg3[%c0_4, %c0_5] : memref<256x1xf32, #tpu.memory_space<vmem>>, vector<256x1xf32>
    %7 = vector.broadcast %6 : vector<256x1xf32> to vector<256x256xf32>
    %8 = arith.addf %5, %7 : vector<256x256xf32>
    %c0_6 = arith.constant 0 : index
    %c0_7 = arith.constant 0 : index
    %c0_8 = arith.constant 0 : index
    %9 = vector.load %arg6[%c0_6, %c0_7, %c0_8] : memref<1x256x256xf32, #tpu.memory_space<vmem>>, vector<1x256x256xf32>
    %10 = vector.shape_cast %9 : vector<1x256x256xf32> to vector<256x256xf32>
    %11 = vector.shape_cast %8 : vector<256x256xf32> to vector<1x256x256xf32>
    tpu.vector_store %arg6[%c0_6, %c0_7, %c0_8], %11 {strides = array<i32>} : memref<1x256x256xf32, #tpu.memory_space<vmem>>, vector<1x256x256xf32>,
    %12 = vector.extract_strided_slice %4 {offsets = [256, 0], sizes = [8, 256], strides = [1, 1]} : vector<392x256xf32> to vector<8x256xf32>
    %c0_9 = arith.constant 0 : index
    %c0_10 = arith.constant 0 : index
    %13 = vector.load %arg4[%c0_9, %c0_10] : memref<8x1xf32, #tpu.memory_space<vmem>>, vector<8x1xf32>
    %14 = vector.broadcast %13 : vector<8x1xf32> to vector<8x256xf32>
    %15 = arith.addf %12, %14 : vector<8x256xf32>
    %16 = vector.extract_strided_slice %4 {offsets = [264, 0], sizes = [8, 256], strides = [1, 1]} : vector<392x256xf32> to vector<8x256xf32>
    %c102_i32 = arith.constant 102 : i32
    %17 = tpu.dynamic_rotate %16 by %c102_i32 dim 1 : vector<8x256xf32>, i32 -> vector<8x256xf32>
    %c1 = arith.constant 1 : index
    %c0_11 = arith.constant 0 : index
    %18 = vector.load %arg5[%c1, %c0_11] : memref<17x256xf32, #tpu.memory_space<vmem>>, vector<1x256xf32>
    %19 = vector.shape_cast %18 : vector<1x256xf32> to vector<256xf32>
    %20 = vector.shape_cast %19 : vector<256xf32> to vector<1x256xf32>
    %21 = vector.broadcast %20 : vector<1x256xf32> to vector<8x256xf32>
    %22 = arith.mulf %17, %21 : vector<8x256xf32>
    %23 = arith.addf %15, %22 : vector<8x256xf32>
    %24 = vector.extract_strided_slice %4 {offsets = [272, 0], sizes = [8, 256], strides = [1, 1]} : vector<392x256xf32> to vector<8x256xf32>
    %c96_i32 = arith.constant 96 : i32
    %25 = tpu.dynamic_rotate %24 by %c96_i32 dim 1 : vector<8x256xf32>, i32 -> vector<8x256xf32>
    %c2 = arith.constant 2 : index
    %c0_12 = arith.constant 0 : index
    %26 = vector.load %arg5[%c2, %c0_12] : memref<17x256xf32, #tpu.memory_space<vmem>>, vector<1x256xf32>
    %27 = vector.shape_cast %26 : vector<1x256xf32> to vector<256xf32>
    %28 = vector.shape_cast %27 : vector<256xf32> to vector<1x256xf32>
    %29 = vector.broadcast %28 : vector<1x256xf32> to vector<8x256xf32>
    %30 = arith.mulf %25, %29 : vector<8x256xf32>
    %31 = arith.addf %23, %30 : vector<8x256xf32>
    %32 = vector.extract_strided_slice %4 {offsets = [280, 0], sizes = [8, 256], strides = [1, 1]} : vector<392x256xf32> to vector<8x256xf32>
    %c90_i32 = arith.constant 90 : i32
    %33 = tpu.dynamic_rotate %32 by %c90_i32 dim 1 : vector<8x256xf32>, i32 -> vector<8x256xf32>
    %c3 = arith.constant 3 : index
    %c0_13 = arith.constant 0 : index
    %34 = vector.load %arg5[%c3, %c0_13] : memref<17x256xf32, #tpu.memory_space<vmem>>, vector<1x256xf32>
    %35 = vector.shape_cast %34 : vector<1x256xf32> to vector<256xf32>
    %36 = vector.shape_cast %35 : vector<256xf32> to vector<1x256xf32>
    %37 = vector.broadcast %36 : vector<1x256xf32> to vector<8x256xf32>
    %38 = arith.mulf %33, %37 : vector<8x256xf32>
    %39 = arith.addf %31, %38 : vector<8x256xf32>
    %40 = vector.extract_strided_slice %4 {offsets = [288, 0], sizes = [8, 256], strides = [1, 1]} : vector<392x256xf32> to vector<8x256xf32>
    %c6_i32 = arith.constant 6 : i32
    %41 = tpu.dynamic_rotate %40 by %c6_i32 dim 1 : vector<8x256xf32>, i32 -> vector<8x256xf32>
    %c4 = arith.constant 4 : index
    %c0_14 = arith.constant 0 : index
    %42 = vector.load %arg5[%c4, %c0_14] : memref<17x256xf32, #tpu.memory_space<vmem>>, vector<1x256xf32>
    %43 = vector.shape_cast %42 : vector<1x256xf32> to vector<256xf32>
    %44 = vector.shape_cast %43 : vector<256xf32> to vector<1x256xf32>
    %45 = vector.broadcast %44 : vector<1x256xf32> to vector<8x256xf32>
    %46 = arith.mulf %41, %45 : vector<8x256xf32>
    %47 = arith.addf %39, %46 : vector<8x256xf32>
    %48 = vector.extract_strided_slice %4 {offsets = [296, 0], sizes = [8, 256], strides = [1, 1]} : vector<392x256xf32> to vector<8x256xf32>
    %c250_i32 = arith.constant 250 : i32
    %49 = tpu.dynamic_rotate %48 by %c250_i32 dim 1 : vector<8x256xf32>, i32 -> vector<8x256xf32>
    %c5 = arith.constant 5 : index
    %c0_15 = arith.constant 0 : index
    %50 = vector.load %arg5[%c5, %c0_15] : memref<17x256xf32, #tpu.memory_space<vmem>>, vector<1x256xf32>
    %51 = vector.shape_cast %50 : vector<1x256xf32> to vector<256xf32>
    %52 = vector.shape_cast %51 : vector<256xf32> to vector<1x256xf32>
    %53 = vector.broadcast %52 : vector<1x256xf32> to vector<8x256xf32>
    %54 = arith.mulf %49, %53 : vector<8x256xf32>
    %55 = arith.addf %47, %54 : vector<8x256xf32>
    %56 = vector.extract_strided_slice %4 {offsets = [304, 0], sizes = [8, 256], strides = [1, 1]} : vector<392x256xf32> to vector<8x256xf32>
    %c166_i32 = arith.constant 166 : i32
    %57 = tpu.dynamic_rotate %56 by %c166_i32 dim 1 : vector<8x256xf32>, i32 -> vector<8x256xf32>
    %c6 = arith.constant 6 : index
    %c0_16 = arith.constant 0 : index
    %58 = vector.load %arg5[%c6, %c0_16] : memref<17x256xf32, #tpu.memory_space<vmem>>, vector<1x256xf32>
    %59 = vector.shape_cast %58 : vector<1x256xf32> to vector<256xf32>
    %60 = vector.shape_cast %59 : vector<256xf32> to vector<1x256xf32>
    %61 = vector.broadcast %60 : vector<1x256xf32> to vector<8x256xf32>
    %62 = arith.mulf %57, %61 : vector<8x256xf32>
    %63 = arith.addf %55, %62 : vector<8x256xf32>
    %64 = vector.extract_strided_slice %4 {offsets = [312, 0], sizes = [8, 256], strides = [1, 1]} : vector<392x256xf32> to vector<8x256xf32>
    %c160_i32 = arith.constant 160 : i32
    %65 = tpu.dynamic_rotate %64 by %c160_i32 dim 1 : vector<8x256xf32>, i32 -> vector<8x256xf32>
    %c7 = arith.constant 7 : index
    %c0_17 = arith.constant 0 : index
    %66 = vector.load %arg5[%c7, %c0_17] : memref<17x256xf32, #tpu.memory_space<vmem>>, vector<1x256xf32>
    %67 = vector.shape_cast %66 : vector<1x256xf32> to vector<256xf32>
    %68 = vector.shape_cast %67 : vector<256xf32> to vector<1x256xf32>
    %69 = vector.broadcast %68 : vector<1x256xf32> to vector<8x256xf32>
    %70 = arith.mulf %65, %69 : vector<8x256xf32>
    %71 = arith.addf %63, %70 : vector<8x256xf32>
    %72 = vector.extract_strided_slice %4 {offsets = [320, 0], sizes = [8, 256], strides = [1, 1]} : vector<392x256xf32> to vector<8x256xf32>
    %c154_i32 = arith.constant 154 : i32
    %73 = tpu.dynamic_rotate %72 by %c154_i32 dim 1 : vector<8x256xf32>, i32 -> vector<8x256xf32>
    %c8 = arith.constant 8 : index
    %c0_18 = arith.constant 0 : index
    %74 = vector.load %arg5[%c8, %c0_18] : memref<17x256xf32, #tpu.memory_space<vmem>>, vector<1x256xf32>
    %75 = vector.shape_cast %74 : vector<1x256xf32> to vector<256xf32>
    %76 = vector.shape_cast %75 : vector<256xf32> to vector<1x256xf32>
    %77 = vector.broadcast %76 : vector<1x256xf32> to vector<8x256xf32>
    %78 = arith.mulf %73, %77 : vector<8x256xf32>
    %79 = arith.addf %71, %78 : vector<8x256xf32>
    %80 = vector.extract_strided_slice %4 {offsets = [328, 0], sizes = [8, 256], strides = [1, 1]} : vector<392x256xf32> to vector<8x256xf32>
    %c204_i32 = arith.constant 204 : i32
    %81 = tpu.dynamic_rotate %80 by %c204_i32 dim 1 : vector<8x256xf32>, i32 -> vector<8x256xf32>
    %c9 = arith.constant 9 : index
    %c0_19 = arith.constant 0 : index
    %82 = vector.load %arg5[%c9, %c0_19] : memref<17x256xf32, #tpu.memory_space<vmem>>, vector<1x256xf32>
    %83 = vector.shape_cast %82 : vector<1x256xf32> to vector<256xf32>
    %84 = vector.shape_cast %83 : vector<256xf32> to vector<1x256xf32>
    %85 = vector.broadcast %84 : vector<1x256xf32> to vector<8x256xf32>
    %86 = arith.mulf %81, %85 : vector<8x256xf32>
    %87 = arith.addf %79, %86 : vector<8x256xf32>
    %88 = vector.extract_strided_slice %4 {offsets = [336, 0], sizes = [8, 256], strides = [1, 1]} : vector<392x256xf32> to vector<8x256xf32>
    %c192_i32 = arith.constant 192 : i32
    %89 = tpu.dynamic_rotate %88 by %c192_i32 dim 1 : vector<8x256xf32>, i32 -> vector<8x256xf32>
    %c10 = arith.constant 10 : index
    %c0_20 = arith.constant 0 : index
    %90 = vector.load %arg5[%c10, %c0_20] : memref<17x256xf32, #tpu.memory_space<vmem>>, vector<1x256xf32>
    %91 = vector.shape_cast %90 : vector<1x256xf32> to vector<256xf32>
    %92 = vector.shape_cast %91 : vector<256xf32> to vector<1x256xf32>
    %93 = vector.broadcast %92 : vector<1x256xf32> to vector<8x256xf32>
    %94 = arith.mulf %89, %93 : vector<8x256xf32>
    %95 = arith.addf %87, %94 : vector<8x256xf32>
    %96 = vector.extract_strided_slice %4 {offsets = [344, 0], sizes = [8, 256], strides = [1, 1]} : vector<392x256xf32> to vector<8x256xf32>
    %c180_i32 = arith.constant 180 : i32
    %97 = tpu.dynamic_rotate %96 by %c180_i32 dim 1 : vector<8x256xf32>, i32 -> vector<8x256xf32>
    %c11 = arith.constant 11 : index
    %c0_21 = arith.constant 0 : index
    %98 = vector.load %arg5[%c11, %c0_21] : memref<17x256xf32, #tpu.memory_space<vmem>>, vector<1x256xf32>
    %99 = vector.shape_cast %98 : vector<1x256xf32> to vector<256xf32>
    %100 = vector.shape_cast %99 : vector<256xf32> to vector<1x256xf32>
    %101 = vector.broadcast %100 : vector<1x256xf32> to vector<8x256xf32>
    %102 = arith.mulf %97, %101 : vector<8x256xf32>
    %103 = arith.addf %95, %102 : vector<8x256xf32>
    %104 = vector.extract_strided_slice %4 {offsets = [352, 0], sizes = [8, 256], strides = [1, 1]} : vector<392x256xf32> to vector<8x256xf32>
    %c12_i32 = arith.constant 12 : i32
    %105 = tpu.dynamic_rotate %104 by %c12_i32 dim 1 : vector<8x256xf32>, i32 -> vector<8x256xf32>
    %c12 = arith.constant 12 : index
    %c0_22 = arith.constant 0 : index
    %106 = vector.load %arg5[%c12, %c0_22] : memref<17x256xf32, #tpu.memory_space<vmem>>, vector<1x256xf32>
    %107 = vector.shape_cast %106 : vector<1x256xf32> to vector<256xf32>
    %108 = vector.shape_cast %107 : vector<256xf32> to vector<1x256xf32>
    %109 = vector.broadcast %108 : vector<1x256xf32> to vector<8x256xf32>
    %110 = arith.mulf %105, %109 : vector<8x256xf32>
    %111 = arith.addf %103, %110 : vector<8x256xf32>
    %112 = vector.extract_strided_slice %4 {offsets = [360, 0], sizes = [8, 256], strides = [1, 1]} : vector<392x256xf32> to vector<8x256xf32>
    %c244_i32 = arith.constant 244 : i32
    %113 = tpu.dynamic_rotate %112 by %c244_i32 dim 1 : vector<8x256xf32>, i32 -> vector<8x256xf32>
    %c13 = arith.constant 13 : index
    %c0_23 = arith.constant 0 : index
    %114 = vector.load %arg5[%c13, %c0_23] : memref<17x256xf32, #tpu.memory_space<vmem>>, vector<1x256xf32>
    %115 = vector.shape_cast %114 : vector<1x256xf32> to vector<256xf32>
    %116 = vector.shape_cast %115 : vector<256xf32> to vector<1x256xf32>
    %117 = vector.broadcast %116 : vector<1x256xf32> to vector<8x256xf32>
    %118 = arith.mulf %113, %117 : vector<8x256xf32>
    %119 = arith.addf %111, %118 : vector<8x256xf32>
    %120 = vector.extract_strided_slice %4 {offsets = [368, 0], sizes = [8, 256], strides = [1, 1]} : vector<392x256xf32> to vector<8x256xf32>
    %c76_i32 = arith.constant 76 : i32
    %121 = tpu.dynamic_rotate %120 by %c76_i32 dim 1 : vector<8x256xf32>, i32 -> vector<8x256xf32>
    %c14 = arith.constant 14 : index
    %c0_24 = arith.constant 0 : index
    %122 = vector.load %arg5[%c14, %c0_24] : memref<17x256xf32, #tpu.memory_space<vmem>>, vector<1x256xf32>
    %123 = vector.shape_cast %122 : vector<1x256xf32> to vector<256xf32>
    %124 = vector.shape_cast %123 : vector<256xf32> to vector<1x256xf32>
    %125 = vector.broadcast %124 : vector<1x256xf32> to vector<8x256xf32>
    %126 = arith.mulf %121, %125 : vector<8x256xf32>
    %127 = arith.addf %119, %126 : vector<8x256xf32>
    %128 = vector.extract_strided_slice %4 {offsets = [376, 0], sizes = [8, 256], strides = [1, 1]} : vector<392x256xf32> to vector<8x256xf32>
    %c64_i32 = arith.constant 64 : i32
    %129 = tpu.dynamic_rotate %128 by %c64_i32 dim 1 : vector<8x256xf32>, i32 -> vector<8x256xf32>
    %c15 = arith.constant 15 : index
    %c0_25 = arith.constant 0 : index
    %130 = vector.load %arg5[%c15, %c0_25] : memref<17x256xf32, #tpu.memory_space<vmem>>, vector<1x256xf32>
    %131 = vector.shape_cast %130 : vector<1x256xf32> to vector<256xf32>
    %132 = vector.shape_cast %131 : vector<256xf32> to vector<1x256xf32>
    %133 = vector.broadcast %132 : vector<1x256xf32> to vector<8x256xf32>
    %134 = arith.mulf %129, %133 : vector<8x256xf32>
    %135 = arith.addf %127, %134 : vector<8x256xf32>
    %136 = vector.extract_strided_slice %4 {offsets = [384, 0], sizes = [8, 256], strides = [1, 1]} : vector<392x256xf32> to vector<8x256xf32>
    %c52_i32 = arith.constant 52 : i32
    %137 = tpu.dynamic_rotate %136 by %c52_i32 dim 1 : vector<8x256xf32>, i32 -> vector<8x256xf32>
    %c16 = arith.constant 16 : index
    %c0_26 = arith.constant 0 : index
    %138 = vector.load %arg5[%c16, %c0_26] : memref<17x256xf32, #tpu.memory_space<vmem>>, vector<1x256xf32>
    %139 = vector.shape_cast %138 : vector<1x256xf32> to vector<256xf32>
    %140 = vector.shape_cast %139 : vector<256xf32> to vector<1x256xf32>
    %141 = vector.broadcast %140 : vector<1x256xf32> to vector<8x256xf32>
    %142 = arith.mulf %137, %141 : vector<8x256xf32>
    %143 = arith.addf %135, %142 : vector<8x256xf32>
    %c0_27 = arith.constant 0 : index
    %c0_28 = arith.constant 0 : index
    %c0_29 = arith.constant 0 : index
    %144 = vector.load %arg7[%c0_27, %c0_28, %c0_29] : memref<1x8x256xf32, #tpu.memory_space<vmem>>, vector<1x8x256xf32>
    %145 = vector.shape_cast %144 : vector<1x8x256xf32> to vector<8x256xf32>
    %146 = vector.shape_cast %143 : vector<8x256xf32> to vector<1x8x256xf32>
    tpu.vector_store %arg7[%c0_27, %c0_28, %c0_29], %146 {strides = array<i32>} : memref<1x8x256xf32, #tpu.memory_space<vmem>>, vector<1x8x256xf32>,
    return
  }
  func.func @transform_0(%arg0: i32) -> (i32, i32, i32) {
    %c0_i32 = arith.constant 0 : i32
    %c0_i32_0 = arith.constant 0 : i32
    %c0_i32_1 = arith.constant 0 : i32
    return %arg0, %c0_i32, %c0_i32_0 : i32, i32, i32
  }
  func.func @transform_1(%arg0: i32) -> (i32, i32) {
    %c0_i32 = arith.constant 0 : i32
    %c0_i32_0 = arith.constant 0 : i32
    %c0_i32_1 = arith.constant 0 : i32
    return %c0_i32, %c0_i32_0 : i32, i32
  }
  func.func @transform_2(%arg0: i32) -> (i32, i32) {
    %c0_i32 = arith.constant 0 : i32
    %c0_i32_0 = arith.constant 0 : i32
    %c0_i32_1 = arith.constant 0 : i32
    return %c0_i32, %c0_i32_0 : i32, i32
  }
  func.func @transform_3(%arg0: i32) -> (i32, i32) {
    %c0_i32 = arith.constant 0 : i32
    %c0_i32_0 = arith.constant 0 : i32
    %c0_i32_1 = arith.constant 0 : i32
    return %c0_i32, %c0_i32_0 : i32, i32
  }
  func.func @transform_4(%arg0: i32) -> (i32, i32) {
    %c0_i32 = arith.constant 0 : i32
    %c0_i32_0 = arith.constant 0 : i32
    %c0_i32_1 = arith.constant 0 : i32
    return %c0_i32, %c0_i32_0 : i32, i32
  }
  func.func @transform_5(%arg0: i32) -> (i32, i32, i32) {
    %c0_i32 = arith.constant 0 : i32
    %c0_i32_0 = arith.constant 0 : i32
    %c0_i32_1 = arith.constant 0 : i32
    return %arg0, %c0_i32, %c0_i32_0 : i32, i32, i32
  }
  func.func @transform_6(%arg0: i32) -> (i32, i32, i32) {
    %c0_i32 = arith.constant 0 : i32
    %c0_i32_0 = arith.constant 0 : i32
    %c0_i32_1 = arith.constant 0 : i32
    return %arg0, %c0_i32, %c0_i32_0 : i32, i32, i32
  }
}

</mosaic_0001>

<llo_original>
// kernel: tpu_custom_call.1
$region0: #{tpu_custom_call.1}
  #allocation0 [shape = 'u32[]', space=smem, size = 0x4, offset = 0x4, fixed_abs, tag = 'smem constant byte address 0x4 - core index']
  #allocation1 [shape = 'u32[72,128]{1,0:T(1,128)}', space=vmem, size = 0x9000, scoped, tag = 'internal scratch']
  %s0 = inlined_call_operand.hbm [shape: f32[2,2048,256], index: 0, kind: input, shape index: {}]
  %s1 = inlined_call_operand.hbm [shape: bf16[392,2048], index: 1, kind: input, shape index: {}]
  %s2 = inlined_call_operand.vmem [shape: f32[256,1], index: 2, kind: input, shape index: {}]
  %s3 = inlined_call_operand.vmem [shape: f32[8,1], index: 3, kind: input, shape index: {}]
  %s4 = inlined_call_operand.hbm [shape: f32[17,256], index: 4, kind: input, shape index: {}]
  %s5 = inlined_call_operand.hbm [shape: f32[2,256,256], index: 5, kind: output, shape index: {0}]
  %s6 = inlined_call_operand.hbm [shape: f32[2,8,256], index: 6, kind: output, shape index: {1}]
  %7 = xla_tuple %s5, %s6
  %s8 = sld [smem:[#allocation0]]
  $region73: #{tpu_custom_call.1} parent=0
    _
  %s10 = ssub.s32 1, %s8
  %s11 = scalar_select 0, %s10, %s8
  $region1: #{tpu_custom_call.1} parent=0
    #allocation2 [shape = 'u8[4194304]{0}', space=vmem, size = 0x400000, scoped, tag = 'input window, operand 0']
    #allocation3 [shape = 's32[2]{0}', space=sflag, size = 0x8, scoped, tag = 'scoped memory for tpu_custom_call.1']
    #allocation4 [shape = 's32[2]{0}', space=sflag, size = 0x8, scoped, tag = 'scoped memory for tpu_custom_call.1']
    #allocation5 [shape = 'u8[1605632]{0}', space=vmem, size = 0x188000, scoped, tag = 'input window, operand 1, single buffered']
    #allocation6 [shape = 's32[1]{0}', space=sflag, size = 0x4, scoped, tag = 'scoped memory for tpu_custom_call.1']
    #allocation7 [shape = 'u8[24576]{0}', space=vmem, size = 0x6000, scoped, tag = 'input window, operand 4, single buffered']
    #allocation8 [shape = 'u8[524288]{0}', space=vmem, size = 0x80000, scoped, tag = 'output window, operand 0']
    #allocation9 [shape = 'u8[16384]{0}', space=vmem, size = 0x4000, scoped, tag = 'output window, operand 1']
    #allocation10 [shape = 's32[2]{0}', space=sflag, size = 0x8, scoped, tag = 'scoped memory for tpu_custom_call.1']
    %12 = vsyncpa [#allocation3], 0
    %s13 = scalar_lea.sflag [#allocation3], 1
    %14 = vsyncpa %s13, 0
    %15 = vsyncpa [#allocation6], 0
    %16 = vsyncpa [#allocation4], 0
    %s17 = scalar_lea.sflag [#allocation4], 1
    %18 = vsyncpa %s17, 0
    %19 = vsyncpa [#allocation10], 0
    %s20 = scalar_lea.sflag [#allocation10], 1
    %21 = vsyncpa %s20, 0
    loop: start=0, step=1, limit=4
    $region2: #{tpu_custom_call.1} parent=1 // loop_pre_header
      _
    $region3: #{tpu_custom_call.1} parent=1 // loop_header
      %s23 = sphi 0, %s27
      %p24 = scmp.ge.s32.totalorder %s23, 4
      %s33 = sphi 0, %s35
      %s36 = sphi 0, %s33
      %s37 = sphi 0, %s36
      %s53 = sphi 0, %s37
      %s57 = sphi 0, %s57
      %s59 = sphi 0, %s57
      %s60 = sphi 0, %s59
      %s74 = sphi 0, %s60
      %s78 = sphi 0, %s78
      %s80 = sphi 0, %s78
      %s81 = sphi 0, %s80
      %s95 = sphi 0, %s81
      %s99 = sphi 0, %s99
      %s101 = sphi 0, %s99
      %s102 = sphi 0, %s101
      %s116 = sphi 0, %s102
      %s120 = sphi 0, %s120
      %s122 = sphi 0, %s120
      %s123 = sphi 0, %s122
      %s137 = sphi 0, %s123
      %s143 = sphi 0, %s145
      %s146 = sphi 0, %s143
      %s147 = sphi 0, %s146
      %s163 = sphi 0, %s147
      %s169 = sphi 0, %s171
      %s172 = sphi 0, %s169
      %s173 = sphi 0, %s172
      %s189 = sphi 0, %s173
    $region4: #{tpu_custom_call.1} parent=1 // loop_header_branch
      %26 = sbr.rel (%p24) target = $region8
    $region5: #{tpu_custom_call.1} parent=1 // loop_body
      %s28 = ssub.s32 %s23, 1
      %s29 = ssub.s32 %s23, 2
      %s30 = sadd.s32 %s23, 1
      %s31 = ssub.s32 %s23, %s30
      %p32 = scmp.eq.s32.totalorder %s31, 0
      %s34 = sadd.s32 %s33, 1
      %s35 = scalar_select %p32, %s33, %s34
      %p38 = pneg %p32
      %p39 = scmp.eq.s32.totalorder %s23, 1
      %p40 = por %p38, %p39
      %p41 = scmp.ne.s32.totalorder %s33, %s36
      %p42 = scmp.eq.s32.totalorder %s23, 0
      %p43 = por %p41, %p42
      %p44 = scmp.ne.s32.totalorder %s33, %s36
      %p45 = scmp.eq.s32.totalorder %s28, 1
      %p46 = por %p44, %p45
      %p47 = scmp.ne.s32.totalorder %s36, %s37
      %p48 = scmp.eq.s32.totalorder %s28, 0
      %p49 = por %p47, %p48
      %p50 = scmp.ne.s32.totalorder %s36, %s37
      %p51 = scmp.eq.s32.totalorder %s29, 1
      %p52 = por %p50, %p51
      %p54 = scmp.ne.s32.totalorder %s37, %s53
      %p55 = scmp.eq.s32.totalorder %s29, 0
      %p56 = por %p54, %p55
      %s58 = sadd.s32 %s57, 1
      %p61 = scmp.eq.s32.totalorder %s23, 1
      %p62 = scmp.ne.s32.totalorder %s57, %s59
      %p63 = scmp.eq.s32.totalorder %s23, 0
      %p64 = por %p62, %p63
      %p65 = scmp.ne.s32.totalorder %s57, %s59
      %p66 = scmp.eq.s32.totalorder %s28, 1
      %p67 = por %p65, %p66
      %p68 = scmp.ne.s32.totalorder %s59, %s60
      %p69 = scmp.eq.s32.totalorder %s28, 0
      %p70 = por %p68, %p69
      %p71 = scmp.ne.s32.totalorder %s59, %s60
      %p72 = scmp.eq.s32.totalorder %s29, 1
      %p73 = por %p71, %p72
      %p75 = scmp.ne.s32.totalorder %s60, %s74
      %p76 = scmp.eq.s32.totalorder %s29, 0
      %p77 = por %p75, %p76
      %s79 = sadd.s32 %s78, 1
      %p82 = scmp.eq.s32.totalorder %s23, 1
      %p83 = scmp.ne.s32.totalorder %s78, %s80
      %p84 = scmp.eq.s32.totalorder %s23, 0
      %p85 = por %p83, %p84
      %p86 = scmp.ne.s32.totalorder %s78, %s80
      %p87 = scmp.eq.s32.totalorder %s28, 1
      %p88 = por %p86, %p87
      %p89 = scmp.ne.s32.totalorder %s80, %s81
      %p90 = scmp.eq.s32.totalorder %s28, 0
      %p91 = por %p89, %p90
      %p92 = scmp.ne.s32.totalorder %s80, %s81
      %p93 = scmp.eq.s32.totalorder %s29, 1
      %p94 = por %p92, %p93
      %p96 = scmp.ne.s32.totalorder %s81, %s95
      %p97 = scmp.eq.s32.totalorder %s29, 0
      %p98 = por %p96, %p97
      %s100 = sadd.s32 %s99, 1
      %p103 = scmp.eq.s32.totalorder %s23, 1
      %p104 = scmp.ne.s32.totalorder %s99, %s101
      %p105 = scmp.eq.s32.totalorder %s23, 0
      %p106 = por %p104, %p105
      %p107 = scmp.ne.s32.totalorder %s99, %s101
      %p108 = scmp.eq.s32.totalorder %s28, 1
      %p109 = por %p107, %p108
      %p110 = scmp.ne.s32.totalorder %s101, %s102
      %p111 = scmp.eq.s32.totalorder %s28, 0
      %p112 = por %p110, %p111
      %p113 = scmp.ne.s32.totalorder %s101, %s102
      %p114 = scmp.eq.s32.totalorder %s29, 1
      %p115 = por %p113, %p114
      %p117 = scmp.ne.s32.totalorder %s102, %s116
      %p118 = scmp.eq.s32.totalorder %s29, 0
      %p119 = por %p117, %p118
      %s121 = sadd.s32 %s120, 1
      %p124 = scmp.eq.s32.totalorder %s23, 1
      %p125 = scmp.ne.s32.totalorder %s120, %s122
      %p126 = scmp.eq.s32.totalorder %s23, 0
      %p127 = por %p125, %p126
      %p128 = scmp.ne.s32.totalorder %s120, %s122
      %p129 = scmp.eq.s32.totalorder %s28, 1
      %p130 = por %p128, %p129
      %p131 = scmp.ne.s32.totalorder %s122, %s123
      %p132 = scmp.eq.s32.totalorder %s28, 0
      %p133 = por %p131, %p132
      %p134 = scmp.ne.s32.totalorder %s122, %s123
      %p135 = scmp.eq.s32.totalorder %s29, 1
      %p136 = por %p134, %p135
      %p138 = scmp.ne.s32.totalorder %s123, %s137
      %p139 = scmp.eq.s32.totalorder %s29, 0
      %p140 = por %p138, %p139
      %s141 = ssub.s32 %s23, %s30
      %p142 = scmp.eq.s32.totalorder %s141, 0
      %s144 = sadd.s32 %s143, 1
      %s145 = scalar_select %p142, %s143, %s144
      %p148 = pneg %p142
      %p149 = scmp.eq.s32.totalorder %s23, 1
      %p150 = por %p148, %p149
      %p151 = scmp.ne.s32.totalorder %s143, %s146
      %p152 = scmp.eq.s32.totalorder %s23, 0
      %p153 = por %p151, %p152
      %p154 = scmp.ne.s32.totalorder %s143, %s146
      %p155 = scmp.eq.s32.totalorder %s28, 1
      %p156 = por %p154, %p155
      %p157 = scmp.ne.s32.totalorder %s146, %s147
      %p158 = scmp.eq.s32.totalorder %s28, 0
      %p159 = por %p157, %p158
      %p160 = scmp.ne.s32.totalorder %s146, %s147
      %p161 = scmp.eq.s32.totalorder %s29, 1
      %p162 = por %p160, %p161
      %p164 = scmp.ne.s32.totalorder %s147, %s163
      %p165 = scmp.eq.s32.totalorder %s29, 0
      %p166 = por %p164, %p165
      %s167 = ssub.s32 %s23, %s30
      %p168 = scmp.eq.s32.totalorder %s167, 0
      %s170 = sadd.s32 %s169, 1
      %s171 = scalar_select %p168, %s169, %s170
      %p174 = pneg %p168
      %p175 = scmp.eq.s32.totalorder %s23, 1
      %p176 = por %p174, %p175
      %p177 = scmp.ne.s32.totalorder %s169, %s172
      %p178 = scmp.eq.s32.totalorder %s23, 0
      %p179 = por %p177, %p178
      %p180 = scmp.ne.s32.totalorder %s169, %s172
      %p181 = scmp.eq.s32.totalorder %s28, 1
      %p182 = por %p180, %p181
      %p183 = scmp.ne.s32.totalorder %s172, %s173
      %p184 = scmp.eq.s32.totalorder %s28, 0
      %p185 = por %p183, %p184
      %p186 = scmp.ne.s32.totalorder %s172, %s173
      %p187 = scmp.eq.s32.totalorder %s29, 1
      %p188 = por %p186, %p187
      %p190 = scmp.ne.s32.totalorder %s173, %s189
      %p191 = scmp.eq.s32.totalorder %s29, 0
      %p192 = por %p190, %p191
      %p193 = scmp.le.s32.totalorder 1, %s23
      %p194 = scmp.lt.s32.totalorder %s23, 3
      %p195 = pnand %p193, %p194
      %p196 = pneg %p195
      // Predicated region
      $region9: #{tpu_custom_call.1} parent=5 // pred_check
        _
      $region10: #{tpu_custom_call.1} parent=5 // pred_check_branch
        %198 = sbr.rel (%p195) target = $region12
      $region11: #{tpu_custom_call.1} parent=5 // pred_region
        %s199 = ssub.s32 %s23, 1
        // Predicated region
        $region13: #{tpu_custom_call.1} parent=11 // pred_check
          %p200 = pneg %p70
        $region14: #{tpu_custom_call.1} parent=11 // pred_check_branch
          %202 = sbr.rel (%p200) target = $region16
        $region15: #{tpu_custom_call.1} parent=11 // pred_region
          %204 = vsyncadd [#allocation6], 0
          %s205 = sshll.u32 %s1, 4
          %s206 = int_to_ptr.hbm [resolvable:$true] %s205
          %s207 = sshll.u32 [#allocation5], 4
          %s208 = int_to_ptr.vmem [resolvable:$true] %s207
          %213 = dma.hbm_to_vmem [thread:$0]  %s206, 50176, %s208, [#allocation6], 1024, 1024, 64
        $region16: #{tpu_custom_call.1} parent=11 // pred_fallthru
          _
        // Predicated region
        $region17: #{tpu_custom_call.1} parent=11 // pred_check
          %p214 = pneg %p91
        $region18: #{tpu_custom_call.1} parent=11 // pred_check_branch
          %216 = sbr.rel (%p214) target = $region20
        $region19: #{tpu_custom_call.1} parent=11 // pred_region
          _
        $region20: #{tpu_custom_call.1} parent=11 // pred_fallthru
          _
        // Predicated region
        $region21: #{tpu_custom_call.1} parent=11 // pred_check
          %p217 = pneg %p112
        $region22: #{tpu_custom_call.1} parent=11 // pred_check_branch
          %219 = sbr.rel (%p217) target = $region24
        $region23: #{tpu_custom_call.1} parent=11 // pred_region
          _
        $region24: #{tpu_custom_call.1} parent=11 // pred_fallthru
          _
        // Predicated region
        $region25: #{tpu_custom_call.1} parent=11 // pred_check
          %p220 = pneg %p133
        $region26: #{tpu_custom_call.1} parent=11 // pred_check_branch
          %222 = sbr.rel (%p220) target = $region28
        $region27: #{tpu_custom_call.1} parent=11 // pred_region
          %224 = vsyncadd [#allocation6], 0
          %s225 = sshll.u32 %s4, 4
          %s226 = int_to_ptr.hbm [resolvable:$true] %s225
          %s227 = sshll.u32 [#allocation7], 4
          %s228 = int_to_ptr.vmem [resolvable:$true] %s227
          %233 = dma.hbm_to_vmem [thread:$0]  %s226, 768, %s228, [#allocation6], 256, 256, 16
        $region28: #{tpu_custom_call.1} parent=11 // pred_fallthru
          _
      $region12: #{tpu_custom_call.1} parent=5 // pred_fallthru
        _
      %p234 = scmp.lt.s32.totalorder %s23, 2
      // Predicated region
      $region29: #{tpu_custom_call.1} parent=5 // pred_check
        %p235 = pneg %p234
      $region30: #{tpu_custom_call.1} parent=5 // pred_check_branch
        %237 = sbr.rel (%p235) target = $region32
      $region31: #{tpu_custom_call.1} parent=5 // pred_region
        // Predicated region
        $region33: #{tpu_custom_call.1} parent=31 // pred_check
          %p238 = pneg %p43
        $region34: #{tpu_custom_call.1} parent=31 // pred_check_branch
          %240 = sbr.rel (%p238) target = $region36
        $region35: #{tpu_custom_call.1} parent=31 // pred_region
          %s241 = sand.u32 %s33, 1
          %s242 = scalar_lea.sflag [#allocation3], %s241
          %s243 = sand.u32 %s33, 1
          %s244 = smul.addr %s243, 4096
          %s245 = scalar_lea.vmem [#allocation2], %s244
          %247 = vsyncadd %s242, 0
          %s248 = smul.addr %s23, 512
          %s249 = smul.addr %s248, 8
          %s250 = scalar_lea.hbm %s0, %s249
          %s251 = sshll.u32 %s250, 4
          %s252 = int_to_ptr.hbm [resolvable:$true] %s251
          %s253 = sshll.u32 %s245, 4
          %s254 = int_to_ptr.vmem [resolvable:$true] %s253
          %259 = dma.hbm_to_vmem [thread:$0]  %s252, 65536, %s254, %s242, 256, 256, 16
        $region36: #{tpu_custom_call.1} parent=31 // pred_fallthru
          _
      $region32: #{tpu_custom_call.1} parent=5 // pred_fallthru
        _
      %p260 = scmp.le.s32.totalorder 1, %s23
      %p261 = scmp.lt.s32.totalorder %s23, 3
      %p262 = pnand %p260, %p261
      %p263 = pneg %p262
      // Predicated region
      $region37: #{tpu_custom_call.1} parent=5 // pred_check
        _
      $region38: #{tpu_custom_call.1} parent=5 // pred_check_branch
        %265 = sbr.rel (%p262) target = $region40
      $region39: #{tpu_custom_call.1} parent=5 // pred_region
        %s266 = ssub.s32 %s23, 1
        %s267 = sand.u32 %s36, 1
        %s268 = scalar_lea.sflag [#allocation3], %s267
        %s269 = sand.u32 %s36, 1
        %s270 = smul.addr %s269, 4096
        %s271 = scalar_lea.vmem [#allocation2], %s270
        // Predicated region
        $region41: #{tpu_custom_call.1} parent=39 // pred_check
          %p272 = pneg %p49
        $region42: #{tpu_custom_call.1} parent=39 // pred_check_branch
          %274 = sbr.rel (%p272) target = $region44
        $region43: #{tpu_custom_call.1} parent=39 // pred_region
          %276 = dma.done %s268, 65536
        $region44: #{tpu_custom_call.1} parent=39 // pred_fallthru
          _
        // Predicated region
        $region45: #{tpu_custom_call.1} parent=39 // pred_check
          %p277 = pneg %p70
        $region46: #{tpu_custom_call.1} parent=39 // pred_check_branch
          %279 = sbr.rel (%p277) target = $region48
        $region47: #{tpu_custom_call.1} parent=39 // pred_region
          %281 = dma.done [#allocation6], 50176
        $region48: #{tpu_custom_call.1} parent=39 // pred_fallthru
          _
        // Predicated region
        $region49: #{tpu_custom_call.1} parent=39 // pred_check
          %p282 = pneg %p133
        $region50: #{tpu_custom_call.1} parent=39 // pred_check_branch
          %284 = sbr.rel (%p282) target = $region52
        $region51: #{tpu_custom_call.1} parent=39 // pred_region
          %286 = dma.done [#allocation6], 768
        $region52: #{tpu_custom_call.1} parent=39 // pred_fallthru
          _
        %s287 = sand.u32 %s36, 1
        %s288 = scalar_lea.sflag [#allocation3], %s287
        %s289 = sand.u32 %s36, 1
        %s290 = smul.addr %s289, 4096
        %s291 = scalar_lea.vmem [#allocation2], %s290
        %p292 = pneg %p49
        %p293 = pneg %p46
        %p294 = pneg %p70
        %p295 = pneg %p67
        %p296 = pneg %p91
        %p297 = pneg %p88
        %p298 = pneg %p112
        %p299 = pneg %p109
        %p300 = pneg %p133
        %p301 = pneg %p130
        %p302 = pneg %p159
        %p303 = pneg %p156
        %s304 = sand.u32 %s146, 1
        %s305 = scalar_lea.sflag [#allocation4], %s304
        %s306 = sand.u32 %s146, 1
        %s307 = smul.addr %s306, 512
        %s308 = scalar_lea.vmem [#allocation8], %s307
        %p309 = pneg %p185
        %p310 = pneg %p182
        %s311 = sand.u32 %s172, 1
        %s312 = scalar_lea.sflag [#allocation10], %s311
        %s313 = sand.u32 %s172, 1
        %s314 = smul.addr %s313, 16
        %s315 = scalar_lea.vmem [#allocation9], %s314
        %v316 = vld [vmem:[%s271] sm:$0xff]
        %v317 = vld [vmem:[%s271 + $0x8] sm:$0xff]
        %v318 = vld [vmem:[%s271 + $0x10] sm:$0xff]
        %v319 = vld [vmem:[%s271 + $0x18] sm:$0xff]
        %v320 = vld [vmem:[%s271 + $0x20] sm:$0xff]
        %v321 = vld [vmem:[%s271 + $0x28] sm:$0xff]
        %v322 = vld [vmem:[%s271 + $0x30] sm:$0xff]
        %v323 = vld [vmem:[%s271 + $0x38] sm:$0xff]
        %v324 = vld [vmem:[%s271 + $0x40] sm:$0xff]
        %v325 = vld [vmem:[%s271 + $0x48] sm:$0xff]
        %v326 = vld [vmem:[%s271 + $0x50] sm:$0xff]
        %v327 = vld [vmem:[%s271 + $0x58] sm:$0xff]
        %v328 = vld [vmem:[%s271 + $0x60] sm:$0xff]
        %v329 = vld [vmem:[%s271 + $0x68] sm:$0xff]
        %v330 = vld [vmem:[%s271 + $0x70] sm:$0xff]
        %v331 = vld [vmem:[%s271 + $0x78] sm:$0xff]
        %v332 = vld [vmem:[%s271 + $0x80] sm:$0xff]
        %v333 = vld [vmem:[%s271 + $0x88] sm:$0xff]
        %v334 = vld [vmem:[%s271 + $0x90] sm:$0xff]
        %v335 = vld [vmem:[%s271 + $0x98] sm:$0xff]
        %v336 = vld [vmem:[%s271 + $0xa0] sm:$0xff]
        %v337 = vld [vmem:[%s271 + $0xa8] sm:$0xff]
        %v338 = vld [vmem:[%s271 + $0xb0] sm:$0xff]
        %v339 = vld [vmem:[%s271 + $0xb8] sm:$0xff]
        %v340 = vld [vmem:[%s271 + $0xc0] sm:$0xff]
        %v341 = vld [vmem:[%s271 + $0xc8] sm:$0xff]
        %v342 = vld [vmem:[%s271 + $0xd0] sm:$0xff]
        %v343 = vld [vmem:[%s271 + $0xd8] sm:$0xff]
        %v344 = vld [vmem:[%s271 + $0xe0] sm:$0xff]
        %v345 = vld [vmem:[%s271 + $0xe8] sm:$0xff]
        %v346 = vld [vmem:[%s271 + $0xf0] sm:$0xff]
        %v347 = vld [vmem:[%s271 + $0xf8] sm:$0xff]
        %v348 = vld [vmem:[%s271 + $0x100] sm:$0xff]
        %v349 = vld [vmem:[%s271 + $0x108] sm:$0xff]
        %v350 = vld [vmem:[%s271 + $0x110] sm:$0xff]
        %v351 = vld [vmem:[%s271 + $0x118] sm:$0xff]
        %v352 = vld [vmem:[%s271 + $0x120] sm:$0xff]
        %v353 = vld [vmem:[%s271 + $0x128] sm:$0xff]
        %v354 = vld [vmem:[%s271 + $0x130] sm:$0xff]
        %v355 = vld [vmem:[%s271 + $0x138] sm:$0xff]
        %v356 = vld [vmem:[%s271 + $0x140] sm:$0xff]
        %v357 = vld [vmem:[%s271 + $0x148] sm:$0xff]
        %v358 = vld [vmem:[%s271 + $0x150] sm:$0xff]
        %v359 = vld [vmem:[%s271 + $0x158] sm:$0xff]
        %v360 = vld [vmem:[%s271 + $0x160] sm:$0xff]
        %v361 = vld [vmem:[%s271 + $0x168] sm:$0xff]
        %v362 = vld [vmem:[%s271 + $0x170] sm:$0xff]
        %v363 = vld [vmem:[%s271 + $0x178] sm:$0xff]
        %v364 = vld [vmem:[%s271 + $0x180] sm:$0xff]
        %v365 = vld [vmem:[%s271 + $0x188] sm:$0xff]
        %v366 = vld [vmem:[%s271 + $0x190] sm:$0xff]
        %v367 = vld [vmem:[%s271 + $0x198] sm:$0xff]
        %v368 = vld [vmem:[%s271 + $0x1a0] sm:$0xff]
        %v369 = vld [vmem:[%s271 + $0x1a8] sm:$0xff]
        %v370 = vld [vmem:[%s271 + $0x1b0] sm:$0xff]
        %v371 = vld [vmem:[%s271 + $0x1b8] sm:$0xff]
        %v372 = vld [vmem:[%s271 + $0x1c0] sm:$0xff]
        %v373 = vld [vmem:[%s271 + $0x1c8] sm:$0xff]
        %v374 = vld [vmem:[%s271 + $0x1d0] sm:$0xff]
        %v375 = vld [vmem:[%s271 + $0x1d8] sm:$0xff]
        %v376 = vld [vmem:[%s271 + $0x1e0] sm:$0xff]
        %v377 = vld [vmem:[%s271 + $0x1e8] sm:$0xff]
        %v378 = vld [vmem:[%s271 + $0x1f0] sm:$0xff]
        %v379 = vld [vmem:[%s271 + $0x1f8] sm:$0xff]
        %v380 = vld [vmem:[%s271 + $0x200] sm:$0xff]
        %v381 = vld [vmem:[%s271 + $0x208] sm:$0xff]
        %v382 = vld [vmem:[%s271 + $0x210] sm:$0xff]
        %v383 = vld [vmem:[%s271 + $0x218] sm:$0xff]
        %v384 = vld [vmem:[%s271 + $0x220] sm:$0xff]
        %v385 = vld [vmem:[%s271 + $0x228] sm:$0xff]
        %v386 = vld [vmem:[%s271 + $0x230] sm:$0xff]
        %v387 = vld [vmem:[%s271 + $0x238] sm:$0xff]
        %v388 = vld [vmem:[%s271 + $0x240] sm:$0xff]
        %v389 = vld [vmem:[%s271 + $0x248] sm:$0xff]
        %v390 = vld [vmem:[%s271 + $0x250] sm:$0xff]
        %v391 = vld [vmem:[%s271 + $0x258] sm:$0xff]
        %v392 = vld [vmem:[%s271 + $0x260] sm:$0xff]
        %v393 = vld [vmem:[%s271 + $0x268] sm:$0xff]
        %v394 = vld [vmem:[%s271 + $0x270] sm:$0xff]
        %v395 = vld [vmem:[%s271 + $0x278] sm:$0xff]
        %v396 = vld [vmem:[%s271 + $0x280] sm:$0xff]
        %v397 = vld [vmem:[%s271 + $0x288] sm:$0xff]
        %v398 = vld [vmem:[%s271 + $0x290] sm:$0xff]
        %v399 = vld [vmem:[%s271 + $0x298] sm:$0xff]
        %v400 = vld [vmem:[%s271 + $0x2a0] sm:$0xff]
        %v401 = vld [vmem:[%s271 + $0x2a8] sm:$0xff]
        %v402 = vld [vmem:[%s271 + $0x2b0] sm:$0xff]
        %v403 = vld [vmem:[%s271 + $0x2b8] sm:$0xff]
        %v404 = vld [vmem:[%s271 + $0x2c0] sm:$0xff]
        %v405 = vld [vmem:[%s271 + $0x2c8] sm:$0xff]
        %v406 = vld [vmem:[%s271 + $0x2d0] sm:$0xff]
        %v407 = vld [vmem:[%s271 + $0x2d8] sm:$0xff]
        %v408 = vld [vmem:[%s271 + $0x2e0] sm:$0xff]
        %v409 = vld [vmem:[%s271 + $0x2e8] sm:$0xff]
        %v410 = vld [vmem:[%s271 + $0x2f0] sm:$0xff]
        %v411 = vld [vmem:[%s271 + $0x2f8] sm:$0xff]
        %v412 = vld [vmem:[%s271 + $0x300] sm:$0xff]
        %v413 = vld [vmem:[%s271 + $0x308] sm:$0xff]
        %v414 = vld [vmem:[%s271 + $0x310] sm:$0xff]
        %v415 = vld [vmem:[%s271 + $0x318] sm:$0xff]
        %v416 = vld [vmem:[%s271 + $0x320] sm:$0xff]
        %v417 = vld [vmem:[%s271 + $0x328] sm:$0xff]
        %v418 = vld [vmem:[%s271 + $0x330] sm:$0xff]
        %v419 = vld [vmem:[%s271 + $0x338] sm:$0xff]
        %v420 = vld [vmem:[%s271 + $0x340] sm:$0xff]
        %v421 = vld [vmem:[%s271 + $0x348] sm:$0xff]
        %v422 = vld [vmem:[%s271 + $0x350] sm:$0xff]
        %v423 = vld [vmem:[%s271 + $0x358] sm:$0xff]
        %v424 = vld [vmem:[%s271 + $0x360] sm:$0xff]
        %v425 = vld [vmem:[%s271 + $0x368] sm:$0xff]
        %v426 = vld [vmem:[%s271 + $0x370] sm:$0xff]
        %v427 = vld [vmem:[%s271 + $0x378] sm:$0xff]
        %v428 = vld [vmem:[%s271 + $0x380] sm:$0xff]
        %v429 = vld [vmem:[%s271 + $0x388] sm:$0xff]
        %v430 = vld [vmem:[%s271 + $0x390] sm:$0xff]
        %v431 = vld [vmem:[%s271 + $0x398] sm:$0xff]
        %v432 = vld [vmem:[%s271 + $0x3a0] sm:$0xff]
        %v433 = vld [vmem:[%s271 + $0x3a8] sm:$0xff]
        %v434 = vld [vmem:[%s271 + $0x3b0] sm:$0xff]
        %v435 = vld [vmem:[%s271 + $0x3b8] sm:$0xff]
        %v436 = vld [vmem:[%s271 + $0x3c0] sm:$0xff]
        %v437 = vld [vmem:[%s271 + $0x3c8] sm:$0xff]
        %v438 = vld [vmem:[%s271 + $0x3d0] sm:$0xff]
        %v439 = vld [vmem:[%s271 + $0x3d8] sm:$0xff]
        %v440 = vld [vmem:[%s271 + $0x3e0] sm:$0xff]
        %v441 = vld [vmem:[%s271 + $0x3e8] sm:$0xff]
        %v442 = vld [vmem:[%s271 + $0x3f0] sm:$0xff]
        %v443 = vld [vmem:[%s271 + $0x3f8] sm:$0xff]
        %v444 = vld [vmem:[%s271 + $0x400] sm:$0xff]
        %v445 = vld [vmem:[%s271 + $0x408] sm:$0xff]
        %v446 = vld [vmem:[%s271 + $0x410] sm:$0xff]
        %v447 = vld [vmem:[%s271 + $0x418] sm:$0xff]
        %v448 = vld [vmem:[%s271 + $0x420] sm:$0xff]
        %v449 = vld [vmem:[%s271 + $0x428] sm:$0xff]
        %v450 = vld [vmem:[%s271 + $0x430] sm:$0xff]
        %v451 = vld [vmem:[%s271 + $0x438] sm:$0xff]
        %v452 = vld [vmem:[%s271 + $0x440] sm:$0xff]
        %v453 = vld [vmem:[%s271 + $0x448] sm:$0xff]
        %v454 = vld [vmem:[%s271 + $0x450] sm:$0xff]
        %v455 = vld [vmem:[%s271 + $0x458] sm:$0xff]
        %v456 = vld [vmem:[%s271 + $0x460] sm:$0xff]
        %v457 = vld [vmem:[%s271 + $0x468] sm:$0xff]
        %v458 = vld [vmem:[%s271 + $0x470] sm:$0xff]
        %v459 = vld [vmem:[%s271 + $0x478] sm:$0xff]
        %v460 = vld [vmem:[%s271 + $0x480] sm:$0xff]
        %v461 = vld [vmem:[%s271 + $0x488] sm:$0xff]
        %v462 = vld [vmem:[%s271 + $0x490] sm:$0xff]
        %v463 = vld [vmem:[%s271 + $0x498] sm:$0xff]
        %v464 = vld [vmem:[%s271 + $0x4a0] sm:$0xff]
        %v465 = vld [vmem:[%s271 + $0x4a8] sm:$0xff]
        %v466 = vld [vmem:[%s271 + $0x4b0] sm:$0xff]
        %v467 = vld [vmem:[%s271 + $0x4b8] sm:$0xff]
        %v468 = vld [vmem:[%s271 + $0x4c0] sm:$0xff]
        %v469 = vld [vmem:[%s271 + $0x4c8] sm:$0xff]
        %v470 = vld [vmem:[%s271 + $0x4d0] sm:$0xff]
        %v471 = vld [vmem:[%s271 + $0x4d8] sm:$0xff]
        %v472 = vld [vmem:[%s271 + $0x4e0] sm:$0xff]
        %v473 = vld [vmem:[%s271 + $0x4e8] sm:$0xff]
        %v474 = vld [vmem:[%s271 + $0x4f0] sm:$0xff]
        %v475 = vld [vmem:[%s271 + $0x4f8] sm:$0xff]
        %v476 = vld [vmem:[%s271 + $0x500] sm:$0xff]
        %v477 = vld [vmem:[%s271 + $0x508] sm:$0xff]
        %v478 = vld [vmem:[%s271 + $0x510] sm:$0xff]
        %v479 = vld [vmem:[%s271 + $0x518] sm:$0xff]
        %v480 = vld [vmem:[%s271 + $0x520] sm:$0xff]
        %v481 = vld [vmem:[%s271 + $0x528] sm:$0xff]
        %v482 = vld [vmem:[%s271 + $0x530] sm:$0xff]
        %v483 = vld [vmem:[%s271 + $0x538] sm:$0xff]
        %v484 = vld [vmem:[%s271 + $0x540] sm:$0xff]
        %v485 = vld [vmem:[%s271 + $0x548] sm:$0xff]
        %v486 = vld [vmem:[%s271 + $0x550] sm:$0xff]
        %v487 = vld [vmem:[%s271 + $0x558] sm:$0xff]
        %v488 = vld [vmem:[%s271 + $0x560] sm:$0xff]
        %v489 = vld [vmem:[%s271 + $0x568] sm:$0xff]
        %v490 = vld [vmem:[%s271 + $0x570] sm:$0xff]
        %v491 = vld [vmem:[%s271 + $0x578] sm:$0xff]
        %v492 = vld [vmem:[%s271 + $0x580] sm:$0xff]
        %v493 = vld [vmem:[%s271 + $0x588] sm:$0xff]
        %v494 = vld [vmem:[%s271 + $0x590] sm:$0xff]
        %v495 = vld [vmem:[%s271 + $0x598] sm:$0xff]
        %v496 = vld [vmem:[%s271 + $0x5a0] sm:$0xff]
        %v497 = vld [vmem:[%s271 + $0x5a8] sm:$0xff]
        %v498 = vld [vmem:[%s271 + $0x5b0] sm:$0xff]
        %v499 = vld [vmem:[%s271 + $0x5b8] sm:$0xff]
        %v500 = vld [vmem:[%s271 + $0x5c0] sm:$0xff]
        %v501 = vld [vmem:[%s271 + $0x5c8] sm:$0xff]
        %v502 = vld [vmem:[%s271 + $0x5d0] sm:$0xff]
        %v503 = vld [vmem:[%s271 + $0x5d8] sm:$0xff]
        %v504 = vld [vmem:[%s271 + $0x5e0] sm:$0xff]
        %v505 = vld [vmem:[%s271 + $0x5e8] sm:$0xff]
        %v506 = vld [vmem:[%s271 + $0x5f0] sm:$0xff]
        %v507 = vld [vmem:[%s271 + $0x5f8] sm:$0xff]
        %v508 = vld [vmem:[%s271 + $0x600] sm:$0xff]
        %v509 = vld [vmem:[%s271 + $0x608] sm:$0xff]
        %v510 = vld [vmem:[%s271 + $0x610] sm:$0xff]
        %v511 = vld [vmem:[%s271 + $0x618] sm:$0xff]
        %v512 = vld [vmem:[%s271 + $0x620] sm:$0xff]
        %v513 = vld [vmem:[%s271 + $0x628] sm:$0xff]
        %v514 = vld [vmem:[%s271 + $0x630] sm:$0xff]
        %v515 = vld [vmem:[%s271 + $0x638] sm:$0xff]
        %v516 = vld [vmem:[%s271 + $0x640] sm:$0xff]
        %v517 = vld [vmem:[%s271 + $0x648] sm:$0xff]
        %v518 = vld [vmem:[%s271 + $0x650] sm:$0xff]
        %v519 = vld [vmem:[%s271 + $0x658] sm:$0xff]
        %v520 = vld [vmem:[%s271 + $0x660] sm:$0xff]
        %v521 = vld [vmem:[%s271 + $0x668] sm:$0xff]
        %v522 = vld [vmem:[%s271 + $0x670] sm:$0xff]
        %v523 = vld [vmem:[%s271 + $0x678] sm:$0xff]
        %v524 = vld [vmem:[%s271 + $0x680] sm:$0xff]
        %v525 = vld [vmem:[%s271 + $0x688] sm:$0xff]
        %v526 = vld [vmem:[%s271 + $0x690] sm:$0xff]
        %v527 = vld [vmem:[%s271 + $0x698] sm:$0xff]
        %v528 = vld [vmem:[%s271 + $0x6a0] sm:$0xff]
        %v529 = vld [vmem:[%s271 + $0x6a8] sm:$0xff]
        %v530 = vld [vmem:[%s271 + $0x6b0] sm:$0xff]
        %v531 = vld [vmem:[%s271 + $0x6b8] sm:$0xff]
        %v532 = vld [vmem:[%s271 + $0x6c0] sm:$0xff]
        %v533 = vld [vmem:[%s271 + $0x6c8] sm:$0xff]
        %v534 = vld [vmem:[%s271 + $0x6d0] sm:$0xff]
        %v535 = vld [vmem:[%s271 + $0x6d8] sm:$0xff]
        %v536 = vld [vmem:[%s271 + $0x6e0] sm:$0xff]
        %v537 = vld [vmem:[%s271 + $0x6e8] sm:$0xff]
        %v538 = vld [vmem:[%s271 + $0x6f0] sm:$0xff]
        %v539 = vld [vmem:[%s271 + $0x6f8] sm:$0xff]
        %v540 = vld [vmem:[%s271 + $0x700] sm:$0xff]
        %v541 = vld [vmem:[%s271 + $0x708] sm:$0xff]
        %v542 = vld [vmem:[%s271 + $0x710] sm:$0xff]
        %v543 = vld [vmem:[%s271 + $0x718] sm:$0xff]
        %v544 = vld [vmem:[%s271 + $0x720] sm:$0xff]
        %v545 = vld [vmem:[%s271 + $0x728] sm:$0xff]
        %v546 = vld [vmem:[%s271 + $0x730] sm:$0xff]
        %v547 = vld [vmem:[%s271 + $0x738] sm:$0xff]
        %v548 = vld [vmem:[%s271 + $0x740] sm:$0xff]
        %v549 = vld [vmem:[%s271 + $0x748] sm:$0xff]
        %v550 = vld [vmem:[%s271 + $0x750] sm:$0xff]
        %v551 = vld [vmem:[%s271 + $0x758] sm:$0xff]
        %v552 = vld [vmem:[%s271 + $0x760] sm:$0xff]
        %v553 = vld [vmem:[%s271 + $0x768] sm:$0xff]
        %v554 = vld [vmem:[%s271 + $0x770] sm:$0xff]
        %v555 = vld [vmem:[%s271 + $0x778] sm:$0xff]
        %v556 = vld [vmem:[%s271 + $0x780] sm:$0xff]
        %v557 = vld [vmem:[%s271 + $0x788] sm:$0xff]
        %v558 = vld [vmem:[%s271 + $0x790] sm:$0xff]
        %v559 = vld [vmem:[%s271 + $0x798] sm:$0xff]
        %v560 = vld [vmem:[%s271 + $0x7a0] sm:$0xff]
        %v561 = vld [vmem:[%s271 + $0x7a8] sm:$0xff]
        %v562 = vld [vmem:[%s271 + $0x7b0] sm:$0xff]
        %v563 = vld [vmem:[%s271 + $0x7b8] sm:$0xff]
        %v564 = vld [vmem:[%s271 + $0x7c0] sm:$0xff]
        %v565 = vld [vmem:[%s271 + $0x7c8] sm:$0xff]
        %v566 = vld [vmem:[%s271 + $0x7d0] sm:$0xff]
        %v567 = vld [vmem:[%s271 + $0x7d8] sm:$0xff]
        %v568 = vld [vmem:[%s271 + $0x7e0] sm:$0xff]
        %v569 = vld [vmem:[%s271 + $0x7e8] sm:$0xff]
        %v570 = vld [vmem:[%s271 + $0x7f0] sm:$0xff]
        %v571 = vld [vmem:[%s271 + $0x7f8] sm:$0xff]
        %v572 = vld [vmem:[%s271 + $0x800] sm:$0xff]
        %v573 = vld [vmem:[%s271 + $0x808] sm:$0xff]
        %v574 = vld [vmem:[%s271 + $0x810] sm:$0xff]
        %v575 = vld [vmem:[%s271 + $0x818] sm:$0xff]
        %v576 = vld [vmem:[%s271 + $0x820] sm:$0xff]
        %v577 = vld [vmem:[%s271 + $0x828] sm:$0xff]
        %v578 = vld [vmem:[%s271 + $0x830] sm:$0xff]
        %v579 = vld [vmem:[%s271 + $0x838] sm:$0xff]
        %v580 = vld [vmem:[%s271 + $0x840] sm:$0xff]
        %v581 = vld [vmem:[%s271 + $0x848] sm:$0xff]
        %v582 = vld [vmem:[%s271 + $0x850] sm:$0xff]
        %v583 = vld [vmem:[%s271 + $0x858] sm:$0xff]
        %v584 = vld [vmem:[%s271 + $0x860] sm:$0xff]
        %v585 = vld [vmem:[%s271 + $0x868] sm:$0xff]
        %v586 = vld [vmem:[%s271 + $0x870] sm:$0xff]
        %v587 = vld [vmem:[%s271 + $0x878] sm:$0xff]
        %v588 = vld [vmem:[%s271 + $0x880] sm:$0xff]
        %v589 = vld [vmem:[%s271 + $0x888] sm:$0xff]
        %v590 = vld [vmem:[%s271 + $0x890] sm:$0xff]
        %v591 = vld [vmem:[%s271 + $0x898] sm:$0xff]
        %v592 = vld [vmem:[%s271 + $0x8a0] sm:$0xff]
        %v593 = vld [vmem:[%s271 + $0x8a8] sm:$0xff]
        %v594 = vld [vmem:[%s271 + $0x8b0] sm:$0xff]
        %v595 = vld [vmem:[%s271 + $0x8b8] sm:$0xff]
        %v596 = vld [vmem:[%s271 + $0x8c0] sm:$0xff]
        %v597 = vld [vmem:[%s271 + $0x8c8] sm:$0xff]
        %v598 = vld [vmem:[%s271 + $0x8d0] sm:$0xff]
        %v599 = vld [vmem:[%s271 + $0x8d8] sm:$0xff]
        %v600 = vld [vmem:[%s271 + $0x8e0] sm:$0xff]
        %v601 = vld [vmem:[%s271 + $0x8e8] sm:$0xff]
        %v602 = vld [vmem:[%s271 + $0x8f0] sm:$0xff]
        %v603 = vld [vmem:[%s271 + $0x8f8] sm:$0xff]
        %v604 = vld [vmem:[%s271 + $0x900] sm:$0xff]
        %v605 = vld [vmem:[%s271 + $0x908] sm:$0xff]
        %v606 = vld [vmem:[%s271 + $0x910] sm:$0xff]
        %v607 = vld [vmem:[%s271 + $0x918] sm:$0xff]
        %v608 = vld [vmem:[%s271 + $0x920] sm:$0xff]
        %v609 = vld [vmem:[%s271 + $0x928] sm:$0xff]
        %v610 = vld [vmem:[%s271 + $0x930] sm:$0xff]
        %v611 = vld [vmem:[%s271 + $0x938] sm:$0xff]
        %v612 = vld [vmem:[%s271 + $0x940] sm:$0xff]
        %v613 = vld [vmem:[%s271 + $0x948] sm:$0xff]
        %v614 = vld [vmem:[%s271 + $0x950] sm:$0xff]
        %v615 = vld [vmem:[%s271 + $0x958] sm:$0xff]
        %v616 = vld [vmem:[%s271 + $0x960] sm:$0xff]
        %v617 = vld [vmem:[%s271 + $0x968] sm:$0xff]
        %v618 = vld [vmem:[%s271 + $0x970] sm:$0xff]
        %v619 = vld [vmem:[%s271 + $0x978] sm:$0xff]
        %v620 = vld [vmem:[%s271 + $0x980] sm:$0xff]
        %v621 = vld [vmem:[%s271 + $0x988] sm:$0xff]
        %v622 = vld [vmem:[%s271 + $0x990] sm:$0xff]
        %v623 = vld [vmem:[%s271 + $0x998] sm:$0xff]
        %v624 = vld [vmem:[%s271 + $0x9a0] sm:$0xff]
        %v625 = vld [vmem:[%s271 + $0x9a8] sm:$0xff]
        %v626 = vld [vmem:[%s271 + $0x9b0] sm:$0xff]
        %v627 = vld [vmem:[%s271 + $0x9b8] sm:$0xff]
        %v628 = vld [vmem:[%s271 + $0x9c0] sm:$0xff]
        %v629 = vld [vmem:[%s271 + $0x9c8] sm:$0xff]
        %v630 = vld [vmem:[%s271 + $0x9d0] sm:$0xff]
        %v631 = vld [vmem:[%s271 + $0x9d8] sm:$0xff]
        %v632 = vld [vmem:[%s271 + $0x9e0] sm:$0xff]
        %v633 = vld [vmem:[%s271 + $0x9e8] sm:$0xff]
        %v634 = vld [vmem:[%s271 + $0x9f0] sm:$0xff]
        %v635 = vld [vmem:[%s271 + $0x9f8] sm:$0xff]
        %v636 = vld [vmem:[%s271 + $0xa00] sm:$0xff]
        %v637 = vld [vmem:[%s271 + $0xa08] sm:$0xff]
        %v638 = vld [vmem:[%s271 + $0xa10] sm:$0xff]
        %v639 = vld [vmem:[%s271 + $0xa18] sm:$0xff]
        %v640 = vld [vmem:[%s271 + $0xa20] sm:$0xff]
        %v641 = vld [vmem:[%s271 + $0xa28] sm:$0xff]
        %v642 = vld [vmem:[%s271 + $0xa30] sm:$0xff]
        %v643 = vld [vmem:[%s271 + $0xa38] sm:$0xff]
        %v644 = vld [vmem:[%s271 + $0xa40] sm:$0xff]
        %v645 = vld [vmem:[%s271 + $0xa48] sm:$0xff]
        %v646 = vld [vmem:[%s271 + $0xa50] sm:$0xff]
        %v647 = vld [vmem:[%s271 + $0xa58] sm:$0xff]
        %v648 = vld [vmem:[%s271 + $0xa60] sm:$0xff]
        %v649 = vld [vmem:[%s271 + $0xa68] sm:$0xff]
        %v650 = vld [vmem:[%s271 + $0xa70] sm:$0xff]
        %v651 = vld [vmem:[%s271 + $0xa78] sm:$0xff]
        %v652 = vld [vmem:[%s271 + $0xa80] sm:$0xff]
        %v653 = vld [vmem:[%s271 + $0xa88] sm:$0xff]
        %v654 = vld [vmem:[%s271 + $0xa90] sm:$0xff]
        %v655 = vld [vmem:[%s271 + $0xa98] sm:$0xff]
        %v656 = vld [vmem:[%s271 + $0xaa0] sm:$0xff]
        %v657 = vld [vmem:[%s271 + $0xaa8] sm:$0xff]
        %v658 = vld [vmem:[%s271 + $0xab0] sm:$0xff]
        %v659 = vld [vmem:[%s271 + $0xab8] sm:$0xff]
        %v660 = vld [vmem:[%s271 + $0xac0] sm:$0xff]
        %v661 = vld [vmem:[%s271 + $0xac8] sm:$0xff]
        %v662 = vld [vmem:[%s271 + $0xad0] sm:$0xff]
        %v663 = vld [vmem:[%s271 + $0xad8] sm:$0xff]
        %v664 = vld [vmem:[%s271 + $0xae0] sm:$0xff]
        %v665 = vld [vmem:[%s271 + $0xae8] sm:$0xff]
        %v666 = vld [vmem:[%s271 + $0xaf0] sm:$0xff]
        %v667 = vld [vmem:[%s271 + $0xaf8] sm:$0xff]
        %v668 = vld [vmem:[%s271 + $0xb00] sm:$0xff]
        %v669 = vld [vmem:[%s271 + $0xb08] sm:$0xff]
        %v670 = vld [vmem:[%s271 + $0xb10] sm:$0xff]
        %v671 = vld [vmem:[%s271 + $0xb18] sm:$0xff]
        %v672 = vld [vmem:[%s271 + $0xb20] sm:$0xff]
        %v673 = vld [vmem:[%s271 + $0xb28] sm:$0xff]
        %v674 = vld [vmem:[%s271 + $0xb30] sm:$0xff]
        %v675 = vld [vmem:[%s271 + $0xb38] sm:$0xff]
        %v676 = vld [vmem:[%s271 + $0xb40] sm:$0xff]
        %v677 = vld [vmem:[%s271 + $0xb48] sm:$0xff]
        %v678 = vld [vmem:[%s271 + $0xb50] sm:$0xff]
        %v679 = vld [vmem:[%s271 + $0xb58] sm:$0xff]
        %v680 = vld [vmem:[%s271 + $0xb60] sm:$0xff]
        %v681 = vld [vmem:[%s271 + $0xb68] sm:$0xff]
        %v682 = vld [vmem:[%s271 + $0xb70] sm:$0xff]
        %v683 = vld [vmem:[%s271 + $0xb78] sm:$0xff]
        %v684 = vld [vmem:[%s271 + $0xb80] sm:$0xff]
        %v685 = vld [vmem:[%s271 + $0xb88] sm:$0xff]
        %v686 = vld [vmem:[%s271 + $0xb90] sm:$0xff]
        %v687 = vld [vmem:[%s271 + $0xb98] sm:$0xff]
        %v688 = vld [vmem:[%s271 + $0xba0] sm:$0xff]
        %v689 = vld [vmem:[%s271 + $0xba8] sm:$0xff]
        %v690 = vld [vmem:[%s271 + $0xbb0] sm:$0xff]
        %v691 = vld [vmem:[%s271 + $0xbb8] sm:$0xff]
        %v692 = vld [vmem:[%s271 + $0xbc0] sm:$0xff]
        %v693 = vld [vmem:[%s271 + $0xbc8] sm:$0xff]
        %v694 = vld [vmem:[%s271 + $0xbd0] sm:$0xff]
        %v695 = vld [vmem:[%s271 + $0xbd8] sm:$0xff]
        %v696 = vld [vmem:[%s271 + $0xbe0] sm:$0xff]
        %v697 = vld [vmem:[%s271 + $0xbe8] sm:$0xff]
        %v698 = vld [vmem:[%s271 + $0xbf0] sm:$0xff]
        %v699 = vld [vmem:[%s271 + $0xbf8] sm:$0xff]
        %v700 = vld [vmem:[%s271 + $0xc00] sm:$0xff]
        %v701 = vld [vmem:[%s271 + $0xc08] sm:$0xff]
        %v702 = vld [vmem:[%s271 + $0xc10] sm:$0xff]
        %v703 = vld [vmem:[%s271 + $0xc18] sm:$0xff]
        %v704 = vld [vmem:[%s271 + $0xc20] sm:$0xff]
        %v705 = vld [vmem:[%s271 + $0xc28] sm:$0xff]
        %v706 = vld [vmem:[%s271 + $0xc30] sm:$0xff]
        %v707 = vld [vmem:[%s271 + $0xc38] sm:$0xff]
        %v708 = vld [vmem:[%s271 + $0xc40] sm:$0xff]
        %v709 = vld [vmem:[%s271 + $0xc48] sm:$0xff]
        %v710 = vld [vmem:[%s271 + $0xc50] sm:$0xff]
        %v711 = vld [vmem:[%s271 + $0xc58] sm:$0xff]
        %v712 = vld [vmem:[%s271 + $0xc60] sm:$0xff]
        %v713 = vld [vmem:[%s271 + $0xc68] sm:$0xff]
        %v714 = vld [vmem:[%s271 + $0xc70] sm:$0xff]
        %v715 = vld [vmem:[%s271 + $0xc78] sm:$0xff]
        %v716 = vld [vmem:[%s271 + $0xc80] sm:$0xff]
        %v717 = vld [vmem:[%s271 + $0xc88] sm:$0xff]
        %v718 = vld [vmem:[%s271 + $0xc90] sm:$0xff]
        %v719 = vld [vmem:[%s271 + $0xc98] sm:$0xff]
        %v720 = vld [vmem:[%s271 + $0xca0] sm:$0xff]
        %v721 = vld [vmem:[%s271 + $0xca8] sm:$0xff]
        %v722 = vld [vmem:[%s271 + $0xcb0] sm:$0xff]
        %v723 = vld [vmem:[%s271 + $0xcb8] sm:$0xff]
        %v724 = vld [vmem:[%s271 + $0xcc0] sm:$0xff]
        %v725 = vld [vmem:[%s271 + $0xcc8] sm:$0xff]
        %v726 = vld [vmem:[%s271 + $0xcd0] sm:$0xff]
        %v727 = vld [vmem:[%s271 + $0xcd8] sm:$0xff]
        %v728 = vld [vmem:[%s271 + $0xce0] sm:$0xff]
        %v729 = vld [vmem:[%s271 + $0xce8] sm:$0xff]
        %v730 = vld [vmem:[%s271 + $0xcf0] sm:$0xff]
        %v731 = vld [vmem:[%s271 + $0xcf8] sm:$0xff]
        %v732 = vld [vmem:[%s271 + $0xd00] sm:$0xff]
        %v733 = vld [vmem:[%s271 + $0xd08] sm:$0xff]
        %v734 = vld [vmem:[%s271 + $0xd10] sm:$0xff]
        %v735 = vld [vmem:[%s271 + $0xd18] sm:$0xff]
        %v736 = vld [vmem:[%s271 + $0xd20] sm:$0xff]
        %v737 = vld [vmem:[%s271 + $0xd28] sm:$0xff]
        %v738 = vld [vmem:[%s271 + $0xd30] sm:$0xff]
        %v739 = vld [vmem:[%s271 + $0xd38] sm:$0xff]
        %v740 = vld [vmem:[%s271 + $0xd40] sm:$0xff]
        %v741 = vld [vmem:[%s271 + $0xd48] sm:$0xff]
        %v742 = vld [vmem:[%s271 + $0xd50] sm:$0xff]
        %v743 = vld [vmem:[%s271 + $0xd58] sm:$0xff]
        %v744 = vld [vmem:[%s271 + $0xd60] sm:$0xff]
        %v745 = vld [vmem:[%s271 + $0xd68] sm:$0xff]
        %v746 = vld [vmem:[%s271 + $0xd70] sm:$0xff]
        %v747 = vld [vmem:[%s271 + $0xd78] sm:$0xff]
        %v748 = vld [vmem:[%s271 + $0xd80] sm:$0xff]
        %v749 = vld [vmem:[%s271 + $0xd88] sm:$0xff]
        %v750 = vld [vmem:[%s271 + $0xd90] sm:$0xff]
        %v751 = vld [vmem:[%s271 + $0xd98] sm:$0xff]
        %v752 = vld [vmem:[%s271 + $0xda0] sm:$0xff]
        %v753 = vld [vmem:[%s271 + $0xda8] sm:$0xff]
        %v754 = vld [vmem:[%s271 + $0xdb0] sm:$0xff]
        %v755 = vld [vmem:[%s271 + $0xdb8] sm:$0xff]
        %v756 = vld [vmem:[%s271 + $0xdc0] sm:$0xff]
        %v757 = vld [vmem:[%s271 + $0xdc8] sm:$0xff]
        %v758 = vld [vmem:[%s271 + $0xdd0] sm:$0xff]
        %v759 = vld [vmem:[%s271 + $0xdd8] sm:$0xff]
        %v760 = vld [vmem:[%s271 + $0xde0] sm:$0xff]
        %v761 = vld [vmem:[%s271 + $0xde8] sm:$0xff]
        %v762 = vld [vmem:[%s271 + $0xdf0] sm:$0xff]
        %v763 = vld [vmem:[%s271 + $0xdf8] sm:$0xff]
        %v764 = vld [vmem:[%s271 + $0xe00] sm:$0xff]
        %v765 = vld [vmem:[%s271 + $0xe08] sm:$0xff]
        %v766 = vld [vmem:[%s271 + $0xe10] sm:$0xff]
        %v767 = vld [vmem:[%s271 + $0xe18] sm:$0xff]
        %v768 = vld [vmem:[%s271 + $0xe20] sm:$0xff]
        %v769 = vld [vmem:[%s271 + $0xe28] sm:$0xff]
        %v770 = vld [vmem:[%s271 + $0xe30] sm:$0xff]
        %v771 = vld [vmem:[%s271 + $0xe38] sm:$0xff]
        %v772 = vld [vmem:[%s271 + $0xe40] sm:$0xff]
        %v773 = vld [vmem:[%s271 + $0xe48] sm:$0xff]
        %v774 = vld [vmem:[%s271 + $0xe50] sm:$0xff]
        %v775 = vld [vmem:[%s271 + $0xe58] sm:$0xff]
        %v776 = vld [vmem:[%s271 + $0xe60] sm:$0xff]
        %v777 = vld [vmem:[%s271 + $0xe68] sm:$0xff]
        %v778 = vld [vmem:[%s271 + $0xe70] sm:$0xff]
        %v779 = vld [vmem:[%s271 + $0xe78] sm:$0xff]
        %v780 = vld [vmem:[%s271 + $0xe80] sm:$0xff]
        %v781 = vld [vmem:[%s271 + $0xe88] sm:$0xff]
        %v782 = vld [vmem:[%s271 + $0xe90] sm:$0xff]
        %v783 = vld [vmem:[%s271 + $0xe98] sm:$0xff]
        %v784 = vld [vmem:[%s271 + $0xea0] sm:$0xff]
        %v785 = vld [vmem:[%s271 + $0xea8] sm:$0xff]
        %v786 = vld [vmem:[%s271 + $0xeb0] sm:$0xff]
        %v787 = vld [vmem:[%s271 + $0xeb8] sm:$0xff]
        %v788 = vld [vmem:[%s271 + $0xec0] sm:$0xff]
        %v789 = vld [vmem:[%s271 + $0xec8] sm:$0xff]
        %v790 = vld [vmem:[%s271 + $0xed0] sm:$0xff]
        %v791 = vld [vmem:[%s271 + $0xed8] sm:$0xff]
        %v792 = vld [vmem:[%s271 + $0xee0] sm:$0xff]
        %v793 = vld [vmem:[%s271 + $0xee8] sm:$0xff]
        %v794 = vld [vmem:[%s271 + $0xef0] sm:$0xff]
        %v795 = vld [vmem:[%s271 + $0xef8] sm:$0xff]
        %v796 = vld [vmem:[%s271 + $0xf00] sm:$0xff]
        %v797 = vld [vmem:[%s271 + $0xf08] sm:$0xff]
        %v798 = vld [vmem:[%s271 + $0xf10] sm:$0xff]
        %v799 = vld [vmem:[%s271 + $0xf18] sm:$0xff]
        %v800 = vld [vmem:[%s271 + $0xf20] sm:$0xff]
        %v801 = vld [vmem:[%s271 + $0xf28] sm:$0xff]
        %v802 = vld [vmem:[%s271 + $0xf30] sm:$0xff]
        %v803 = vld [vmem:[%s271 + $0xf38] sm:$0xff]
        %v804 = vld [vmem:[%s271 + $0xf40] sm:$0xff]
        %v805 = vld [vmem:[%s271 + $0xf48] sm:$0xff]
        %v806 = vld [vmem:[%s271 + $0xf50] sm:$0xff]
        %v807 = vld [vmem:[%s271 + $0xf58] sm:$0xff]
        %v808 = vld [vmem:[%s271 + $0xf60] sm:$0xff]
        %v809 = vld [vmem:[%s271 + $0xf68] sm:$0xff]
        %v810 = vld [vmem:[%s271 + $0xf70] sm:$0xff]
        %v811 = vld [vmem:[%s271 + $0xf78] sm:$0xff]
        %v812 = vld [vmem:[%s271 + $0xf80] sm:$0xff]
        %v813 = vld [vmem:[%s271 + $0xf88] sm:$0xff]
        %v814 = vld [vmem:[%s271 + $0xf90] sm:$0xff]
        %v815 = vld [vmem:[%s271 + $0xf98] sm:$0xff]
        %v816 = vld [vmem:[%s271 + $0xfa0] sm:$0xff]
        %v817 = vld [vmem:[%s271 + $0xfa8] sm:$0xff]
        %v818 = vld [vmem:[%s271 + $0xfb0] sm:$0xff]
        %v819 = vld [vmem:[%s271 + $0xfb8] sm:$0xff]
        %v820 = vld [vmem:[%s271 + $0xfc0] sm:$0xff]
        %v821 = vld [vmem:[%s271 + $0xfc8] sm:$0xff]
        %v822 = vld [vmem:[%s271 + $0xfd0] sm:$0xff]
        %v823 = vld [vmem:[%s271 + $0xfd8] sm:$0xff]
        %v824 = vld [vmem:[%s271 + $0xfe0] sm:$0xff]
        %v825 = vld [vmem:[%s271 + $0xfe8] sm:$0xff]
        %v826 = vld [vmem:[%s271 + $0xff0] sm:$0xff]
        %v827 = vld [vmem:[%s271 + $0xff8] sm:$0xff]
        %v828 = vpack.c.bf16 %v318, %v316
        %v829 = vpack.c.bf16 %v319, %v317
        %v830 = vpack.c.bf16 %v322, %v320
        %v831 = vpack.c.bf16 %v323, %v321
        %v832 = vpack.c.bf16 %v326, %v324
        %v833 = vpack.c.bf16 %v327, %v325
        %v834 = vpack.c.bf16 %v330, %v328
        %v835 = vpack.c.bf16 %v331, %v329
        %v836 = vpack.c.bf16 %v334, %v332
        %v837 = vpack.c.bf16 %v335, %v333
        %v838 = vpack.c.bf16 %v338, %v336
        %v839 = vpack.c.bf16 %v339, %v337
        %v840 = vpack.c.bf16 %v342, %v340
        %v841 = vpack.c.bf16 %v343, %v341
        %v842 = vpack.c.bf16 %v346, %v344
        %v843 = vpack.c.bf16 %v347, %v345
        %v844 = vpack.c.bf16 %v350, %v348
        %v845 = vpack.c.bf16 %v351, %v349
        %v846 = vpack.c.bf16 %v354, %v352
        %v847 = vpack.c.bf16 %v355, %v353
        %v848 = vpack.c.bf16 %v358, %v356
        %v849 = vpack.c.bf16 %v359, %v357
        %v850 = vpack.c.bf16 %v362, %v360
        %v851 = vpack.c.bf16 %v363, %v361
        %v852 = vpack.c.bf16 %v366, %v364
        %v853 = vpack.c.bf16 %v367, %v365
        %v854 = vpack.c.bf16 %v370, %v368
        %v855 = vpack.c.bf16 %v371, %v369
        %v856 = vpack.c.bf16 %v374, %v372
        %v857 = vpack.c.bf16 %v375, %v373
        %v858 = vpack.c.bf16 %v378, %v376
        %v859 = vpack.c.bf16 %v379, %v377
        %v860 = vpack.c.bf16 %v382, %v380
        %v861 = vpack.c.bf16 %v383, %v381
        %v862 = vpack.c.bf16 %v386, %v384
        %v863 = vpack.c.bf16 %v387, %v385
        %v864 = vpack.c.bf16 %v390, %v388
        %v865 = vpack.c.bf16 %v391, %v389
        %v866 = vpack.c.bf16 %v394, %v392
        %v867 = vpack.c.bf16 %v395, %v393
        %v868 = vpack.c.bf16 %v398, %v396
        %v869 = vpack.c.bf16 %v399, %v397
        %v870 = vpack.c.bf16 %v402, %v400
        %v871 = vpack.c.bf16 %v403, %v401
        %v872 = vpack.c.bf16 %v406, %v404
        %v873 = vpack.c.bf16 %v407, %v405
        %v874 = vpack.c.bf16 %v410, %v408
        %v875 = vpack.c.bf16 %v411, %v409
        %v876 = vpack.c.bf16 %v414, %v412
        %v877 = vpack.c.bf16 %v415, %v413
        %v878 = vpack.c.bf16 %v418, %v416
        %v879 = vpack.c.bf16 %v419, %v417
        %v880 = vpack.c.bf16 %v422, %v420
        %v881 = vpack.c.bf16 %v423, %v421
        %v882 = vpack.c.bf16 %v426, %v424
        %v883 = vpack.c.bf16 %v427, %v425
        %v884 = vpack.c.bf16 %v430, %v428
        %v885 = vpack.c.bf16 %v431, %v429
        %v886 = vpack.c.bf16 %v434, %v432
        %v887 = vpack.c.bf16 %v435, %v433
        %v888 = vpack.c.bf16 %v438, %v436
        %v889 = vpack.c.bf16 %v439, %v437
        %v890 = vpack.c.bf16 %v442, %v440
        %v891 = vpack.c.bf16 %v443, %v441
        %v892 = vpack.c.bf16 %v446, %v444
        %v893 = vpack.c.bf16 %v447, %v445
        %v894 = vpack.c.bf16 %v450, %v448
        %v895 = vpack.c.bf16 %v451, %v449
        %v896 = vpack.c.bf16 %v454, %v452
        %v897 = vpack.c.bf16 %v455, %v453
        %v898 = vpack.c.bf16 %v458, %v456
        %v899 = vpack.c.bf16 %v459, %v457
        %v900 = vpack.c.bf16 %v462, %v460
        %v901 = vpack.c.bf16 %v463, %v461
        %v902 = vpack.c.bf16 %v466, %v464
        %v903 = vpack.c.bf16 %v467, %v465
        %v904 = vpack.c.bf16 %v470, %v468
        %v905 = vpack.c.bf16 %v471, %v469
        %v906 = vpack.c.bf16 %v474, %v472
        %v907 = vpack.c.bf16 %v475, %v473
        %v908 = vpack.c.bf16 %v478, %v476
        %v909 = vpack.c.bf16 %v479, %v477
        %v910 = vpack.c.bf16 %v482, %v480
        %v911 = vpack.c.bf16 %v483, %v481
        %v912 = vpack.c.bf16 %v486, %v484
        %v913 = vpack.c.bf16 %v487, %v485
        %v914 = vpack.c.bf16 %v490, %v488
        %v915 = vpack.c.bf16 %v491, %v489
        %v916 = vpack.c.bf16 %v494, %v492
        %v917 = vpack.c.bf16 %v495, %v493
        %v918 = vpack.c.bf16 %v498, %v496
        %v919 = vpack.c.bf16 %v499, %v497
        %v920 = vpack.c.bf16 %v502, %v500
        %v921 = vpack.c.bf16 %v503, %v501
        %v922 = vpack.c.bf16 %v506, %v504
        %v923 = vpack.c.bf16 %v507, %v505
        %v924 = vpack.c.bf16 %v510, %v508
        %v925 = vpack.c.bf16 %v511, %v509
        %v926 = vpack.c.bf16 %v514, %v512
        %v927 = vpack.c.bf16 %v515, %v513
        %v928 = vpack.c.bf16 %v518, %v516
        %v929 = vpack.c.bf16 %v519, %v517
        %v930 = vpack.c.bf16 %v522, %v520
        %v931 = vpack.c.bf16 %v523, %v521
        %v932 = vpack.c.bf16 %v526, %v524
        %v933 = vpack.c.bf16 %v527, %v525
        %v934 = vpack.c.bf16 %v530, %v528
        %v935 = vpack.c.bf16 %v531, %v529
        %v936 = vpack.c.bf16 %v534, %v532
        %v937 = vpack.c.bf16 %v535, %v533
        %v938 = vpack.c.bf16 %v538, %v536
        %v939 = vpack.c.bf16 %v539, %v537
        %v940 = vpack.c.bf16 %v542, %v540
        %v941 = vpack.c.bf16 %v543, %v541
        %v942 = vpack.c.bf16 %v546, %v544
        %v943 = vpack.c.bf16 %v547, %v545
        %v944 = vpack.c.bf16 %v550, %v548
        %v945 = vpack.c.bf16 %v551, %v549
        %v946 = vpack.c.bf16 %v554, %v552
        %v947 = vpack.c.bf16 %v555, %v553
        %v948 = vpack.c.bf16 %v558, %v556
        %v949 = vpack.c.bf16 %v559, %v557
        %v950 = vpack.c.bf16 %v562, %v560
        %v951 = vpack.c.bf16 %v563, %v561
        %v952 = vpack.c.bf16 %v566, %v564
        %v953 = vpack.c.bf16 %v567, %v565
        %v954 = vpack.c.bf16 %v570, %v568
        %v955 = vpack.c.bf16 %v571, %v569
        %v956 = vpack.c.bf16 %v574, %v572
        %v957 = vpack.c.bf16 %v575, %v573
        %v958 = vpack.c.bf16 %v578, %v576
        %v959 = vpack.c.bf16 %v579, %v577
        %v960 = vpack.c.bf16 %v582, %v580
        %v961 = vpack.c.bf16 %v583, %v581
        %v962 = vpack.c.bf16 %v586, %v584
        %v963 = vpack.c.bf16 %v587, %v585
        %v964 = vpack.c.bf16 %v590, %v588
        %v965 = vpack.c.bf16 %v591, %v589
        %v966 = vpack.c.bf16 %v594, %v592
        %v967 = vpack.c.bf16 %v595, %v593
        %v968 = vpack.c.bf16 %v598, %v596
        %v969 = vpack.c.bf16 %v599, %v597
        %v970 = vpack.c.bf16 %v602, %v600
        %v971 = vpack.c.bf16 %v603, %v601
        %v972 = vpack.c.bf16 %v606, %v604
        %v973 = vpack.c.bf16 %v607, %v605
        %v974 = vpack.c.bf16 %v610, %v608
        %v975 = vpack.c.bf16 %v611, %v609
        %v976 = vpack.c.bf16 %v614, %v612
        %v977 = vpack.c.bf16 %v615, %v613
        %v978 = vpack.c.bf16 %v618, %v616
        %v979 = vpack.c.bf16 %v619, %v617
        %v980 = vpack.c.bf16 %v622, %v620
        %v981 = vpack.c.bf16 %v623, %v621
        %v982 = vpack.c.bf16 %v626, %v624
        %v983 = vpack.c.bf16 %v627, %v625
        %v984 = vpack.c.bf16 %v630, %v628
        %v985 = vpack.c.bf16 %v631, %v629
        %v986 = vpack.c.bf16 %v634, %v632
        %v987 = vpack.c.bf16 %v635, %v633
        %v988 = vpack.c.bf16 %v638, %v636
        %v989 = vpack.c.bf16 %v639, %v637
        %v990 = vpack.c.bf16 %v642, %v640
        %v991 = vpack.c.bf16 %v643, %v641
        %v992 = vpack.c.bf16 %v646, %v644
        %v993 = vpack.c.bf16 %v647, %v645
        %v994 = vpack.c.bf16 %v650, %v648
        %v995 = vpack.c.bf16 %v651, %v649
        %v996 = vpack.c.bf16 %v654, %v652
        %v997 = vpack.c.bf16 %v655, %v653
        %v998 = vpack.c.bf16 %v658, %v656
        %v999 = vpack.c.bf16 %v659, %v657
        %v1000 = vpack.c.bf16 %v662, %v660
        %v1001 = vpack.c.bf16 %v663, %v661
        %v1002 = vpack.c.bf16 %v666, %v664
        %v1003 = vpack.c.bf16 %v667, %v665
        %v1004 = vpack.c.bf16 %v670, %v668
        %v1005 = vpack.c.bf16 %v671, %v669
        %v1006 = vpack.c.bf16 %v674, %v672
        %v1007 = vpack.c.bf16 %v675, %v673
        %v1008 = vpack.c.bf16 %v678, %v676
        %v1009 = vpack.c.bf16 %v679, %v677
        %v1010 = vpack.c.bf16 %v682, %v680
        %v1011 = vpack.c.bf16 %v683, %v681
        %v1012 = vpack.c.bf16 %v686, %v684
        %v1013 = vpack.c.bf16 %v687, %v685
        %v1014 = vpack.c.bf16 %v690, %v688
        %v1015 = vpack.c.bf16 %v691, %v689
        %v1016 = vpack.c.bf16 %v694, %v692
        %v1017 = vpack.c.bf16 %v695, %v693
        %v1018 = vpack.c.bf16 %v698, %v696
        %v1019 = vpack.c.bf16 %v699, %v697
        %v1020 = vpack.c.bf16 %v702, %v700
        %v1021 = vpack.c.bf16 %v703, %v701
        %v1022 = vpack.c.bf16 %v706, %v704
        %v1023 = vpack.c.bf16 %v707, %v705
        %v1024 = vpack.c.bf16 %v710, %v708
        %v1025 = vpack.c.bf16 %v711, %v709
        %v1026 = vpack.c.bf16 %v714, %v712
        %v1027 = vpack.c.bf16 %v715, %v713
        %v1028 = vpack.c.bf16 %v718, %v716
        %v1029 = vpack.c.bf16 %v719, %v717
        %v1030 = vpack.c.bf16 %v722, %v720
        %v1031 = vpack.c.bf16 %v723, %v721
        %v1032 = vpack.c.bf16 %v726, %v724
        %v1033 = vpack.c.bf16 %v727, %v725
        %v1034 = vpack.c.bf16 %v730, %v728
        %v1035 = vpack.c.bf16 %v731, %v729
        %v1036 = vpack.c.bf16 %v734, %v732
        %v1037 = vpack.c.bf16 %v735, %v733
        %v1038 = vpack.c.bf16 %v738, %v736
        %v1039 = vpack.c.bf16 %v739, %v737
        %v1040 = vpack.c.bf16 %v742, %v740
        %v1041 = vpack.c.bf16 %v743, %v741
        %v1042 = vpack.c.bf16 %v746, %v744
        %v1043 = vpack.c.bf16 %v747, %v745
        %v1044 = vpack.c.bf16 %v750, %v748
        %v1045 = vpack.c.bf16 %v751, %v749
        %v1046 = vpack.c.bf16 %v754, %v752
        %v1047 = vpack.c.bf16 %v755, %v753
        %v1048 = vpack.c.bf16 %v758, %v756
        %v1049 = vpack.c.bf16 %v759, %v757
        %v1050 = vpack.c.bf16 %v762, %v760
        %v1051 = vpack.c.bf16 %v763, %v761
        %v1052 = vpack.c.bf16 %v766, %v764
        %v1053 = vpack.c.bf16 %v767, %v765
        %v1054 = vpack.c.bf16 %v770, %v768
        %v1055 = vpack.c.bf16 %v771, %v769
        %v1056 = vpack.c.bf16 %v774, %v772
        %v1057 = vpack.c.bf16 %v775, %v773
        %v1058 = vpack.c.bf16 %v778, %v776
        %v1059 = vpack.c.bf16 %v779, %v777
        %v1060 = vpack.c.bf16 %v782, %v780
        %v1061 = vpack.c.bf16 %v783, %v781
        %v1062 = vpack.c.bf16 %v786, %v784
        %v1063 = vpack.c.bf16 %v787, %v785
        %v1064 = vpack.c.bf16 %v790, %v788
        %v1065 = vpack.c.bf16 %v791, %v789
        %v1066 = vpack.c.bf16 %v794, %v792
        %v1067 = vpack.c.bf16 %v795, %v793
        %v1068 = vpack.c.bf16 %v798, %v796
        %v1069 = vpack.c.bf16 %v799, %v797
        %v1070 = vpack.c.bf16 %v802, %v800
        %v1071 = vpack.c.bf16 %v803, %v801
        %v1072 = vpack.c.bf16 %v806, %v804
        %v1073 = vpack.c.bf16 %v807, %v805
        %v1074 = vpack.c.bf16 %v810, %v808
        %v1075 = vpack.c.bf16 %v811, %v809
        %v1076 = vpack.c.bf16 %v814, %v812
        %v1077 = vpack.c.bf16 %v815, %v813
        %v1078 = vpack.c.bf16 %v818, %v816
        %v1079 = vpack.c.bf16 %v819, %v817
        %v1080 = vpack.c.bf16 %v822, %v820
        %v1081 = vpack.c.bf16 %v823, %v821
        %v1082 = vpack.c.bf16 %v826, %v824
        %v1083 = vpack.c.bf16 %v827, %v825
        %v1084 = vld [vmem:[#allocation5] sm:$0xff]
        %v1085 = vld [vmem:[#allocation5 + $0x8] sm:$0xff]
        %v1086 = vld [vmem:[#allocation5 + $0x10] sm:$0xff]
        %v1087 = vld [vmem:[#allocation5 + $0x18] sm:$0xff]
        %v1088 = vld [vmem:[#allocation5 + $0x20] sm:$0xff]
        %v1089 = vld [vmem:[#allocation5 + $0x28] sm:$0xff]
        %v1090 = vld [vmem:[#allocation5 + $0x30] sm:$0xff]
        %v1091 = vld [vmem:[#allocation5 + $0x38] sm:$0xff]
        %v1092 = vld [vmem:[#allocation5 + $0x40] sm:$0xff]
        %v1093 = vld [vmem:[#allocation5 + $0x48] sm:$0xff]
        %v1094 = vld [vmem:[#allocation5 + $0x50] sm:$0xff]
        %v1095 = vld [vmem:[#allocation5 + $0x58] sm:$0xff]
        %v1096 = vld [vmem:[#allocation5 + $0x60] sm:$0xff]
        %v1097 = vld [vmem:[#allocation5 + $0x68] sm:$0xff]
        %v1098 = vld [vmem:[#allocation5 + $0x70] sm:$0xff]
        %v1099 = vld [vmem:[#allocation5 + $0x78] sm:$0xff]
        %v1100 = vld [vmem:[#allocation5 + $0x80] sm:$0xff]
        %v1101 = vld [vmem:[#allocation5 + $0x88] sm:$0xff]
        %v1102 = vld [vmem:[#allocation5 + $0x90] sm:$0xff]
        %v1103 = vld [vmem:[#allocation5 + $0x98] sm:$0xff]
        %v1104 = vld [vmem:[#allocation5 + $0xa0] sm:$0xff]
        %v1105 = vld [vmem:[#allocation5 + $0xa8] sm:$0xff]
        %v1106 = vld [vmem:[#allocation5 + $0xb0] sm:$0xff]
        %v1107 = vld [vmem:[#allocation5 + $0xb8] sm:$0xff]
        %v1108 = vld [vmem:[#allocation5 + $0xc0] sm:$0xff]
        %v1109 = vld [vmem:[#allocation5 + $0xc8] sm:$0xff]
        %v1110 = vld [vmem:[#allocation5 + $0xd0] sm:$0xff]
        %v1111 = vld [vmem:[#allocation5 + $0xd8] sm:$0xff]
        %v1112 = vld [vmem:[#allocation5 + $0xe0] sm:$0xff]
        %v1113 = vld [vmem:[#allocation5 + $0xe8] sm:$0xff]
        %v1114 = vld [vmem:[#allocation5 + $0xf0] sm:$0xff]
        %v1115 = vld [vmem:[#allocation5 + $0xf8] sm:$0xff]
        %v1116 = vld [vmem:[#allocation5 + $0x100] sm:$0xff]
        %v1117 = vld [vmem:[#allocation5 + $0x108] sm:$0xff]
        %v1118 = vld [vmem:[#allocation5 + $0x110] sm:$0xff]
        %v1119 = vld [vmem:[#allocation5 + $0x118] sm:$0xff]
        %v1120 = vld [vmem:[#allocation5 + $0x120] sm:$0xff]
        %v1121 = vld [vmem:[#allocation5 + $0x128] sm:$0xff]
        %v1122 = vld [vmem:[#allocation5 + $0x130] sm:$0xff]
        %v1123 = vld [vmem:[#allocation5 + $0x138] sm:$0xff]
        %v1124 = vld [vmem:[#allocation5 + $0x140] sm:$0xff]
        %v1125 = vld [vmem:[#allocation5 + $0x148] sm:$0xff]
        %v1126 = vld [vmem:[#allocation5 + $0x150] sm:$0xff]
        %v1127 = vld [vmem:[#allocation5 + $0x158] sm:$0xff]
        %v1128 = vld [vmem:[#allocation5 + $0x160] sm:$0xff]
        %v1129 = vld [vmem:[#allocation5 + $0x168] sm:$0xff]
        %v1130 = vld [vmem:[#allocation5 + $0x170] sm:$0xff]
        %v1131 = vld [vmem:[#allocation5 + $0x178] sm:$0xff]
        %v1132 = vld [vmem:[#allocation5 + $0x180] sm:$0xff]
        %v1133 = vld [vmem:[#allocation5 + $0x188] sm:$0xff]
        %v1134 = vld [vmem:[#allocation5 + $0x190] sm:$0xff]
        %v1135 = vld [vmem:[#allocation5 + $0x198] sm:$0xff]
        %v1136 = vld [vmem:[#allocation5 + $0x1a0] sm:$0xff]
        %v1137 = vld [vmem:[#allocation5 + $0x1a8] sm:$0xff]
        %v1138 = vld [vmem:[#allocation5 + $0x1b0] sm:$0xff]
        %v1139 = vld [vmem:[#allocation5 + $0x1b8] sm:$0xff]
        %v1140 = vld [vmem:[#allocation5 + $0x1c0] sm:$0xff]
        %v1141 = vld [vmem:[#allocation5 + $0x1c8] sm:$0xff]
        %v1142 = vld [vmem:[#allocation5 + $0x1d0] sm:$0xff]
        %v1143 = vld [vmem:[#allocation5 + $0x1d8] sm:$0xff]
        %v1144 = vld [vmem:[#allocation5 + $0x1e0] sm:$0xff]
        %v1145 = vld [vmem:[#allocation5 + $0x1e8] sm:$0xff]
        %v1146 = vld [vmem:[#allocation5 + $0x1f0] sm:$0xff]
        %v1147 = vld [vmem:[#allocation5 + $0x1f8] sm:$0xff]
        %v1148 = vld [vmem:[#allocation5 + $0x200] sm:$0xff]
        %v1149 = vld [vmem:[#allocation5 + $0x208] sm:$0xff]
        %v1150 = vld [vmem:[#allocation5 + $0x210] sm:$0xff]
        %v1151 = vld [vmem:[#allocation5 + $0x218] sm:$0xff]
        %v1152 = vld [vmem:[#allocation5 + $0x220] sm:$0xff]
        %v1153 = vld [vmem:[#allocation5 + $0x228] sm:$0xff]
        %v1154 = vld [vmem:[#allocation5 + $0x230] sm:$0xff]
        %v1155 = vld [vmem:[#allocation5 + $0x238] sm:$0xff]
        %v1156 = vld [vmem:[#allocation5 + $0x240] sm:$0xff]
        %v1157 = vld [vmem:[#allocation5 + $0x248] sm:$0xff]
        %v1158 = vld [vmem:[#allocation5 + $0x250] sm:$0xff]
        %v1159 = vld [vmem:[#allocation5 + $0x258] sm:$0xff]
        %v1160 = vld [vmem:[#allocation5 + $0x260] sm:$0xff]
        %v1161 = vld [vmem:[#allocation5 + $0x268] sm:$0xff]
        %v1162 = vld [vmem:[#allocation5 + $0x270] sm:$0xff]
        %v1163 = vld [vmem:[#allocation5 + $0x278] sm:$0xff]
        %v1164 = vld [vmem:[#allocation5 + $0x280] sm:$0xff]
        %v1165 = vld [vmem:[#allocation5 + $0x288] sm:$0xff]
        %v1166 = vld [vmem:[#allocation5 + $0x290] sm:$0xff]
        %v1167 = vld [vmem:[#allocation5 + $0x298] sm:$0xff]
        %v1168 = vld [vmem:[#allocation5 + $0x2a0] sm:$0xff]
        %v1169 = vld [vmem:[#allocation5 + $0x2a8] sm:$0xff]
        %v1170 = vld [vmem:[#allocation5 + $0x2b0] sm:$0xff]
        %v1171 = vld [vmem:[#allocation5 + $0x2b8] sm:$0xff]
        %v1172 = vld [vmem:[#allocation5 + $0x2c0] sm:$0xff]
        %v1173 = vld [vmem:[#allocation5 + $0x2c8] sm:$0xff]
        %v1174 = vld [vmem:[#allocation5 + $0x2d0] sm:$0xff]
        %v1175 = vld [vmem:[#allocation5 + $0x2d8] sm:$0xff]
        %v1176 = vld [vmem:[#allocation5 + $0x2e0] sm:$0xff]
        %v1177 = vld [vmem:[#allocation5 + $0x2e8] sm:$0xff]
        %v1178 = vld [vmem:[#allocation5 + $0x2f0] sm:$0xff]
        %v1179 = vld [vmem:[#allocation5 + $0x2f8] sm:$0xff]
        %v1180 = vld [vmem:[#allocation5 + $0x300] sm:$0xff]
        %v1181 = vld [vmem:[#allocation5 + $0x308] sm:$0xff]
        %v1182 = vld [vmem:[#allocation5 + $0x310] sm:$0xff]
        %v1183 = vld [vmem:[#allocation5 + $0x318] sm:$0xff]
        %v1184 = vld [vmem:[#allocation5 + $0x320] sm:$0xff]
        %v1185 = vld [vmem:[#allocation5 + $0x328] sm:$0xff]
        %v1186 = vld [vmem:[#allocation5 + $0x330] sm:$0xff]
        %v1187 = vld [vmem:[#allocation5 + $0x338] sm:$0xff]
        %v1188 = vld [vmem:[#allocation5 + $0x340] sm:$0xff]
        %v1189 = vld [vmem:[#allocation5 + $0x348] sm:$0xff]
        %v1190 = vld [vmem:[#allocation5 + $0x350] sm:$0xff]
        %v1191 = vld [vmem:[#allocation5 + $0x358] sm:$0xff]
        %v1192 = vld [vmem:[#allocation5 + $0x360] sm:$0xff]
        %v1193 = vld [vmem:[#allocation5 + $0x368] sm:$0xff]
        %v1194 = vld [vmem:[#allocation5 + $0x370] sm:$0xff]
        %v1195 = vld [vmem:[#allocation5 + $0x378] sm:$0xff]
        %v1196 = vld [vmem:[#allocation5 + $0x380] sm:$0xff]
        %v1197 = vld [vmem:[#allocation5 + $0x388] sm:$0xff]
        %v1198 = vld [vmem:[#allocation5 + $0x390] sm:$0xff]
        %v1199 = vld [vmem:[#allocation5 + $0x398] sm:$0xff]
        %v1200 = vld [vmem:[#allocation5 + $0x3a0] sm:$0xff]
        %v1201 = vld [vmem:[#allocation5 + $0x3a8] sm:$0xff]
        %v1202 = vld [vmem:[#allocation5 + $0x3b0] sm:$0xff]
        %v1203 = vld [vmem:[#allocation5 + $0x3b8] sm:$0xff]
        %v1204 = vld [vmem:[#allocation5 + $0x3c0] sm:$0xff]
        %v1205 = vld [vmem:[#allocation5 + $0x3c8] sm:$0xff]
        %v1206 = vld [vmem:[#allocation5 + $0x3d0] sm:$0xff]
        %v1207 = vld [vmem:[#allocation5 + $0x3d8] sm:$0xff]
        %v1208 = vld [vmem:[#allocation5 + $0x3e0] sm:$0xff]
        %v1209 = vld [vmem:[#allocation5 + $0x3e8] sm:$0xff]
        %v1210 = vld [vmem:[#allocation5 + $0x3f0] sm:$0xff]
        %v1211 = vld [vmem:[#allocation5 + $0x3f8] sm:$0xff]
        %v1212 = vld [vmem:[#allocation5 + $0x400] sm:$0xff]
        %v1213 = vld [vmem:[#allocation5 + $0x408] sm:$0xff]
        %v1214 = vld [vmem:[#allocation5 + $0x410] sm:$0xff]
        %v1215 = vld [vmem:[#allocation5 + $0x418] sm:$0xff]
        %v1216 = vld [vmem:[#allocation5 + $0x420] sm:$0xff]
        %v1217 = vld [vmem:[#allocation5 + $0x428] sm:$0xff]
        %v1218 = vld [vmem:[#allocation5 + $0x430] sm:$0xff]
        %v1219 = vld [vmem:[#allocation5 + $0x438] sm:$0xff]
        %v1220 = vld [vmem:[#allocation5 + $0x440] sm:$0xff]
        %v1221 = vld [vmem:[#allocation5 + $0x448] sm:$0xff]
        %v1222 = vld [vmem:[#allocation5 + $0x450] sm:$0xff]
        %v1223 = vld [vmem:[#allocation5 + $0x458] sm:$0xff]
        %v1224 = vld [vmem:[#allocation5 + $0x460] sm:$0xff]
        %v1225 = vld [vmem:[#allocation5 + $0x468] sm:$0xff]
        %v1226 = vld [vmem:[#allocation5 + $0x470] sm:$0xff]
        %v1227 = vld [vmem:[#allocation5 + $0x478] sm:$0xff]
        %v1228 = vld [vmem:[#allocation5 + $0x480] sm:$0xff]
        %v1229 = vld [vmem:[#allocation5 + $0x488] sm:$0xff]
        %v1230 = vld [vmem:[#allocation5 + $0x490] sm:$0xff]
        %v1231 = vld [vmem:[#allocation5 + $0x498] sm:$0xff]
        %v1232 = vld [vmem:[#allocation5 + $0x4a0] sm:$0xff]
        %v1233 = vld [vmem:[#allocation5 + $0x4a8] sm:$0xff]
        %v1234 = vld [vmem:[#allocation5 + $0x4b0] sm:$0xff]
        %v1235 = vld [vmem:[#allocation5 + $0x4b8] sm:$0xff]
        %v1236 = vld [vmem:[#allocation5 + $0x4c0] sm:$0xff]
        %v1237 = vld [vmem:[#allocation5 + $0x4c8] sm:$0xff]
        %v1238 = vld [vmem:[#allocation5 + $0x4d0] sm:$0xff]
        %v1239 = vld [vmem:[#allocation5 + $0x4d8] sm:$0xff]
        %v1240 = vld [vmem:[#allocation5 + $0x4e0] sm:$0xff]
        %v1241 = vld [vmem:[#allocation5 + $0x4e8] sm:$0xff]
        %v1242 = vld [vmem:[#allocation5 + $0x4f0] sm:$0xff]
        %v1243 = vld [vmem:[#allocation5 + $0x4f8] sm:$0xff]
        %v1244 = vld [vmem:[#allocation5 + $0x500] sm:$0xff]
        %v1245 = vld [vmem:[#allocation5 + $0x508] sm:$0xff]
        %v1246 = vld [vmem:[#allocation5 + $0x510] sm:$0xff]
        %v1247 = vld [vmem:[#allocation5 + $0x518] sm:$0xff]
        %v1248 = vld [vmem:[#allocation5 + $0x520] sm:$0xff]
        %v1249 = vld [vmem:[#allocation5 + $0x528] sm:$0xff]
        %v1250 = vld [vmem:[#allocation5 + $0x530] sm:$0xff]
        %v1251 = vld [vmem:[#allocation5 + $0x538] sm:$0xff]
        %v1252 = vld [vmem:[#allocation5 + $0x540] sm:$0xff]
        %v1253 = vld [vmem:[#allocation5 + $0x548] sm:$0xff]
        %v1254 = vld [vmem:[#allocation5 + $0x550] sm:$0xff]
        %v1255 = vld [vmem:[#allocation5 + $0x558] sm:$0xff]
        %v1256 = vld [vmem:[#allocation5 + $0x560] sm:$0xff]
        %v1257 = vld [vmem:[#allocation5 + $0x568] sm:$0xff]
        %v1258 = vld [vmem:[#allocation5 + $0x570] sm:$0xff]
        %v1259 = vld [vmem:[#allocation5 + $0x578] sm:$0xff]
        %v1260 = vld [vmem:[#allocation5 + $0x580] sm:$0xff]
        %v1261 = vld [vmem:[#allocation5 + $0x588] sm:$0xff]
        %v1262 = vld [vmem:[#allocation5 + $0x590] sm:$0xff]
        %v1263 = vld [vmem:[#allocation5 + $0x598] sm:$0xff]
        %v1264 = vld [vmem:[#allocation5 + $0x5a0] sm:$0xff]
        %v1265 = vld [vmem:[#allocation5 + $0x5a8] sm:$0xff]
        %v1266 = vld [vmem:[#allocation5 + $0x5b0] sm:$0xff]
        %v1267 = vld [vmem:[#allocation5 + $0x5b8] sm:$0xff]
        %v1268 = vld [vmem:[#allocation5 + $0x5c0] sm:$0xff]
        %v1269 = vld [vmem:[#allocation5 + $0x5c8] sm:$0xff]
        %v1270 = vld [vmem:[#allocation5 + $0x5d0] sm:$0xff]
        %v1271 = vld [vmem:[#allocation5 + $0x5d8] sm:$0xff]
        %v1272 = vld [vmem:[#allocation5 + $0x5e0] sm:$0xff]
        %v1273 = vld [vmem:[#allocation5 + $0x5e8] sm:$0xff]
        %v1274 = vld [vmem:[#allocation5 + $0x5f0] sm:$0xff]
        %v1275 = vld [vmem:[#allocation5 + $0x5f8] sm:$0xff]
        %v1276 = vld [vmem:[#allocation5 + $0x600] sm:$0xff]
        %v1277 = vld [vmem:[#allocation5 + $0x608] sm:$0xff]
        %v1278 = vld [vmem:[#allocation5 + $0x610] sm:$0xff]
        %v1279 = vld [vmem:[#allocation5 + $0x618] sm:$0xff]
        %v1280 = vld [vmem:[#allocation5 + $0x620] sm:$0xff]
        %v1281 = vld [vmem:[#allocation5 + $0x628] sm:$0xff]
        %v1282 = vld [vmem:[#allocation5 + $0x630] sm:$0xff]
        %v1283 = vld [vmem:[#allocation5 + $0x638] sm:$0xff]
        %v1284 = vld [vmem:[#allocation5 + $0x640] sm:$0xff]
        %v1285 = vld [vmem:[#allocation5 + $0x648] sm:$0xff]
        %v1286 = vld [vmem:[#allocation5 + $0x650] sm:$0xff]
        %v1287 = vld [vmem:[#allocation5 + $0x658] sm:$0xff]
        %v1288 = vld [vmem:[#allocation5 + $0x660] sm:$0xff]
        %v1289 = vld [vmem:[#allocation5 + $0x668] sm:$0xff]
        %v1290 = vld [vmem:[#allocation5 + $0x670] sm:$0xff]
        %v1291 = vld [vmem:[#allocation5 + $0x678] sm:$0xff]
        %v1292 = vld [vmem:[#allocation5 + $0x680] sm:$0xff]
        %v1293 = vld [vmem:[#allocation5 + $0x688] sm:$0xff]
        %v1294 = vld [vmem:[#allocation5 + $0x690] sm:$0xff]
        %v1295 = vld [vmem:[#allocation5 + $0x698] sm:$0xff]
        %v1296 = vld [vmem:[#allocation5 + $0x6a0] sm:$0xff]
        %v1297 = vld [vmem:[#allocation5 + $0x6a8] sm:$0xff]
        %v1298 = vld [vmem:[#allocation5 + $0x6b0] sm:$0xff]
        %v1299 = vld [vmem:[#allocation5 + $0x6b8] sm:$0xff]
        %v1300 = vld [vmem:[#allocation5 + $0x6c0] sm:$0xff]
        %v1301 = vld [vmem:[#allocation5 + $0x6c8] sm:$0xff]
        %v1302 = vld [vmem:[#allocation5 + $0x6d0] sm:$0xff]
        %v1303 = vld [vmem:[#allocation5 + $0x6d8] sm:$0xff]
        %v1304 = vld [vmem:[#allocation5 + $0x6e0] sm:$0xff]
        %v1305 = vld [vmem:[#allocation5 + $0x6e8] sm:$0xff]
        %v1306 = vld [vmem:[#allocation5 + $0x6f0] sm:$0xff]
        %v1307 = vld [vmem:[#allocation5 + $0x6f8] sm:$0xff]
        %v1308 = vld [vmem:[#allocation5 + $0x700] sm:$0xff]
        %v1309 = vld [vmem:[#allocation5 + $0x708] sm:$0xff]
        %v1310 = vld [vmem:[#allocation5 + $0x710] sm:$0xff]
        %v1311 = vld [vmem:[#allocation5 + $0x718] sm:$0xff]
        %v1312 = vld [vmem:[#allocation5 + $0x720] sm:$0xff]
        %v1313 = vld [vmem:[#allocation5 + $0x728] sm:$0xff]
        %v1314 = vld [vmem:[#allocation5 + $0x730] sm:$0xff]
        %v1315 = vld [vmem:[#allocation5 + $0x738] sm:$0xff]
        %v1316 = vld [vmem:[#allocation5 + $0x740] sm:$0xff]
        %v1317 = vld [vmem:[#allocation5 + $0x748] sm:$0xff]
        %v1318 = vld [vmem:[#allocation5 + $0x750] sm:$0xff]
        %v1319 = vld [vmem:[#allocation5 + $0x758] sm:$0xff]
        %v1320 = vld [vmem:[#allocation5 + $0x760] sm:$0xff]
        %v1321 = vld [vmem:[#allocation5 + $0x768] sm:$0xff]
        %v1322 = vld [vmem:[#allocation5 + $0x770] sm:$0xff]
        %v1323 = vld [vmem:[#allocation5 + $0x778] sm:$0xff]
        %v1324 = vld [vmem:[#allocation5 + $0x780] sm:$0xff]
        %v1325 = vld [vmem:[#allocation5 + $0x788] sm:$0xff]
        %v1326 = vld [vmem:[#allocation5 + $0x790] sm:$0xff]
        %v1327 = vld [vmem:[#allocation5 + $0x798] sm:$0xff]
        %v1328 = vld [vmem:[#allocation5 + $0x7a0] sm:$0xff]
        %v1329 = vld [vmem:[#allocation5 + $0x7a8] sm:$0xff]
        %v1330 = vld [vmem:[#allocation5 + $0x7b0] sm:$0xff]
        %v1331 = vld [vmem:[#allocation5 + $0x7b8] sm:$0xff]
        %v1332 = vld [vmem:[#allocation5 + $0x7c0] sm:$0xff]
        %v1333 = vld [vmem:[#allocation5 + $0x7c8] sm:$0xff]
        %v1334 = vld [vmem:[#allocation5 + $0x7d0] sm:$0xff]
        %v1335 = vld [vmem:[#allocation5 + $0x7d8] sm:$0xff]
        %v1336 = vld [vmem:[#allocation5 + $0x7e0] sm:$0xff]
        %v1337 = vld [vmem:[#allocation5 + $0x7e8] sm:$0xff]
        %v1338 = vld [vmem:[#allocation5 + $0x7f0] sm:$0xff]
        %v1339 = vld [vmem:[#allocation5 + $0x7f8] sm:$0xff]
        %v1340 = vld [vmem:[#allocation5 + $0x800] sm:$0xff]
        %v1341 = vld [vmem:[#allocation5 + $0x808] sm:$0xff]
        %v1342 = vld [vmem:[#allocation5 + $0x810] sm:$0xff]
        %v1343 = vld [vmem:[#allocation5 + $0x818] sm:$0xff]
        %v1344 = vld [vmem:[#allocation5 + $0x820] sm:$0xff]
        %v1345 = vld [vmem:[#allocation5 + $0x828] sm:$0xff]
        %v1346 = vld [vmem:[#allocation5 + $0x830] sm:$0xff]
        %v1347 = vld [vmem:[#allocation5 + $0x838] sm:$0xff]
        %v1348 = vld [vmem:[#allocation5 + $0x840] sm:$0xff]
        %v1349 = vld [vmem:[#allocation5 + $0x848] sm:$0xff]
        %v1350 = vld [vmem:[#allocation5 + $0x850] sm:$0xff]
        %v1351 = vld [vmem:[#allocation5 + $0x858] sm:$0xff]
        %v1352 = vld [vmem:[#allocation5 + $0x860] sm:$0xff]
        %v1353 = vld [vmem:[#allocation5 + $0x868] sm:$0xff]
        %v1354 = vld [vmem:[#allocation5 + $0x870] sm:$0xff]
        %v1355 = vld [vmem:[#allocation5 + $0x878] sm:$0xff]
        %v1356 = vld [vmem:[#allocation5 + $0x880] sm:$0xff]
        %v1357 = vld [vmem:[#allocation5 + $0x888] sm:$0xff]
        %v1358 = vld [vmem:[#allocation5 + $0x890] sm:$0xff]
        %v1359 = vld [vmem:[#allocation5 + $0x898] sm:$0xff]
        %v1360 = vld [vmem:[#allocation5 + $0x8a0] sm:$0xff]
        %v1361 = vld [vmem:[#allocation5 + $0x8a8] sm:$0xff]
        %v1362 = vld [vmem:[#allocation5 + $0x8b0] sm:$0xff]
        %v1363 = vld [vmem:[#allocation5 + $0x8b8] sm:$0xff]
        %v1364 = vld [vmem:[#allocation5 + $0x8c0] sm:$0xff]
        %v1365 = vld [vmem:[#allocation5 + $0x8c8] sm:$0xff]
        %v1366 = vld [vmem:[#allocation5 + $0x8d0] sm:$0xff]
        %v1367 = vld [vmem:[#allocation5 + $0x8d8] sm:$0xff]
        %v1368 = vld [vmem:[#allocation5 + $0x8e0] sm:$0xff]
        %v1369 = vld [vmem:[#allocation5 + $0x8e8] sm:$0xff]
        %v1370 = vld [vmem:[#allocation5 + $0x8f0] sm:$0xff]
        %v1371 = vld [vmem:[#allocation5 + $0x8f8] sm:$0xff]
        %v1372 = vld [vmem:[#allocation5 + $0x900] sm:$0xff]
        %v1373 = vld [vmem:[#allocation5 + $0x908] sm:$0xff]
        %v1374 = vld [vmem:[#allocation5 + $0x910] sm:$0xff]
        %v1375 = vld [vmem:[#allocation5 + $0x918] sm:$0xff]
        %v1376 = vld [vmem:[#allocation5 + $0x920] sm:$0xff]
        %v1377 = vld [vmem:[#allocation5 + $0x928] sm:$0xff]
        %v1378 = vld [vmem:[#allocation5 + $0x930] sm:$0xff]
        %v1379 = vld [vmem:[#allocation5 + $0x938] sm:$0xff]
        %v1380 = vld [vmem:[#allocation5 + $0x940] sm:$0xff]
        %v1381 = vld [vmem:[#allocation5 + $0x948] sm:$0xff]
        %v1382 = vld [vmem:[#allocation5 + $0x950] sm:$0xff]
        %v1383 = vld [vmem:[#allocation5 + $0x958] sm:$0xff]
        %v1384 = vld [vmem:[#allocation5 + $0x960] sm:$0xff]
        %v1385 = vld [vmem:[#allocation5 + $0x968] sm:$0xff]
        %v1386 = vld [vmem:[#allocation5 + $0x970] sm:$0xff]
        %v1387 = vld [vmem:[#allocation5 + $0x978] sm:$0xff]
        %v1388 = vld [vmem:[#allocation5 + $0x980] sm:$0xff]
        %v1389 = vld [vmem:[#allocation5 + $0x988] sm:$0xff]
        %v1390 = vld [vmem:[#allocation5 + $0x990] sm:$0xff]
        %v1391 = vld [vmem:[#allocation5 + $0x998] sm:$0xff]
        %v1392 = vld [vmem:[#allocation5 + $0x9a0] sm:$0xff]
        %v1393 = vld [vmem:[#allocation5 + $0x9a8] sm:$0xff]
        %v1394 = vld [vmem:[#allocation5 + $0x9b0] sm:$0xff]
        %v1395 = vld [vmem:[#allocation5 + $0x9b8] sm:$0xff]
        %v1396 = vld [vmem:[#allocation5 + $0x9c0] sm:$0xff]
        %v1397 = vld [vmem:[#allocation5 + $0x9c8] sm:$0xff]
        %v1398 = vld [vmem:[#allocation5 + $0x9d0] sm:$0xff]
        %v1399 = vld [vmem:[#allocation5 + $0x9d8] sm:$0xff]
        %v1400 = vld [vmem:[#allocation5 + $0x9e0] sm:$0xff]
        %v1401 = vld [vmem:[#allocation5 + $0x9e8] sm:$0xff]
        %v1402 = vld [vmem:[#allocation5 + $0x9f0] sm:$0xff]
        %v1403 = vld [vmem:[#allocation5 + $0x9f8] sm:$0xff]
        %v1404 = vld [vmem:[#allocation5 + $0xa00] sm:$0xff]
        %v1405 = vld [vmem:[#allocation5 + $0xa08] sm:$0xff]
        %v1406 = vld [vmem:[#allocation5 + $0xa10] sm:$0xff]
        %v1407 = vld [vmem:[#allocation5 + $0xa18] sm:$0xff]
        %v1408 = vld [vmem:[#allocation5 + $0xa20] sm:$0xff]
        %v1409 = vld [vmem:[#allocation5 + $0xa28] sm:$0xff]
        %v1410 = vld [vmem:[#allocation5 + $0xa30] sm:$0xff]
        %v1411 = vld [vmem:[#allocation5 + $0xa38] sm:$0xff]
        %v1412 = vld [vmem:[#allocation5 + $0xa40] sm:$0xff]
        %v1413 = vld [vmem:[#allocation5 + $0xa48] sm:$0xff]
        %v1414 = vld [vmem:[#allocation5 + $0xa50] sm:$0xff]
        %v1415 = vld [vmem:[#allocation5 + $0xa58] sm:$0xff]
        %v1416 = vld [vmem:[#allocation5 + $0xa60] sm:$0xff]
        %v1417 = vld [vmem:[#allocation5 + $0xa68] sm:$0xff]
        %v1418 = vld [vmem:[#allocation5 + $0xa70] sm:$0xff]
        %v1419 = vld [vmem:[#allocation5 + $0xa78] sm:$0xff]
        %v1420 = vld [vmem:[#allocation5 + $0xa80] sm:$0xff]
        %v1421 = vld [vmem:[#allocation5 + $0xa88] sm:$0xff]
        %v1422 = vld [vmem:[#allocation5 + $0xa90] sm:$0xff]
        %v1423 = vld [vmem:[#allocation5 + $0xa98] sm:$0xff]
        %v1424 = vld [vmem:[#allocation5 + $0xaa0] sm:$0xff]
        %v1425 = vld [vmem:[#allocation5 + $0xaa8] sm:$0xff]
        %v1426 = vld [vmem:[#allocation5 + $0xab0] sm:$0xff]
        %v1427 = vld [vmem:[#allocation5 + $0xab8] sm:$0xff]
        %v1428 = vld [vmem:[#allocation5 + $0xac0] sm:$0xff]
        %v1429 = vld [vmem:[#allocation5 + $0xac8] sm:$0xff]
        %v1430 = vld [vmem:[#allocation5 + $0xad0] sm:$0xff]
        %v1431 = vld [vmem:[#allocation5 + $0xad8] sm:$0xff]
        %v1432 = vld [vmem:[#allocation5 + $0xae0] sm:$0xff]
        %v1433 = vld [vmem:[#allocation5 + $0xae8] sm:$0xff]
        %v1434 = vld [vmem:[#allocation5 + $0xaf0] sm:$0xff]
        %v1435 = vld [vmem:[#allocation5 + $0xaf8] sm:$0xff]
        %v1436 = vld [vmem:[#allocation5 + $0xb00] sm:$0xff]
        %v1437 = vld [vmem:[#allocation5 + $0xb08] sm:$0xff]
        %v1438 = vld [vmem:[#allocation5 + $0xb10] sm:$0xff]
        %v1439 = vld [vmem:[#allocation5 + $0xb18] sm:$0xff]
        %v1440 = vld [vmem:[#allocation5 + $0xb20] sm:$0xff]
        %v1441 = vld [vmem:[#allocation5 + $0xb28] sm:$0xff]
        %v1442 = vld [vmem:[#allocation5 + $0xb30] sm:$0xff]
        %v1443 = vld [vmem:[#allocation5 + $0xb38] sm:$0xff]
        %v1444 = vld [vmem:[#allocation5 + $0xb40] sm:$0xff]
        %v1445 = vld [vmem:[#allocation5 + $0xb48] sm:$0xff]
        %v1446 = vld [vmem:[#allocation5 + $0xb50] sm:$0xff]
        %v1447 = vld [vmem:[#allocation5 + $0xb58] sm:$0xff]
        %v1448 = vld [vmem:[#allocation5 + $0xb60] sm:$0xff]
        %v1449 = vld [vmem:[#allocation5 + $0xb68] sm:$0xff]
        %v1450 = vld [vmem:[#allocation5 + $0xb70] sm:$0xff]
        %v1451 = vld [vmem:[#allocation5 + $0xb78] sm:$0xff]
        %v1452 = vld [vmem:[#allocation5 + $0xb80] sm:$0xff]
        %v1453 = vld [vmem:[#allocation5 + $0xb88] sm:$0xff]
        %v1454 = vld [vmem:[#allocation5 + $0xb90] sm:$0xff]
        %v1455 = vld [vmem:[#allocation5 + $0xb98] sm:$0xff]
        %v1456 = vld [vmem:[#allocation5 + $0xba0] sm:$0xff]
        %v1457 = vld [vmem:[#allocation5 + $0xba8] sm:$0xff]
        %v1458 = vld [vmem:[#allocation5 + $0xbb0] sm:$0xff]
        %v1459 = vld [vmem:[#allocation5 + $0xbb8] sm:$0xff]
        %v1460 = vld [vmem:[#allocation5 + $0xbc0] sm:$0xff]
        %v1461 = vld [vmem:[#allocation5 + $0xbc8] sm:$0xff]
        %v1462 = vld [vmem:[#allocation5 + $0xbd0] sm:$0xff]
        %v1463 = vld [vmem:[#allocation5 + $0xbd8] sm:$0xff]
        %v1464 = vld [vmem:[#allocation5 + $0xbe0] sm:$0xff]
        %v1465 = vld [vmem:[#allocation5 + $0xbe8] sm:$0xff]
        %v1466 = vld [vmem:[#allocation5 + $0xbf0] sm:$0xff]
        %v1467 = vld [vmem:[#allocation5 + $0xbf8] sm:$0xff]
        %v1468 = vld [vmem:[#allocation5 + $0xc00] sm:$0xff]
        %v1469 = vld [vmem:[#allocation5 + $0xc08] sm:$0xff]
        %v1470 = vld [vmem:[#allocation5 + $0xc10] sm:$0xff]
        %v1471 = vld [vmem:[#allocation5 + $0xc18] sm:$0xff]
        %v1472 = vld [vmem:[#allocation5 + $0xc20] sm:$0xff]
        %v1473 = vld [vmem:[#allocation5 + $0xc28] sm:$0xff]
        %v1474 = vld [vmem:[#allocation5 + $0xc30] sm:$0xff]
        %v1475 = vld [vmem:[#allocation5 + $0xc38] sm:$0xff]
        %v1868 = vunpack.c.l.b16 %v1084
        %v1869 = vunpack.c.h.b16 %v1084
        %v1870 = vunpack.c.l.b16 %v1085
        %v1871 = vunpack.c.h.b16 %v1085
        %v1872 = vunpack.c.l.b16 %v1086
        %v1873 = vunpack.c.h.b16 %v1086
        %v1874 = vunpack.c.l.b16 %v1087
        %v1875 = vunpack.c.h.b16 %v1087
        %v1876 = vunpack.c.l.b16 %v1088
        %v1877 = vunpack.c.h.b16 %v1088
        %v1878 = vunpack.c.l.b16 %v1089
        %v1879 = vunpack.c.h.b16 %v1089
        %v1880 = vunpack.c.l.b16 %v1090
        %v1881 = vunpack.c.h.b16 %v1090
        %v1882 = vunpack.c.l.b16 %v1091
        %v1883 = vunpack.c.h.b16 %v1091
        %v1884 = vunpack.c.l.b16 %v1092
        %v1885 = vunpack.c.h.b16 %v1092
        %v1886 = vunpack.c.l.b16 %v1093
        %v1887 = vunpack.c.h.b16 %v1093
        %v1888 = vunpack.c.l.b16 %v1094
        %v1889 = vunpack.c.h.b16 %v1094
        %v1890 = vunpack.c.l.b16 %v1095
        %v1891 = vunpack.c.h.b16 %v1095
        %v1892 = vunpack.c.l.b16 %v1096
        %v1893 = vunpack.c.h.b16 %v1096
        %v1894 = vunpack.c.l.b16 %v1097
        %v1895 = vunpack.c.h.b16 %v1097
        %v1896 = vunpack.c.l.b16 %v1098
        %v1897 = vunpack.c.h.b16 %v1098
        %v1898 = vunpack.c.l.b16 %v1099
        %v1899 = vunpack.c.h.b16 %v1099
        %v1900 = vunpack.c.l.b16 %v1100
        %v1901 = vunpack.c.h.b16 %v1100
        %v1902 = vunpack.c.l.b16 %v1101
        %v1903 = vunpack.c.h.b16 %v1101
        %v1904 = vunpack.c.l.b16 %v1102
        %v1905 = vunpack.c.h.b16 %v1102
        %v1906 = vunpack.c.l.b16 %v1103
        %v1907 = vunpack.c.h.b16 %v1103
        %v1908 = vunpack.c.l.b16 %v1104
        %v1909 = vunpack.c.h.b16 %v1104
        %v1910 = vunpack.c.l.b16 %v1105
        %v1911 = vunpack.c.h.b16 %v1105
        %v1912 = vunpack.c.l.b16 %v1106
        %v1913 = vunpack.c.h.b16 %v1106
        %v1914 = vunpack.c.l.b16 %v1107
        %v1915 = vunpack.c.h.b16 %v1107
        %v1916 = vunpack.c.l.b16 %v1108
        %v1917 = vunpack.c.h.b16 %v1108
        %v1918 = vunpack.c.l.b16 %v1109
        %v1919 = vunpack.c.h.b16 %v1109
        %v1920 = vunpack.c.l.b16 %v1110
        %v1921 = vunpack.c.h.b16 %v1110
        %v1922 = vunpack.c.l.b16 %v1111
        %v1923 = vunpack.c.h.b16 %v1111
        %v1924 = vunpack.c.l.b16 %v1112
        %v1925 = vunpack.c.h.b16 %v1112
        %v1926 = vunpack.c.l.b16 %v1113
        %v1927 = vunpack.c.h.b16 %v1113
        %v1928 = vunpack.c.l.b16 %v1114
        %v1929 = vunpack.c.h.b16 %v1114
        %v1930 = vunpack.c.l.b16 %v1115
        %v1931 = vunpack.c.h.b16 %v1115
        %v1932 = vunpack.c.l.b16 %v1116
        %v1933 = vunpack.c.h.b16 %v1116
        %v1934 = vunpack.c.l.b16 %v1117
        %v1935 = vunpack.c.h.b16 %v1117
        %v1936 = vunpack.c.l.b16 %v1118
        %v1937 = vunpack.c.h.b16 %v1118
        %v1938 = vunpack.c.l.b16 %v1119
        %v1939 = vunpack.c.h.b16 %v1119
        %v1940 = vunpack.c.l.b16 %v1120
        %v1941 = vunpack.c.h.b16 %v1120
        %v1942 = vunpack.c.l.b16 %v1121
        %v1943 = vunpack.c.h.b16 %v1121
        %v1944 = vunpack.c.l.b16 %v1122
        %v1945 = vunpack.c.h.b16 %v1122
        %v1946 = vunpack.c.l.b16 %v1123
        %v1947 = vunpack.c.h.b16 %v1123
        %v1948 = vunpack.c.l.b16 %v1124
        %v1949 = vunpack.c.h.b16 %v1124
        %v1950 = vunpack.c.l.b16 %v1125
        %v1951 = vunpack.c.h.b16 %v1125
        %v1952 = vunpack.c.l.b16 %v1126
        %v1953 = vunpack.c.h.b16 %v1126
        %v1954 = vunpack.c.l.b16 %v1127
        %v1955 = vunpack.c.h.b16 %v1127
        %v1956 = vunpack.c.l.b16 %v1128
        %v1957 = vunpack.c.h.b16 %v1128
        %v1958 = vunpack.c.l.b16 %v1129
        %v1959 = vunpack.c.h.b16 %v1129
        %v1960 = vunpack.c.l.b16 %v1130
        %v1961 = vunpack.c.h.b16 %v1130
        %v1962 = vunpack.c.l.b16 %v1131
        %v1963 = vunpack.c.h.b16 %v1131
        %v1964 = vunpack.c.l.b16 %v1132
        %v1965 = vunpack.c.h.b16 %v1132
        %v1966 = vunpack.c.l.b16 %v1133
        %v1967 = vunpack.c.h.b16 %v1133
        %v1968 = vunpack.c.l.b16 %v1134
        %v1969 = vunpack.c.h.b16 %v1134
        %v1970 = vunpack.c.l.b16 %v1135
        %v1971 = vunpack.c.h.b16 %v1135
        %v1972 = vunpack.c.l.b16 %v1136
        %v1973 = vunpack.c.h.b16 %v1136
        %v1974 = vunpack.c.l.b16 %v1137
        %v1975 = vunpack.c.h.b16 %v1137
        %v1976 = vunpack.c.l.b16 %v1138
        %v1977 = vunpack.c.h.b16 %v1138
        %v1978 = vunpack.c.l.b16 %v1139
        %v1979 = vunpack.c.h.b16 %v1139
        %v1980 = vunpack.c.l.b16 %v1140
        %v1981 = vunpack.c.h.b16 %v1140
        %v1982 = vunpack.c.l.b16 %v1141
        %v1983 = vunpack.c.h.b16 %v1141
        %v1984 = vunpack.c.l.b16 %v1142
        %v1985 = vunpack.c.h.b16 %v1142
        %v1986 = vunpack.c.l.b16 %v1143
        %v1987 = vunpack.c.h.b16 %v1143
        %v1988 = vunpack.c.l.b16 %v1144
        %v1989 = vunpack.c.h.b16 %v1144
        %v1990 = vunpack.c.l.b16 %v1145
        %v1991 = vunpack.c.h.b16 %v1145
        %v1992 = vunpack.c.l.b16 %v1146
        %v1993 = vunpack.c.h.b16 %v1146
        %v1994 = vunpack.c.l.b16 %v1147
        %v1995 = vunpack.c.h.b16 %v1147
        %v1996 = vunpack.c.l.b16 %v1148
        %v1997 = vunpack.c.h.b16 %v1148
        %v1998 = vunpack.c.l.b16 %v1149
        %v1999 = vunpack.c.h.b16 %v1149
        %v2000 = vunpack.c.l.b16 %v1150
        %v2001 = vunpack.c.h.b16 %v1150
        %v2002 = vunpack.c.l.b16 %v1151
        %v2003 = vunpack.c.h.b16 %v1151
        %v2004 = vunpack.c.l.b16 %v1152
        %v2005 = vunpack.c.h.b16 %v1152
        %v2006 = vunpack.c.l.b16 %v1153
        %v2007 = vunpack.c.h.b16 %v1153
        %v2008 = vunpack.c.l.b16 %v1154
        %v2009 = vunpack.c.h.b16 %v1154
        %v2010 = vunpack.c.l.b16 %v1155
        %v2011 = vunpack.c.h.b16 %v1155
        %v2012 = vunpack.c.l.b16 %v1156
        %v2013 = vunpack.c.h.b16 %v1156
        %v2014 = vunpack.c.l.b16 %v1157
        %v2015 = vunpack.c.h.b16 %v1157
        %v2016 = vunpack.c.l.b16 %v1158
        %v2017 = vunpack.c.h.b16 %v1158
        %v2018 = vunpack.c.l.b16 %v1159
        %v2019 = vunpack.c.h.b16 %v1159
        %v2020 = vunpack.c.l.b16 %v1160
        %v2021 = vunpack.c.h.b16 %v1160
        %v2022 = vunpack.c.l.b16 %v1161
        %v2023 = vunpack.c.h.b16 %v1161
        %v2024 = vunpack.c.l.b16 %v1162
        %v2025 = vunpack.c.h.b16 %v1162
        %v2026 = vunpack.c.l.b16 %v1163
        %v2027 = vunpack.c.h.b16 %v1163
        %v2028 = vunpack.c.l.b16 %v1164
        %v2029 = vunpack.c.h.b16 %v1164
        %v2030 = vunpack.c.l.b16 %v1165
        %v2031 = vunpack.c.h.b16 %v1165
        %v2032 = vunpack.c.l.b16 %v1166
        %v2033 = vunpack.c.h.b16 %v1166
        %v2034 = vunpack.c.l.b16 %v1167
        %v2035 = vunpack.c.h.b16 %v1167
        %v2036 = vunpack.c.l.b16 %v1168
        %v2037 = vunpack.c.h.b16 %v1168
        %v2038 = vunpack.c.l.b16 %v1169
        %v2039 = vunpack.c.h.b16 %v1169
        %v2040 = vunpack.c.l.b16 %v1170
        %v2041 = vunpack.c.h.b16 %v1170
        %v2042 = vunpack.c.l.b16 %v1171
        %v2043 = vunpack.c.h.b16 %v1171
        %v2044 = vunpack.c.l.b16 %v1172
        %v2045 = vunpack.c.h.b16 %v1172
        %v2046 = vunpack.c.l.b16 %v1173
        %v2047 = vunpack.c.h.b16 %v1173
        %v2048 = vunpack.c.l.b16 %v1174
        %v2049 = vunpack.c.h.b16 %v1174
        %v2050 = vunpack.c.l.b16 %v1175
        %v2051 = vunpack.c.h.b16 %v1175
        %v2052 = vunpack.c.l.b16 %v1176
        %v2053 = vunpack.c.h.b16 %v1176
        %v2054 = vunpack.c.l.b16 %v1177
        %v2055 = vunpack.c.h.b16 %v1177
        %v2056 = vunpack.c.l.b16 %v1178
        %v2057 = vunpack.c.h.b16 %v1178
        %v2058 = vunpack.c.l.b16 %v1179
        %v2059 = vunpack.c.h.b16 %v1179
        %v2060 = vunpack.c.l.b16 %v1180
        %v2061 = vunpack.c.h.b16 %v1180
        %v2062 = vunpack.c.l.b16 %v1181
        %v2063 = vunpack.c.h.b16 %v1181
        %v2064 = vunpack.c.l.b16 %v1182
        %v2065 = vunpack.c.h.b16 %v1182
        %v2066 = vunpack.c.l.b16 %v1183
        %v2067 = vunpack.c.h.b16 %v1183
        %v2068 = vunpack.c.l.b16 %v1184
        %v2069 = vunpack.c.h.b16 %v1184
        %v2070 = vunpack.c.l.b16 %v1185
        %v2071 = vunpack.c.h.b16 %v1185
        %v2072 = vunpack.c.l.b16 %v1186
        %v2073 = vunpack.c.h.b16 %v1186
        %v2074 = vunpack.c.l.b16 %v1187
        %v2075 = vunpack.c.h.b16 %v1187
        %v2076 = vunpack.c.l.b16 %v1188
        %v2077 = vunpack.c.h.b16 %v1188
        %v2078 = vunpack.c.l.b16 %v1189
        %v2079 = vunpack.c.h.b16 %v1189
        %v2080 = vunpack.c.l.b16 %v1190
        %v2081 = vunpack.c.h.b16 %v1190
        %v2082 = vunpack.c.l.b16 %v1191
        %v2083 = vunpack.c.h.b16 %v1191
        %v2084 = vunpack.c.l.b16 %v1192
        %v2085 = vunpack.c.h.b16 %v1192
        %v2086 = vunpack.c.l.b16 %v1193
        %v2087 = vunpack.c.h.b16 %v1193
        %v2088 = vunpack.c.l.b16 %v1194
        %v2089 = vunpack.c.h.b16 %v1194
        %v2090 = vunpack.c.l.b16 %v1195
        %v2091 = vunpack.c.h.b16 %v1195
        %v2092 = vunpack.c.l.b16 %v1196
        %v2093 = vunpack.c.h.b16 %v1196
        %v2094 = vunpack.c.l.b16 %v1197
        %v2095 = vunpack.c.h.b16 %v1197
        %v2096 = vunpack.c.l.b16 %v1198
        %v2097 = vunpack.c.h.b16 %v1198
        %v2098 = vunpack.c.l.b16 %v1199
        %v2099 = vunpack.c.h.b16 %v1199
        %v2100 = vunpack.c.l.b16 %v1200
        %v2101 = vunpack.c.h.b16 %v1200
        %v2102 = vunpack.c.l.b16 %v1201
        %v2103 = vunpack.c.h.b16 %v1201
        %v2104 = vunpack.c.l.b16 %v1202
        %v2105 = vunpack.c.h.b16 %v1202
        %v2106 = vunpack.c.l.b16 %v1203
        %v2107 = vunpack.c.h.b16 %v1203
        %v2108 = vunpack.c.l.b16 %v1204
        %v2109 = vunpack.c.h.b16 %v1204
        %v2110 = vunpack.c.l.b16 %v1205
        %v2111 = vunpack.c.h.b16 %v1205
        %v2112 = vunpack.c.l.b16 %v1206
        %v2113 = vunpack.c.h.b16 %v1206
        %v2114 = vunpack.c.l.b16 %v1207
        %v2115 = vunpack.c.h.b16 %v1207
        %v2116 = vunpack.c.l.b16 %v1208
        %v2117 = vunpack.c.h.b16 %v1208
        %v2118 = vunpack.c.l.b16 %v1209
        %v2119 = vunpack.c.h.b16 %v1209
        %v2120 = vunpack.c.l.b16 %v1210
        %v2121 = vunpack.c.h.b16 %v1210
        %v2122 = vunpack.c.l.b16 %v1211
        %v2123 = vunpack.c.h.b16 %v1211
        %v2124 = vunpack.c.l.b16 %v1212
        %v2125 = vunpack.c.h.b16 %v1212
        %v2126 = vunpack.c.l.b16 %v1213
        %v2127 = vunpack.c.h.b16 %v1213
        %v2128 = vunpack.c.l.b16 %v1214
        %v2129 = vunpack.c.h.b16 %v1214
        %v2130 = vunpack.c.l.b16 %v1215
        %v2131 = vunpack.c.h.b16 %v1215
        %v2132 = vunpack.c.l.b16 %v1216
        %v2133 = vunpack.c.h.b16 %v1216
        %v2134 = vunpack.c.l.b16 %v1217
        %v2135 = vunpack.c.h.b16 %v1217
        %v2136 = vunpack.c.l.b16 %v1218
        %v2137 = vunpack.c.h.b16 %v1218
        %v2138 = vunpack.c.l.b16 %v1219
        %v2139 = vunpack.c.h.b16 %v1219
        %v2140 = vunpack.c.l.b16 %v1220
        %v2141 = vunpack.c.h.b16 %v1220
        %v2142 = vunpack.c.l.b16 %v1221
        %v2143 = vunpack.c.h.b16 %v1221
        %v2144 = vunpack.c.l.b16 %v1222
        %v2145 = vunpack.c.h.b16 %v1222
        %v2146 = vunpack.c.l.b16 %v1223
        %v2147 = vunpack.c.h.b16 %v1223
        %v2148 = vunpack.c.l.b16 %v1224
        %v2149 = vunpack.c.h.b16 %v1224
        %v2150 = vunpack.c.l.b16 %v1225
        %v2151 = vunpack.c.h.b16 %v1225
        %v2152 = vunpack.c.l.b16 %v1226
        %v2153 = vunpack.c.h.b16 %v1226
        %v2154 = vunpack.c.l.b16 %v1227
        %v2155 = vunpack.c.h.b16 %v1227
        %v2156 = vunpack.c.l.b16 %v1228
        %v2157 = vunpack.c.h.b16 %v1228
        %v2158 = vunpack.c.l.b16 %v1229
        %v2159 = vunpack.c.h.b16 %v1229
        %v2160 = vunpack.c.l.b16 %v1230
        %v2161 = vunpack.c.h.b16 %v1230
        %v2162 = vunpack.c.l.b16 %v1231
        %v2163 = vunpack.c.h.b16 %v1231
        %v2164 = vunpack.c.l.b16 %v1232
        %v2165 = vunpack.c.h.b16 %v1232
        %v2166 = vunpack.c.l.b16 %v1233
        %v2167 = vunpack.c.h.b16 %v1233
        %v2168 = vunpack.c.l.b16 %v1234
        %v2169 = vunpack.c.h.b16 %v1234
        %v2170 = vunpack.c.l.b16 %v1235
        %v2171 = vunpack.c.h.b16 %v1235
        %v2172 = vunpack.c.l.b16 %v1236
        %v2173 = vunpack.c.h.b16 %v1236
        %v2174 = vunpack.c.l.b16 %v1237
        %v2175 = vunpack.c.h.b16 %v1237
        %v2176 = vunpack.c.l.b16 %v1238
        %v2177 = vunpack.c.h.b16 %v1238
        %v2178 = vunpack.c.l.b16 %v1239
        %v2179 = vunpack.c.h.b16 %v1239
        %v2180 = vunpack.c.l.b16 %v1240
        %v2181 = vunpack.c.h.b16 %v1240
        %v2182 = vunpack.c.l.b16 %v1241
        %v2183 = vunpack.c.h.b16 %v1241
        %v2184 = vunpack.c.l.b16 %v1242
        %v2185 = vunpack.c.h.b16 %v1242
        %v2186 = vunpack.c.l.b16 %v1243
        %v2187 = vunpack.c.h.b16 %v1243
        %v2188 = vunpack.c.l.b16 %v1244
        %v2189 = vunpack.c.h.b16 %v1244
        %v2190 = vunpack.c.l.b16 %v1245
        %v2191 = vunpack.c.h.b16 %v1245
        %v2192 = vunpack.c.l.b16 %v1246
        %v2193 = vunpack.c.h.b16 %v1246
        %v2194 = vunpack.c.l.b16 %v1247
        %v2195 = vunpack.c.h.b16 %v1247
        %v2196 = vunpack.c.l.b16 %v1248
        %v2197 = vunpack.c.h.b16 %v1248
        %v2198 = vunpack.c.l.b16 %v1249
        %v2199 = vunpack.c.h.b16 %v1249
        %v2200 = vunpack.c.l.b16 %v1250
        %v2201 = vunpack.c.h.b16 %v1250
        %v2202 = vunpack.c.l.b16 %v1251
        %v2203 = vunpack.c.h.b16 %v1251
        %v2204 = vunpack.c.l.b16 %v1252
        %v2205 = vunpack.c.h.b16 %v1252
        %v2206 = vunpack.c.l.b16 %v1253
        %v2207 = vunpack.c.h.b16 %v1253
        %v2208 = vunpack.c.l.b16 %v1254
        %v2209 = vunpack.c.h.b16 %v1254
        %v2210 = vunpack.c.l.b16 %v1255
        %v2211 = vunpack.c.h.b16 %v1255
        %v2212 = vunpack.c.l.b16 %v1256
        %v2213 = vunpack.c.h.b16 %v1256
        %v2214 = vunpack.c.l.b16 %v1257
        %v2215 = vunpack.c.h.b16 %v1257
        %v2216 = vunpack.c.l.b16 %v1258
        %v2217 = vunpack.c.h.b16 %v1258
        %v2218 = vunpack.c.l.b16 %v1259
        %v2219 = vunpack.c.h.b16 %v1259
        %v2220 = vunpack.c.l.b16 %v1260
        %v2221 = vunpack.c.h.b16 %v1260
        %v2222 = vunpack.c.l.b16 %v1261
        %v2223 = vunpack.c.h.b16 %v1261
        %v2224 = vunpack.c.l.b16 %v1262
        %v2225 = vunpack.c.h.b16 %v1262
        %v2226 = vunpack.c.l.b16 %v1263
        %v2227 = vunpack.c.h.b16 %v1263
        %v2228 = vunpack.c.l.b16 %v1264
        %v2229 = vunpack.c.h.b16 %v1264
        %v2230 = vunpack.c.l.b16 %v1265
        %v2231 = vunpack.c.h.b16 %v1265
        %v2232 = vunpack.c.l.b16 %v1266
        %v2233 = vunpack.c.h.b16 %v1266
        %v2234 = vunpack.c.l.b16 %v1267
        %v2235 = vunpack.c.h.b16 %v1267
        %v2236 = vunpack.c.l.b16 %v1268
        %v2237 = vunpack.c.h.b16 %v1268
        %v2238 = vunpack.c.l.b16 %v1269
        %v2239 = vunpack.c.h.b16 %v1269
        %v2240 = vunpack.c.l.b16 %v1270
        %v2241 = vunpack.c.h.b16 %v1270
        %v2242 = vunpack.c.l.b16 %v1271
        %v2243 = vunpack.c.h.b16 %v1271
        %v2244 = vunpack.c.l.b16 %v1272
        %v2245 = vunpack.c.h.b16 %v1272
        %v2246 = vunpack.c.l.b16 %v1273
        %v2247 = vunpack.c.h.b16 %v1273
        %v2248 = vunpack.c.l.b16 %v1274
        %v2249 = vunpack.c.h.b16 %v1274
        %v2250 = vunpack.c.l.b16 %v1275
        %v2251 = vunpack.c.h.b16 %v1275
        %v2252 = vunpack.c.l.b16 %v1276
        %v2253 = vunpack.c.h.b16 %v1276
        %v2254 = vunpack.c.l.b16 %v1277
        %v2255 = vunpack.c.h.b16 %v1277
        %v2256 = vunpack.c.l.b16 %v1278
        %v2257 = vunpack.c.h.b16 %v1278
        %v2258 = vunpack.c.l.b16 %v1279
        %v2259 = vunpack.c.h.b16 %v1279
        %v2260 = vunpack.c.l.b16 %v1280
        %v2261 = vunpack.c.h.b16 %v1280
        %v2262 = vunpack.c.l.b16 %v1281
        %v2263 = vunpack.c.h.b16 %v1281
        %v2264 = vunpack.c.l.b16 %v1282
        %v2265 = vunpack.c.h.b16 %v1282
        %v2266 = vunpack.c.l.b16 %v1283
        %v2267 = vunpack.c.h.b16 %v1283
        %v2268 = vunpack.c.l.b16 %v1284
        %v2269 = vunpack.c.h.b16 %v1284
        %v2270 = vunpack.c.l.b16 %v1285
        %v2271 = vunpack.c.h.b16 %v1285
        %v2272 = vunpack.c.l.b16 %v1286
        %v2273 = vunpack.c.h.b16 %v1286
        %v2274 = vunpack.c.l.b16 %v1287
        %v2275 = vunpack.c.h.b16 %v1287
        %v2276 = vunpack.c.l.b16 %v1288
        %v2277 = vunpack.c.h.b16 %v1288
        %v2278 = vunpack.c.l.b16 %v1289
        %v2279 = vunpack.c.h.b16 %v1289
        %v2280 = vunpack.c.l.b16 %v1290
        %v2281 = vunpack.c.h.b16 %v1290
        %v2282 = vunpack.c.l.b16 %v1291
        %v2283 = vunpack.c.h.b16 %v1291
        %v2284 = vunpack.c.l.b16 %v1292
        %v2285 = vunpack.c.h.b16 %v1292
        %v2286 = vunpack.c.l.b16 %v1293
        %v2287 = vunpack.c.h.b16 %v1293
        %v2288 = vunpack.c.l.b16 %v1294
        %v2289 = vunpack.c.h.b16 %v1294
        %v2290 = vunpack.c.l.b16 %v1295
        %v2291 = vunpack.c.h.b16 %v1295
        %v2292 = vunpack.c.l.b16 %v1296
        %v2293 = vunpack.c.h.b16 %v1296
        %v2294 = vunpack.c.l.b16 %v1297
        %v2295 = vunpack.c.h.b16 %v1297
        %v2296 = vunpack.c.l.b16 %v1298
        %v2297 = vunpack.c.h.b16 %v1298
        %v2298 = vunpack.c.l.b16 %v1299
        %v2299 = vunpack.c.h.b16 %v1299
        %v2300 = vunpack.c.l.b16 %v1300
        %v2301 = vunpack.c.h.b16 %v1300
        %v2302 = vunpack.c.l.b16 %v1301
        %v2303 = vunpack.c.h.b16 %v1301
        %v2304 = vunpack.c.l.b16 %v1302
        %v2305 = vunpack.c.h.b16 %v1302
        %v2306 = vunpack.c.l.b16 %v1303
        %v2307 = vunpack.c.h.b16 %v1303
        %v2308 = vunpack.c.l.b16 %v1304
        %v2309 = vunpack.c.h.b16 %v1304
        %v2310 = vunpack.c.l.b16 %v1305
        %v2311 = vunpack.c.h.b16 %v1305
        %v2312 = vunpack.c.l.b16 %v1306
        %v2313 = vunpack.c.h.b16 %v1306
        %v2314 = vunpack.c.l.b16 %v1307
        %v2315 = vunpack.c.h.b16 %v1307
        %v2316 = vunpack.c.l.b16 %v1308
        %v2317 = vunpack.c.h.b16 %v1308
        %v2318 = vunpack.c.l.b16 %v1309
        %v2319 = vunpack.c.h.b16 %v1309
        %v2320 = vunpack.c.l.b16 %v1310
        %v2321 = vunpack.c.h.b16 %v1310
        %v2322 = vunpack.c.l.b16 %v1311
        %v2323 = vunpack.c.h.b16 %v1311
        %v2324 = vunpack.c.l.b16 %v1312
        %v2325 = vunpack.c.h.b16 %v1312
        %v2326 = vunpack.c.l.b16 %v1313
        %v2327 = vunpack.c.h.b16 %v1313
        %v2328 = vunpack.c.l.b16 %v1314
        %v2329 = vunpack.c.h.b16 %v1314
        %v2330 = vunpack.c.l.b16 %v1315
        %v2331 = vunpack.c.h.b16 %v1315
        %v2332 = vunpack.c.l.b16 %v1316
        %v2333 = vunpack.c.h.b16 %v1316
        %v2334 = vunpack.c.l.b16 %v1317
        %v2335 = vunpack.c.h.b16 %v1317
        %v2336 = vunpack.c.l.b16 %v1318
        %v2337 = vunpack.c.h.b16 %v1318
        %v2338 = vunpack.c.l.b16 %v1319
        %v2339 = vunpack.c.h.b16 %v1319
        %v2340 = vunpack.c.l.b16 %v1320
        %v2341 = vunpack.c.h.b16 %v1320
        %v2342 = vunpack.c.l.b16 %v1321
        %v2343 = vunpack.c.h.b16 %v1321
        %v2344 = vunpack.c.l.b16 %v1322
        %v2345 = vunpack.c.h.b16 %v1322
        %v2346 = vunpack.c.l.b16 %v1323
        %v2347 = vunpack.c.h.b16 %v1323
        %v2348 = vunpack.c.l.b16 %v1324
        %v2349 = vunpack.c.h.b16 %v1324
        %v2350 = vunpack.c.l.b16 %v1325
        %v2351 = vunpack.c.h.b16 %v1325
        %v2352 = vunpack.c.l.b16 %v1326
        %v2353 = vunpack.c.h.b16 %v1326
        %v2354 = vunpack.c.l.b16 %v1327
        %v2355 = vunpack.c.h.b16 %v1327
        %v2356 = vunpack.c.l.b16 %v1328
        %v2357 = vunpack.c.h.b16 %v1328
        %v2358 = vunpack.c.l.b16 %v1329
        %v2359 = vunpack.c.h.b16 %v1329
        %v2360 = vunpack.c.l.b16 %v1330
        %v2361 = vunpack.c.h.b16 %v1330
        %v2362 = vunpack.c.l.b16 %v1331
        %v2363 = vunpack.c.h.b16 %v1331
        %v2364 = vunpack.c.l.b16 %v1332
        %v2365 = vunpack.c.h.b16 %v1332
        %v2366 = vunpack.c.l.b16 %v1333
        %v2367 = vunpack.c.h.b16 %v1333
        %v2368 = vunpack.c.l.b16 %v1334
        %v2369 = vunpack.c.h.b16 %v1334
        %v2370 = vunpack.c.l.b16 %v1335
        %v2371 = vunpack.c.h.b16 %v1335
        %v2372 = vunpack.c.l.b16 %v1336
        %v2373 = vunpack.c.h.b16 %v1336
        %v2374 = vunpack.c.l.b16 %v1337
        %v2375 = vunpack.c.h.b16 %v1337
        %v2376 = vunpack.c.l.b16 %v1338
        %v2377 = vunpack.c.h.b16 %v1338
        %v2378 = vunpack.c.l.b16 %v1339
        %v2379 = vunpack.c.h.b16 %v1339
        %v2380 = vunpack.c.l.b16 %v1340
        %v2381 = vunpack.c.h.b16 %v1340
        %v2382 = vunpack.c.l.b16 %v1341
        %v2383 = vunpack.c.h.b16 %v1341
        %v2384 = vunpack.c.l.b16 %v1342
        %v2385 = vunpack.c.h.b16 %v1342
        %v2386 = vunpack.c.l.b16 %v1343
        %v2387 = vunpack.c.h.b16 %v1343
        %v2388 = vunpack.c.l.b16 %v1344
        %v2389 = vunpack.c.h.b16 %v1344
        %v2390 = vunpack.c.l.b16 %v1345
        %v2391 = vunpack.c.h.b16 %v1345
        %v2392 = vunpack.c.l.b16 %v1346
        %v2393 = vunpack.c.h.b16 %v1346
        %v2394 = vunpack.c.l.b16 %v1347
        %v2395 = vunpack.c.h.b16 %v1347
        %v2396 = vunpack.c.l.b16 %v1348
        %v2397 = vunpack.c.h.b16 %v1348
        %v2398 = vunpack.c.l.b16 %v1349
        %v2399 = vunpack.c.h.b16 %v1349
        %v2400 = vunpack.c.l.b16 %v1350
        %v2401 = vunpack.c.h.b16 %v1350
        %v2402 = vunpack.c.l.b16 %v1351
        %v2403 = vunpack.c.h.b16 %v1351
        %v2404 = vunpack.c.l.b16 %v1352
        %v2405 = vunpack.c.h.b16 %v1352
        %v2406 = vunpack.c.l.b16 %v1353
        %v2407 = vunpack.c.h.b16 %v1353
        %v2408 = vunpack.c.l.b16 %v1354
        %v2409 = vunpack.c.h.b16 %v1354
        %v2410 = vunpack.c.l.b16 %v1355
        %v2411 = vunpack.c.h.b16 %v1355
        %v2412 = vunpack.c.l.b16 %v1356
        %v2413 = vunpack.c.h.b16 %v1356
        %v2414 = vunpack.c.l.b16 %v1357
        %v2415 = vunpack.c.h.b16 %v1357
        %v2416 = vunpack.c.l.b16 %v1358
        %v2417 = vunpack.c.h.b16 %v1358
        %v2418 = vunpack.c.l.b16 %v1359
        %v2419 = vunpack.c.h.b16 %v1359
        %v2420 = vunpack.c.l.b16 %v1360
        %v2421 = vunpack.c.h.b16 %v1360
        %v2422 = vunpack.c.l.b16 %v1361
        %v2423 = vunpack.c.h.b16 %v1361
        %v2424 = vunpack.c.l.b16 %v1362
        %v2425 = vunpack.c.h.b16 %v1362
        %v2426 = vunpack.c.l.b16 %v1363
        %v2427 = vunpack.c.h.b16 %v1363
        %v2428 = vunpack.c.l.b16 %v1364
        %v2429 = vunpack.c.h.b16 %v1364
        %v2430 = vunpack.c.l.b16 %v1365
        %v2431 = vunpack.c.h.b16 %v1365
        %v2432 = vunpack.c.l.b16 %v1366
        %v2433 = vunpack.c.h.b16 %v1366
        %v2434 = vunpack.c.l.b16 %v1367
        %v2435 = vunpack.c.h.b16 %v1367
        %v2436 = vunpack.c.l.b16 %v1368
        %v2437 = vunpack.c.h.b16 %v1368
        %v2438 = vunpack.c.l.b16 %v1369
        %v2439 = vunpack.c.h.b16 %v1369
        %v2440 = vunpack.c.l.b16 %v1370
        %v2441 = vunpack.c.h.b16 %v1370
        %v2442 = vunpack.c.l.b16 %v1371
        %v2443 = vunpack.c.h.b16 %v1371
        %v2444 = vunpack.c.l.b16 %v1372
        %v2445 = vunpack.c.h.b16 %v1372
        %v2446 = vunpack.c.l.b16 %v1373
        %v2447 = vunpack.c.h.b16 %v1373
        %v2448 = vunpack.c.l.b16 %v1374
        %v2449 = vunpack.c.h.b16 %v1374
        %v2450 = vunpack.c.l.b16 %v1375
        %v2451 = vunpack.c.h.b16 %v1375
        %v2452 = vunpack.c.l.b16 %v1376
        %v2453 = vunpack.c.h.b16 %v1376
        %v2454 = vunpack.c.l.b16 %v1377
        %v2455 = vunpack.c.h.b16 %v1377
        %v2456 = vunpack.c.l.b16 %v1378
        %v2457 = vunpack.c.h.b16 %v1378
        %v2458 = vunpack.c.l.b16 %v1379
        %v2459 = vunpack.c.h.b16 %v1379
        %v2460 = vunpack.c.l.b16 %v1380
        %v2461 = vunpack.c.h.b16 %v1380
        %v2462 = vunpack.c.l.b16 %v1381
        %v2463 = vunpack.c.h.b16 %v1381
        %v2464 = vunpack.c.l.b16 %v1382
        %v2465 = vunpack.c.h.b16 %v1382
        %v2466 = vunpack.c.l.b16 %v1383
        %v2467 = vunpack.c.h.b16 %v1383
        %v2468 = vunpack.c.l.b16 %v1384
        %v2469 = vunpack.c.h.b16 %v1384
        %v2470 = vunpack.c.l.b16 %v1385
        %v2471 = vunpack.c.h.b16 %v1385
        %v2472 = vunpack.c.l.b16 %v1386
        %v2473 = vunpack.c.h.b16 %v1386
        %v2474 = vunpack.c.l.b16 %v1387
        %v2475 = vunpack.c.h.b16 %v1387
        %v2476 = vunpack.c.l.b16 %v1388
        %v2477 = vunpack.c.h.b16 %v1388
        %v2478 = vunpack.c.l.b16 %v1389
        %v2479 = vunpack.c.h.b16 %v1389
        %v2480 = vunpack.c.l.b16 %v1390
        %v2481 = vunpack.c.h.b16 %v1390
        %v2482 = vunpack.c.l.b16 %v1391
        %v2483 = vunpack.c.h.b16 %v1391
        %v2484 = vunpack.c.l.b16 %v1392
        %v2485 = vunpack.c.h.b16 %v1392
        %v2486 = vunpack.c.l.b16 %v1393
        %v2487 = vunpack.c.h.b16 %v1393
        %v2488 = vunpack.c.l.b16 %v1394
        %v2489 = vunpack.c.h.b16 %v1394
        %v2490 = vunpack.c.l.b16 %v1395
        %v2491 = vunpack.c.h.b16 %v1395
        %v2492 = vunpack.c.l.b16 %v1396
        %v2493 = vunpack.c.h.b16 %v1396
        %v2494 = vunpack.c.l.b16 %v1397
        %v2495 = vunpack.c.h.b16 %v1397
        %v2496 = vunpack.c.l.b16 %v1398
        %v2497 = vunpack.c.h.b16 %v1398
        %v2498 = vunpack.c.l.b16 %v1399
        %v2499 = vunpack.c.h.b16 %v1399
        %v2500 = vunpack.c.l.b16 %v1400
        %v2501 = vunpack.c.h.b16 %v1400
        %v2502 = vunpack.c.l.b16 %v1401
        %v2503 = vunpack.c.h.b16 %v1401
        %v2504 = vunpack.c.l.b16 %v1402
        %v2505 = vunpack.c.h.b16 %v1402
        %v2506 = vunpack.c.l.b16 %v1403
        %v2507 = vunpack.c.h.b16 %v1403
        %v2508 = vunpack.c.l.b16 %v1404
        %v2509 = vunpack.c.h.b16 %v1404
        %v2510 = vunpack.c.l.b16 %v1405
        %v2511 = vunpack.c.h.b16 %v1405
        %v2512 = vunpack.c.l.b16 %v1406
        %v2513 = vunpack.c.h.b16 %v1406
        %v2514 = vunpack.c.l.b16 %v1407
        %v2515 = vunpack.c.h.b16 %v1407
        %v2516 = vunpack.c.l.b16 %v1408
        %v2517 = vunpack.c.h.b16 %v1408
        %v2518 = vunpack.c.l.b16 %v1409
        %v2519 = vunpack.c.h.b16 %v1409
        %v2520 = vunpack.c.l.b16 %v1410
        %v2521 = vunpack.c.h.b16 %v1410
        %v2522 = vunpack.c.l.b16 %v1411
        %v2523 = vunpack.c.h.b16 %v1411
        %v2524 = vunpack.c.l.b16 %v1412
        %v2525 = vunpack.c.h.b16 %v1412
        %v2526 = vunpack.c.l.b16 %v1413
        %v2527 = vunpack.c.h.b16 %v1413
        %v2528 = vunpack.c.l.b16 %v1414
        %v2529 = vunpack.c.h.b16 %v1414
        %v2530 = vunpack.c.l.b16 %v1415
        %v2531 = vunpack.c.h.b16 %v1415
        %v2532 = vunpack.c.l.b16 %v1416
        %v2533 = vunpack.c.h.b16 %v1416
        %v2534 = vunpack.c.l.b16 %v1417
        %v2535 = vunpack.c.h.b16 %v1417
        %v2536 = vunpack.c.l.b16 %v1418
        %v2537 = vunpack.c.h.b16 %v1418
        %v2538 = vunpack.c.l.b16 %v1419
        %v2539 = vunpack.c.h.b16 %v1419
        %v2540 = vunpack.c.l.b16 %v1420
        %v2541 = vunpack.c.h.b16 %v1420
        %v2542 = vunpack.c.l.b16 %v1421
        %v2543 = vunpack.c.h.b16 %v1421
        %v2544 = vunpack.c.l.b16 %v1422
        %v2545 = vunpack.c.h.b16 %v1422
        %v2546 = vunpack.c.l.b16 %v1423
        %v2547 = vunpack.c.h.b16 %v1423
        %v2548 = vunpack.c.l.b16 %v1424
        %v2549 = vunpack.c.h.b16 %v1424
        %v2550 = vunpack.c.l.b16 %v1425
        %v2551 = vunpack.c.h.b16 %v1425
        %v2552 = vunpack.c.l.b16 %v1426
        %v2553 = vunpack.c.h.b16 %v1426
        %v2554 = vunpack.c.l.b16 %v1427
        %v2555 = vunpack.c.h.b16 %v1427
        %v2556 = vunpack.c.l.b16 %v1428
        %v2557 = vunpack.c.h.b16 %v1428
        %v2558 = vunpack.c.l.b16 %v1429
        %v2559 = vunpack.c.h.b16 %v1429
        %v2560 = vunpack.c.l.b16 %v1430
        %v2561 = vunpack.c.h.b16 %v1430
        %v2562 = vunpack.c.l.b16 %v1431
        %v2563 = vunpack.c.h.b16 %v1431
        %v2564 = vunpack.c.l.b16 %v1432
        %v2565 = vunpack.c.h.b16 %v1432
        %v2566 = vunpack.c.l.b16 %v1433
        %v2567 = vunpack.c.h.b16 %v1433
        %v2568 = vunpack.c.l.b16 %v1434
        %v2569 = vunpack.c.h.b16 %v1434
        %v2570 = vunpack.c.l.b16 %v1435
        %v2571 = vunpack.c.h.b16 %v1435
        %v2572 = vunpack.c.l.b16 %v1436
        %v2573 = vunpack.c.h.b16 %v1436
        %v2574 = vunpack.c.l.b16 %v1437
        %v2575 = vunpack.c.h.b16 %v1437
        %v2576 = vunpack.c.l.b16 %v1438
        %v2577 = vunpack.c.h.b16 %v1438
        %v2578 = vunpack.c.l.b16 %v1439
        %v2579 = vunpack.c.h.b16 %v1439
        %v2580 = vunpack.c.l.b16 %v1440
        %v2581 = vunpack.c.h.b16 %v1440
        %v2582 = vunpack.c.l.b16 %v1441
        %v2583 = vunpack.c.h.b16 %v1441
        %v2584 = vunpack.c.l.b16 %v1442
        %v2585 = vunpack.c.h.b16 %v1442
        %v2586 = vunpack.c.l.b16 %v1443
        %v2587 = vunpack.c.h.b16 %v1443
        %v2588 = vunpack.c.l.b16 %v1444
        %v2589 = vunpack.c.h.b16 %v1444
        %v2590 = vunpack.c.l.b16 %v1445
        %v2591 = vunpack.c.h.b16 %v1445
        %v2592 = vunpack.c.l.b16 %v1446
        %v2593 = vunpack.c.h.b16 %v1446
        %v2594 = vunpack.c.l.b16 %v1447
        %v2595 = vunpack.c.h.b16 %v1447
        %v2596 = vunpack.c.l.b16 %v1448
        %v2597 = vunpack.c.h.b16 %v1448
        %v2598 = vunpack.c.l.b16 %v1449
        %v2599 = vunpack.c.h.b16 %v1449
        %v2600 = vunpack.c.l.b16 %v1450
        %v2601 = vunpack.c.h.b16 %v1450
        %v2602 = vunpack.c.l.b16 %v1451
        %v2603 = vunpack.c.h.b16 %v1451
        %v2604 = vunpack.c.l.b16 %v1452
        %v2605 = vunpack.c.h.b16 %v1452
        %v2606 = vunpack.c.l.b16 %v1453
        %v2607 = vunpack.c.h.b16 %v1453
        %v2608 = vunpack.c.l.b16 %v1454
        %v2609 = vunpack.c.h.b16 %v1454
        %v2610 = vunpack.c.l.b16 %v1455
        %v2611 = vunpack.c.h.b16 %v1455
        %v2612 = vunpack.c.l.b16 %v1456
        %v2613 = vunpack.c.h.b16 %v1456
        %v2614 = vunpack.c.l.b16 %v1457
        %v2615 = vunpack.c.h.b16 %v1457
        %v2616 = vunpack.c.l.b16 %v1458
        %v2617 = vunpack.c.h.b16 %v1458
        %v2618 = vunpack.c.l.b16 %v1459
        %v2619 = vunpack.c.h.b16 %v1459
        %v2620 = vunpack.c.l.b16 %v1460
        %v2621 = vunpack.c.h.b16 %v1460
        %v2622 = vunpack.c.l.b16 %v1461
        %v2623 = vunpack.c.h.b16 %v1461
        %v2624 = vunpack.c.l.b16 %v1462
        %v2625 = vunpack.c.h.b16 %v1462
        %v2626 = vunpack.c.l.b16 %v1463
        %v2627 = vunpack.c.h.b16 %v1463
        %v2628 = vunpack.c.l.b16 %v1464
        %v2629 = vunpack.c.h.b16 %v1464
        %v2630 = vunpack.c.l.b16 %v1465
        %v2631 = vunpack.c.h.b16 %v1465
        %v2632 = vunpack.c.l.b16 %v1466
        %v2633 = vunpack.c.h.b16 %v1466
        %v2634 = vunpack.c.l.b16 %v1467
        %v2635 = vunpack.c.h.b16 %v1467
        %v2636 = vunpack.c.l.b16 %v1468
        %v2637 = vunpack.c.h.b16 %v1468
        %v2638 = vunpack.c.l.b16 %v1469
        %v2639 = vunpack.c.h.b16 %v1469
        %v2640 = vunpack.c.l.b16 %v1470
        %v2641 = vunpack.c.h.b16 %v1470
        %v2642 = vunpack.c.l.b16 %v1471
        %v2643 = vunpack.c.h.b16 %v1471
        %v2644 = vunpack.c.l.b16 %v1472
        %v2645 = vunpack.c.h.b16 %v1472
        %v2646 = vunpack.c.l.b16 %v1473
        %v2647 = vunpack.c.h.b16 %v1473
        %v2648 = vunpack.c.l.b16 %v1474
        %v2649 = vunpack.c.h.b16 %v1474
        %v2650 = vunpack.c.l.b16 %v1475
        %v2651 = vunpack.c.h.b16 %v1475
        %v2652 = vpack.c.b16 %v1884, %v1868
        %v2653 = vpack.c.b16 %v1885, %v1869
        %v2654 = vpack.c.b16 %v1886, %v1870
        %v2655 = vpack.c.b16 %v1887, %v1871
        %v2656 = vpack.c.b16 %v1888, %v1872
        %v2657 = vpack.c.b16 %v1889, %v1873
        %v2658 = vpack.c.b16 %v1890, %v1874
        %v2659 = vpack.c.b16 %v1891, %v1875
        %v2660 = vpack.c.b16 %v1892, %v1876
        %v2661 = vpack.c.b16 %v1893, %v1877
        %v2662 = vpack.c.b16 %v1894, %v1878
        %v2663 = vpack.c.b16 %v1895, %v1879
        %v2664 = vpack.c.b16 %v1896, %v1880
        %v2665 = vpack.c.b16 %v1897, %v1881
        %v2666 = vpack.c.b16 %v1898, %v1882
        %v2667 = vpack.c.b16 %v1899, %v1883
        %v2668 = vpack.c.b16 %v1916, %v1900
        %v2669 = vpack.c.b16 %v1917, %v1901
        %v2670 = vpack.c.b16 %v1918, %v1902
        %v2671 = vpack.c.b16 %v1919, %v1903
        %v2672 = vpack.c.b16 %v1920, %v1904
        %v2673 = vpack.c.b16 %v1921, %v1905
        %v2674 = vpack.c.b16 %v1922, %v1906
        %v2675 = vpack.c.b16 %v1923, %v1907
        %v2676 = vpack.c.b16 %v1924, %v1908
        %v2677 = vpack.c.b16 %v1925, %v1909
        %v2678 = vpack.c.b16 %v1926, %v1910
        %v2679 = vpack.c.b16 %v1927, %v1911
        %v2680 = vpack.c.b16 %v1928, %v1912
        %v2681 = vpack.c.b16 %v1929, %v1913
        %v2682 = vpack.c.b16 %v1930, %v1914
        %v2683 = vpack.c.b16 %v1931, %v1915
        %v2684 = vpack.c.b16 %v1948, %v1932
        %v2685 = vpack.c.b16 %v1949, %v1933
        %v2686 = vpack.c.b16 %v1950, %v1934
        %v2687 = vpack.c.b16 %v1951, %v1935
        %v2688 = vpack.c.b16 %v1952, %v1936
        %v2689 = vpack.c.b16 %v1953, %v1937
        %v2690 = vpack.c.b16 %v1954, %v1938
        %v2691 = vpack.c.b16 %v1955, %v1939
        %v2692 = vpack.c.b16 %v1956, %v1940
        %v2693 = vpack.c.b16 %v1957, %v1941
        %v2694 = vpack.c.b16 %v1958, %v1942
        %v2695 = vpack.c.b16 %v1959, %v1943
        %v2696 = vpack.c.b16 %v1960, %v1944
        %v2697 = vpack.c.b16 %v1961, %v1945
        %v2698 = vpack.c.b16 %v1962, %v1946
        %v2699 = vpack.c.b16 %v1963, %v1947
        %v2700 = vpack.c.b16 %v1980, %v1964
        %v2701 = vpack.c.b16 %v1981, %v1965
        %v2702 = vpack.c.b16 %v1982, %v1966
        %v2703 = vpack.c.b16 %v1983, %v1967
        %v2704 = vpack.c.b16 %v1984, %v1968
        %v2705 = vpack.c.b16 %v1985, %v1969
        %v2706 = vpack.c.b16 %v1986, %v1970
        %v2707 = vpack.c.b16 %v1987, %v1971
        %v2708 = vpack.c.b16 %v1988, %v1972
        %v2709 = vpack.c.b16 %v1989, %v1973
        %v2710 = vpack.c.b16 %v1990, %v1974
        %v2711 = vpack.c.b16 %v1991, %v1975
        %v2712 = vpack.c.b16 %v1992, %v1976
        %v2713 = vpack.c.b16 %v1993, %v1977
        %v2714 = vpack.c.b16 %v1994, %v1978
        %v2715 = vpack.c.b16 %v1995, %v1979
        %v2716 = vpack.c.b16 %v2012, %v1996
        %v2717 = vpack.c.b16 %v2013, %v1997
        %v2718 = vpack.c.b16 %v2014, %v1998
        %v2719 = vpack.c.b16 %v2015, %v1999
        %v2720 = vpack.c.b16 %v2016, %v2000
        %v2721 = vpack.c.b16 %v2017, %v2001
        %v2722 = vpack.c.b16 %v2018, %v2002
        %v2723 = vpack.c.b16 %v2019, %v2003
        %v2724 = vpack.c.b16 %v2020, %v2004
        %v2725 = vpack.c.b16 %v2021, %v2005
        %v2726 = vpack.c.b16 %v2022, %v2006
        %v2727 = vpack.c.b16 %v2023, %v2007
        %v2728 = vpack.c.b16 %v2024, %v2008
        %v2729 = vpack.c.b16 %v2025, %v2009
        %v2730 = vpack.c.b16 %v2026, %v2010
        %v2731 = vpack.c.b16 %v2027, %v2011
        %v2732 = vpack.c.b16 %v2044, %v2028
        %v2733 = vpack.c.b16 %v2045, %v2029
        %v2734 = vpack.c.b16 %v2046, %v2030
        %v2735 = vpack.c.b16 %v2047, %v2031
        %v2736 = vpack.c.b16 %v2048, %v2032
        %v2737 = vpack.c.b16 %v2049, %v2033
        %v2738 = vpack.c.b16 %v2050, %v2034
        %v2739 = vpack.c.b16 %v2051, %v2035
        %v2740 = vpack.c.b16 %v2052, %v2036
        %v2741 = vpack.c.b16 %v2053, %v2037
        %v2742 = vpack.c.b16 %v2054, %v2038
        %v2743 = vpack.c.b16 %v2055, %v2039
        %v2744 = vpack.c.b16 %v2056, %v2040
        %v2745 = vpack.c.b16 %v2057, %v2041
        %v2746 = vpack.c.b16 %v2058, %v2042
        %v2747 = vpack.c.b16 %v2059, %v2043
        %v2748 = vpack.c.b16 %v2076, %v2060
        %v2749 = vpack.c.b16 %v2077, %v2061
        %v2750 = vpack.c.b16 %v2078, %v2062
        %v2751 = vpack.c.b16 %v2079, %v2063
        %v2752 = vpack.c.b16 %v2080, %v2064
        %v2753 = vpack.c.b16 %v2081, %v2065
        %v2754 = vpack.c.b16 %v2082, %v2066
        %v2755 = vpack.c.b16 %v2083, %v2067
        %v2756 = vpack.c.b16 %v2084, %v2068
        %v2757 = vpack.c.b16 %v2085, %v2069
        %v2758 = vpack.c.b16 %v2086, %v2070
        %v2759 = vpack.c.b16 %v2087, %v2071
        %v2760 = vpack.c.b16 %v2088, %v2072
        %v2761 = vpack.c.b16 %v2089, %v2073
        %v2762 = vpack.c.b16 %v2090, %v2074
        %v2763 = vpack.c.b16 %v2091, %v2075
        %v2764 = vpack.c.b16 %v2108, %v2092
        %v2765 = vpack.c.b16 %v2109, %v2093
        %v2766 = vpack.c.b16 %v2110, %v2094
        %v2767 = vpack.c.b16 %v2111, %v2095
        %v2768 = vpack.c.b16 %v2112, %v2096
        %v2769 = vpack.c.b16 %v2113, %v2097
        %v2770 = vpack.c.b16 %v2114, %v2098
        %v2771 = vpack.c.b16 %v2115, %v2099
        %v2772 = vpack.c.b16 %v2116, %v2100
        %v2773 = vpack.c.b16 %v2117, %v2101
        %v2774 = vpack.c.b16 %v2118, %v2102
        %v2775 = vpack.c.b16 %v2119, %v2103
        %v2776 = vpack.c.b16 %v2120, %v2104
        %v2777 = vpack.c.b16 %v2121, %v2105
        %v2778 = vpack.c.b16 %v2122, %v2106
        %v2779 = vpack.c.b16 %v2123, %v2107
        %v2780 = vpack.c.b16 %v2140, %v2124
        %v2781 = vpack.c.b16 %v2141, %v2125
        %v2782 = vpack.c.b16 %v2142, %v2126
        %v2783 = vpack.c.b16 %v2143, %v2127
        %v2784 = vpack.c.b16 %v2144, %v2128
        %v2785 = vpack.c.b16 %v2145, %v2129
        %v2786 = vpack.c.b16 %v2146, %v2130
        %v2787 = vpack.c.b16 %v2147, %v2131
        %v2788 = vpack.c.b16 %v2148, %v2132
        %v2789 = vpack.c.b16 %v2149, %v2133
        %v2790 = vpack.c.b16 %v2150, %v2134
        %v2791 = vpack.c.b16 %v2151, %v2135
        %v2792 = vpack.c.b16 %v2152, %v2136
        %v2793 = vpack.c.b16 %v2153, %v2137
        %v2794 = vpack.c.b16 %v2154, %v2138
        %v2795 = vpack.c.b16 %v2155, %v2139
        %v2796 = vpack.c.b16 %v2172, %v2156
        %v2797 = vpack.c.b16 %v2173, %v2157
        %v2798 = vpack.c.b16 %v2174, %v2158
        %v2799 = vpack.c.b16 %v2175, %v2159
        %v2800 = vpack.c.b16 %v2176, %v2160
        %v2801 = vpack.c.b16 %v2177, %v2161
        %v2802 = vpack.c.b16 %v2178, %v2162
        %v2803 = vpack.c.b16 %v2179, %v2163
        %v2804 = vpack.c.b16 %v2180, %v2164
        %v2805 = vpack.c.b16 %v2181, %v2165
        %v2806 = vpack.c.b16 %v2182, %v2166
        %v2807 = vpack.c.b16 %v2183, %v2167
        %v2808 = vpack.c.b16 %v2184, %v2168
        %v2809 = vpack.c.b16 %v2185, %v2169
        %v2810 = vpack.c.b16 %v2186, %v2170
        %v2811 = vpack.c.b16 %v2187, %v2171
        %v2812 = vpack.c.b16 %v2204, %v2188
        %v2813 = vpack.c.b16 %v2205, %v2189
        %v2814 = vpack.c.b16 %v2206, %v2190
        %v2815 = vpack.c.b16 %v2207, %v2191
        %v2816 = vpack.c.b16 %v2208, %v2192
        %v2817 = vpack.c.b16 %v2209, %v2193
        %v2818 = vpack.c.b16 %v2210, %v2194
        %v2819 = vpack.c.b16 %v2211, %v2195
        %v2820 = vpack.c.b16 %v2212, %v2196
        %v2821 = vpack.c.b16 %v2213, %v2197
        %v2822 = vpack.c.b16 %v2214, %v2198
        %v2823 = vpack.c.b16 %v2215, %v2199
        %v2824 = vpack.c.b16 %v2216, %v2200
        %v2825 = vpack.c.b16 %v2217, %v2201
        %v2826 = vpack.c.b16 %v2218, %v2202
        %v2827 = vpack.c.b16 %v2219, %v2203
        %v2828 = vpack.c.b16 %v2236, %v2220
        %v2829 = vpack.c.b16 %v2237, %v2221
        %v2830 = vpack.c.b16 %v2238, %v2222
        %v2831 = vpack.c.b16 %v2239, %v2223
        %v2832 = vpack.c.b16 %v2240, %v2224
        %v2833 = vpack.c.b16 %v2241, %v2225
        %v2834 = vpack.c.b16 %v2242, %v2226
        %v2835 = vpack.c.b16 %v2243, %v2227
        %v2836 = vpack.c.b16 %v2244, %v2228
        %v2837 = vpack.c.b16 %v2245, %v2229
        %v2838 = vpack.c.b16 %v2246, %v2230
        %v2839 = vpack.c.b16 %v2247, %v2231
        %v2840 = vpack.c.b16 %v2248, %v2232
        %v2841 = vpack.c.b16 %v2249, %v2233
        %v2842 = vpack.c.b16 %v2250, %v2234
        %v2843 = vpack.c.b16 %v2251, %v2235
        %v2844 = vpack.c.b16 %v2268, %v2252
        %v2845 = vpack.c.b16 %v2269, %v2253
        %v2846 = vpack.c.b16 %v2270, %v2254
        %v2847 = vpack.c.b16 %v2271, %v2255
        %v2848 = vpack.c.b16 %v2272, %v2256
        %v2849 = vpack.c.b16 %v2273, %v2257
        %v2850 = vpack.c.b16 %v2274, %v2258
        %v2851 = vpack.c.b16 %v2275, %v2259
        %v2852 = vpack.c.b16 %v2276, %v2260
        %v2853 = vpack.c.b16 %v2277, %v2261
        %v2854 = vpack.c.b16 %v2278, %v2262
        %v2855 = vpack.c.b16 %v2279, %v2263
        %v2856 = vpack.c.b16 %v2280, %v2264
        %v2857 = vpack.c.b16 %v2281, %v2265
        %v2858 = vpack.c.b16 %v2282, %v2266
        %v2859 = vpack.c.b16 %v2283, %v2267
        %v2860 = vpack.c.b16 %v2300, %v2284
        %v2861 = vpack.c.b16 %v2301, %v2285
        %v2862 = vpack.c.b16 %v2302, %v2286
        %v2863 = vpack.c.b16 %v2303, %v2287
        %v2864 = vpack.c.b16 %v2304, %v2288
        %v2865 = vpack.c.b16 %v2305, %v2289
        %v2866 = vpack.c.b16 %v2306, %v2290
        %v2867 = vpack.c.b16 %v2307, %v2291
        %v2868 = vpack.c.b16 %v2308, %v2292
        %v2869 = vpack.c.b16 %v2309, %v2293
        %v2870 = vpack.c.b16 %v2310, %v2294
        %v2871 = vpack.c.b16 %v2311, %v2295
        %v2872 = vpack.c.b16 %v2312, %v2296
        %v2873 = vpack.c.b16 %v2313, %v2297
        %v2874 = vpack.c.b16 %v2314, %v2298
        %v2875 = vpack.c.b16 %v2315, %v2299
        %v2876 = vpack.c.b16 %v2332, %v2316
        %v2877 = vpack.c.b16 %v2333, %v2317
        %v2878 = vpack.c.b16 %v2334, %v2318
        %v2879 = vpack.c.b16 %v2335, %v2319
        %v2880 = vpack.c.b16 %v2336, %v2320
        %v2881 = vpack.c.b16 %v2337, %v2321
        %v2882 = vpack.c.b16 %v2338, %v2322
        %v2883 = vpack.c.b16 %v2339, %v2323
        %v2884 = vpack.c.b16 %v2340, %v2324
        %v2885 = vpack.c.b16 %v2341, %v2325
        %v2886 = vpack.c.b16 %v2342, %v2326
        %v2887 = vpack.c.b16 %v2343, %v2327
        %v2888 = vpack.c.b16 %v2344, %v2328
        %v2889 = vpack.c.b16 %v2345, %v2329
        %v2890 = vpack.c.b16 %v2346, %v2330
        %v2891 = vpack.c.b16 %v2347, %v2331
        %v2892 = vpack.c.b16 %v2364, %v2348
        %v2893 = vpack.c.b16 %v2365, %v2349
        %v2894 = vpack.c.b16 %v2366, %v2350
        %v2895 = vpack.c.b16 %v2367, %v2351
        %v2896 = vpack.c.b16 %v2368, %v2352
        %v2897 = vpack.c.b16 %v2369, %v2353
        %v2898 = vpack.c.b16 %v2370, %v2354
        %v2899 = vpack.c.b16 %v2371, %v2355
        %v2900 = vpack.c.b16 %v2372, %v2356
        %v2901 = vpack.c.b16 %v2373, %v2357
        %v2902 = vpack.c.b16 %v2374, %v2358
        %v2903 = vpack.c.b16 %v2375, %v2359
        %v2904 = vpack.c.b16 %v2376, %v2360
        %v2905 = vpack.c.b16 %v2377, %v2361
        %v2906 = vpack.c.b16 %v2378, %v2362
        %v2907 = vpack.c.b16 %v2379, %v2363
        %v2908 = vpack.c.b16 %v2396, %v2380
        %v2909 = vpack.c.b16 %v2397, %v2381
        %v2910 = vpack.c.b16 %v2398, %v2382
        %v2911 = vpack.c.b16 %v2399, %v2383
        %v2912 = vpack.c.b16 %v2400, %v2384
        %v2913 = vpack.c.b16 %v2401, %v2385
        %v2914 = vpack.c.b16 %v2402, %v2386
        %v2915 = vpack.c.b16 %v2403, %v2387
        %v2916 = vpack.c.b16 %v2404, %v2388
        %v2917 = vpack.c.b16 %v2405, %v2389
        %v2918 = vpack.c.b16 %v2406, %v2390
        %v2919 = vpack.c.b16 %v2407, %v2391
        %v2920 = vpack.c.b16 %v2408, %v2392
        %v2921 = vpack.c.b16 %v2409, %v2393
        %v2922 = vpack.c.b16 %v2410, %v2394
        %v2923 = vpack.c.b16 %v2411, %v2395
        %v2924 = vpack.c.b16 %v2428, %v2412
        %v2925 = vpack.c.b16 %v2429, %v2413
        %v2926 = vpack.c.b16 %v2430, %v2414
        %v2927 = vpack.c.b16 %v2431, %v2415
        %v2928 = vpack.c.b16 %v2432, %v2416
        %v2929 = vpack.c.b16 %v2433, %v2417
        %v2930 = vpack.c.b16 %v2434, %v2418
        %v2931 = vpack.c.b16 %v2435, %v2419
        %v2932 = vpack.c.b16 %v2436, %v2420
        %v2933 = vpack.c.b16 %v2437, %v2421
        %v2934 = vpack.c.b16 %v2438, %v2422
        %v2935 = vpack.c.b16 %v2439, %v2423
        %v2936 = vpack.c.b16 %v2440, %v2424
        %v2937 = vpack.c.b16 %v2441, %v2425
        %v2938 = vpack.c.b16 %v2442, %v2426
        %v2939 = vpack.c.b16 %v2443, %v2427
        %v2940 = vpack.c.b16 %v2460, %v2444
        %v2941 = vpack.c.b16 %v2461, %v2445
        %v2942 = vpack.c.b16 %v2462, %v2446
        %v2943 = vpack.c.b16 %v2463, %v2447
        %v2944 = vpack.c.b16 %v2464, %v2448
        %v2945 = vpack.c.b16 %v2465, %v2449
        %v2946 = vpack.c.b16 %v2466, %v2450
        %v2947 = vpack.c.b16 %v2467, %v2451
        %v2948 = vpack.c.b16 %v2468, %v2452
        %v2949 = vpack.c.b16 %v2469, %v2453
        %v2950 = vpack.c.b16 %v2470, %v2454
        %v2951 = vpack.c.b16 %v2471, %v2455
        %v2952 = vpack.c.b16 %v2472, %v2456
        %v2953 = vpack.c.b16 %v2473, %v2457
        %v2954 = vpack.c.b16 %v2474, %v2458
        %v2955 = vpack.c.b16 %v2475, %v2459
        %v2956 = vpack.c.b16 %v2492, %v2476
        %v2957 = vpack.c.b16 %v2493, %v2477
        %v2958 = vpack.c.b16 %v2494, %v2478
        %v2959 = vpack.c.b16 %v2495, %v2479
        %v2960 = vpack.c.b16 %v2496, %v2480
        %v2961 = vpack.c.b16 %v2497, %v2481
        %v2962 = vpack.c.b16 %v2498, %v2482
        %v2963 = vpack.c.b16 %v2499, %v2483
        %v2964 = vpack.c.b16 %v2500, %v2484
        %v2965 = vpack.c.b16 %v2501, %v2485
        %v2966 = vpack.c.b16 %v2502, %v2486
        %v2967 = vpack.c.b16 %v2503, %v2487
        %v2968 = vpack.c.b16 %v2504, %v2488
        %v2969 = vpack.c.b16 %v2505, %v2489
        %v2970 = vpack.c.b16 %v2506, %v2490
        %v2971 = vpack.c.b16 %v2507, %v2491
        %v2972 = vpack.c.b16 %v2524, %v2508
        %v2973 = vpack.c.b16 %v2525, %v2509
        %v2974 = vpack.c.b16 %v2526, %v2510
        %v2975 = vpack.c.b16 %v2527, %v2511
        %v2976 = vpack.c.b16 %v2528, %v2512
        %v2977 = vpack.c.b16 %v2529, %v2513
        %v2978 = vpack.c.b16 %v2530, %v2514
        %v2979 = vpack.c.b16 %v2531, %v2515
        %v2980 = vpack.c.b16 %v2532, %v2516
        %v2981 = vpack.c.b16 %v2533, %v2517
        %v2982 = vpack.c.b16 %v2534, %v2518
        %v2983 = vpack.c.b16 %v2535, %v2519
        %v2984 = vpack.c.b16 %v2536, %v2520
        %v2985 = vpack.c.b16 %v2537, %v2521
        %v2986 = vpack.c.b16 %v2538, %v2522
        %v2987 = vpack.c.b16 %v2539, %v2523
        %v2988 = vpack.c.b16 %v2556, %v2540
        %v2989 = vpack.c.b16 %v2557, %v2541
        %v2990 = vpack.c.b16 %v2558, %v2542
        %v2991 = vpack.c.b16 %v2559, %v2543
        %v2992 = vpack.c.b16 %v2560, %v2544
        %v2993 = vpack.c.b16 %v2561, %v2545
        %v2994 = vpack.c.b16 %v2562, %v2546
        %v2995 = vpack.c.b16 %v2563, %v2547
        %v2996 = vpack.c.b16 %v2564, %v2548
        %v2997 = vpack.c.b16 %v2565, %v2549
        %v2998 = vpack.c.b16 %v2566, %v2550
        %v2999 = vpack.c.b16 %v2567, %v2551
        %v3000 = vpack.c.b16 %v2568, %v2552
        %v3001 = vpack.c.b16 %v2569, %v2553
        %v3002 = vpack.c.b16 %v2570, %v2554
        %v3003 = vpack.c.b16 %v2571, %v2555
        %v3004 = vpack.c.b16 %v2588, %v2572
        %v3005 = vpack.c.b16 %v2589, %v2573
        %v3006 = vpack.c.b16 %v2590, %v2574
        %v3007 = vpack.c.b16 %v2591, %v2575
        %v3008 = vpack.c.b16 %v2592, %v2576
        %v3009 = vpack.c.b16 %v2593, %v2577
        %v3010 = vpack.c.b16 %v2594, %v2578
        %v3011 = vpack.c.b16 %v2595, %v2579
        %v3012 = vpack.c.b16 %v2596, %v2580
        %v3013 = vpack.c.b16 %v2597, %v2581
        %v3014 = vpack.c.b16 %v2598, %v2582
        %v3015 = vpack.c.b16 %v2599, %v2583
        %v3016 = vpack.c.b16 %v2600, %v2584
        %v3017 = vpack.c.b16 %v2601, %v2585
        %v3018 = vpack.c.b16 %v2602, %v2586
        %v3019 = vpack.c.b16 %v2603, %v2587
        %v3020 = vpack.c.b16 %v2620, %v2604
        %v3021 = vpack.c.b16 %v2621, %v2605
        %v3022 = vpack.c.b16 %v2622, %v2606
        %v3023 = vpack.c.b16 %v2623, %v2607
        %v3024 = vpack.c.b16 %v2624, %v2608
        %v3025 = vpack.c.b16 %v2625, %v2609
        %v3026 = vpack.c.b16 %v2626, %v2610
        %v3027 = vpack.c.b16 %v2627, %v2611
        %v3028 = vpack.c.b16 %v2628, %v2612
        %v3029 = vpack.c.b16 %v2629, %v2613
        %v3030 = vpack.c.b16 %v2630, %v2614
        %v3031 = vpack.c.b16 %v2631, %v2615
        %v3032 = vpack.c.b16 %v2632, %v2616
        %v3033 = vpack.c.b16 %v2633, %v2617
        %v3034 = vpack.c.b16 %v2634, %v2618
        %v3035 = vpack.c.b16 %v2635, %v2619
        %v3036 = vpack.c.b16 %v2636, %v2636
        %v3037 = vpack.c.b16 %v2637, %v2637
        %v3038 = vpack.c.b16 %v2638, %v2638
        %v3039 = vpack.c.b16 %v2639, %v2639
        %v3040 = vpack.c.b16 %v2640, %v2640
        %v3041 = vpack.c.b16 %v2641, %v2641
        %v3042 = vpack.c.b16 %v2642, %v2642
        %v3043 = vpack.c.b16 %v2643, %v2643
        %v3044 = vpack.c.b16 %v2644, %v2644
        %v3045 = vpack.c.b16 %v2645, %v2645
        %v3046 = vpack.c.b16 %v2646, %v2646
        %v3047 = vpack.c.b16 %v2647, %v2647
        %v3048 = vpack.c.b16 %v2648, %v2648
        %v3049 = vpack.c.b16 %v2649, %v2649
        %v3050 = vpack.c.b16 %v2650, %v2650
        %v3051 = vpack.c.b16 %v2651, %v2651
        %3452 = vmatpush.bf16.msra.mxu0 %v842
        %3453 = vmatpush.bf16.msra.mxu0 %v840
        %3454 = vmatpush.bf16.msra.mxu0 %v838
        %3455 = vmatpush.bf16.msra.mxu0 %v836
        %3456 = vmatpush.bf16.msra.mxu0 %v834
        %3457 = vmatpush.bf16.msra.mxu0 %v832
        %3458 = vmatpush.bf16.msra.mxu0 %v830
        %3459 = vmatpush.bf16.msra.mxu0 %v828
        %3460 = vmatmul.bf16.gmra.mxu0 %v2652
        %v3461 = vpop.f32.mrf.mxu0
        %v3462 = vadd.f32 0.0, %v3461
        %v3463 = vpop.f32.mrf.mxu0
        %v3464 = vadd.f32 0.0, %v3463
        %3465 = vmatmul.bf16.gmra.mxu0 %v2668
        %v3466 = vpop.f32.mrf.mxu0
        %v3467 = vadd.f32 0.0, %v3466
        %v3468 = vpop.f32.mrf.mxu0
        %v3469 = vadd.f32 0.0, %v3468
        %3470 = vmatmul.bf16.gmra.mxu0 %v2684
        %v3471 = vpop.f32.mrf.mxu0
        %v3472 = vadd.f32 0.0, %v3471
        %v3473 = vpop.f32.mrf.mxu0
        %v3474 = vadd.f32 0.0, %v3473
        %3475 = vmatmul.bf16.gmra.mxu0 %v2700
        %v3476 = vpop.f32.mrf.mxu0
        %v3477 = vadd.f32 0.0, %v3476
        %v3478 = vpop.f32.mrf.mxu0
        %v3479 = vadd.f32 0.0, %v3478
        %3480 = vmatmul.bf16.gmra.mxu0 %v2716
        %v3481 = vpop.f32.mrf.mxu0
        %v3482 = vadd.f32 0.0, %v3481
        %v3483 = vpop.f32.mrf.mxu0
        %v3484 = vadd.f32 0.0, %v3483
        %3485 = vmatmul.bf16.gmra.mxu0 %v2732
        %v3486 = vpop.f32.mrf.mxu0
        %v3487 = vadd.f32 0.0, %v3486
        %v3488 = vpop.f32.mrf.mxu0
        %v3489 = vadd.f32 0.0, %v3488
        %3490 = vmatmul.bf16.gmra.mxu0 %v2748
        %v3491 = vpop.f32.mrf.mxu0
        %v3492 = vadd.f32 0.0, %v3491
        %v3493 = vpop.f32.mrf.mxu0
        %v3494 = vadd.f32 0.0, %v3493
        %3495 = vmatmul.bf16.gmra.mxu0 %v2764
        %v3496 = vpop.f32.mrf.mxu0
        %v3497 = vadd.f32 0.0, %v3496
        %v3498 = vpop.f32.mrf.mxu0
        %v3499 = vadd.f32 0.0, %v3498
        %3500 = vmatmul.bf16.gmra.mxu0 %v2780
        %v3501 = vpop.f32.mrf.mxu0
        %v3502 = vadd.f32 0.0, %v3501
        %v3503 = vpop.f32.mrf.mxu0
        %v3504 = vadd.f32 0.0, %v3503
        %3505 = vmatmul.bf16.gmra.mxu0 %v2796
        %v3506 = vpop.f32.mrf.mxu0
        %v3507 = vadd.f32 0.0, %v3506
        %v3508 = vpop.f32.mrf.mxu0
        %v3509 = vadd.f32 0.0, %v3508
        %3510 = vmatmul.bf16.gmra.mxu0 %v2812
        %v3511 = vpop.f32.mrf.mxu0
        %v3512 = vadd.f32 0.0, %v3511
        %v3513 = vpop.f32.mrf.mxu0
        %v3514 = vadd.f32 0.0, %v3513
        %3515 = vmatmul.bf16.gmra.mxu0 %v2828
        %v3516 = vpop.f32.mrf.mxu0
        %v3517 = vadd.f32 0.0, %v3516
        %v3518 = vpop.f32.mrf.mxu0
        %v3519 = vadd.f32 0.0, %v3518
        %3520 = vmatmul.bf16.gmra.mxu0 %v2844
        %v3521 = vpop.f32.mrf.mxu0
        %v3522 = vadd.f32 0.0, %v3521
        %v3523 = vpop.f32.mrf.mxu0
        %v3524 = vadd.f32 0.0, %v3523
        %3525 = vmatmul.bf16.gmra.mxu0 %v2860
        %v3526 = vpop.f32.mrf.mxu0
        %v3527 = vadd.f32 0.0, %v3526
        %v3528 = vpop.f32.mrf.mxu0
        %v3529 = vadd.f32 0.0, %v3528
        %3530 = vmatmul.bf16.gmra.mxu0 %v2876
        %v3531 = vpop.f32.mrf.mxu0
        %v3532 = vadd.f32 0.0, %v3531
        %v3533 = vpop.f32.mrf.mxu0
        %v3534 = vadd.f32 0.0, %v3533
        %3535 = vmatmul.bf16.gmra.mxu0 %v2892
        %v3536 = vpop.f32.mrf.mxu0
        %v3537 = vadd.f32 0.0, %v3536
        %v3538 = vpop.f32.mrf.mxu0
        %v3539 = vadd.f32 0.0, %v3538
        %3540 = vmatmul.bf16.gmra.mxu0 %v2908
        %v3541 = vpop.f32.mrf.mxu0
        %v3542 = vadd.f32 0.0, %v3541
        %v3543 = vpop.f32.mrf.mxu0
        %v3544 = vadd.f32 0.0, %v3543
        %3545 = vmatmul.bf16.gmra.mxu0 %v2924
        %v3546 = vpop.f32.mrf.mxu0
        %v3547 = vadd.f32 0.0, %v3546
        %v3548 = vpop.f32.mrf.mxu0
        %v3549 = vadd.f32 0.0, %v3548
        %3550 = vmatmul.bf16.gmra.mxu0 %v2940
        %v3551 = vpop.f32.mrf.mxu0
        %v3552 = vadd.f32 0.0, %v3551
        %v3553 = vpop.f32.mrf.mxu0
        %v3554 = vadd.f32 0.0, %v3553
        %3555 = vmatmul.bf16.gmra.mxu0 %v2956
        %v3556 = vpop.f32.mrf.mxu0
        %v3557 = vadd.f32 0.0, %v3556
        %v3558 = vpop.f32.mrf.mxu0
        %v3559 = vadd.f32 0.0, %v3558
        %3560 = vmatmul.bf16.gmra.mxu0 %v2972
        %v3561 = vpop.f32.mrf.mxu0
        %v3562 = vadd.f32 0.0, %v3561
        %v3563 = vpop.f32.mrf.mxu0
        %v3564 = vadd.f32 0.0, %v3563
        %3565 = vmatmul.bf16.gmra.mxu0 %v2988
        %v3566 = vpop.f32.mrf.mxu0
        %v3567 = vadd.f32 0.0, %v3566
        %v3568 = vpop.f32.mrf.mxu0
        %v3569 = vadd.f32 0.0, %v3568
        %3570 = vmatmul.bf16.gmra.mxu0 %v3004
        %v3571 = vpop.f32.mrf.mxu0
        %v3572 = vadd.f32 0.0, %v3571
        %v3573 = vpop.f32.mrf.mxu0
        %v3574 = vadd.f32 0.0, %v3573
        %3575 = vmatmul.bf16.gmra.mxu0 %v3020
        %v3576 = vpop.f32.mrf.mxu0
        %v3577 = vadd.f32 0.0, %v3576
        %v3578 = vpop.f32.mrf.mxu0
        %v3579 = vadd.f32 0.0, %v3578
        %3580 = vmatmul.bf16.gmra.mxu0 %v3036
        %v3581 = vpop.f32.mrf.mxu0
        %v3582 = vadd.f32 0.0, %v3581
        %v3583 = vpop.f32.mrf.mxu0
        %3584 = vdwg.mxu0
        %3585 = vmatpush.bf16.msra.mxu0 %v858
        %3586 = vmatpush.bf16.msra.mxu0 %v856
        %3587 = vmatpush.bf16.msra.mxu0 %v854
        %3588 = vmatpush.bf16.msra.mxu0 %v852
        %3589 = vmatpush.bf16.msra.mxu0 %v850
        %3590 = vmatpush.bf16.msra.mxu0 %v848
        %3591 = vmatpush.bf16.msra.mxu0 %v846
        %3592 = vmatpush.bf16.msra.mxu0 %v844
        %3593 = vmatmul.bf16.gmra.mxu0 %v2653
        %v3594 = vpop.f32.mrf.mxu0
        %v3595 = vadd.f32 %v3462, %v3594
        %v3596 = vpop.f32.mrf.mxu0
        %v3597 = vadd.f32 %v3464, %v3596
        %3598 = vmatmul.bf16.gmra.mxu0 %v2669
        %v3599 = vpop.f32.mrf.mxu0
        %v3600 = vadd.f32 %v3467, %v3599
        %v3601 = vpop.f32.mrf.mxu0
        %v3602 = vadd.f32 %v3469, %v3601
        %3603 = vmatmul.bf16.gmra.mxu0 %v2685
        %v3604 = vpop.f32.mrf.mxu0
        %v3605 = vadd.f32 %v3472, %v3604
        %v3606 = vpop.f32.mrf.mxu0
        %v3607 = vadd.f32 %v3474, %v3606
        %3608 = vmatmul.bf16.gmra.mxu0 %v2701
        %v3609 = vpop.f32.mrf.mxu0
        %v3610 = vadd.f32 %v3477, %v3609
        %v3611 = vpop.f32.mrf.mxu0
        %v3612 = vadd.f32 %v3479, %v3611
        %3613 = vmatmul.bf16.gmra.mxu0 %v2717
        %v3614 = vpop.f32.mrf.mxu0
        %v3615 = vadd.f32 %v3482, %v3614
        %v3616 = vpop.f32.mrf.mxu0
        %v3617 = vadd.f32 %v3484, %v3616
        %3618 = vmatmul.bf16.gmra.mxu0 %v2733
        %v3619 = vpop.f32.mrf.mxu0
        %v3620 = vadd.f32 %v3487, %v3619
        %v3621 = vpop.f32.mrf.mxu0
        %v3622 = vadd.f32 %v3489, %v3621
        %3623 = vmatmul.bf16.gmra.mxu0 %v2749
        %v3624 = vpop.f32.mrf.mxu0
        %v3625 = vadd.f32 %v3492, %v3624
        %v3626 = vpop.f32.mrf.mxu0
        %v3627 = vadd.f32 %v3494, %v3626
        %3628 = vmatmul.bf16.gmra.mxu0 %v2765
        %v3629 = vpop.f32.mrf.mxu0
        %v3630 = vadd.f32 %v3497, %v3629
        %v3631 = vpop.f32.mrf.mxu0
        %v3632 = vadd.f32 %v3499, %v3631
        %3633 = vmatmul.bf16.gmra.mxu0 %v2781
        %v3634 = vpop.f32.mrf.mxu0
        %v3635 = vadd.f32 %v3502, %v3634
        %v3636 = vpop.f32.mrf.mxu0
        %v3637 = vadd.f32 %v3504, %v3636
        %3638 = vmatmul.bf16.gmra.mxu0 %v2797
        %v3639 = vpop.f32.mrf.mxu0
        %v3640 = vadd.f32 %v3507, %v3639
        %v3641 = vpop.f32.mrf.mxu0
        %v3642 = vadd.f32 %v3509, %v3641
        %3643 = vmatmul.bf16.gmra.mxu0 %v2813
        %v3644 = vpop.f32.mrf.mxu0
        %v3645 = vadd.f32 %v3512, %v3644
        %v3646 = vpop.f32.mrf.mxu0
        %v3647 = vadd.f32 %v3514, %v3646
        %3648 = vmatmul.bf16.gmra.mxu0 %v2829
        %v3649 = vpop.f32.mrf.mxu0
        %v3650 = vadd.f32 %v3517, %v3649
        %v3651 = vpop.f32.mrf.mxu0
        %v3652 = vadd.f32 %v3519, %v3651
        %3653 = vmatmul.bf16.gmra.mxu0 %v2845
        %v3654 = vpop.f32.mrf.mxu0
        %v3655 = vadd.f32 %v3522, %v3654
        %v3656 = vpop.f32.mrf.mxu0
        %v3657 = vadd.f32 %v3524, %v3656
        %3658 = vmatmul.bf16.gmra.mxu0 %v2861
        %v3659 = vpop.f32.mrf.mxu0
        %v3660 = vadd.f32 %v3527, %v3659
        %v3661 = vpop.f32.mrf.mxu0
        %v3662 = vadd.f32 %v3529, %v3661
        %3663 = vmatmul.bf16.gmra.mxu0 %v2877
        %v3664 = vpop.f32.mrf.mxu0
        %v3665 = vadd.f32 %v3532, %v3664
        %v3666 = vpop.f32.mrf.mxu0
        %v3667 = vadd.f32 %v3534, %v3666
        %3668 = vmatmul.bf16.gmra.mxu0 %v2893
        %v3669 = vpop.f32.mrf.mxu0
        %v3670 = vadd.f32 %v3537, %v3669
        %v3671 = vpop.f32.mrf.mxu0
        %v3672 = vadd.f32 %v3539, %v3671
        %3673 = vmatmul.bf16.gmra.mxu0 %v2909
        %v3674 = vpop.f32.mrf.mxu0
        %v3675 = vadd.f32 %v3542, %v3674
        %v3676 = vpop.f32.mrf.mxu0
        %v3677 = vadd.f32 %v3544, %v3676
        %3678 = vmatmul.bf16.gmra.mxu0 %v2925
        %v3679 = vpop.f32.mrf.mxu0
        %v3680 = vadd.f32 %v3547, %v3679
        %v3681 = vpop.f32.mrf.mxu0
        %v3682 = vadd.f32 %v3549, %v3681
        %3683 = vmatmul.bf16.gmra.mxu0 %v2941
        %v3684 = vpop.f32.mrf.mxu0
        %v3685 = vadd.f32 %v3552, %v3684
        %v3686 = vpop.f32.mrf.mxu0
        %v3687 = vadd.f32 %v3554, %v3686
        %3688 = vmatmul.bf16.gmra.mxu0 %v2957
        %v3689 = vpop.f32.mrf.mxu0
        %v3690 = vadd.f32 %v3557, %v3689
        %v3691 = vpop.f32.mrf.mxu0
        %v3692 = vadd.f32 %v3559, %v3691
        %3693 = vmatmul.bf16.gmra.mxu0 %v2973
        %v3694 = vpop.f32.mrf.mxu0
        %v3695 = vadd.f32 %v3562, %v3694
        %v3696 = vpop.f32.mrf.mxu0
        %v3697 = vadd.f32 %v3564, %v3696
        %3698 = vmatmul.bf16.gmra.mxu0 %v2989
        %v3699 = vpop.f32.mrf.mxu0
        %v3700 = vadd.f32 %v3567, %v3699
        %v3701 = vpop.f32.mrf.mxu0
        %v3702 = vadd.f32 %v3569, %v3701
        %3703 = vmatmul.bf16.gmra.mxu0 %v3005
        %v3704 = vpop.f32.mrf.mxu0
        %v3705 = vadd.f32 %v3572, %v3704
        %v3706 = vpop.f32.mrf.mxu0
        %v3707 = vadd.f32 %v3574, %v3706
        %3708 = vmatmul.bf16.gmra.mxu0 %v3021
        %v3709 = vpop.f32.mrf.mxu0
        %v3710 = vadd.f32 %v3577, %v3709
        %v3711 = vpop.f32.mrf.mxu0
        %v3712 = vadd.f32 %v3579, %v3711
        %3713 = vmatmul.bf16.gmra.mxu0 %v3037
        %v3714 = vpop.f32.mrf.mxu0
        %v3715 = vadd.f32 %v3582, %v3714
        %v3716 = vpop.f32.mrf.mxu0
        %3717 = vdwg.mxu0
        %3718 = vmatpush.bf16.msra.mxu0 %v874
        %3719 = vmatpush.bf16.msra.mxu0 %v872
        %3720 = vmatpush.bf16.msra.mxu0 %v870
        %3721 = vmatpush.bf16.msra.mxu0 %v868
        %3722 = vmatpush.bf16.msra.mxu0 %v866
        %3723 = vmatpush.bf16.msra.mxu0 %v864
        %3724 = vmatpush.bf16.msra.mxu0 %v862
        %3725 = vmatpush.bf16.msra.mxu0 %v860
        %3726 = vmatmul.bf16.gmra.mxu0 %v2654
        %v3727 = vpop.f32.mrf.mxu0
        %v3728 = vadd.f32 %v3595, %v3727
        %v3729 = vpop.f32.mrf.mxu0
        %v3730 = vadd.f32 %v3597, %v3729
        %3731 = vmatmul.bf16.gmra.mxu0 %v2670
        %v3732 = vpop.f32.mrf.mxu0
        %v3733 = vadd.f32 %v3600, %v3732
        %v3734 = vpop.f32.mrf.mxu0
        %v3735 = vadd.f32 %v3602, %v3734
        %3736 = vmatmul.bf16.gmra.mxu0 %v2686
        %v3737 = vpop.f32.mrf.mxu0
        %v3738 = vadd.f32 %v3605, %v3737
        %v3739 = vpop.f32.mrf.mxu0
        %v3740 = vadd.f32 %v3607, %v3739
        %3741 = vmatmul.bf16.gmra.mxu0 %v2702
        %v3742 = vpop.f32.mrf.mxu0
        %v3743 = vadd.f32 %v3610, %v3742
        %v3744 = vpop.f32.mrf.mxu0
        %v3745 = vadd.f32 %v3612, %v3744
        %3746 = vmatmul.bf16.gmra.mxu0 %v2718
        %v3747 = vpop.f32.mrf.mxu0
        %v3748 = vadd.f32 %v3615, %v3747
        %v3749 = vpop.f32.mrf.mxu0
        %v3750 = vadd.f32 %v3617, %v3749
        %3751 = vmatmul.bf16.gmra.mxu0 %v2734
        %v3752 = vpop.f32.mrf.mxu0
        %v3753 = vadd.f32 %v3620, %v3752
        %v3754 = vpop.f32.mrf.mxu0
        %v3755 = vadd.f32 %v3622, %v3754
        %3756 = vmatmul.bf16.gmra.mxu0 %v2750
        %v3757 = vpop.f32.mrf.mxu0
        %v3758 = vadd.f32 %v3625, %v3757
        %v3759 = vpop.f32.mrf.mxu0
        %v3760 = vadd.f32 %v3627, %v3759
        %3761 = vmatmul.bf16.gmra.mxu0 %v2766
        %v3762 = vpop.f32.mrf.mxu0
        %v3763 = vadd.f32 %v3630, %v3762
        %v3764 = vpop.f32.mrf.mxu0
        %v3765 = vadd.f32 %v3632, %v3764
        %3766 = vmatmul.bf16.gmra.mxu0 %v2782
        %v3767 = vpop.f32.mrf.mxu0
        %v3768 = vadd.f32 %v3635, %v3767
        %v3769 = vpop.f32.mrf.mxu0
        %v3770 = vadd.f32 %v3637, %v3769
        %3771 = vmatmul.bf16.gmra.mxu0 %v2798
        %v3772 = vpop.f32.mrf.mxu0
        %v3773 = vadd.f32 %v3640, %v3772
        %v3774 = vpop.f32.mrf.mxu0
        %v3775 = vadd.f32 %v3642, %v3774
        %3776 = vmatmul.bf16.gmra.mxu0 %v2814
        %v3777 = vpop.f32.mrf.mxu0
        %v3778 = vadd.f32 %v3645, %v3777
        %v3779 = vpop.f32.mrf.mxu0
        %v3780 = vadd.f32 %v3647, %v3779
        %3781 = vmatmul.bf16.gmra.mxu0 %v2830
        %v3782 = vpop.f32.mrf.mxu0
        %v3783 = vadd.f32 %v3650, %v3782
        %v3784 = vpop.f32.mrf.mxu0
        %v3785 = vadd.f32 %v3652, %v3784
        %3786 = vmatmul.bf16.gmra.mxu0 %v2846
        %v3787 = vpop.f32.mrf.mxu0
        %v3788 = vadd.f32 %v3655, %v3787
        %v3789 = vpop.f32.mrf.mxu0
        %v3790 = vadd.f32 %v3657, %v3789
        %3791 = vmatmul.bf16.gmra.mxu0 %v2862
        %v3792 = vpop.f32.mrf.mxu0
        %v3793 = vadd.f32 %v3660, %v3792
        %v3794 = vpop.f32.mrf.mxu0
        %v3795 = vadd.f32 %v3662, %v3794
        %3796 = vmatmul.bf16.gmra.mxu0 %v2878
        %v3797 = vpop.f32.mrf.mxu0
        %v3798 = vadd.f32 %v3665, %v3797
        %v3799 = vpop.f32.mrf.mxu0
        %v3800 = vadd.f32 %v3667, %v3799
        %3801 = vmatmul.bf16.gmra.mxu0 %v2894
        %v3802 = vpop.f32.mrf.mxu0
        %v3803 = vadd.f32 %v3670, %v3802
        %v3804 = vpop.f32.mrf.mxu0
        %v3805 = vadd.f32 %v3672, %v3804
        %3806 = vmatmul.bf16.gmra.mxu0 %v2910
        %v3807 = vpop.f32.mrf.mxu0
        %v3808 = vadd.f32 %v3675, %v3807
        %v3809 = vpop.f32.mrf.mxu0
        %v3810 = vadd.f32 %v3677, %v3809
        %3811 = vmatmul.bf16.gmra.mxu0 %v2926
        %v3812 = vpop.f32.mrf.mxu0
        %v3813 = vadd.f32 %v3680, %v3812
        %v3814 = vpop.f32.mrf.mxu0
        %v3815 = vadd.f32 %v3682, %v3814
        %3816 = vmatmul.bf16.gmra.mxu0 %v2942
        %v3817 = vpop.f32.mrf.mxu0
        %v3818 = vadd.f32 %v3685, %v3817
        %v3819 = vpop.f32.mrf.mxu0
        %v3820 = vadd.f32 %v3687, %v3819
        %3821 = vmatmul.bf16.gmra.mxu0 %v2958
        %v3822 = vpop.f32.mrf.mxu0
        %v3823 = vadd.f32 %v3690, %v3822
        %v3824 = vpop.f32.mrf.mxu0
        %v3825 = vadd.f32 %v3692, %v3824
        %3826 = vmatmul.bf16.gmra.mxu0 %v2974
        %v3827 = vpop.f32.mrf.mxu0
        %v3828 = vadd.f32 %v3695, %v3827
        %v3829 = vpop.f32.mrf.mxu0
        %v3830 = vadd.f32 %v3697, %v3829
        %3831 = vmatmul.bf16.gmra.mxu0 %v2990
        %v3832 = vpop.f32.mrf.mxu0
        %v3833 = vadd.f32 %v3700, %v3832
        %v3834 = vpop.f32.mrf.mxu0
        %v3835 = vadd.f32 %v3702, %v3834
        %3836 = vmatmul.bf16.gmra.mxu0 %v3006
        %v3837 = vpop.f32.mrf.mxu0
        %v3838 = vadd.f32 %v3705, %v3837
        %v3839 = vpop.f32.mrf.mxu0
        %v3840 = vadd.f32 %v3707, %v3839
        %3841 = vmatmul.bf16.gmra.mxu0 %v3022
        %v3842 = vpop.f32.mrf.mxu0
        %v3843 = vadd.f32 %v3710, %v3842
        %v3844 = vpop.f32.mrf.mxu0
        %v3845 = vadd.f32 %v3712, %v3844
        %3846 = vmatmul.bf16.gmra.mxu0 %v3038
        %v3847 = vpop.f32.mrf.mxu0
        %v3848 = vadd.f32 %v3715, %v3847
        %v3849 = vpop.f32.mrf.mxu0
        %3850 = vdwg.mxu0
        %3851 = vmatpush.bf16.msra.mxu0 %v890
        %3852 = vmatpush.bf16.msra.mxu0 %v888
        %3853 = vmatpush.bf16.msra.mxu0 %v886
        %3854 = vmatpush.bf16.msra.mxu0 %v884
        %3855 = vmatpush.bf16.msra.mxu0 %v882
        %3856 = vmatpush.bf16.msra.mxu0 %v880
        %3857 = vmatpush.bf16.msra.mxu0 %v878
        %3858 = vmatpush.bf16.msra.mxu0 %v876
        %3859 = vmatmul.bf16.gmra.mxu0 %v2655
        %v3860 = vpop.f32.mrf.mxu0
        %v3861 = vadd.f32 %v3728, %v3860
        %v3862 = vpop.f32.mrf.mxu0
        %v3863 = vadd.f32 %v3730, %v3862
        %3864 = vmatmul.bf16.gmra.mxu0 %v2671
        %v3865 = vpop.f32.mrf.mxu0
        %v3866 = vadd.f32 %v3733, %v3865
        %v3867 = vpop.f32.mrf.mxu0
        %v3868 = vadd.f32 %v3735, %v3867
        %3869 = vmatmul.bf16.gmra.mxu0 %v2687
        %v3870 = vpop.f32.mrf.mxu0
        %v3871 = vadd.f32 %v3738, %v3870
        %v3872 = vpop.f32.mrf.mxu0
        %v3873 = vadd.f32 %v3740, %v3872
        %3874 = vmatmul.bf16.gmra.mxu0 %v2703
        %v3875 = vpop.f32.mrf.mxu0
        %v3876 = vadd.f32 %v3743, %v3875
        %v3877 = vpop.f32.mrf.mxu0
        %v3878 = vadd.f32 %v3745, %v3877
        %3879 = vmatmul.bf16.gmra.mxu0 %v2719
        %v3880 = vpop.f32.mrf.mxu0
        %v3881 = vadd.f32 %v3748, %v3880
        %v3882 = vpop.f32.mrf.mxu0
        %v3883 = vadd.f32 %v3750, %v3882
        %3884 = vmatmul.bf16.gmra.mxu0 %v2735
        %v3885 = vpop.f32.mrf.mxu0
        %v3886 = vadd.f32 %v3753, %v3885
        %v3887 = vpop.f32.mrf.mxu0
        %v3888 = vadd.f32 %v3755, %v3887
        %3889 = vmatmul.bf16.gmra.mxu0 %v2751
        %v3890 = vpop.f32.mrf.mxu0
        %v3891 = vadd.f32 %v3758, %v3890
        %v3892 = vpop.f32.mrf.mxu0
        %v3893 = vadd.f32 %v3760, %v3892
        %3894 = vmatmul.bf16.gmra.mxu0 %v2767
        %v3895 = vpop.f32.mrf.mxu0
        %v3896 = vadd.f32 %v3763, %v3895
        %v3897 = vpop.f32.mrf.mxu0
        %v3898 = vadd.f32 %v3765, %v3897
        %3899 = vmatmul.bf16.gmra.mxu0 %v2783
        %v3900 = vpop.f32.mrf.mxu0
        %v3901 = vadd.f32 %v3768, %v3900
        %v3902 = vpop.f32.mrf.mxu0
        %v3903 = vadd.f32 %v3770, %v3902
        %3904 = vmatmul.bf16.gmra.mxu0 %v2799
        %v3905 = vpop.f32.mrf.mxu0
        %v3906 = vadd.f32 %v3773, %v3905
        %v3907 = vpop.f32.mrf.mxu0
        %v3908 = vadd.f32 %v3775, %v3907
        %3909 = vmatmul.bf16.gmra.mxu0 %v2815
        %v3910 = vpop.f32.mrf.mxu0
        %v3911 = vadd.f32 %v3778, %v3910
        %v3912 = vpop.f32.mrf.mxu0
        %v3913 = vadd.f32 %v3780, %v3912
        %3914 = vmatmul.bf16.gmra.mxu0 %v2831
        %v3915 = vpop.f32.mrf.mxu0
        %v3916 = vadd.f32 %v3783, %v3915
        %v3917 = vpop.f32.mrf.mxu0
        %v3918 = vadd.f32 %v3785, %v3917
        %3919 = vmatmul.bf16.gmra.mxu0 %v2847
        %v3920 = vpop.f32.mrf.mxu0
        %v3921 = vadd.f32 %v3788, %v3920
        %v3922 = vpop.f32.mrf.mxu0
        %v3923 = vadd.f32 %v3790, %v3922
        %3924 = vmatmul.bf16.gmra.mxu0 %v2863
        %v3925 = vpop.f32.mrf.mxu0
        %v3926 = vadd.f32 %v3793, %v3925
        %v3927 = vpop.f32.mrf.mxu0
        %v3928 = vadd.f32 %v3795, %v3927
        %3929 = vmatmul.bf16.gmra.mxu0 %v2879
        %v3930 = vpop.f32.mrf.mxu0
        %v3931 = vadd.f32 %v3798, %v3930
        %v3932 = vpop.f32.mrf.mxu0
        %v3933 = vadd.f32 %v3800, %v3932
        %3934 = vmatmul.bf16.gmra.mxu0 %v2895
        %v3935 = vpop.f32.mrf.mxu0
        %v3936 = vadd.f32 %v3803, %v3935
        %v3937 = vpop.f32.mrf.mxu0
        %v3938 = vadd.f32 %v3805, %v3937
        %3939 = vmatmul.bf16.gmra.mxu0 %v2911
        %v3940 = vpop.f32.mrf.mxu0
        %v3941 = vadd.f32 %v3808, %v3940
        %v3942 = vpop.f32.mrf.mxu0
        %v3943 = vadd.f32 %v3810, %v3942
        %3944 = vmatmul.bf16.gmra.mxu0 %v2927
        %v3945 = vpop.f32.mrf.mxu0
        %v3946 = vadd.f32 %v3813, %v3945
        %v3947 = vpop.f32.mrf.mxu0
        %v3948 = vadd.f32 %v3815, %v3947
        %3949 = vmatmul.bf16.gmra.mxu0 %v2943
        %v3950 = vpop.f32.mrf.mxu0
        %v3951 = vadd.f32 %v3818, %v3950
        %v3952 = vpop.f32.mrf.mxu0
        %v3953 = vadd.f32 %v3820, %v3952
        %3954 = vmatmul.bf16.gmra.mxu0 %v2959
        %v3955 = vpop.f32.mrf.mxu0
        %v3956 = vadd.f32 %v3823, %v3955
        %v3957 = vpop.f32.mrf.mxu0
        %v3958 = vadd.f32 %v3825, %v3957
        %3959 = vmatmul.bf16.gmra.mxu0 %v2975
        %v3960 = vpop.f32.mrf.mxu0
        %v3961 = vadd.f32 %v3828, %v3960
        %v3962 = vpop.f32.mrf.mxu0
        %v3963 = vadd.f32 %v3830, %v3962
        %3964 = vmatmul.bf16.gmra.mxu0 %v2991
        %v3965 = vpop.f32.mrf.mxu0
        %v3966 = vadd.f32 %v3833, %v3965
        %v3967 = vpop.f32.mrf.mxu0
        %v3968 = vadd.f32 %v3835, %v3967
        %3969 = vmatmul.bf16.gmra.mxu0 %v3007
        %v3970 = vpop.f32.mrf.mxu0
        %v3971 = vadd.f32 %v3838, %v3970
        %v3972 = vpop.f32.mrf.mxu0
        %v3973 = vadd.f32 %v3840, %v3972
        %3974 = vmatmul.bf16.gmra.mxu0 %v3023
        %v3975 = vpop.f32.mrf.mxu0
        %v3976 = vadd.f32 %v3843, %v3975
        %v3977 = vpop.f32.mrf.mxu0
        %v3978 = vadd.f32 %v3845, %v3977
        %3979 = vmatmul.bf16.gmra.mxu0 %v3039
        %v3980 = vpop.f32.mrf.mxu0
        %v3981 = vadd.f32 %v3848, %v3980
        %v3982 = vpop.f32.mrf.mxu0
        %3983 = vdwg.mxu0
        %3984 = vmatpush.bf16.msra.mxu0 %v906
        %3985 = vmatpush.bf16.msra.mxu0 %v904
        %3986 = vmatpush.bf16.msra.mxu0 %v902
        %3987 = vmatpush.bf16.msra.mxu0 %v900
        %3988 = vmatpush.bf16.msra.mxu0 %v898
        %3989 = vmatpush.bf16.msra.mxu0 %v896
        %3990 = vmatpush.bf16.msra.mxu0 %v894
        %3991 = vmatpush.bf16.msra.mxu0 %v892
        %3992 = vmatmul.bf16.gmra.mxu0 %v2656
        %v3993 = vpop.f32.mrf.mxu0
        %v3994 = vadd.f32 %v3861, %v3993
        %v3995 = vpop.f32.mrf.mxu0
        %v3996 = vadd.f32 %v3863, %v3995
        %3997 = vmatmul.bf16.gmra.mxu0 %v2672
        %v3998 = vpop.f32.mrf.mxu0
        %v3999 = vadd.f32 %v3866, %v3998
        %v4000 = vpop.f32.mrf.mxu0
        %v4001 = vadd.f32 %v3868, %v4000
        %4002 = vmatmul.bf16.gmra.mxu0 %v2688
        %v4003 = vpop.f32.mrf.mxu0
        %v4004 = vadd.f32 %v3871, %v4003
        %v4005 = vpop.f32.mrf.mxu0
        %v4006 = vadd.f32 %v3873, %v4005
        %4007 = vmatmul.bf16.gmra.mxu0 %v2704
        %v4008 = vpop.f32.mrf.mxu0
        %v4009 = vadd.f32 %v3876, %v4008
        %v4010 = vpop.f32.mrf.mxu0
        %v4011 = vadd.f32 %v3878, %v4010
        %4012 = vmatmul.bf16.gmra.mxu0 %v2720
        %v4013 = vpop.f32.mrf.mxu0
        %v4014 = vadd.f32 %v3881, %v4013
        %v4015 = vpop.f32.mrf.mxu0
        %v4016 = vadd.f32 %v3883, %v4015
        %4017 = vmatmul.bf16.gmra.mxu0 %v2736
        %v4018 = vpop.f32.mrf.mxu0
        %v4019 = vadd.f32 %v3886, %v4018
        %v4020 = vpop.f32.mrf.mxu0
        %v4021 = vadd.f32 %v3888, %v4020
        %4022 = vmatmul.bf16.gmra.mxu0 %v2752
        %v4023 = vpop.f32.mrf.mxu0
        %v4024 = vadd.f32 %v3891, %v4023
        %v4025 = vpop.f32.mrf.mxu0
        %v4026 = vadd.f32 %v3893, %v4025
        %4027 = vmatmul.bf16.gmra.mxu0 %v2768
        %v4028 = vpop.f32.mrf.mxu0
        %v4029 = vadd.f32 %v3896, %v4028
        %v4030 = vpop.f32.mrf.mxu0
        %v4031 = vadd.f32 %v3898, %v4030
        %4032 = vmatmul.bf16.gmra.mxu0 %v2784
        %v4033 = vpop.f32.mrf.mxu0
        %v4034 = vadd.f32 %v3901, %v4033
        %v4035 = vpop.f32.mrf.mxu0
        %v4036 = vadd.f32 %v3903, %v4035
        %4037 = vmatmul.bf16.gmra.mxu0 %v2800
        %v4038 = vpop.f32.mrf.mxu0
        %v4039 = vadd.f32 %v3906, %v4038
        %v4040 = vpop.f32.mrf.mxu0
        %v4041 = vadd.f32 %v3908, %v4040
        %4042 = vmatmul.bf16.gmra.mxu0 %v2816
        %v4043 = vpop.f32.mrf.mxu0
        %v4044 = vadd.f32 %v3911, %v4043
        %v4045 = vpop.f32.mrf.mxu0
        %v4046 = vadd.f32 %v3913, %v4045
        %4047 = vmatmul.bf16.gmra.mxu0 %v2832
        %v4048 = vpop.f32.mrf.mxu0
        %v4049 = vadd.f32 %v3916, %v4048
        %v4050 = vpop.f32.mrf.mxu0
        %v4051 = vadd.f32 %v3918, %v4050
        %4052 = vmatmul.bf16.gmra.mxu0 %v2848
        %v4053 = vpop.f32.mrf.mxu0
        %v4054 = vadd.f32 %v3921, %v4053
        %v4055 = vpop.f32.mrf.mxu0
        %v4056 = vadd.f32 %v3923, %v4055
        %4057 = vmatmul.bf16.gmra.mxu0 %v2864
        %v4058 = vpop.f32.mrf.mxu0
        %v4059 = vadd.f32 %v3926, %v4058
        %v4060 = vpop.f32.mrf.mxu0
        %v4061 = vadd.f32 %v3928, %v4060
        %4062 = vmatmul.bf16.gmra.mxu0 %v2880
        %v4063 = vpop.f32.mrf.mxu0
        %v4064 = vadd.f32 %v3931, %v4063
        %v4065 = vpop.f32.mrf.mxu0
        %v4066 = vadd.f32 %v3933, %v4065
        %4067 = vmatmul.bf16.gmra.mxu0 %v2896
        %v4068 = vpop.f32.mrf.mxu0
        %v4069 = vadd.f32 %v3936, %v4068
        %v4070 = vpop.f32.mrf.mxu0
        %v4071 = vadd.f32 %v3938, %v4070
        %4072 = vmatmul.bf16.gmra.mxu0 %v2912
        %v4073 = vpop.f32.mrf.mxu0
        %v4074 = vadd.f32 %v3941, %v4073
        %v4075 = vpop.f32.mrf.mxu0
        %v4076 = vadd.f32 %v3943, %v4075
        %4077 = vmatmul.bf16.gmra.mxu0 %v2928
        %v4078 = vpop.f32.mrf.mxu0
        %v4079 = vadd.f32 %v3946, %v4078
        %v4080 = vpop.f32.mrf.mxu0
        %v4081 = vadd.f32 %v3948, %v4080
        %4082 = vmatmul.bf16.gmra.mxu0 %v2944
        %v4083 = vpop.f32.mrf.mxu0
        %v4084 = vadd.f32 %v3951, %v4083
        %v4085 = vpop.f32.mrf.mxu0
        %v4086 = vadd.f32 %v3953, %v4085
        %4087 = vmatmul.bf16.gmra.mxu0 %v2960
        %v4088 = vpop.f32.mrf.mxu0
        %v4089 = vadd.f32 %v3956, %v4088
        %v4090 = vpop.f32.mrf.mxu0
        %v4091 = vadd.f32 %v3958, %v4090
        %4092 = vmatmul.bf16.gmra.mxu0 %v2976
        %v4093 = vpop.f32.mrf.mxu0
        %v4094 = vadd.f32 %v3961, %v4093
        %v4095 = vpop.f32.mrf.mxu0
        %v4096 = vadd.f32 %v3963, %v4095
        %4097 = vmatmul.bf16.gmra.mxu0 %v2992
        %v4098 = vpop.f32.mrf.mxu0
        %v4099 = vadd.f32 %v3966, %v4098
        %v4100 = vpop.f32.mrf.mxu0
        %v4101 = vadd.f32 %v3968, %v4100
        %4102 = vmatmul.bf16.gmra.mxu0 %v3008
        %v4103 = vpop.f32.mrf.mxu0
        %v4104 = vadd.f32 %v3971, %v4103
        %v4105 = vpop.f32.mrf.mxu0
        %v4106 = vadd.f32 %v3973, %v4105
        %4107 = vmatmul.bf16.gmra.mxu0 %v3024
        %v4108 = vpop.f32.mrf.mxu0
        %v4109 = vadd.f32 %v3976, %v4108
        %v4110 = vpop.f32.mrf.mxu0
        %v4111 = vadd.f32 %v3978, %v4110
        %4112 = vmatmul.bf16.gmra.mxu0 %v3040
        %v4113 = vpop.f32.mrf.mxu0
        %v4114 = vadd.f32 %v3981, %v4113
        %v4115 = vpop.f32.mrf.mxu0
        %4116 = vdwg.mxu0
        %4117 = vmatpush.bf16.msra.mxu0 %v922
        %4118 = vmatpush.bf16.msra.mxu0 %v920
        %4119 = vmatpush.bf16.msra.mxu0 %v918
        %4120 = vmatpush.bf16.msra.mxu0 %v916
        %4121 = vmatpush.bf16.msra.mxu0 %v914
        %4122 = vmatpush.bf16.msra.mxu0 %v912
        %4123 = vmatpush.bf16.msra.mxu0 %v910
        %4124 = vmatpush.bf16.msra.mxu0 %v908
        %4125 = vmatmul.bf16.gmra.mxu0 %v2657
        %v4126 = vpop.f32.mrf.mxu0
        %v4127 = vadd.f32 %v3994, %v4126
        %v4128 = vpop.f32.mrf.mxu0
        %v4129 = vadd.f32 %v3996, %v4128
        %4130 = vmatmul.bf16.gmra.mxu0 %v2673
        %v4131 = vpop.f32.mrf.mxu0
        %v4132 = vadd.f32 %v3999, %v4131
        %v4133 = vpop.f32.mrf.mxu0
        %v4134 = vadd.f32 %v4001, %v4133
        %4135 = vmatmul.bf16.gmra.mxu0 %v2689
        %v4136 = vpop.f32.mrf.mxu0
        %v4137 = vadd.f32 %v4004, %v4136
        %v4138 = vpop.f32.mrf.mxu0
        %v4139 = vadd.f32 %v4006, %v4138
        %4140 = vmatmul.bf16.gmra.mxu0 %v2705
        %v4141 = vpop.f32.mrf.mxu0
        %v4142 = vadd.f32 %v4009, %v4141
        %v4143 = vpop.f32.mrf.mxu0
        %v4144 = vadd.f32 %v4011, %v4143
        %4145 = vmatmul.bf16.gmra.mxu0 %v2721
        %v4146 = vpop.f32.mrf.mxu0
        %v4147 = vadd.f32 %v4014, %v4146
        %v4148 = vpop.f32.mrf.mxu0
        %v4149 = vadd.f32 %v4016, %v4148
        %4150 = vmatmul.bf16.gmra.mxu0 %v2737
        %v4151 = vpop.f32.mrf.mxu0
        %v4152 = vadd.f32 %v4019, %v4151
        %v4153 = vpop.f32.mrf.mxu0
        %v4154 = vadd.f32 %v4021, %v4153
        %4155 = vmatmul.bf16.gmra.mxu0 %v2753
        %v4156 = vpop.f32.mrf.mxu0
        %v4157 = vadd.f32 %v4024, %v4156
        %v4158 = vpop.f32.mrf.mxu0
        %v4159 = vadd.f32 %v4026, %v4158
        %4160 = vmatmul.bf16.gmra.mxu0 %v2769
        %v4161 = vpop.f32.mrf.mxu0
        %v4162 = vadd.f32 %v4029, %v4161
        %v4163 = vpop.f32.mrf.mxu0
        %v4164 = vadd.f32 %v4031, %v4163
        %4165 = vmatmul.bf16.gmra.mxu0 %v2785
        %v4166 = vpop.f32.mrf.mxu0
        %v4167 = vadd.f32 %v4034, %v4166
        %v4168 = vpop.f32.mrf.mxu0
        %v4169 = vadd.f32 %v4036, %v4168
        %4170 = vmatmul.bf16.gmra.mxu0 %v2801
        %v4171 = vpop.f32.mrf.mxu0
        %v4172 = vadd.f32 %v4039, %v4171
        %v4173 = vpop.f32.mrf.mxu0
        %v4174 = vadd.f32 %v4041, %v4173
        %4175 = vmatmul.bf16.gmra.mxu0 %v2817
        %v4176 = vpop.f32.mrf.mxu0
        %v4177 = vadd.f32 %v4044, %v4176
        %v4178 = vpop.f32.mrf.mxu0
        %v4179 = vadd.f32 %v4046, %v4178
        %4180 = vmatmul.bf16.gmra.mxu0 %v2833
        %v4181 = vpop.f32.mrf.mxu0
        %v4182 = vadd.f32 %v4049, %v4181
        %v4183 = vpop.f32.mrf.mxu0
        %v4184 = vadd.f32 %v4051, %v4183
        %4185 = vmatmul.bf16.gmra.mxu0 %v2849
        %v4186 = vpop.f32.mrf.mxu0
        %v4187 = vadd.f32 %v4054, %v4186
        %v4188 = vpop.f32.mrf.mxu0
        %v4189 = vadd.f32 %v4056, %v4188
        %4190 = vmatmul.bf16.gmra.mxu0 %v2865
        %v4191 = vpop.f32.mrf.mxu0
        %v4192 = vadd.f32 %v4059, %v4191
        %v4193 = vpop.f32.mrf.mxu0
        %v4194 = vadd.f32 %v4061, %v4193
        %4195 = vmatmul.bf16.gmra.mxu0 %v2881
        %v4196 = vpop.f32.mrf.mxu0
        %v4197 = vadd.f32 %v4064, %v4196
        %v4198 = vpop.f32.mrf.mxu0
        %v4199 = vadd.f32 %v4066, %v4198
        %4200 = vmatmul.bf16.gmra.mxu0 %v2897
        %v4201 = vpop.f32.mrf.mxu0
        %v4202 = vadd.f32 %v4069, %v4201
        %v4203 = vpop.f32.mrf.mxu0
        %v4204 = vadd.f32 %v4071, %v4203
        %4205 = vmatmul.bf16.gmra.mxu0 %v2913
        %v4206 = vpop.f32.mrf.mxu0
        %v4207 = vadd.f32 %v4074, %v4206
        %v4208 = vpop.f32.mrf.mxu0
        %v4209 = vadd.f32 %v4076, %v4208
        %4210 = vmatmul.bf16.gmra.mxu0 %v2929
        %v4211 = vpop.f32.mrf.mxu0
        %v4212 = vadd.f32 %v4079, %v4211
        %v4213 = vpop.f32.mrf.mxu0
        %v4214 = vadd.f32 %v4081, %v4213
        %4215 = vmatmul.bf16.gmra.mxu0 %v2945
        %v4216 = vpop.f32.mrf.mxu0
        %v4217 = vadd.f32 %v4084, %v4216
        %v4218 = vpop.f32.mrf.mxu0
        %v4219 = vadd.f32 %v4086, %v4218
        %4220 = vmatmul.bf16.gmra.mxu0 %v2961
        %v4221 = vpop.f32.mrf.mxu0
        %v4222 = vadd.f32 %v4089, %v4221
        %v4223 = vpop.f32.mrf.mxu0
        %v4224 = vadd.f32 %v4091, %v4223
        %4225 = vmatmul.bf16.gmra.mxu0 %v2977
        %v4226 = vpop.f32.mrf.mxu0
        %v4227 = vadd.f32 %v4094, %v4226
        %v4228 = vpop.f32.mrf.mxu0
        %v4229 = vadd.f32 %v4096, %v4228
        %4230 = vmatmul.bf16.gmra.mxu0 %v2993
        %v4231 = vpop.f32.mrf.mxu0
        %v4232 = vadd.f32 %v4099, %v4231
        %v4233 = vpop.f32.mrf.mxu0
        %v4234 = vadd.f32 %v4101, %v4233
        %4235 = vmatmul.bf16.gmra.mxu0 %v3009
        %v4236 = vpop.f32.mrf.mxu0
        %v4237 = vadd.f32 %v4104, %v4236
        %v4238 = vpop.f32.mrf.mxu0
        %v4239 = vadd.f32 %v4106, %v4238
        %4240 = vmatmul.bf16.gmra.mxu0 %v3025
        %v4241 = vpop.f32.mrf.mxu0
        %v4242 = vadd.f32 %v4109, %v4241
        %v4243 = vpop.f32.mrf.mxu0
        %v4244 = vadd.f32 %v4111, %v4243
        %4245 = vmatmul.bf16.gmra.mxu0 %v3041
        %v4246 = vpop.f32.mrf.mxu0
        %v4247 = vadd.f32 %v4114, %v4246
        %v4248 = vpop.f32.mrf.mxu0
        %4249 = vdwg.mxu0
        %4250 = vmatpush.bf16.msra.mxu0 %v938
        %4251 = vmatpush.bf16.msra.mxu0 %v936
        %4252 = vmatpush.bf16.msra.mxu0 %v934
        %4253 = vmatpush.bf16.msra.mxu0 %v932
        %4254 = vmatpush.bf16.msra.mxu0 %v930
        %4255 = vmatpush.bf16.msra.mxu0 %v928
        %4256 = vmatpush.bf16.msra.mxu0 %v926
        %4257 = vmatpush.bf16.msra.mxu0 %v924
        %4258 = vmatmul.bf16.gmra.mxu0 %v2658
        %v4259 = vpop.f32.mrf.mxu0
        %v4260 = vadd.f32 %v4127, %v4259
        %v4261 = vpop.f32.mrf.mxu0
        %v4262 = vadd.f32 %v4129, %v4261
        %4263 = vmatmul.bf16.gmra.mxu0 %v2674
        %v4264 = vpop.f32.mrf.mxu0
        %v4265 = vadd.f32 %v4132, %v4264
        %v4266 = vpop.f32.mrf.mxu0
        %v4267 = vadd.f32 %v4134, %v4266
        %4268 = vmatmul.bf16.gmra.mxu0 %v2690
        %v4269 = vpop.f32.mrf.mxu0
        %v4270 = vadd.f32 %v4137, %v4269
        %v4271 = vpop.f32.mrf.mxu0
        %v4272 = vadd.f32 %v4139, %v4271
        %4273 = vmatmul.bf16.gmra.mxu0 %v2706
        %v4274 = vpop.f32.mrf.mxu0
        %v4275 = vadd.f32 %v4142, %v4274
        %v4276 = vpop.f32.mrf.mxu0
        %v4277 = vadd.f32 %v4144, %v4276
        %4278 = vmatmul.bf16.gmra.mxu0 %v2722
        %v4279 = vpop.f32.mrf.mxu0
        %v4280 = vadd.f32 %v4147, %v4279
        %v4281 = vpop.f32.mrf.mxu0
        %v4282 = vadd.f32 %v4149, %v4281
        %4283 = vmatmul.bf16.gmra.mxu0 %v2738
        %v4284 = vpop.f32.mrf.mxu0
        %v4285 = vadd.f32 %v4152, %v4284
        %v4286 = vpop.f32.mrf.mxu0
        %v4287 = vadd.f32 %v4154, %v4286
        %4288 = vmatmul.bf16.gmra.mxu0 %v2754
        %v4289 = vpop.f32.mrf.mxu0
        %v4290 = vadd.f32 %v4157, %v4289
        %v4291 = vpop.f32.mrf.mxu0
        %v4292 = vadd.f32 %v4159, %v4291
        %4293 = vmatmul.bf16.gmra.mxu0 %v2770
        %v4294 = vpop.f32.mrf.mxu0
        %v4295 = vadd.f32 %v4162, %v4294
        %v4296 = vpop.f32.mrf.mxu0
        %v4297 = vadd.f32 %v4164, %v4296
        %4298 = vmatmul.bf16.gmra.mxu0 %v2786
        %v4299 = vpop.f32.mrf.mxu0
        %v4300 = vadd.f32 %v4167, %v4299
        %v4301 = vpop.f32.mrf.mxu0
        %v4302 = vadd.f32 %v4169, %v4301
        %4303 = vmatmul.bf16.gmra.mxu0 %v2802
        %v4304 = vpop.f32.mrf.mxu0
        %v4305 = vadd.f32 %v4172, %v4304
        %v4306 = vpop.f32.mrf.mxu0
        %v4307 = vadd.f32 %v4174, %v4306
        %4308 = vmatmul.bf16.gmra.mxu0 %v2818
        %v4309 = vpop.f32.mrf.mxu0
        %v4310 = vadd.f32 %v4177, %v4309
        %v4311 = vpop.f32.mrf.mxu0
        %v4312 = vadd.f32 %v4179, %v4311
        %4313 = vmatmul.bf16.gmra.mxu0 %v2834
        %v4314 = vpop.f32.mrf.mxu0
        %v4315 = vadd.f32 %v4182, %v4314
        %v4316 = vpop.f32.mrf.mxu0
        %v4317 = vadd.f32 %v4184, %v4316
        %4318 = vmatmul.bf16.gmra.mxu0 %v2850
        %v4319 = vpop.f32.mrf.mxu0
        %v4320 = vadd.f32 %v4187, %v4319
        %v4321 = vpop.f32.mrf.mxu0
        %v4322 = vadd.f32 %v4189, %v4321
        %4323 = vmatmul.bf16.gmra.mxu0 %v2866
        %v4324 = vpop.f32.mrf.mxu0
        %v4325 = vadd.f32 %v4192, %v4324
        %v4326 = vpop.f32.mrf.mxu0
        %v4327 = vadd.f32 %v4194, %v4326
        %4328 = vmatmul.bf16.gmra.mxu0 %v2882
        %v4329 = vpop.f32.mrf.mxu0
        %v4330 = vadd.f32 %v4197, %v4329
        %v4331 = vpop.f32.mrf.mxu0
        %v4332 = vadd.f32 %v4199, %v4331
        %4333 = vmatmul.bf16.gmra.mxu0 %v2898
        %v4334 = vpop.f32.mrf.mxu0
        %v4335 = vadd.f32 %v4202, %v4334
        %v4336 = vpop.f32.mrf.mxu0
        %v4337 = vadd.f32 %v4204, %v4336
        %4338 = vmatmul.bf16.gmra.mxu0 %v2914
        %v4339 = vpop.f32.mrf.mxu0
        %v4340 = vadd.f32 %v4207, %v4339
        %v4341 = vpop.f32.mrf.mxu0
        %v4342 = vadd.f32 %v4209, %v4341
        %4343 = vmatmul.bf16.gmra.mxu0 %v2930
        %v4344 = vpop.f32.mrf.mxu0
        %v4345 = vadd.f32 %v4212, %v4344
        %v4346 = vpop.f32.mrf.mxu0
        %v4347 = vadd.f32 %v4214, %v4346
        %4348 = vmatmul.bf16.gmra.mxu0 %v2946
        %v4349 = vpop.f32.mrf.mxu0
        %v4350 = vadd.f32 %v4217, %v4349
        %v4351 = vpop.f32.mrf.mxu0
        %v4352 = vadd.f32 %v4219, %v4351
        %4353 = vmatmul.bf16.gmra.mxu0 %v2962
        %v4354 = vpop.f32.mrf.mxu0
        %v4355 = vadd.f32 %v4222, %v4354
        %v4356 = vpop.f32.mrf.mxu0
        %v4357 = vadd.f32 %v4224, %v4356
        %4358 = vmatmul.bf16.gmra.mxu0 %v2978
        %v4359 = vpop.f32.mrf.mxu0
        %v4360 = vadd.f32 %v4227, %v4359
        %v4361 = vpop.f32.mrf.mxu0
        %v4362 = vadd.f32 %v4229, %v4361
        %4363 = vmatmul.bf16.gmra.mxu0 %v2994
        %v4364 = vpop.f32.mrf.mxu0
        %v4365 = vadd.f32 %v4232, %v4364
        %v4366 = vpop.f32.mrf.mxu0
        %v4367 = vadd.f32 %v4234, %v4366
        %4368 = vmatmul.bf16.gmra.mxu0 %v3010
        %v4369 = vpop.f32.mrf.mxu0
        %v4370 = vadd.f32 %v4237, %v4369
        %v4371 = vpop.f32.mrf.mxu0
        %v4372 = vadd.f32 %v4239, %v4371
        %4373 = vmatmul.bf16.gmra.mxu0 %v3026
        %v4374 = vpop.f32.mrf.mxu0
        %v4375 = vadd.f32 %v4242, %v4374
        %v4376 = vpop.f32.mrf.mxu0
        %v4377 = vadd.f32 %v4244, %v4376
        %4378 = vmatmul.bf16.gmra.mxu0 %v3042
        %v4379 = vpop.f32.mrf.mxu0
        %v4380 = vadd.f32 %v4247, %v4379
        %v4381 = vpop.f32.mrf.mxu0
        %4382 = vdwg.mxu0
        %4383 = vmatpush.bf16.msra.mxu0 %v954
        %4384 = vmatpush.bf16.msra.mxu0 %v952
        %4385 = vmatpush.bf16.msra.mxu0 %v950
        %4386 = vmatpush.bf16.msra.mxu0 %v948
        %4387 = vmatpush.bf16.msra.mxu0 %v946
        %4388 = vmatpush.bf16.msra.mxu0 %v944
        %4389 = vmatpush.bf16.msra.mxu0 %v942
        %4390 = vmatpush.bf16.msra.mxu0 %v940
        %4391 = vmatmul.bf16.gmra.mxu0 %v2659
        %v4392 = vpop.f32.mrf.mxu0
        %v4393 = vadd.f32 %v4260, %v4392
        %v4394 = vpop.f32.mrf.mxu0
        %v4395 = vadd.f32 %v4262, %v4394
        %4396 = vmatmul.bf16.gmra.mxu0 %v2675
        %v4397 = vpop.f32.mrf.mxu0
        %v4398 = vadd.f32 %v4265, %v4397
        %v4399 = vpop.f32.mrf.mxu0
        %v4400 = vadd.f32 %v4267, %v4399
        %4401 = vmatmul.bf16.gmra.mxu0 %v2691
        %v4402 = vpop.f32.mrf.mxu0
        %v4403 = vadd.f32 %v4270, %v4402
        %v4404 = vpop.f32.mrf.mxu0
        %v4405 = vadd.f32 %v4272, %v4404
        %4406 = vmatmul.bf16.gmra.mxu0 %v2707
        %v4407 = vpop.f32.mrf.mxu0
        %v4408 = vadd.f32 %v4275, %v4407
        %v4409 = vpop.f32.mrf.mxu0
        %v4410 = vadd.f32 %v4277, %v4409
        %4411 = vmatmul.bf16.gmra.mxu0 %v2723
        %v4412 = vpop.f32.mrf.mxu0
        %v4413 = vadd.f32 %v4280, %v4412
        %v4414 = vpop.f32.mrf.mxu0
        %v4415 = vadd.f32 %v4282, %v4414
        %4416 = vmatmul.bf16.gmra.mxu0 %v2739
        %v4417 = vpop.f32.mrf.mxu0
        %v4418 = vadd.f32 %v4285, %v4417
        %v4419 = vpop.f32.mrf.mxu0
        %v4420 = vadd.f32 %v4287, %v4419
        %4421 = vmatmul.bf16.gmra.mxu0 %v2755
        %v4422 = vpop.f32.mrf.mxu0
        %v4423 = vadd.f32 %v4290, %v4422
        %v4424 = vpop.f32.mrf.mxu0
        %v4425 = vadd.f32 %v4292, %v4424
        %4426 = vmatmul.bf16.gmra.mxu0 %v2771
        %v4427 = vpop.f32.mrf.mxu0
        %v4428 = vadd.f32 %v4295, %v4427
        %v4429 = vpop.f32.mrf.mxu0
        %v4430 = vadd.f32 %v4297, %v4429
        %4431 = vmatmul.bf16.gmra.mxu0 %v2787
        %v4432 = vpop.f32.mrf.mxu0
        %v4433 = vadd.f32 %v4300, %v4432
        %v4434 = vpop.f32.mrf.mxu0
        %v4435 = vadd.f32 %v4302, %v4434
        %4436 = vmatmul.bf16.gmra.mxu0 %v2803
        %v4437 = vpop.f32.mrf.mxu0
        %v4438 = vadd.f32 %v4305, %v4437
        %v4439 = vpop.f32.mrf.mxu0
        %v4440 = vadd.f32 %v4307, %v4439
        %4441 = vmatmul.bf16.gmra.mxu0 %v2819
        %v4442 = vpop.f32.mrf.mxu0
        %v4443 = vadd.f32 %v4310, %v4442
        %v4444 = vpop.f32.mrf.mxu0
        %v4445 = vadd.f32 %v4312, %v4444
        %4446 = vmatmul.bf16.gmra.mxu0 %v2835
        %v4447 = vpop.f32.mrf.mxu0
        %v4448 = vadd.f32 %v4315, %v4447
        %v4449 = vpop.f32.mrf.mxu0
        %v4450 = vadd.f32 %v4317, %v4449
        %4451 = vmatmul.bf16.gmra.mxu0 %v2851
        %v4452 = vpop.f32.mrf.mxu0
        %v4453 = vadd.f32 %v4320, %v4452
        %v4454 = vpop.f32.mrf.mxu0
        %v4455 = vadd.f32 %v4322, %v4454
        %4456 = vmatmul.bf16.gmra.mxu0 %v2867
        %v4457 = vpop.f32.mrf.mxu0
        %v4458 = vadd.f32 %v4325, %v4457
        %v4459 = vpop.f32.mrf.mxu0
        %v4460 = vadd.f32 %v4327, %v4459
        %4461 = vmatmul.bf16.gmra.mxu0 %v2883
        %v4462 = vpop.f32.mrf.mxu0
        %v4463 = vadd.f32 %v4330, %v4462
        %v4464 = vpop.f32.mrf.mxu0
        %v4465 = vadd.f32 %v4332, %v4464
        %4466 = vmatmul.bf16.gmra.mxu0 %v2899
        %v4467 = vpop.f32.mrf.mxu0
        %v4468 = vadd.f32 %v4335, %v4467
        %v4469 = vpop.f32.mrf.mxu0
        %v4470 = vadd.f32 %v4337, %v4469
        %4471 = vmatmul.bf16.gmra.mxu0 %v2915
        %v4472 = vpop.f32.mrf.mxu0
        %v4473 = vadd.f32 %v4340, %v4472
        %v4474 = vpop.f32.mrf.mxu0
        %v4475 = vadd.f32 %v4342, %v4474
        %4476 = vmatmul.bf16.gmra.mxu0 %v2931
        %v4477 = vpop.f32.mrf.mxu0
        %v4478 = vadd.f32 %v4345, %v4477
        %v4479 = vpop.f32.mrf.mxu0
        %v4480 = vadd.f32 %v4347, %v4479
        %4481 = vmatmul.bf16.gmra.mxu0 %v2947
        %v4482 = vpop.f32.mrf.mxu0
        %v4483 = vadd.f32 %v4350, %v4482
        %v4484 = vpop.f32.mrf.mxu0
        %v4485 = vadd.f32 %v4352, %v4484
        %4486 = vmatmul.bf16.gmra.mxu0 %v2963
        %v4487 = vpop.f32.mrf.mxu0
        %v4488 = vadd.f32 %v4355, %v4487
        %v4489 = vpop.f32.mrf.mxu0
        %v4490 = vadd.f32 %v4357, %v4489
        %4491 = vmatmul.bf16.gmra.mxu0 %v2979
        %v4492 = vpop.f32.mrf.mxu0
        %v4493 = vadd.f32 %v4360, %v4492
        %v4494 = vpop.f32.mrf.mxu0
        %v4495 = vadd.f32 %v4362, %v4494
        %4496 = vmatmul.bf16.gmra.mxu0 %v2995
        %v4497 = vpop.f32.mrf.mxu0
        %v4498 = vadd.f32 %v4365, %v4497
        %v4499 = vpop.f32.mrf.mxu0
        %v4500 = vadd.f32 %v4367, %v4499
        %4501 = vmatmul.bf16.gmra.mxu0 %v3011
        %v4502 = vpop.f32.mrf.mxu0
        %v4503 = vadd.f32 %v4370, %v4502
        %v4504 = vpop.f32.mrf.mxu0
        %v4505 = vadd.f32 %v4372, %v4504
        %4506 = vmatmul.bf16.gmra.mxu0 %v3027
        %v4507 = vpop.f32.mrf.mxu0
        %v4508 = vadd.f32 %v4375, %v4507
        %v4509 = vpop.f32.mrf.mxu0
        %v4510 = vadd.f32 %v4377, %v4509
        %4511 = vmatmul.bf16.gmra.mxu0 %v3043
        %v4512 = vpop.f32.mrf.mxu0
        %v4513 = vadd.f32 %v4380, %v4512
        %v4514 = vpop.f32.mrf.mxu0
        %4515 = vdwg.mxu0
        %4516 = vmatpush.bf16.msra.mxu0 %v970
        %4517 = vmatpush.bf16.msra.mxu0 %v968
        %4518 = vmatpush.bf16.msra.mxu0 %v966
        %4519 = vmatpush.bf16.msra.mxu0 %v964
        %4520 = vmatpush.bf16.msra.mxu0 %v962
        %4521 = vmatpush.bf16.msra.mxu0 %v960
        %4522 = vmatpush.bf16.msra.mxu0 %v958
        %4523 = vmatpush.bf16.msra.mxu0 %v956
        %4524 = vmatmul.bf16.gmra.mxu0 %v2660
        %v4525 = vpop.f32.mrf.mxu0
        %v4526 = vadd.f32 %v4393, %v4525
        %v4527 = vpop.f32.mrf.mxu0
        %v4528 = vadd.f32 %v4395, %v4527
        %4529 = vmatmul.bf16.gmra.mxu0 %v2676
        %v4530 = vpop.f32.mrf.mxu0
        %v4531 = vadd.f32 %v4398, %v4530
        %v4532 = vpop.f32.mrf.mxu0
        %v4533 = vadd.f32 %v4400, %v4532
        %4534 = vmatmul.bf16.gmra.mxu0 %v2692
        %v4535 = vpop.f32.mrf.mxu0
        %v4536 = vadd.f32 %v4403, %v4535
        %v4537 = vpop.f32.mrf.mxu0
        %v4538 = vadd.f32 %v4405, %v4537
        %4539 = vmatmul.bf16.gmra.mxu0 %v2708
        %v4540 = vpop.f32.mrf.mxu0
        %v4541 = vadd.f32 %v4408, %v4540
        %v4542 = vpop.f32.mrf.mxu0
        %v4543 = vadd.f32 %v4410, %v4542
        %4544 = vmatmul.bf16.gmra.mxu0 %v2724
        %v4545 = vpop.f32.mrf.mxu0
        %v4546 = vadd.f32 %v4413, %v4545
        %v4547 = vpop.f32.mrf.mxu0
        %v4548 = vadd.f32 %v4415, %v4547
        %4549 = vmatmul.bf16.gmra.mxu0 %v2740
        %v4550 = vpop.f32.mrf.mxu0
        %v4551 = vadd.f32 %v4418, %v4550
        %v4552 = vpop.f32.mrf.mxu0
        %v4553 = vadd.f32 %v4420, %v4552
        %4554 = vmatmul.bf16.gmra.mxu0 %v2756
        %v4555 = vpop.f32.mrf.mxu0
        %v4556 = vadd.f32 %v4423, %v4555
        %v4557 = vpop.f32.mrf.mxu0
        %v4558 = vadd.f32 %v4425, %v4557
        %4559 = vmatmul.bf16.gmra.mxu0 %v2772
        %v4560 = vpop.f32.mrf.mxu0
        %v4561 = vadd.f32 %v4428, %v4560
        %v4562 = vpop.f32.mrf.mxu0
        %v4563 = vadd.f32 %v4430, %v4562
        %4564 = vmatmul.bf16.gmra.mxu0 %v2788
        %v4565 = vpop.f32.mrf.mxu0
        %v4566 = vadd.f32 %v4433, %v4565
        %v4567 = vpop.f32.mrf.mxu0
        %v4568 = vadd.f32 %v4435, %v4567
        %4569 = vmatmul.bf16.gmra.mxu0 %v2804
        %v4570 = vpop.f32.mrf.mxu0
        %v4571 = vadd.f32 %v4438, %v4570
        %v4572 = vpop.f32.mrf.mxu0
        %v4573 = vadd.f32 %v4440, %v4572
        %4574 = vmatmul.bf16.gmra.mxu0 %v2820
        %v4575 = vpop.f32.mrf.mxu0
        %v4576 = vadd.f32 %v4443, %v4575
        %v4577 = vpop.f32.mrf.mxu0
        %v4578 = vadd.f32 %v4445, %v4577
        %4579 = vmatmul.bf16.gmra.mxu0 %v2836
        %v4580 = vpop.f32.mrf.mxu0
        %v4581 = vadd.f32 %v4448, %v4580
        %v4582 = vpop.f32.mrf.mxu0
        %v4583 = vadd.f32 %v4450, %v4582
        %4584 = vmatmul.bf16.gmra.mxu0 %v2852
        %v4585 = vpop.f32.mrf.mxu0
        %v4586 = vadd.f32 %v4453, %v4585
        %v4587 = vpop.f32.mrf.mxu0
        %v4588 = vadd.f32 %v4455, %v4587
        %4589 = vmatmul.bf16.gmra.mxu0 %v2868
        %v4590 = vpop.f32.mrf.mxu0
        %v4591 = vadd.f32 %v4458, %v4590
        %v4592 = vpop.f32.mrf.mxu0
        %v4593 = vadd.f32 %v4460, %v4592
        %4594 = vmatmul.bf16.gmra.mxu0 %v2884
        %v4595 = vpop.f32.mrf.mxu0
        %v4596 = vadd.f32 %v4463, %v4595
        %v4597 = vpop.f32.mrf.mxu0
        %v4598 = vadd.f32 %v4465, %v4597
        %4599 = vmatmul.bf16.gmra.mxu0 %v2900
        %v4600 = vpop.f32.mrf.mxu0
        %v4601 = vadd.f32 %v4468, %v4600
        %v4602 = vpop.f32.mrf.mxu0
        %v4603 = vadd.f32 %v4470, %v4602
        %4604 = vmatmul.bf16.gmra.mxu0 %v2916
        %v4605 = vpop.f32.mrf.mxu0
        %v4606 = vadd.f32 %v4473, %v4605
        %v4607 = vpop.f32.mrf.mxu0
        %v4608 = vadd.f32 %v4475, %v4607
        %4609 = vmatmul.bf16.gmra.mxu0 %v2932
        %v4610 = vpop.f32.mrf.mxu0
        %v4611 = vadd.f32 %v4478, %v4610
        %v4612 = vpop.f32.mrf.mxu0
        %v4613 = vadd.f32 %v4480, %v4612
        %4614 = vmatmul.bf16.gmra.mxu0 %v2948
        %v4615 = vpop.f32.mrf.mxu0
        %v4616 = vadd.f32 %v4483, %v4615
        %v4617 = vpop.f32.mrf.mxu0
        %v4618 = vadd.f32 %v4485, %v4617
        %4619 = vmatmul.bf16.gmra.mxu0 %v2964
        %v4620 = vpop.f32.mrf.mxu0
        %v4621 = vadd.f32 %v4488, %v4620
        %v4622 = vpop.f32.mrf.mxu0
        %v4623 = vadd.f32 %v4490, %v4622
        %4624 = vmatmul.bf16.gmra.mxu0 %v2980
        %v4625 = vpop.f32.mrf.mxu0
        %v4626 = vadd.f32 %v4493, %v4625
        %v4627 = vpop.f32.mrf.mxu0
        %v4628 = vadd.f32 %v4495, %v4627
        %4629 = vmatmul.bf16.gmra.mxu0 %v2996
        %v4630 = vpop.f32.mrf.mxu0
        %v4631 = vadd.f32 %v4498, %v4630
        %v4632 = vpop.f32.mrf.mxu0
        %v4633 = vadd.f32 %v4500, %v4632
        %4634 = vmatmul.bf16.gmra.mxu0 %v3012
        %v4635 = vpop.f32.mrf.mxu0
        %v4636 = vadd.f32 %v4503, %v4635
        %v4637 = vpop.f32.mrf.mxu0
        %v4638 = vadd.f32 %v4505, %v4637
        %4639 = vmatmul.bf16.gmra.mxu0 %v3028
        %v4640 = vpop.f32.mrf.mxu0
        %v4641 = vadd.f32 %v4508, %v4640
        %v4642 = vpop.f32.mrf.mxu0
        %v4643 = vadd.f32 %v4510, %v4642
        %4644 = vmatmul.bf16.gmra.mxu0 %v3044
        %v4645 = vpop.f32.mrf.mxu0
        %v4646 = vadd.f32 %v4513, %v4645
        %v4647 = vpop.f32.mrf.mxu0
        %4648 = vdwg.mxu0
        %4649 = vmatpush.bf16.msra.mxu0 %v986
        %4650 = vmatpush.bf16.msra.mxu0 %v984
        %4651 = vmatpush.bf16.msra.mxu0 %v982
        %4652 = vmatpush.bf16.msra.mxu0 %v980
        %4653 = vmatpush.bf16.msra.mxu0 %v978
        %4654 = vmatpush.bf16.msra.mxu0 %v976
        %4655 = vmatpush.bf16.msra.mxu0 %v974
        %4656 = vmatpush.bf16.msra.mxu0 %v972
        %4657 = vmatmul.bf16.gmra.mxu0 %v2661
        %v4658 = vpop.f32.mrf.mxu0
        %v4659 = vadd.f32 %v4526, %v4658
        %v4660 = vpop.f32.mrf.mxu0
        %v4661 = vadd.f32 %v4528, %v4660
        %4662 = vmatmul.bf16.gmra.mxu0 %v2677
        %v4663 = vpop.f32.mrf.mxu0
        %v4664 = vadd.f32 %v4531, %v4663
        %v4665 = vpop.f32.mrf.mxu0
        %v4666 = vadd.f32 %v4533, %v4665
        %4667 = vmatmul.bf16.gmra.mxu0 %v2693
        %v4668 = vpop.f32.mrf.mxu0
        %v4669 = vadd.f32 %v4536, %v4668
        %v4670 = vpop.f32.mrf.mxu0
        %v4671 = vadd.f32 %v4538, %v4670
        %4672 = vmatmul.bf16.gmra.mxu0 %v2709
        %v4673 = vpop.f32.mrf.mxu0
        %v4674 = vadd.f32 %v4541, %v4673
        %v4675 = vpop.f32.mrf.mxu0
        %v4676 = vadd.f32 %v4543, %v4675
        %4677 = vmatmul.bf16.gmra.mxu0 %v2725
        %v4678 = vpop.f32.mrf.mxu0
        %v4679 = vadd.f32 %v4546, %v4678
        %v4680 = vpop.f32.mrf.mxu0
        %v4681 = vadd.f32 %v4548, %v4680
        %4682 = vmatmul.bf16.gmra.mxu0 %v2741
        %v4683 = vpop.f32.mrf.mxu0
        %v4684 = vadd.f32 %v4551, %v4683
        %v4685 = vpop.f32.mrf.mxu0
        %v4686 = vadd.f32 %v4553, %v4685
        %4687 = vmatmul.bf16.gmra.mxu0 %v2757
        %v4688 = vpop.f32.mrf.mxu0
        %v4689 = vadd.f32 %v4556, %v4688
        %v4690 = vpop.f32.mrf.mxu0
        %v4691 = vadd.f32 %v4558, %v4690
        %4692 = vmatmul.bf16.gmra.mxu0 %v2773
        %v4693 = vpop.f32.mrf.mxu0
        %v4694 = vadd.f32 %v4561, %v4693
        %v4695 = vpop.f32.mrf.mxu0
        %v4696 = vadd.f32 %v4563, %v4695
        %4697 = vmatmul.bf16.gmra.mxu0 %v2789
        %v4698 = vpop.f32.mrf.mxu0
        %v4699 = vadd.f32 %v4566, %v4698
        %v4700 = vpop.f32.mrf.mxu0
        %v4701 = vadd.f32 %v4568, %v4700
        %4702 = vmatmul.bf16.gmra.mxu0 %v2805
        %v4703 = vpop.f32.mrf.mxu0
        %v4704 = vadd.f32 %v4571, %v4703
        %v4705 = vpop.f32.mrf.mxu0
        %v4706 = vadd.f32 %v4573, %v4705
        %4707 = vmatmul.bf16.gmra.mxu0 %v2821
        %v4708 = vpop.f32.mrf.mxu0
        %v4709 = vadd.f32 %v4576, %v4708
        %v4710 = vpop.f32.mrf.mxu0
        %v4711 = vadd.f32 %v4578, %v4710
        %4712 = vmatmul.bf16.gmra.mxu0 %v2837
        %v4713 = vpop.f32.mrf.mxu0
        %v4714 = vadd.f32 %v4581, %v4713
        %v4715 = vpop.f32.mrf.mxu0
        %v4716 = vadd.f32 %v4583, %v4715
        %4717 = vmatmul.bf16.gmra.mxu0 %v2853
        %v4718 = vpop.f32.mrf.mxu0
        %v4719 = vadd.f32 %v4586, %v4718
        %v4720 = vpop.f32.mrf.mxu0
        %v4721 = vadd.f32 %v4588, %v4720
        %4722 = vmatmul.bf16.gmra.mxu0 %v2869
        %v4723 = vpop.f32.mrf.mxu0
        %v4724 = vadd.f32 %v4591, %v4723
        %v4725 = vpop.f32.mrf.mxu0
        %v4726 = vadd.f32 %v4593, %v4725
        %4727 = vmatmul.bf16.gmra.mxu0 %v2885
        %v4728 = vpop.f32.mrf.mxu0
        %v4729 = vadd.f32 %v4596, %v4728
        %v4730 = vpop.f32.mrf.mxu0
        %v4731 = vadd.f32 %v4598, %v4730
        %4732 = vmatmul.bf16.gmra.mxu0 %v2901
        %v4733 = vpop.f32.mrf.mxu0
        %v4734 = vadd.f32 %v4601, %v4733
        %v4735 = vpop.f32.mrf.mxu0
        %v4736 = vadd.f32 %v4603, %v4735
        %4737 = vmatmul.bf16.gmra.mxu0 %v2917
        %v4738 = vpop.f32.mrf.mxu0
        %v4739 = vadd.f32 %v4606, %v4738
        %v4740 = vpop.f32.mrf.mxu0
        %v4741 = vadd.f32 %v4608, %v4740
        %4742 = vmatmul.bf16.gmra.mxu0 %v2933
        %v4743 = vpop.f32.mrf.mxu0
        %v4744 = vadd.f32 %v4611, %v4743
        %v4745 = vpop.f32.mrf.mxu0
        %v4746 = vadd.f32 %v4613, %v4745
        %4747 = vmatmul.bf16.gmra.mxu0 %v2949
        %v4748 = vpop.f32.mrf.mxu0
        %v4749 = vadd.f32 %v4616, %v4748
        %v4750 = vpop.f32.mrf.mxu0
        %v4751 = vadd.f32 %v4618, %v4750
        %4752 = vmatmul.bf16.gmra.mxu0 %v2965
        %v4753 = vpop.f32.mrf.mxu0
        %v4754 = vadd.f32 %v4621, %v4753
        %v4755 = vpop.f32.mrf.mxu0
        %v4756 = vadd.f32 %v4623, %v4755
        %4757 = vmatmul.bf16.gmra.mxu0 %v2981
        %v4758 = vpop.f32.mrf.mxu0
        %v4759 = vadd.f32 %v4626, %v4758
        %v4760 = vpop.f32.mrf.mxu0
        %v4761 = vadd.f32 %v4628, %v4760
        %4762 = vmatmul.bf16.gmra.mxu0 %v2997
        %v4763 = vpop.f32.mrf.mxu0
        %v4764 = vadd.f32 %v4631, %v4763
        %v4765 = vpop.f32.mrf.mxu0
        %v4766 = vadd.f32 %v4633, %v4765
        %4767 = vmatmul.bf16.gmra.mxu0 %v3013
        %v4768 = vpop.f32.mrf.mxu0
        %v4769 = vadd.f32 %v4636, %v4768
        %v4770 = vpop.f32.mrf.mxu0
        %v4771 = vadd.f32 %v4638, %v4770
        %4772 = vmatmul.bf16.gmra.mxu0 %v3029
        %v4773 = vpop.f32.mrf.mxu0
        %v4774 = vadd.f32 %v4641, %v4773
        %v4775 = vpop.f32.mrf.mxu0
        %v4776 = vadd.f32 %v4643, %v4775
        %4777 = vmatmul.bf16.gmra.mxu0 %v3045
        %v4778 = vpop.f32.mrf.mxu0
        %v4779 = vadd.f32 %v4646, %v4778
        %v4780 = vpop.f32.mrf.mxu0
        %4781 = vdwg.mxu0
        %4782 = vmatpush.bf16.msra.mxu0 %v1002
        %4783 = vmatpush.bf16.msra.mxu0 %v1000
        %4784 = vmatpush.bf16.msra.mxu0 %v998
        %4785 = vmatpush.bf16.msra.mxu0 %v996
        %4786 = vmatpush.bf16.msra.mxu0 %v994
        %4787 = vmatpush.bf16.msra.mxu0 %v992
        %4788 = vmatpush.bf16.msra.mxu0 %v990
        %4789 = vmatpush.bf16.msra.mxu0 %v988
        %4790 = vmatmul.bf16.gmra.mxu0 %v2662
        %v4791 = vpop.f32.mrf.mxu0
        %v4792 = vadd.f32 %v4659, %v4791
        %v4793 = vpop.f32.mrf.mxu0
        %v4794 = vadd.f32 %v4661, %v4793
        %4795 = vmatmul.bf16.gmra.mxu0 %v2678
        %v4796 = vpop.f32.mrf.mxu0
        %v4797 = vadd.f32 %v4664, %v4796
        %v4798 = vpop.f32.mrf.mxu0
        %v4799 = vadd.f32 %v4666, %v4798
        %4800 = vmatmul.bf16.gmra.mxu0 %v2694
        %v4801 = vpop.f32.mrf.mxu0
        %v4802 = vadd.f32 %v4669, %v4801
        %v4803 = vpop.f32.mrf.mxu0
        %v4804 = vadd.f32 %v4671, %v4803
        %4805 = vmatmul.bf16.gmra.mxu0 %v2710
        %v4806 = vpop.f32.mrf.mxu0
        %v4807 = vadd.f32 %v4674, %v4806
        %v4808 = vpop.f32.mrf.mxu0
        %v4809 = vadd.f32 %v4676, %v4808
        %4810 = vmatmul.bf16.gmra.mxu0 %v2726
        %v4811 = vpop.f32.mrf.mxu0
        %v4812 = vadd.f32 %v4679, %v4811
        %v4813 = vpop.f32.mrf.mxu0
        %v4814 = vadd.f32 %v4681, %v4813
        %4815 = vmatmul.bf16.gmra.mxu0 %v2742
        %v4816 = vpop.f32.mrf.mxu0
        %v4817 = vadd.f32 %v4684, %v4816
        %v4818 = vpop.f32.mrf.mxu0
        %v4819 = vadd.f32 %v4686, %v4818
        %4820 = vmatmul.bf16.gmra.mxu0 %v2758
        %v4821 = vpop.f32.mrf.mxu0
        %v4822 = vadd.f32 %v4689, %v4821
        %v4823 = vpop.f32.mrf.mxu0
        %v4824 = vadd.f32 %v4691, %v4823
        %4825 = vmatmul.bf16.gmra.mxu0 %v2774
        %v4826 = vpop.f32.mrf.mxu0
        %v4827 = vadd.f32 %v4694, %v4826
        %v4828 = vpop.f32.mrf.mxu0
        %v4829 = vadd.f32 %v4696, %v4828
        %4830 = vmatmul.bf16.gmra.mxu0 %v2790
        %v4831 = vpop.f32.mrf.mxu0
        %v4832 = vadd.f32 %v4699, %v4831
        %v4833 = vpop.f32.mrf.mxu0
        %v4834 = vadd.f32 %v4701, %v4833
        %4835 = vmatmul.bf16.gmra.mxu0 %v2806
        %v4836 = vpop.f32.mrf.mxu0
        %v4837 = vadd.f32 %v4704, %v4836
        %v4838 = vpop.f32.mrf.mxu0
        %v4839 = vadd.f32 %v4706, %v4838
        %4840 = vmatmul.bf16.gmra.mxu0 %v2822
        %v4841 = vpop.f32.mrf.mxu0
        %v4842 = vadd.f32 %v4709, %v4841
        %v4843 = vpop.f32.mrf.mxu0
        %v4844 = vadd.f32 %v4711, %v4843
        %4845 = vmatmul.bf16.gmra.mxu0 %v2838
        %v4846 = vpop.f32.mrf.mxu0
        %v4847 = vadd.f32 %v4714, %v4846
        %v4848 = vpop.f32.mrf.mxu0
        %v4849 = vadd.f32 %v4716, %v4848
        %4850 = vmatmul.bf16.gmra.mxu0 %v2854
        %v4851 = vpop.f32.mrf.mxu0
        %v4852 = vadd.f32 %v4719, %v4851
        %v4853 = vpop.f32.mrf.mxu0
        %v4854 = vadd.f32 %v4721, %v4853
        %4855 = vmatmul.bf16.gmra.mxu0 %v2870
        %v4856 = vpop.f32.mrf.mxu0
        %v4857 = vadd.f32 %v4724, %v4856
        %v4858 = vpop.f32.mrf.mxu0
        %v4859 = vadd.f32 %v4726, %v4858
        %4860 = vmatmul.bf16.gmra.mxu0 %v2886
        %v4861 = vpop.f32.mrf.mxu0
        %v4862 = vadd.f32 %v4729, %v4861
        %v4863 = vpop.f32.mrf.mxu0
        %v4864 = vadd.f32 %v4731, %v4863
        %4865 = vmatmul.bf16.gmra.mxu0 %v2902
        %v4866 = vpop.f32.mrf.mxu0
        %v4867 = vadd.f32 %v4734, %v4866
        %v4868 = vpop.f32.mrf.mxu0
        %v4869 = vadd.f32 %v4736, %v4868
        %4870 = vmatmul.bf16.gmra.mxu0 %v2918
        %v4871 = vpop.f32.mrf.mxu0
        %v4872 = vadd.f32 %v4739, %v4871
        %v4873 = vpop.f32.mrf.mxu0
        %v4874 = vadd.f32 %v4741, %v4873
        %4875 = vmatmul.bf16.gmra.mxu0 %v2934
        %v4876 = vpop.f32.mrf.mxu0
        %v4877 = vadd.f32 %v4744, %v4876
        %v4878 = vpop.f32.mrf.mxu0
        %v4879 = vadd.f32 %v4746, %v4878
        %4880 = vmatmul.bf16.gmra.mxu0 %v2950
        %v4881 = vpop.f32.mrf.mxu0
        %v4882 = vadd.f32 %v4749, %v4881
        %v4883 = vpop.f32.mrf.mxu0
        %v4884 = vadd.f32 %v4751, %v4883
        %4885 = vmatmul.bf16.gmra.mxu0 %v2966
        %v4886 = vpop.f32.mrf.mxu0
        %v4887 = vadd.f32 %v4754, %v4886
        %v4888 = vpop.f32.mrf.mxu0
        %v4889 = vadd.f32 %v4756, %v4888
        %4890 = vmatmul.bf16.gmra.mxu0 %v2982
        %v4891 = vpop.f32.mrf.mxu0
        %v4892 = vadd.f32 %v4759, %v4891
        %v4893 = vpop.f32.mrf.mxu0
        %v4894 = vadd.f32 %v4761, %v4893
        %4895 = vmatmul.bf16.gmra.mxu0 %v2998
        %v4896 = vpop.f32.mrf.mxu0
        %v4897 = vadd.f32 %v4764, %v4896
        %v4898 = vpop.f32.mrf.mxu0
        %v4899 = vadd.f32 %v4766, %v4898
        %4900 = vmatmul.bf16.gmra.mxu0 %v3014
        %v4901 = vpop.f32.mrf.mxu0
        %v4902 = vadd.f32 %v4769, %v4901
        %v4903 = vpop.f32.mrf.mxu0
        %v4904 = vadd.f32 %v4771, %v4903
        %4905 = vmatmul.bf16.gmra.mxu0 %v3030
        %v4906 = vpop.f32.mrf.mxu0
        %v4907 = vadd.f32 %v4774, %v4906
        %v4908 = vpop.f32.mrf.mxu0
        %v4909 = vadd.f32 %v4776, %v4908
        %4910 = vmatmul.bf16.gmra.mxu0 %v3046
        %v4911 = vpop.f32.mrf.mxu0
        %v4912 = vadd.f32 %v4779, %v4911
        %v4913 = vpop.f32.mrf.mxu0
        %4914 = vdwg.mxu0
        %4915 = vmatpush.bf16.msra.mxu0 %v1018
        %4916 = vmatpush.bf16.msra.mxu0 %v1016
        %4917 = vmatpush.bf16.msra.mxu0 %v1014
        %4918 = vmatpush.bf16.msra.mxu0 %v1012
        %4919 = vmatpush.bf16.msra.mxu0 %v1010
        %4920 = vmatpush.bf16.msra.mxu0 %v1008
        %4921 = vmatpush.bf16.msra.mxu0 %v1006
        %4922 = vmatpush.bf16.msra.mxu0 %v1004
        %4923 = vmatmul.bf16.gmra.mxu0 %v2663
        %v4924 = vpop.f32.mrf.mxu0
        %v4925 = vadd.f32 %v4792, %v4924
        %v4926 = vpop.f32.mrf.mxu0
        %v4927 = vadd.f32 %v4794, %v4926
        %4928 = vmatmul.bf16.gmra.mxu0 %v2679
        %v4929 = vpop.f32.mrf.mxu0
        %v4930 = vadd.f32 %v4797, %v4929
        %v4931 = vpop.f32.mrf.mxu0
        %v4932 = vadd.f32 %v4799, %v4931
        %4933 = vmatmul.bf16.gmra.mxu0 %v2695
        %v4934 = vpop.f32.mrf.mxu0
        %v4935 = vadd.f32 %v4802, %v4934
        %v4936 = vpop.f32.mrf.mxu0
        %v4937 = vadd.f32 %v4804, %v4936
        %4938 = vmatmul.bf16.gmra.mxu0 %v2711
        %v4939 = vpop.f32.mrf.mxu0
        %v4940 = vadd.f32 %v4807, %v4939
        %v4941 = vpop.f32.mrf.mxu0
        %v4942 = vadd.f32 %v4809, %v4941
        %4943 = vmatmul.bf16.gmra.mxu0 %v2727
        %v4944 = vpop.f32.mrf.mxu0
        %v4945 = vadd.f32 %v4812, %v4944
        %v4946 = vpop.f32.mrf.mxu0
        %v4947 = vadd.f32 %v4814, %v4946
        %4948 = vmatmul.bf16.gmra.mxu0 %v2743
        %v4949 = vpop.f32.mrf.mxu0
        %v4950 = vadd.f32 %v4817, %v4949
        %v4951 = vpop.f32.mrf.mxu0
        %v4952 = vadd.f32 %v4819, %v4951
        %4953 = vmatmul.bf16.gmra.mxu0 %v2759
        %v4954 = vpop.f32.mrf.mxu0
        %v4955 = vadd.f32 %v4822, %v4954
        %v4956 = vpop.f32.mrf.mxu0
        %v4957 = vadd.f32 %v4824, %v4956
        %4958 = vmatmul.bf16.gmra.mxu0 %v2775
        %v4959 = vpop.f32.mrf.mxu0
        %v4960 = vadd.f32 %v4827, %v4959
        %v4961 = vpop.f32.mrf.mxu0
        %v4962 = vadd.f32 %v4829, %v4961
        %4963 = vmatmul.bf16.gmra.mxu0 %v2791
        %v4964 = vpop.f32.mrf.mxu0
        %v4965 = vadd.f32 %v4832, %v4964
        %v4966 = vpop.f32.mrf.mxu0
        %v4967 = vadd.f32 %v4834, %v4966
        %4968 = vmatmul.bf16.gmra.mxu0 %v2807
        %v4969 = vpop.f32.mrf.mxu0
        %v4970 = vadd.f32 %v4837, %v4969
        %v4971 = vpop.f32.mrf.mxu0
        %v4972 = vadd.f32 %v4839, %v4971
        %4973 = vmatmul.bf16.gmra.mxu0 %v2823
        %v4974 = vpop.f32.mrf.mxu0
        %v4975 = vadd.f32 %v4842, %v4974
        %v4976 = vpop.f32.mrf.mxu0
        %v4977 = vadd.f32 %v4844, %v4976
        %4978 = vmatmul.bf16.gmra.mxu0 %v2839
        %v4979 = vpop.f32.mrf.mxu0
        %v4980 = vadd.f32 %v4847, %v4979
        %v4981 = vpop.f32.mrf.mxu0
        %v4982 = vadd.f32 %v4849, %v4981
        %4983 = vmatmul.bf16.gmra.mxu0 %v2855
        %v4984 = vpop.f32.mrf.mxu0
        %v4985 = vadd.f32 %v4852, %v4984
        %v4986 = vpop.f32.mrf.mxu0
        %v4987 = vadd.f32 %v4854, %v4986
        %4988 = vmatmul.bf16.gmra.mxu0 %v2871
        %v4989 = vpop.f32.mrf.mxu0
        %v4990 = vadd.f32 %v4857, %v4989
        %v4991 = vpop.f32.mrf.mxu0
        %v4992 = vadd.f32 %v4859, %v4991
        %4993 = vmatmul.bf16.gmra.mxu0 %v2887
        %v4994 = vpop.f32.mrf.mxu0
        %v4995 = vadd.f32 %v4862, %v4994
        %v4996 = vpop.f32.mrf.mxu0
        %v4997 = vadd.f32 %v4864, %v4996
        %4998 = vmatmul.bf16.gmra.mxu0 %v2903
        %v4999 = vpop.f32.mrf.mxu0
        %v5000 = vadd.f32 %v4867, %v4999
        %v5001 = vpop.f32.mrf.mxu0
        %v5002 = vadd.f32 %v4869, %v5001
        %5003 = vmatmul.bf16.gmra.mxu0 %v2919
        %v5004 = vpop.f32.mrf.mxu0
        %v5005 = vadd.f32 %v4872, %v5004
        %v5006 = vpop.f32.mrf.mxu0
        %v5007 = vadd.f32 %v4874, %v5006
        %5008 = vmatmul.bf16.gmra.mxu0 %v2935
        %v5009 = vpop.f32.mrf.mxu0
        %v5010 = vadd.f32 %v4877, %v5009
        %v5011 = vpop.f32.mrf.mxu0
        %v5012 = vadd.f32 %v4879, %v5011
        %5013 = vmatmul.bf16.gmra.mxu0 %v2951
        %v5014 = vpop.f32.mrf.mxu0
        %v5015 = vadd.f32 %v4882, %v5014
        %v5016 = vpop.f32.mrf.mxu0
        %v5017 = vadd.f32 %v4884, %v5016
        %5018 = vmatmul.bf16.gmra.mxu0 %v2967
        %v5019 = vpop.f32.mrf.mxu0
        %v5020 = vadd.f32 %v4887, %v5019
        %v5021 = vpop.f32.mrf.mxu0
        %v5022 = vadd.f32 %v4889, %v5021
        %5023 = vmatmul.bf16.gmra.mxu0 %v2983
        %v5024 = vpop.f32.mrf.mxu0
        %v5025 = vadd.f32 %v4892, %v5024
        %v5026 = vpop.f32.mrf.mxu0
        %v5027 = vadd.f32 %v4894, %v5026
        %5028 = vmatmul.bf16.gmra.mxu0 %v2999
        %v5029 = vpop.f32.mrf.mxu0
        %v5030 = vadd.f32 %v4897, %v5029
        %v5031 = vpop.f32.mrf.mxu0
        %v5032 = vadd.f32 %v4899, %v5031
        %5033 = vmatmul.bf16.gmra.mxu0 %v3015
        %v5034 = vpop.f32.mrf.mxu0
        %v5035 = vadd.f32 %v4902, %v5034
        %v5036 = vpop.f32.mrf.mxu0
        %v5037 = vadd.f32 %v4904, %v5036
        %5038 = vmatmul.bf16.gmra.mxu0 %v3031
        %v5039 = vpop.f32.mrf.mxu0
        %v5040 = vadd.f32 %v4907, %v5039
        %v5041 = vpop.f32.mrf.mxu0
        %v5042 = vadd.f32 %v4909, %v5041
        %5043 = vmatmul.bf16.gmra.mxu0 %v3047
        %v5044 = vpop.f32.mrf.mxu0
        %v5045 = vadd.f32 %v4912, %v5044
        %v5046 = vpop.f32.mrf.mxu0
        %5047 = vdwg.mxu0
        %5048 = vmatpush.bf16.msra.mxu0 %v1034
        %5049 = vmatpush.bf16.msra.mxu0 %v1032
        %5050 = vmatpush.bf16.msra.mxu0 %v1030
        %5051 = vmatpush.bf16.msra.mxu0 %v1028
        %5052 = vmatpush.bf16.msra.mxu0 %v1026
        %5053 = vmatpush.bf16.msra.mxu0 %v1024
        %5054 = vmatpush.bf16.msra.mxu0 %v1022
        %5055 = vmatpush.bf16.msra.mxu0 %v1020
        %5056 = vmatmul.bf16.gmra.mxu0 %v2664
        %v5057 = vpop.f32.mrf.mxu0
        %v5058 = vadd.f32 %v4925, %v5057
        %v5059 = vpop.f32.mrf.mxu0
        %v5060 = vadd.f32 %v4927, %v5059
        %5061 = vmatmul.bf16.gmra.mxu0 %v2680
        %v5062 = vpop.f32.mrf.mxu0
        %v5063 = vadd.f32 %v4930, %v5062
        %v5064 = vpop.f32.mrf.mxu0
        %v5065 = vadd.f32 %v4932, %v5064
        %5066 = vmatmul.bf16.gmra.mxu0 %v2696
        %v5067 = vpop.f32.mrf.mxu0
        %v5068 = vadd.f32 %v4935, %v5067
        %v5069 = vpop.f32.mrf.mxu0
        %v5070 = vadd.f32 %v4937, %v5069
        %5071 = vmatmul.bf16.gmra.mxu0 %v2712
        %v5072 = vpop.f32.mrf.mxu0
        %v5073 = vadd.f32 %v4940, %v5072
        %v5074 = vpop.f32.mrf.mxu0
        %v5075 = vadd.f32 %v4942, %v5074
        %5076 = vmatmul.bf16.gmra.mxu0 %v2728
        %v5077 = vpop.f32.mrf.mxu0
        %v5078 = vadd.f32 %v4945, %v5077
        %v5079 = vpop.f32.mrf.mxu0
        %v5080 = vadd.f32 %v4947, %v5079
        %5081 = vmatmul.bf16.gmra.mxu0 %v2744
        %v5082 = vpop.f32.mrf.mxu0
        %v5083 = vadd.f32 %v4950, %v5082
        %v5084 = vpop.f32.mrf.mxu0
        %v5085 = vadd.f32 %v4952, %v5084
        %5086 = vmatmul.bf16.gmra.mxu0 %v2760
        %v5087 = vpop.f32.mrf.mxu0
        %v5088 = vadd.f32 %v4955, %v5087
        %v5089 = vpop.f32.mrf.mxu0
        %v5090 = vadd.f32 %v4957, %v5089
        %5091 = vmatmul.bf16.gmra.mxu0 %v2776
        %v5092 = vpop.f32.mrf.mxu0
        %v5093 = vadd.f32 %v4960, %v5092
        %v5094 = vpop.f32.mrf.mxu0
        %v5095 = vadd.f32 %v4962, %v5094
        %5096 = vmatmul.bf16.gmra.mxu0 %v2792
        %v5097 = vpop.f32.mrf.mxu0
        %v5098 = vadd.f32 %v4965, %v5097
        %v5099 = vpop.f32.mrf.mxu0
        %v5100 = vadd.f32 %v4967, %v5099
        %5101 = vmatmul.bf16.gmra.mxu0 %v2808
        %v5102 = vpop.f32.mrf.mxu0
        %v5103 = vadd.f32 %v4970, %v5102
        %v5104 = vpop.f32.mrf.mxu0
        %v5105 = vadd.f32 %v4972, %v5104
        %5106 = vmatmul.bf16.gmra.mxu0 %v2824
        %v5107 = vpop.f32.mrf.mxu0
        %v5108 = vadd.f32 %v4975, %v5107
        %v5109 = vpop.f32.mrf.mxu0
        %v5110 = vadd.f32 %v4977, %v5109
        %5111 = vmatmul.bf16.gmra.mxu0 %v2840
        %v5112 = vpop.f32.mrf.mxu0
        %v5113 = vadd.f32 %v4980, %v5112
        %v5114 = vpop.f32.mrf.mxu0
        %v5115 = vadd.f32 %v4982, %v5114
        %5116 = vmatmul.bf16.gmra.mxu0 %v2856
        %v5117 = vpop.f32.mrf.mxu0
        %v5118 = vadd.f32 %v4985, %v5117
        %v5119 = vpop.f32.mrf.mxu0
        %v5120 = vadd.f32 %v4987, %v5119
        %5121 = vmatmul.bf16.gmra.mxu0 %v2872
        %v5122 = vpop.f32.mrf.mxu0
        %v5123 = vadd.f32 %v4990, %v5122
        %v5124 = vpop.f32.mrf.mxu0
        %v5125 = vadd.f32 %v4992, %v5124
        %5126 = vmatmul.bf16.gmra.mxu0 %v2888
        %v5127 = vpop.f32.mrf.mxu0
        %v5128 = vadd.f32 %v4995, %v5127
        %v5129 = vpop.f32.mrf.mxu0
        %v5130 = vadd.f32 %v4997, %v5129
        %5131 = vmatmul.bf16.gmra.mxu0 %v2904
        %v5132 = vpop.f32.mrf.mxu0
        %v5133 = vadd.f32 %v5000, %v5132
        %v5134 = vpop.f32.mrf.mxu0
        %v5135 = vadd.f32 %v5002, %v5134
        %5136 = vmatmul.bf16.gmra.mxu0 %v2920
        %v5137 = vpop.f32.mrf.mxu0
        %v5138 = vadd.f32 %v5005, %v5137
        %v5139 = vpop.f32.mrf.mxu0
        %v5140 = vadd.f32 %v5007, %v5139
        %5141 = vmatmul.bf16.gmra.mxu0 %v2936
        %v5142 = vpop.f32.mrf.mxu0
        %v5143 = vadd.f32 %v5010, %v5142
        %v5144 = vpop.f32.mrf.mxu0
        %v5145 = vadd.f32 %v5012, %v5144
        %5146 = vmatmul.bf16.gmra.mxu0 %v2952
        %v5147 = vpop.f32.mrf.mxu0
        %v5148 = vadd.f32 %v5015, %v5147
        %v5149 = vpop.f32.mrf.mxu0
        %v5150 = vadd.f32 %v5017, %v5149
        %5151 = vmatmul.bf16.gmra.mxu0 %v2968
        %v5152 = vpop.f32.mrf.mxu0
        %v5153 = vadd.f32 %v5020, %v5152
        %v5154 = vpop.f32.mrf.mxu0
        %v5155 = vadd.f32 %v5022, %v5154
        %5156 = vmatmul.bf16.gmra.mxu0 %v2984
        %v5157 = vpop.f32.mrf.mxu0
        %v5158 = vadd.f32 %v5025, %v5157
        %v5159 = vpop.f32.mrf.mxu0
        %v5160 = vadd.f32 %v5027, %v5159
        %5161 = vmatmul.bf16.gmra.mxu0 %v3000
        %v5162 = vpop.f32.mrf.mxu0
        %v5163 = vadd.f32 %v5030, %v5162
        %v5164 = vpop.f32.mrf.mxu0
        %v5165 = vadd.f32 %v5032, %v5164
        %5166 = vmatmul.bf16.gmra.mxu0 %v3016
        %v5167 = vpop.f32.mrf.mxu0
        %v5168 = vadd.f32 %v5035, %v5167
        %v5169 = vpop.f32.mrf.mxu0
        %v5170 = vadd.f32 %v5037, %v5169
        %5171 = vmatmul.bf16.gmra.mxu0 %v3032
        %v5172 = vpop.f32.mrf.mxu0
        %v5173 = vadd.f32 %v5040, %v5172
        %v5174 = vpop.f32.mrf.mxu0
        %v5175 = vadd.f32 %v5042, %v5174
        %5176 = vmatmul.bf16.gmra.mxu0 %v3048
        %v5177 = vpop.f32.mrf.mxu0
        %v5178 = vadd.f32 %v5045, %v5177
        %v5179 = vpop.f32.mrf.mxu0
        %5180 = vdwg.mxu0
        %5181 = vmatpush.bf16.msra.mxu0 %v1050
        %5182 = vmatpush.bf16.msra.mxu0 %v1048
        %5183 = vmatpush.bf16.msra.mxu0 %v1046
        %5184 = vmatpush.bf16.msra.mxu0 %v1044
        %5185 = vmatpush.bf16.msra.mxu0 %v1042
        %5186 = vmatpush.bf16.msra.mxu0 %v1040
        %5187 = vmatpush.bf16.msra.mxu0 %v1038
        %5188 = vmatpush.bf16.msra.mxu0 %v1036
        %5189 = vmatmul.bf16.gmra.mxu0 %v2665
        %v5190 = vpop.f32.mrf.mxu0
        %v5191 = vadd.f32 %v5058, %v5190
        %v5192 = vpop.f32.mrf.mxu0
        %v5193 = vadd.f32 %v5060, %v5192
        %5194 = vmatmul.bf16.gmra.mxu0 %v2681
        %v5195 = vpop.f32.mrf.mxu0
        %v5196 = vadd.f32 %v5063, %v5195
        %v5197 = vpop.f32.mrf.mxu0
        %v5198 = vadd.f32 %v5065, %v5197
        %5199 = vmatmul.bf16.gmra.mxu0 %v2697
        %v5200 = vpop.f32.mrf.mxu0
        %v5201 = vadd.f32 %v5068, %v5200
        %v5202 = vpop.f32.mrf.mxu0
        %v5203 = vadd.f32 %v5070, %v5202
        %5204 = vmatmul.bf16.gmra.mxu0 %v2713
        %v5205 = vpop.f32.mrf.mxu0
        %v5206 = vadd.f32 %v5073, %v5205
        %v5207 = vpop.f32.mrf.mxu0
        %v5208 = vadd.f32 %v5075, %v5207
        %5209 = vmatmul.bf16.gmra.mxu0 %v2729
        %v5210 = vpop.f32.mrf.mxu0
        %v5211 = vadd.f32 %v5078, %v5210
        %v5212 = vpop.f32.mrf.mxu0
        %v5213 = vadd.f32 %v5080, %v5212
        %5214 = vmatmul.bf16.gmra.mxu0 %v2745
        %v5215 = vpop.f32.mrf.mxu0
        %v5216 = vadd.f32 %v5083, %v5215
        %v5217 = vpop.f32.mrf.mxu0
        %v5218 = vadd.f32 %v5085, %v5217
        %5219 = vmatmul.bf16.gmra.mxu0 %v2761
        %v5220 = vpop.f32.mrf.mxu0
        %v5221 = vadd.f32 %v5088, %v5220
        %v5222 = vpop.f32.mrf.mxu0
        %v5223 = vadd.f32 %v5090, %v5222
        %5224 = vmatmul.bf16.gmra.mxu0 %v2777
        %v5225 = vpop.f32.mrf.mxu0
        %v5226 = vadd.f32 %v5093, %v5225
        %v5227 = vpop.f32.mrf.mxu0
        %v5228 = vadd.f32 %v5095, %v5227
        %5229 = vmatmul.bf16.gmra.mxu0 %v2793
        %v5230 = vpop.f32.mrf.mxu0
        %v5231 = vadd.f32 %v5098, %v5230
        %v5232 = vpop.f32.mrf.mxu0
        %v5233 = vadd.f32 %v5100, %v5232
        %5234 = vmatmul.bf16.gmra.mxu0 %v2809
        %v5235 = vpop.f32.mrf.mxu0
        %v5236 = vadd.f32 %v5103, %v5235
        %v5237 = vpop.f32.mrf.mxu0
        %v5238 = vadd.f32 %v5105, %v5237
        %5239 = vmatmul.bf16.gmra.mxu0 %v2825
        %v5240 = vpop.f32.mrf.mxu0
        %v5241 = vadd.f32 %v5108, %v5240
        %v5242 = vpop.f32.mrf.mxu0
        %v5243 = vadd.f32 %v5110, %v5242
        %5244 = vmatmul.bf16.gmra.mxu0 %v2841
        %v5245 = vpop.f32.mrf.mxu0
        %v5246 = vadd.f32 %v5113, %v5245
        %v5247 = vpop.f32.mrf.mxu0
        %v5248 = vadd.f32 %v5115, %v5247
        %5249 = vmatmul.bf16.gmra.mxu0 %v2857
        %v5250 = vpop.f32.mrf.mxu0
        %v5251 = vadd.f32 %v5118, %v5250
        %v5252 = vpop.f32.mrf.mxu0
        %v5253 = vadd.f32 %v5120, %v5252
        %5254 = vmatmul.bf16.gmra.mxu0 %v2873
        %v5255 = vpop.f32.mrf.mxu0
        %v5256 = vadd.f32 %v5123, %v5255
        %v5257 = vpop.f32.mrf.mxu0
        %v5258 = vadd.f32 %v5125, %v5257
        %5259 = vmatmul.bf16.gmra.mxu0 %v2889
        %v5260 = vpop.f32.mrf.mxu0
        %v5261 = vadd.f32 %v5128, %v5260
        %v5262 = vpop.f32.mrf.mxu0
        %v5263 = vadd.f32 %v5130, %v5262
        %5264 = vmatmul.bf16.gmra.mxu0 %v2905
        %v5265 = vpop.f32.mrf.mxu0
        %v5266 = vadd.f32 %v5133, %v5265
        %v5267 = vpop.f32.mrf.mxu0
        %v5268 = vadd.f32 %v5135, %v5267
        %5269 = vmatmul.bf16.gmra.mxu0 %v2921
        %v5270 = vpop.f32.mrf.mxu0
        %v5271 = vadd.f32 %v5138, %v5270
        %v5272 = vpop.f32.mrf.mxu0
        %v5273 = vadd.f32 %v5140, %v5272
        %5274 = vmatmul.bf16.gmra.mxu0 %v2937
        %v5275 = vpop.f32.mrf.mxu0
        %v5276 = vadd.f32 %v5143, %v5275
        %v5277 = vpop.f32.mrf.mxu0
        %v5278 = vadd.f32 %v5145, %v5277
        %5279 = vmatmul.bf16.gmra.mxu0 %v2953
        %v5280 = vpop.f32.mrf.mxu0
        %v5281 = vadd.f32 %v5148, %v5280
        %v5282 = vpop.f32.mrf.mxu0
        %v5283 = vadd.f32 %v5150, %v5282
        %5284 = vmatmul.bf16.gmra.mxu0 %v2969
        %v5285 = vpop.f32.mrf.mxu0
        %v5286 = vadd.f32 %v5153, %v5285
        %v5287 = vpop.f32.mrf.mxu0
        %v5288 = vadd.f32 %v5155, %v5287
        %5289 = vmatmul.bf16.gmra.mxu0 %v2985
        %v5290 = vpop.f32.mrf.mxu0
        %v5291 = vadd.f32 %v5158, %v5290
        %v5292 = vpop.f32.mrf.mxu0
        %v5293 = vadd.f32 %v5160, %v5292
        %5294 = vmatmul.bf16.gmra.mxu0 %v3001
        %v5295 = vpop.f32.mrf.mxu0
        %v5296 = vadd.f32 %v5163, %v5295
        %v5297 = vpop.f32.mrf.mxu0
        %v5298 = vadd.f32 %v5165, %v5297
        %5299 = vmatmul.bf16.gmra.mxu0 %v3017
        %v5300 = vpop.f32.mrf.mxu0
        %v5301 = vadd.f32 %v5168, %v5300
        %v5302 = vpop.f32.mrf.mxu0
        %v5303 = vadd.f32 %v5170, %v5302
        %5304 = vmatmul.bf16.gmra.mxu0 %v3033
        %v5305 = vpop.f32.mrf.mxu0
        %v5306 = vadd.f32 %v5173, %v5305
        %v5307 = vpop.f32.mrf.mxu0
        %v5308 = vadd.f32 %v5175, %v5307
        %5309 = vmatmul.bf16.gmra.mxu0 %v3049
        %v5310 = vpop.f32.mrf.mxu0
        %v5311 = vadd.f32 %v5178, %v5310
        %v5312 = vpop.f32.mrf.mxu0
        %5313 = vdwg.mxu0
        %5314 = vmatpush.bf16.msra.mxu0 %v1066
        %5315 = vmatpush.bf16.msra.mxu0 %v1064
        %5316 = vmatpush.bf16.msra.mxu0 %v1062
        %5317 = vmatpush.bf16.msra.mxu0 %v1060
        %5318 = vmatpush.bf16.msra.mxu0 %v1058
        %5319 = vmatpush.bf16.msra.mxu0 %v1056
        %5320 = vmatpush.bf16.msra.mxu0 %v1054
        %5321 = vmatpush.bf16.msra.mxu0 %v1052
        %5322 = vmatmul.bf16.gmra.mxu0 %v2666
        %v5323 = vpop.f32.mrf.mxu0
        %v5324 = vadd.f32 %v5191, %v5323
        %v5325 = vpop.f32.mrf.mxu0
        %v5326 = vadd.f32 %v5193, %v5325
        %5327 = vmatmul.bf16.gmra.mxu0 %v2682
        %v5328 = vpop.f32.mrf.mxu0
        %v5329 = vadd.f32 %v5196, %v5328
        %v5330 = vpop.f32.mrf.mxu0
        %v5331 = vadd.f32 %v5198, %v5330
        %5332 = vmatmul.bf16.gmra.mxu0 %v2698
        %v5333 = vpop.f32.mrf.mxu0
        %v5334 = vadd.f32 %v5201, %v5333
        %v5335 = vpop.f32.mrf.mxu0
        %v5336 = vadd.f32 %v5203, %v5335
        %5337 = vmatmul.bf16.gmra.mxu0 %v2714
        %v5338 = vpop.f32.mrf.mxu0
        %v5339 = vadd.f32 %v5206, %v5338
        %v5340 = vpop.f32.mrf.mxu0
        %v5341 = vadd.f32 %v5208, %v5340
        %5342 = vmatmul.bf16.gmra.mxu0 %v2730
        %v5343 = vpop.f32.mrf.mxu0
        %v5344 = vadd.f32 %v5211, %v5343
        %v5345 = vpop.f32.mrf.mxu0
        %v5346 = vadd.f32 %v5213, %v5345
        %5347 = vmatmul.bf16.gmra.mxu0 %v2746
        %v5348 = vpop.f32.mrf.mxu0
        %v5349 = vadd.f32 %v5216, %v5348
        %v5350 = vpop.f32.mrf.mxu0
        %v5351 = vadd.f32 %v5218, %v5350
        %5352 = vmatmul.bf16.gmra.mxu0 %v2762
        %v5353 = vpop.f32.mrf.mxu0
        %v5354 = vadd.f32 %v5221, %v5353
        %v5355 = vpop.f32.mrf.mxu0
        %v5356 = vadd.f32 %v5223, %v5355
        %5357 = vmatmul.bf16.gmra.mxu0 %v2778
        %v5358 = vpop.f32.mrf.mxu0
        %v5359 = vadd.f32 %v5226, %v5358
        %v5360 = vpop.f32.mrf.mxu0
        %v5361 = vadd.f32 %v5228, %v5360
        %5362 = vmatmul.bf16.gmra.mxu0 %v2794
        %v5363 = vpop.f32.mrf.mxu0
        %v5364 = vadd.f32 %v5231, %v5363
        %v5365 = vpop.f32.mrf.mxu0
        %v5366 = vadd.f32 %v5233, %v5365
        %5367 = vmatmul.bf16.gmra.mxu0 %v2810
        %v5368 = vpop.f32.mrf.mxu0
        %v5369 = vadd.f32 %v5236, %v5368
        %v5370 = vpop.f32.mrf.mxu0
        %v5371 = vadd.f32 %v5238, %v5370
        %5372 = vmatmul.bf16.gmra.mxu0 %v2826
        %v5373 = vpop.f32.mrf.mxu0
        %v5374 = vadd.f32 %v5241, %v5373
        %v5375 = vpop.f32.mrf.mxu0
        %v5376 = vadd.f32 %v5243, %v5375
        %5377 = vmatmul.bf16.gmra.mxu0 %v2842
        %v5378 = vpop.f32.mrf.mxu0
        %v5379 = vadd.f32 %v5246, %v5378
        %v5380 = vpop.f32.mrf.mxu0
        %v5381 = vadd.f32 %v5248, %v5380
        %5382 = vmatmul.bf16.gmra.mxu0 %v2858
        %v5383 = vpop.f32.mrf.mxu0
        %v5384 = vadd.f32 %v5251, %v5383
        %v5385 = vpop.f32.mrf.mxu0
        %v5386 = vadd.f32 %v5253, %v5385
        %5387 = vmatmul.bf16.gmra.mxu0 %v2874
        %v5388 = vpop.f32.mrf.mxu0
        %v5389 = vadd.f32 %v5256, %v5388
        %v5390 = vpop.f32.mrf.mxu0
        %v5391 = vadd.f32 %v5258, %v5390
        %5392 = vmatmul.bf16.gmra.mxu0 %v2890
        %v5393 = vpop.f32.mrf.mxu0
        %v5394 = vadd.f32 %v5261, %v5393
        %v5395 = vpop.f32.mrf.mxu0
        %v5396 = vadd.f32 %v5263, %v5395
        %5397 = vmatmul.bf16.gmra.mxu0 %v2906
        %v5398 = vpop.f32.mrf.mxu0
        %v5399 = vadd.f32 %v5266, %v5398
        %v5400 = vpop.f32.mrf.mxu0
        %v5401 = vadd.f32 %v5268, %v5400
        %5402 = vmatmul.bf16.gmra.mxu0 %v2922
        %v5403 = vpop.f32.mrf.mxu0
        %v5404 = vadd.f32 %v5271, %v5403
        %v5405 = vpop.f32.mrf.mxu0
        %v5406 = vadd.f32 %v5273, %v5405
        %5407 = vmatmul.bf16.gmra.mxu0 %v2938
        %v5408 = vpop.f32.mrf.mxu0
        %v5409 = vadd.f32 %v5276, %v5408
        %v5410 = vpop.f32.mrf.mxu0
        %v5411 = vadd.f32 %v5278, %v5410
        %5412 = vmatmul.bf16.gmra.mxu0 %v2954
        %v5413 = vpop.f32.mrf.mxu0
        %v5414 = vadd.f32 %v5281, %v5413
        %v5415 = vpop.f32.mrf.mxu0
        %v5416 = vadd.f32 %v5283, %v5415
        %5417 = vmatmul.bf16.gmra.mxu0 %v2970
        %v5418 = vpop.f32.mrf.mxu0
        %v5419 = vadd.f32 %v5286, %v5418
        %v5420 = vpop.f32.mrf.mxu0
        %v5421 = vadd.f32 %v5288, %v5420
        %5422 = vmatmul.bf16.gmra.mxu0 %v2986
        %v5423 = vpop.f32.mrf.mxu0
        %v5424 = vadd.f32 %v5291, %v5423
        %v5425 = vpop.f32.mrf.mxu0
        %v5426 = vadd.f32 %v5293, %v5425
        %5427 = vmatmul.bf16.gmra.mxu0 %v3002
        %v5428 = vpop.f32.mrf.mxu0
        %v5429 = vadd.f32 %v5296, %v5428
        %v5430 = vpop.f32.mrf.mxu0
        %v5431 = vadd.f32 %v5298, %v5430
        %5432 = vmatmul.bf16.gmra.mxu0 %v3018
        %v5433 = vpop.f32.mrf.mxu0
        %v5434 = vadd.f32 %v5301, %v5433
        %v5435 = vpop.f32.mrf.mxu0
        %v5436 = vadd.f32 %v5303, %v5435
        %5437 = vmatmul.bf16.gmra.mxu0 %v3034
        %v5438 = vpop.f32.mrf.mxu0
        %v5439 = vadd.f32 %v5306, %v5438
        %v5440 = vpop.f32.mrf.mxu0
        %v5441 = vadd.f32 %v5308, %v5440
        %5442 = vmatmul.bf16.gmra.mxu0 %v3050
        %v5443 = vpop.f32.mrf.mxu0
        %v5444 = vadd.f32 %v5311, %v5443
        %v5445 = vpop.f32.mrf.mxu0
        %5446 = vdwg.mxu0
        %5447 = vmatpush.bf16.msra.mxu0 %v1082
        %5448 = vmatpush.bf16.msra.mxu0 %v1080
        %5449 = vmatpush.bf16.msra.mxu0 %v1078
        %5450 = vmatpush.bf16.msra.mxu0 %v1076
        %5451 = vmatpush.bf16.msra.mxu0 %v1074
        %5452 = vmatpush.bf16.msra.mxu0 %v1072
        %5453 = vmatpush.bf16.msra.mxu0 %v1070
        %5454 = vmatpush.bf16.msra.mxu0 %v1068
        %5455 = vmatmul.bf16.gmra.mxu0 %v2667
        %v5456 = vpop.f32.mrf.mxu0
        %v5457 = vadd.f32 %v5324, %v5456
        %v5458 = vpop.f32.mrf.mxu0
        %v5459 = vadd.f32 %v5326, %v5458
        %5460 = vmatmul.bf16.gmra.mxu0 %v2683
        %v5461 = vpop.f32.mrf.mxu0
        %v5462 = vadd.f32 %v5329, %v5461
        %v5463 = vpop.f32.mrf.mxu0
        %v5464 = vadd.f32 %v5331, %v5463
        %5465 = vmatmul.bf16.gmra.mxu0 %v2699
        %v5466 = vpop.f32.mrf.mxu0
        %v5467 = vadd.f32 %v5334, %v5466
        %v5468 = vpop.f32.mrf.mxu0
        %v5469 = vadd.f32 %v5336, %v5468
        %5470 = vmatmul.bf16.gmra.mxu0 %v2715
        %v5471 = vpop.f32.mrf.mxu0
        %v5472 = vadd.f32 %v5339, %v5471
        %v5473 = vpop.f32.mrf.mxu0
        %v5474 = vadd.f32 %v5341, %v5473
        %5475 = vmatmul.bf16.gmra.mxu0 %v2731
        %v5476 = vpop.f32.mrf.mxu0
        %v5477 = vadd.f32 %v5344, %v5476
        %v5478 = vpop.f32.mrf.mxu0
        %v5479 = vadd.f32 %v5346, %v5478
        %5480 = vmatmul.bf16.gmra.mxu0 %v2747
        %v5481 = vpop.f32.mrf.mxu0
        %v5482 = vadd.f32 %v5349, %v5481
        %v5483 = vpop.f32.mrf.mxu0
        %v5484 = vadd.f32 %v5351, %v5483
        %5485 = vmatmul.bf16.gmra.mxu0 %v2763
        %v5486 = vpop.f32.mrf.mxu0
        %v5487 = vadd.f32 %v5354, %v5486
        %v5488 = vpop.f32.mrf.mxu0
        %v5489 = vadd.f32 %v5356, %v5488
        %5490 = vmatmul.bf16.gmra.mxu0 %v2779
        %v5491 = vpop.f32.mrf.mxu0
        %v5492 = vadd.f32 %v5359, %v5491
        %v5493 = vpop.f32.mrf.mxu0
        %v5494 = vadd.f32 %v5361, %v5493
        %5495 = vmatmul.bf16.gmra.mxu0 %v2795
        %v5496 = vpop.f32.mrf.mxu0
        %v5497 = vadd.f32 %v5364, %v5496
        %v5498 = vpop.f32.mrf.mxu0
        %v5499 = vadd.f32 %v5366, %v5498
        %5500 = vmatmul.bf16.gmra.mxu0 %v2811
        %v5501 = vpop.f32.mrf.mxu0
        %v5502 = vadd.f32 %v5369, %v5501
        %v5503 = vpop.f32.mrf.mxu0
        %v5504 = vadd.f32 %v5371, %v5503
        %5505 = vmatmul.bf16.gmra.mxu0 %v2827
        %v5506 = vpop.f32.mrf.mxu0
        %v5507 = vadd.f32 %v5374, %v5506
        %v5508 = vpop.f32.mrf.mxu0
        %v5509 = vadd.f32 %v5376, %v5508
        %5510 = vmatmul.bf16.gmra.mxu0 %v2843
        %v5511 = vpop.f32.mrf.mxu0
        %v5512 = vadd.f32 %v5379, %v5511
        %v5513 = vpop.f32.mrf.mxu0
        %v5514 = vadd.f32 %v5381, %v5513
        %5515 = vmatmul.bf16.gmra.mxu0 %v2859
        %v5516 = vpop.f32.mrf.mxu0
        %v5517 = vadd.f32 %v5384, %v5516
        %v5518 = vpop.f32.mrf.mxu0
        %v5519 = vadd.f32 %v5386, %v5518
        %5520 = vmatmul.bf16.gmra.mxu0 %v2875
        %v5521 = vpop.f32.mrf.mxu0
        %v5522 = vadd.f32 %v5389, %v5521
        %v5523 = vpop.f32.mrf.mxu0
        %v5524 = vadd.f32 %v5391, %v5523
        %5525 = vmatmul.bf16.gmra.mxu0 %v2891
        %v5526 = vpop.f32.mrf.mxu0
        %v5527 = vadd.f32 %v5394, %v5526
        %v5528 = vpop.f32.mrf.mxu0
        %v5529 = vadd.f32 %v5396, %v5528
        %5530 = vmatmul.bf16.gmra.mxu0 %v2907
        %v5531 = vpop.f32.mrf.mxu0
        %v5532 = vadd.f32 %v5399, %v5531
        %v5533 = vpop.f32.mrf.mxu0
        %v5534 = vadd.f32 %v5401, %v5533
        %5535 = vmatmul.bf16.gmra.mxu0 %v2923
        %v5536 = vpop.f32.mrf.mxu0
        %v5537 = vadd.f32 %v5404, %v5536
        %v5538 = vpop.f32.mrf.mxu0
        %v5539 = vadd.f32 %v5406, %v5538
        %5540 = vmatmul.bf16.gmra.mxu0 %v2939
        %v5541 = vpop.f32.mrf.mxu0
        %v5542 = vadd.f32 %v5409, %v5541
        %v5543 = vpop.f32.mrf.mxu0
        %v5544 = vadd.f32 %v5411, %v5543
        %5545 = vmatmul.bf16.gmra.mxu0 %v2955
        %v5546 = vpop.f32.mrf.mxu0
        %v5547 = vadd.f32 %v5414, %v5546
        %v5548 = vpop.f32.mrf.mxu0
        %v5549 = vadd.f32 %v5416, %v5548
        %5550 = vmatmul.bf16.gmra.mxu0 %v2971
        %v5551 = vpop.f32.mrf.mxu0
        %v5552 = vadd.f32 %v5419, %v5551
        %v5553 = vpop.f32.mrf.mxu0
        %v5554 = vadd.f32 %v5421, %v5553
        %5555 = vmatmul.bf16.gmra.mxu0 %v2987
        %v5556 = vpop.f32.mrf.mxu0
        %v5557 = vadd.f32 %v5424, %v5556
        %v5558 = vpop.f32.mrf.mxu0
        %v5559 = vadd.f32 %v5426, %v5558
        %5560 = vmatmul.bf16.gmra.mxu0 %v3003
        %v5561 = vpop.f32.mrf.mxu0
        %v5562 = vadd.f32 %v5429, %v5561
        %v5563 = vpop.f32.mrf.mxu0
        %v5564 = vadd.f32 %v5431, %v5563
        %5565 = vmatmul.bf16.gmra.mxu0 %v3019
        %v5566 = vpop.f32.mrf.mxu0
        %v5567 = vadd.f32 %v5434, %v5566
        %v5568 = vpop.f32.mrf.mxu0
        %v5569 = vadd.f32 %v5436, %v5568
        %5570 = vmatmul.bf16.gmra.mxu0 %v3035
        %v5571 = vpop.f32.mrf.mxu0
        %v5572 = vadd.f32 %v5439, %v5571
        %v5573 = vpop.f32.mrf.mxu0
        %v5574 = vadd.f32 %v5441, %v5573
        %5575 = vmatmul.bf16.gmra.mxu0 %v3051
        %v5576 = vpop.f32.mrf.mxu0
        %v5577 = vadd.f32 %v5444, %v5576
        %v5578 = vpop.f32.mrf.mxu0
        %5579 = vdwg.mxu0
        %5580 = vmatpush.bf16.msra.mxu0 %v843
        %5581 = vmatpush.bf16.msra.mxu0 %v841
        %5582 = vmatpush.bf16.msra.mxu0 %v839
        %5583 = vmatpush.bf16.msra.mxu0 %v837
        %5584 = vmatpush.bf16.msra.mxu0 %v835
        %5585 = vmatpush.bf16.msra.mxu0 %v833
        %5586 = vmatpush.bf16.msra.mxu0 %v831
        %5587 = vmatpush.bf16.msra.mxu0 %v829
        %5588 = vmatmul.bf16.gmra.mxu0 %v2652
        %v5589 = vpop.f32.mrf.mxu0
        %v5590 = vadd.f32 0.0, %v5589
        %v5591 = vpop.f32.mrf.mxu0
        %v5592 = vadd.f32 0.0, %v5591
        %5593 = vmatmul.bf16.gmra.mxu0 %v2668
        %v5594 = vpop.f32.mrf.mxu0
        %v5595 = vadd.f32 0.0, %v5594
        %v5596 = vpop.f32.mrf.mxu0
        %v5597 = vadd.f32 0.0, %v5596
        %5598 = vmatmul.bf16.gmra.mxu0 %v2684
        %v5599 = vpop.f32.mrf.mxu0
        %v5600 = vadd.f32 0.0, %v5599
        %v5601 = vpop.f32.mrf.mxu0
        %v5602 = vadd.f32 0.0, %v5601
        %5603 = vmatmul.bf16.gmra.mxu0 %v2700
        %v5604 = vpop.f32.mrf.mxu0
        %v5605 = vadd.f32 0.0, %v5604
        %v5606 = vpop.f32.mrf.mxu0
        %v5607 = vadd.f32 0.0, %v5606
        %5608 = vmatmul.bf16.gmra.mxu0 %v2716
        %v5609 = vpop.f32.mrf.mxu0
        %v5610 = vadd.f32 0.0, %v5609
        %v5611 = vpop.f32.mrf.mxu0
        %v5612 = vadd.f32 0.0, %v5611
        %5613 = vmatmul.bf16.gmra.mxu0 %v2732
        %v5614 = vpop.f32.mrf.mxu0
        %v5615 = vadd.f32 0.0, %v5614
        %v5616 = vpop.f32.mrf.mxu0
        %v5617 = vadd.f32 0.0, %v5616
        %5618 = vmatmul.bf16.gmra.mxu0 %v2748
        %v5619 = vpop.f32.mrf.mxu0
        %v5620 = vadd.f32 0.0, %v5619
        %v5621 = vpop.f32.mrf.mxu0
        %v5622 = vadd.f32 0.0, %v5621
        %5623 = vmatmul.bf16.gmra.mxu0 %v2764
        %v5624 = vpop.f32.mrf.mxu0
        %v5625 = vadd.f32 0.0, %v5624
        %v5626 = vpop.f32.mrf.mxu0
        %v5627 = vadd.f32 0.0, %v5626
        %5628 = vmatmul.bf16.gmra.mxu0 %v2780
        %v5629 = vpop.f32.mrf.mxu0
        %v5630 = vadd.f32 0.0, %v5629
        %v5631 = vpop.f32.mrf.mxu0
        %v5632 = vadd.f32 0.0, %v5631
        %5633 = vmatmul.bf16.gmra.mxu0 %v2796
        %v5634 = vpop.f32.mrf.mxu0
        %v5635 = vadd.f32 0.0, %v5634
        %v5636 = vpop.f32.mrf.mxu0
        %v5637 = vadd.f32 0.0, %v5636
        %5638 = vmatmul.bf16.gmra.mxu0 %v2812
        %v5639 = vpop.f32.mrf.mxu0
        %v5640 = vadd.f32 0.0, %v5639
        %v5641 = vpop.f32.mrf.mxu0
        %v5642 = vadd.f32 0.0, %v5641
        %5643 = vmatmul.bf16.gmra.mxu0 %v2828
        %v5644 = vpop.f32.mrf.mxu0
        %v5645 = vadd.f32 0.0, %v5644
        %v5646 = vpop.f32.mrf.mxu0
        %v5647 = vadd.f32 0.0, %v5646
        %5648 = vmatmul.bf16.gmra.mxu0 %v2844
        %v5649 = vpop.f32.mrf.mxu0
        %v5650 = vadd.f32 0.0, %v5649
        %v5651 = vpop.f32.mrf.mxu0
        %v5652 = vadd.f32 0.0, %v5651
        %5653 = vmatmul.bf16.gmra.mxu0 %v2860
        %v5654 = vpop.f32.mrf.mxu0
        %v5655 = vadd.f32 0.0, %v5654
        %v5656 = vpop.f32.mrf.mxu0
        %v5657 = vadd.f32 0.0, %v5656
        %5658 = vmatmul.bf16.gmra.mxu0 %v2876
        %v5659 = vpop.f32.mrf.mxu0
        %v5660 = vadd.f32 0.0, %v5659
        %v5661 = vpop.f32.mrf.mxu0
        %v5662 = vadd.f32 0.0, %v5661
        %5663 = vmatmul.bf16.gmra.mxu0 %v2892
        %v5664 = vpop.f32.mrf.mxu0
        %v5665 = vadd.f32 0.0, %v5664
        %v5666 = vpop.f32.mrf.mxu0
        %v5667 = vadd.f32 0.0, %v5666
        %5668 = vmatmul.bf16.gmra.mxu0 %v2908
        %v5669 = vpop.f32.mrf.mxu0
        %v5670 = vadd.f32 0.0, %v5669
        %v5671 = vpop.f32.mrf.mxu0
        %v5672 = vadd.f32 0.0, %v5671
        %5673 = vmatmul.bf16.gmra.mxu0 %v2924
        %v5674 = vpop.f32.mrf.mxu0
        %v5675 = vadd.f32 0.0, %v5674
        %v5676 = vpop.f32.mrf.mxu0
        %v5677 = vadd.f32 0.0, %v5676
        %5678 = vmatmul.bf16.gmra.mxu0 %v2940
        %v5679 = vpop.f32.mrf.mxu0
        %v5680 = vadd.f32 0.0, %v5679
        %v5681 = vpop.f32.mrf.mxu0
        %v5682 = vadd.f32 0.0, %v5681
        %5683 = vmatmul.bf16.gmra.mxu0 %v2956
        %v5684 = vpop.f32.mrf.mxu0
        %v5685 = vadd.f32 0.0, %v5684
        %v5686 = vpop.f32.mrf.mxu0
        %v5687 = vadd.f32 0.0, %v5686
        %5688 = vmatmul.bf16.gmra.mxu0 %v2972
        %v5689 = vpop.f32.mrf.mxu0
        %v5690 = vadd.f32 0.0, %v5689
        %v5691 = vpop.f32.mrf.mxu0
        %v5692 = vadd.f32 0.0, %v5691
        %5693 = vmatmul.bf16.gmra.mxu0 %v2988
        %v5694 = vpop.f32.mrf.mxu0
        %v5695 = vadd.f32 0.0, %v5694
        %v5696 = vpop.f32.mrf.mxu0
        %v5697 = vadd.f32 0.0, %v5696
        %5698 = vmatmul.bf16.gmra.mxu0 %v3004
        %v5699 = vpop.f32.mrf.mxu0
        %v5700 = vadd.f32 0.0, %v5699
        %v5701 = vpop.f32.mrf.mxu0
        %v5702 = vadd.f32 0.0, %v5701
        %5703 = vmatmul.bf16.gmra.mxu0 %v3020
        %v5704 = vpop.f32.mrf.mxu0
        %v5705 = vadd.f32 0.0, %v5704
        %v5706 = vpop.f32.mrf.mxu0
        %v5707 = vadd.f32 0.0, %v5706
        %5708 = vmatmul.bf16.gmra.mxu0 %v3036
        %v5709 = vpop.f32.mrf.mxu0
        %v5710 = vadd.f32 0.0, %v5709
        %v5711 = vpop.f32.mrf.mxu0
        %5712 = vdwg.mxu0
        %5713 = vmatpush.bf16.msra.mxu0 %v859
        %5714 = vmatpush.bf16.msra.mxu0 %v857
        %5715 = vmatpush.bf16.msra.mxu0 %v855
        %5716 = vmatpush.bf16.msra.mxu0 %v853
        %5717 = vmatpush.bf16.msra.mxu0 %v851
        %5718 = vmatpush.bf16.msra.mxu0 %v849
        %5719 = vmatpush.bf16.msra.mxu0 %v847
        %5720 = vmatpush.bf16.msra.mxu0 %v845
        %5721 = vmatmul.bf16.gmra.mxu0 %v2653
        %v5722 = vpop.f32.mrf.mxu0
        %v5723 = vadd.f32 %v5590, %v5722
        %v5724 = vpop.f32.mrf.mxu0
        %v5725 = vadd.f32 %v5592, %v5724
        %5726 = vmatmul.bf16.gmra.mxu0 %v2669
        %v5727 = vpop.f32.mrf.mxu0
        %v5728 = vadd.f32 %v5595, %v5727
        %v5729 = vpop.f32.mrf.mxu0
        %v5730 = vadd.f32 %v5597, %v5729
        %5731 = vmatmul.bf16.gmra.mxu0 %v2685
        %v5732 = vpop.f32.mrf.mxu0
        %v5733 = vadd.f32 %v5600, %v5732
        %v5734 = vpop.f32.mrf.mxu0
        %v5735 = vadd.f32 %v5602, %v5734
        %5736 = vmatmul.bf16.gmra.mxu0 %v2701
        %v5737 = vpop.f32.mrf.mxu0
        %v5738 = vadd.f32 %v5605, %v5737
        %v5739 = vpop.f32.mrf.mxu0
        %v5740 = vadd.f32 %v5607, %v5739
        %5741 = vmatmul.bf16.gmra.mxu0 %v2717
        %v5742 = vpop.f32.mrf.mxu0
        %v5743 = vadd.f32 %v5610, %v5742
        %v5744 = vpop.f32.mrf.mxu0
        %v5745 = vadd.f32 %v5612, %v5744
        %5746 = vmatmul.bf16.gmra.mxu0 %v2733
        %v5747 = vpop.f32.mrf.mxu0
        %v5748 = vadd.f32 %v5615, %v5747
        %v5749 = vpop.f32.mrf.mxu0
        %v5750 = vadd.f32 %v5617, %v5749
        %5751 = vmatmul.bf16.gmra.mxu0 %v2749
        %v5752 = vpop.f32.mrf.mxu0
        %v5753 = vadd.f32 %v5620, %v5752
        %v5754 = vpop.f32.mrf.mxu0
        %v5755 = vadd.f32 %v5622, %v5754
        %5756 = vmatmul.bf16.gmra.mxu0 %v2765
        %v5757 = vpop.f32.mrf.mxu0
        %v5758 = vadd.f32 %v5625, %v5757
        %v5759 = vpop.f32.mrf.mxu0
        %v5760 = vadd.f32 %v5627, %v5759
        %5761 = vmatmul.bf16.gmra.mxu0 %v2781
        %v5762 = vpop.f32.mrf.mxu0
        %v5763 = vadd.f32 %v5630, %v5762
        %v5764 = vpop.f32.mrf.mxu0
        %v5765 = vadd.f32 %v5632, %v5764
        %5766 = vmatmul.bf16.gmra.mxu0 %v2797
        %v5767 = vpop.f32.mrf.mxu0
        %v5768 = vadd.f32 %v5635, %v5767
        %v5769 = vpop.f32.mrf.mxu0
        %v5770 = vadd.f32 %v5637, %v5769
        %5771 = vmatmul.bf16.gmra.mxu0 %v2813
        %v5772 = vpop.f32.mrf.mxu0
        %v5773 = vadd.f32 %v5640, %v5772
        %v5774 = vpop.f32.mrf.mxu0
        %v5775 = vadd.f32 %v5642, %v5774
        %5776 = vmatmul.bf16.gmra.mxu0 %v2829
        %v5777 = vpop.f32.mrf.mxu0
        %v5778 = vadd.f32 %v5645, %v5777
        %v5779 = vpop.f32.mrf.mxu0
        %v5780 = vadd.f32 %v5647, %v5779
        %5781 = vmatmul.bf16.gmra.mxu0 %v2845
        %v5782 = vpop.f32.mrf.mxu0
        %v5783 = vadd.f32 %v5650, %v5782
        %v5784 = vpop.f32.mrf.mxu0
        %v5785 = vadd.f32 %v5652, %v5784
        %5786 = vmatmul.bf16.gmra.mxu0 %v2861
        %v5787 = vpop.f32.mrf.mxu0
        %v5788 = vadd.f32 %v5655, %v5787
        %v5789 = vpop.f32.mrf.mxu0
        %v5790 = vadd.f32 %v5657, %v5789
        %5791 = vmatmul.bf16.gmra.mxu0 %v2877
        %v5792 = vpop.f32.mrf.mxu0
        %v5793 = vadd.f32 %v5660, %v5792
        %v5794 = vpop.f32.mrf.mxu0
        %v5795 = vadd.f32 %v5662, %v5794
        %5796 = vmatmul.bf16.gmra.mxu0 %v2893
        %v5797 = vpop.f32.mrf.mxu0
        %v5798 = vadd.f32 %v5665, %v5797
        %v5799 = vpop.f32.mrf.mxu0
        %v5800 = vadd.f32 %v5667, %v5799
        %5801 = vmatmul.bf16.gmra.mxu0 %v2909
        %v5802 = vpop.f32.mrf.mxu0
        %v5803 = vadd.f32 %v5670, %v5802
        %v5804 = vpop.f32.mrf.mxu0
        %v5805 = vadd.f32 %v5672, %v5804
        %5806 = vmatmul.bf16.gmra.mxu0 %v2925
        %v5807 = vpop.f32.mrf.mxu0
        %v5808 = vadd.f32 %v5675, %v5807
        %v5809 = vpop.f32.mrf.mxu0
        %v5810 = vadd.f32 %v5677, %v5809
        %5811 = vmatmul.bf16.gmra.mxu0 %v2941
        %v5812 = vpop.f32.mrf.mxu0
        %v5813 = vadd.f32 %v5680, %v5812
        %v5814 = vpop.f32.mrf.mxu0
        %v5815 = vadd.f32 %v5682, %v5814
        %5816 = vmatmul.bf16.gmra.mxu0 %v2957
        %v5817 = vpop.f32.mrf.mxu0
        %v5818 = vadd.f32 %v5685, %v5817
        %v5819 = vpop.f32.mrf.mxu0
        %v5820 = vadd.f32 %v5687, %v5819
        %5821 = vmatmul.bf16.gmra.mxu0 %v2973
        %v5822 = vpop.f32.mrf.mxu0
        %v5823 = vadd.f32 %v5690, %v5822
        %v5824 = vpop.f32.mrf.mxu0
        %v5825 = vadd.f32 %v5692, %v5824
        %5826 = vmatmul.bf16.gmra.mxu0 %v2989
        %v5827 = vpop.f32.mrf.mxu0
        %v5828 = vadd.f32 %v5695, %v5827
        %v5829 = vpop.f32.mrf.mxu0
        %v5830 = vadd.f32 %v5697, %v5829
        %5831 = vmatmul.bf16.gmra.mxu0 %v3005
        %v5832 = vpop.f32.mrf.mxu0
        %v5833 = vadd.f32 %v5700, %v5832
        %v5834 = vpop.f32.mrf.mxu0
        %v5835 = vadd.f32 %v5702, %v5834
        %5836 = vmatmul.bf16.gmra.mxu0 %v3021
        %v5837 = vpop.f32.mrf.mxu0
        %v5838 = vadd.f32 %v5705, %v5837
        %v5839 = vpop.f32.mrf.mxu0
        %v5840 = vadd.f32 %v5707, %v5839
        %5841 = vmatmul.bf16.gmra.mxu0 %v3037
        %v5842 = vpop.f32.mrf.mxu0
        %v5843 = vadd.f32 %v5710, %v5842
        %v5844 = vpop.f32.mrf.mxu0
        %5845 = vdwg.mxu0
        %5846 = vmatpush.bf16.msra.mxu0 %v875
        %5847 = vmatpush.bf16.msra.mxu0 %v873
        %5848 = vmatpush.bf16.msra.mxu0 %v871
        %5849 = vmatpush.bf16.msra.mxu0 %v869
        %5850 = vmatpush.bf16.msra.mxu0 %v867
        %5851 = vmatpush.bf16.msra.mxu0 %v865
        %5852 = vmatpush.bf16.msra.mxu0 %v863
        %5853 = vmatpush.bf16.msra.mxu0 %v861
        %5854 = vmatmul.bf16.gmra.mxu0 %v2654
        %v5855 = vpop.f32.mrf.mxu0
        %v5856 = vadd.f32 %v5723, %v5855
        %v5857 = vpop.f32.mrf.mxu0
        %v5858 = vadd.f32 %v5725, %v5857
        %5859 = vmatmul.bf16.gmra.mxu0 %v2670
        %v5860 = vpop.f32.mrf.mxu0
        %v5861 = vadd.f32 %v5728, %v5860
        %v5862 = vpop.f32.mrf.mxu0
        %v5863 = vadd.f32 %v5730, %v5862
        %5864 = vmatmul.bf16.gmra.mxu0 %v2686
        %v5865 = vpop.f32.mrf.mxu0
        %v5866 = vadd.f32 %v5733, %v5865
        %v5867 = vpop.f32.mrf.mxu0
        %v5868 = vadd.f32 %v5735, %v5867
        %5869 = vmatmul.bf16.gmra.mxu0 %v2702
        %v5870 = vpop.f32.mrf.mxu0
        %v5871 = vadd.f32 %v5738, %v5870
        %v5872 = vpop.f32.mrf.mxu0
        %v5873 = vadd.f32 %v5740, %v5872
        %5874 = vmatmul.bf16.gmra.mxu0 %v2718
        %v5875 = vpop.f32.mrf.mxu0
        %v5876 = vadd.f32 %v5743, %v5875
        %v5877 = vpop.f32.mrf.mxu0
        %v5878 = vadd.f32 %v5745, %v5877
        %5879 = vmatmul.bf16.gmra.mxu0 %v2734
        %v5880 = vpop.f32.mrf.mxu0
        %v5881 = vadd.f32 %v5748, %v5880
        %v5882 = vpop.f32.mrf.mxu0
        %v5883 = vadd.f32 %v5750, %v5882
        %5884 = vmatmul.bf16.gmra.mxu0 %v2750
        %v5885 = vpop.f32.mrf.mxu0
        %v5886 = vadd.f32 %v5753, %v5885
        %v5887 = vpop.f32.mrf.mxu0
        %v5888 = vadd.f32 %v5755, %v5887
        %5889 = vmatmul.bf16.gmra.mxu0 %v2766
        %v5890 = vpop.f32.mrf.mxu0
        %v5891 = vadd.f32 %v5758, %v5890
        %v5892 = vpop.f32.mrf.mxu0
        %v5893 = vadd.f32 %v5760, %v5892
        %5894 = vmatmul.bf16.gmra.mxu0 %v2782
        %v5895 = vpop.f32.mrf.mxu0
        %v5896 = vadd.f32 %v5763, %v5895
        %v5897 = vpop.f32.mrf.mxu0
        %v5898 = vadd.f32 %v5765, %v5897
        %5899 = vmatmul.bf16.gmra.mxu0 %v2798
        %v5900 = vpop.f32.mrf.mxu0
        %v5901 = vadd.f32 %v5768, %v5900
        %v5902 = vpop.f32.mrf.mxu0
        %v5903 = vadd.f32 %v5770, %v5902
        %5904 = vmatmul.bf16.gmra.mxu0 %v2814
        %v5905 = vpop.f32.mrf.mxu0
        %v5906 = vadd.f32 %v5773, %v5905
        %v5907 = vpop.f32.mrf.mxu0
        %v5908 = vadd.f32 %v5775, %v5907
        %5909 = vmatmul.bf16.gmra.mxu0 %v2830
        %v5910 = vpop.f32.mrf.mxu0
        %v5911 = vadd.f32 %v5778, %v5910
        %v5912 = vpop.f32.mrf.mxu0
        %v5913 = vadd.f32 %v5780, %v5912
        %5914 = vmatmul.bf16.gmra.mxu0 %v2846
        %v5915 = vpop.f32.mrf.mxu0
        %v5916 = vadd.f32 %v5783, %v5915
        %v5917 = vpop.f32.mrf.mxu0
        %v5918 = vadd.f32 %v5785, %v5917
        %5919 = vmatmul.bf16.gmra.mxu0 %v2862
        %v5920 = vpop.f32.mrf.mxu0
        %v5921 = vadd.f32 %v5788, %v5920
        %v5922 = vpop.f32.mrf.mxu0
        %v5923 = vadd.f32 %v5790, %v5922
        %5924 = vmatmul.bf16.gmra.mxu0 %v2878
        %v5925 = vpop.f32.mrf.mxu0
        %v5926 = vadd.f32 %v5793, %v5925
        %v5927 = vpop.f32.mrf.mxu0
        %v5928 = vadd.f32 %v5795, %v5927
        %5929 = vmatmul.bf16.gmra.mxu0 %v2894
        %v5930 = vpop.f32.mrf.mxu0
        %v5931 = vadd.f32 %v5798, %v5930
        %v5932 = vpop.f32.mrf.mxu0
        %v5933 = vadd.f32 %v5800, %v5932
        %5934 = vmatmul.bf16.gmra.mxu0 %v2910
        %v5935 = vpop.f32.mrf.mxu0
        %v5936 = vadd.f32 %v5803, %v5935
        %v5937 = vpop.f32.mrf.mxu0
        %v5938 = vadd.f32 %v5805, %v5937
        %5939 = vmatmul.bf16.gmra.mxu0 %v2926
        %v5940 = vpop.f32.mrf.mxu0
        %v5941 = vadd.f32 %v5808, %v5940
        %v5942 = vpop.f32.mrf.mxu0
        %v5943 = vadd.f32 %v5810, %v5942
        %5944 = vmatmul.bf16.gmra.mxu0 %v2942
        %v5945 = vpop.f32.mrf.mxu0
        %v5946 = vadd.f32 %v5813, %v5945
        %v5947 = vpop.f32.mrf.mxu0
        %v5948 = vadd.f32 %v5815, %v5947
        %5949 = vmatmul.bf16.gmra.mxu0 %v2958
        %v5950 = vpop.f32.mrf.mxu0
        %v5951 = vadd.f32 %v5818, %v5950
        %v5952 = vpop.f32.mrf.mxu0
        %v5953 = vadd.f32 %v5820, %v5952
        %5954 = vmatmul.bf16.gmra.mxu0 %v2974
        %v5955 = vpop.f32.mrf.mxu0
        %v5956 = vadd.f32 %v5823, %v5955
        %v5957 = vpop.f32.mrf.mxu0
        %v5958 = vadd.f32 %v5825, %v5957
        %5959 = vmatmul.bf16.gmra.mxu0 %v2990
        %v5960 = vpop.f32.mrf.mxu0
        %v5961 = vadd.f32 %v5828, %v5960
        %v5962 = vpop.f32.mrf.mxu0
        %v5963 = vadd.f32 %v5830, %v5962
        %5964 = vmatmul.bf16.gmra.mxu0 %v3006
        %v5965 = vpop.f32.mrf.mxu0
        %v5966 = vadd.f32 %v5833, %v5965
        %v5967 = vpop.f32.mrf.mxu0
        %v5968 = vadd.f32 %v5835, %v5967
        %5969 = vmatmul.bf16.gmra.mxu0 %v3022
        %v5970 = vpop.f32.mrf.mxu0
        %v5971 = vadd.f32 %v5838, %v5970
        %v5972 = vpop.f32.mrf.mxu0
        %v5973 = vadd.f32 %v5840, %v5972
        %5974 = vmatmul.bf16.gmra.mxu0 %v3038
        %v5975 = vpop.f32.mrf.mxu0
        %v5976 = vadd.f32 %v5843, %v5975
        %v5977 = vpop.f32.mrf.mxu0
        %5978 = vdwg.mxu0
        %5979 = vmatpush.bf16.msra.mxu0 %v891
        %5980 = vmatpush.bf16.msra.mxu0 %v889
        %5981 = vmatpush.bf16.msra.mxu0 %v887
        %5982 = vmatpush.bf16.msra.mxu0 %v885
        %5983 = vmatpush.bf16.msra.mxu0 %v883
        %5984 = vmatpush.bf16.msra.mxu0 %v881
        %5985 = vmatpush.bf16.msra.mxu0 %v879
        %5986 = vmatpush.bf16.msra.mxu0 %v877
        %5987 = vmatmul.bf16.gmra.mxu0 %v2655
        %v5988 = vpop.f32.mrf.mxu0
        %v5989 = vadd.f32 %v5856, %v5988
        %v5990 = vpop.f32.mrf.mxu0
        %v5991 = vadd.f32 %v5858, %v5990
        %5992 = vmatmul.bf16.gmra.mxu0 %v2671
        %v5993 = vpop.f32.mrf.mxu0
        %v5994 = vadd.f32 %v5861, %v5993
        %v5995 = vpop.f32.mrf.mxu0
        %v5996 = vadd.f32 %v5863, %v5995
        %5997 = vmatmul.bf16.gmra.mxu0 %v2687
        %v5998 = vpop.f32.mrf.mxu0
        %v5999 = vadd.f32 %v5866, %v5998
        %v6000 = vpop.f32.mrf.mxu0
        %v6001 = vadd.f32 %v5868, %v6000
        %6002 = vmatmul.bf16.gmra.mxu0 %v2703
        %v6003 = vpop.f32.mrf.mxu0
        %v6004 = vadd.f32 %v5871, %v6003
        %v6005 = vpop.f32.mrf.mxu0
        %v6006 = vadd.f32 %v5873, %v6005
        %6007 = vmatmul.bf16.gmra.mxu0 %v2719
        %v6008 = vpop.f32.mrf.mxu0
        %v6009 = vadd.f32 %v5876, %v6008
        %v6010 = vpop.f32.mrf.mxu0
        %v6011 = vadd.f32 %v5878, %v6010
        %6012 = vmatmul.bf16.gmra.mxu0 %v2735
        %v6013 = vpop.f32.mrf.mxu0
        %v6014 = vadd.f32 %v5881, %v6013
        %v6015 = vpop.f32.mrf.mxu0
        %v6016 = vadd.f32 %v5883, %v6015
        %6017 = vmatmul.bf16.gmra.mxu0 %v2751
        %v6018 = vpop.f32.mrf.mxu0
        %v6019 = vadd.f32 %v5886, %v6018
        %v6020 = vpop.f32.mrf.mxu0
        %v6021 = vadd.f32 %v5888, %v6020
        %6022 = vmatmul.bf16.gmra.mxu0 %v2767
        %v6023 = vpop.f32.mrf.mxu0
        %v6024 = vadd.f32 %v5891, %v6023
        %v6025 = vpop.f32.mrf.mxu0
        %v6026 = vadd.f32 %v5893, %v6025
        %6027 = vmatmul.bf16.gmra.mxu0 %v2783
        %v6028 = vpop.f32.mrf.mxu0
        %v6029 = vadd.f32 %v5896, %v6028
        %v6030 = vpop.f32.mrf.mxu0
        %v6031 = vadd.f32 %v5898, %v6030
        %6032 = vmatmul.bf16.gmra.mxu0 %v2799
        %v6033 = vpop.f32.mrf.mxu0
        %v6034 = vadd.f32 %v5901, %v6033
        %v6035 = vpop.f32.mrf.mxu0
        %v6036 = vadd.f32 %v5903, %v6035
        %6037 = vmatmul.bf16.gmra.mxu0 %v2815
        %v6038 = vpop.f32.mrf.mxu0
        %v6039 = vadd.f32 %v5906, %v6038
        %v6040 = vpop.f32.mrf.mxu0
        %v6041 = vadd.f32 %v5908, %v6040
        %6042 = vmatmul.bf16.gmra.mxu0 %v2831
        %v6043 = vpop.f32.mrf.mxu0
        %v6044 = vadd.f32 %v5911, %v6043
        %v6045 = vpop.f32.mrf.mxu0
        %v6046 = vadd.f32 %v5913, %v6045
        %6047 = vmatmul.bf16.gmra.mxu0 %v2847
        %v6048 = vpop.f32.mrf.mxu0
        %v6049 = vadd.f32 %v5916, %v6048
        %v6050 = vpop.f32.mrf.mxu0
        %v6051 = vadd.f32 %v5918, %v6050
        %6052 = vmatmul.bf16.gmra.mxu0 %v2863
        %v6053 = vpop.f32.mrf.mxu0
        %v6054 = vadd.f32 %v5921, %v6053
        %v6055 = vpop.f32.mrf.mxu0
        %v6056 = vadd.f32 %v5923, %v6055
        %6057 = vmatmul.bf16.gmra.mxu0 %v2879
        %v6058 = vpop.f32.mrf.mxu0
        %v6059 = vadd.f32 %v5926, %v6058
        %v6060 = vpop.f32.mrf.mxu0
        %v6061 = vadd.f32 %v5928, %v6060
        %6062 = vmatmul.bf16.gmra.mxu0 %v2895
        %v6063 = vpop.f32.mrf.mxu0
        %v6064 = vadd.f32 %v5931, %v6063
        %v6065 = vpop.f32.mrf.mxu0
        %v6066 = vadd.f32 %v5933, %v6065
        %6067 = vmatmul.bf16.gmra.mxu0 %v2911
        %v6068 = vpop.f32.mrf.mxu0
        %v6069 = vadd.f32 %v5936, %v6068
        %v6070 = vpop.f32.mrf.mxu0
        %v6071 = vadd.f32 %v5938, %v6070
        %6072 = vmatmul.bf16.gmra.mxu0 %v2927
        %v6073 = vpop.f32.mrf.mxu0
        %v6074 = vadd.f32 %v5941, %v6073
        %v6075 = vpop.f32.mrf.mxu0
        %v6076 = vadd.f32 %v5943, %v6075
        %6077 = vmatmul.bf16.gmra.mxu0 %v2943
        %v6078 = vpop.f32.mrf.mxu0
        %v6079 = vadd.f32 %v5946, %v6078
        %v6080 = vpop.f32.mrf.mxu0
        %v6081 = vadd.f32 %v5948, %v6080
        %6082 = vmatmul.bf16.gmra.mxu0 %v2959
        %v6083 = vpop.f32.mrf.mxu0
        %v6084 = vadd.f32 %v5951, %v6083
        %v6085 = vpop.f32.mrf.mxu0
        %v6086 = vadd.f32 %v5953, %v6085
        %6087 = vmatmul.bf16.gmra.mxu0 %v2975
        %v6088 = vpop.f32.mrf.mxu0
        %v6089 = vadd.f32 %v5956, %v6088
        %v6090 = vpop.f32.mrf.mxu0
        %v6091 = vadd.f32 %v5958, %v6090
        %6092 = vmatmul.bf16.gmra.mxu0 %v2991
        %v6093 = vpop.f32.mrf.mxu0
        %v6094 = vadd.f32 %v5961, %v6093
        %v6095 = vpop.f32.mrf.mxu0
        %v6096 = vadd.f32 %v5963, %v6095
        %6097 = vmatmul.bf16.gmra.mxu0 %v3007
        %v6098 = vpop.f32.mrf.mxu0
        %v6099 = vadd.f32 %v5966, %v6098
        %v6100 = vpop.f32.mrf.mxu0
        %v6101 = vadd.f32 %v5968, %v6100
        %6102 = vmatmul.bf16.gmra.mxu0 %v3023
        %v6103 = vpop.f32.mrf.mxu0
        %v6104 = vadd.f32 %v5971, %v6103
        %v6105 = vpop.f32.mrf.mxu0
        %v6106 = vadd.f32 %v5973, %v6105
        %6107 = vmatmul.bf16.gmra.mxu0 %v3039
        %v6108 = vpop.f32.mrf.mxu0
        %v6109 = vadd.f32 %v5976, %v6108
        %v6110 = vpop.f32.mrf.mxu0
        %6111 = vdwg.mxu0
        %6112 = vmatpush.bf16.msra.mxu0 %v907
        %6113 = vmatpush.bf16.msra.mxu0 %v905
        %6114 = vmatpush.bf16.msra.mxu0 %v903
        %6115 = vmatpush.bf16.msra.mxu0 %v901
        %6116 = vmatpush.bf16.msra.mxu0 %v899
        %6117 = vmatpush.bf16.msra.mxu0 %v897
        %6118 = vmatpush.bf16.msra.mxu0 %v895
        %6119 = vmatpush.bf16.msra.mxu0 %v893
        %6120 = vmatmul.bf16.gmra.mxu0 %v2656
        %v6121 = vpop.f32.mrf.mxu0
        %v6122 = vadd.f32 %v5989, %v6121
        %v6123 = vpop.f32.mrf.mxu0
        %v6124 = vadd.f32 %v5991, %v6123
        %6125 = vmatmul.bf16.gmra.mxu0 %v2672
        %v6126 = vpop.f32.mrf.mxu0
        %v6127 = vadd.f32 %v5994, %v6126
        %v6128 = vpop.f32.mrf.mxu0
        %v6129 = vadd.f32 %v5996, %v6128
        %6130 = vmatmul.bf16.gmra.mxu0 %v2688
        %v6131 = vpop.f32.mrf.mxu0
        %v6132 = vadd.f32 %v5999, %v6131
        %v6133 = vpop.f32.mrf.mxu0
        %v6134 = vadd.f32 %v6001, %v6133
        %6135 = vmatmul.bf16.gmra.mxu0 %v2704
        %v6136 = vpop.f32.mrf.mxu0
        %v6137 = vadd.f32 %v6004, %v6136
        %v6138 = vpop.f32.mrf.mxu0
        %v6139 = vadd.f32 %v6006, %v6138
        %6140 = vmatmul.bf16.gmra.mxu0 %v2720
        %v6141 = vpop.f32.mrf.mxu0
        %v6142 = vadd.f32 %v6009, %v6141
        %v6143 = vpop.f32.mrf.mxu0
        %v6144 = vadd.f32 %v6011, %v6143
        %6145 = vmatmul.bf16.gmra.mxu0 %v2736
        %v6146 = vpop.f32.mrf.mxu0
        %v6147 = vadd.f32 %v6014, %v6146
        %v6148 = vpop.f32.mrf.mxu0
        %v6149 = vadd.f32 %v6016, %v6148
        %6150 = vmatmul.bf16.gmra.mxu0 %v2752
        %v6151 = vpop.f32.mrf.mxu0
        %v6152 = vadd.f32 %v6019, %v6151
        %v6153 = vpop.f32.mrf.mxu0
        %v6154 = vadd.f32 %v6021, %v6153
        %6155 = vmatmul.bf16.gmra.mxu0 %v2768
        %v6156 = vpop.f32.mrf.mxu0
        %v6157 = vadd.f32 %v6024, %v6156
        %v6158 = vpop.f32.mrf.mxu0
        %v6159 = vadd.f32 %v6026, %v6158
        %6160 = vmatmul.bf16.gmra.mxu0 %v2784
        %v6161 = vpop.f32.mrf.mxu0
        %v6162 = vadd.f32 %v6029, %v6161
        %v6163 = vpop.f32.mrf.mxu0
        %v6164 = vadd.f32 %v6031, %v6163
        %6165 = vmatmul.bf16.gmra.mxu0 %v2800
        %v6166 = vpop.f32.mrf.mxu0
        %v6167 = vadd.f32 %v6034, %v6166
        %v6168 = vpop.f32.mrf.mxu0
        %v6169 = vadd.f32 %v6036, %v6168
        %6170 = vmatmul.bf16.gmra.mxu0 %v2816
        %v6171 = vpop.f32.mrf.mxu0
        %v6172 = vadd.f32 %v6039, %v6171
        %v6173 = vpop.f32.mrf.mxu0
        %v6174 = vadd.f32 %v6041, %v6173
        %6175 = vmatmul.bf16.gmra.mxu0 %v2832
        %v6176 = vpop.f32.mrf.mxu0
        %v6177 = vadd.f32 %v6044, %v6176
        %v6178 = vpop.f32.mrf.mxu0
        %v6179 = vadd.f32 %v6046, %v6178
        %6180 = vmatmul.bf16.gmra.mxu0 %v2848
        %v6181 = vpop.f32.mrf.mxu0
        %v6182 = vadd.f32 %v6049, %v6181
        %v6183 = vpop.f32.mrf.mxu0
        %v6184 = vadd.f32 %v6051, %v6183
        %6185 = vmatmul.bf16.gmra.mxu0 %v2864
        %v6186 = vpop.f32.mrf.mxu0
        %v6187 = vadd.f32 %v6054, %v6186
        %v6188 = vpop.f32.mrf.mxu0
        %v6189 = vadd.f32 %v6056, %v6188
        %6190 = vmatmul.bf16.gmra.mxu0 %v2880
        %v6191 = vpop.f32.mrf.mxu0
        %v6192 = vadd.f32 %v6059, %v6191
        %v6193 = vpop.f32.mrf.mxu0
        %v6194 = vadd.f32 %v6061, %v6193
        %6195 = vmatmul.bf16.gmra.mxu0 %v2896
        %v6196 = vpop.f32.mrf.mxu0
        %v6197 = vadd.f32 %v6064, %v6196
        %v6198 = vpop.f32.mrf.mxu0
        %v6199 = vadd.f32 %v6066, %v6198
        %6200 = vmatmul.bf16.gmra.mxu0 %v2912
        %v6201 = vpop.f32.mrf.mxu0
        %v6202 = vadd.f32 %v6069, %v6201
        %v6203 = vpop.f32.mrf.mxu0
        %v6204 = vadd.f32 %v6071, %v6203
        %6205 = vmatmul.bf16.gmra.mxu0 %v2928
        %v6206 = vpop.f32.mrf.mxu0
        %v6207 = vadd.f32 %v6074, %v6206
        %v6208 = vpop.f32.mrf.mxu0
        %v6209 = vadd.f32 %v6076, %v6208
        %6210 = vmatmul.bf16.gmra.mxu0 %v2944
        %v6211 = vpop.f32.mrf.mxu0
        %v6212 = vadd.f32 %v6079, %v6211
        %v6213 = vpop.f32.mrf.mxu0
        %v6214 = vadd.f32 %v6081, %v6213
        %6215 = vmatmul.bf16.gmra.mxu0 %v2960
        %v6216 = vpop.f32.mrf.mxu0
        %v6217 = vadd.f32 %v6084, %v6216
        %v6218 = vpop.f32.mrf.mxu0
        %v6219 = vadd.f32 %v6086, %v6218
        %6220 = vmatmul.bf16.gmra.mxu0 %v2976
        %v6221 = vpop.f32.mrf.mxu0
        %v6222 = vadd.f32 %v6089, %v6221
        %v6223 = vpop.f32.mrf.mxu0
        %v6224 = vadd.f32 %v6091, %v6223
        %6225 = vmatmul.bf16.gmra.mxu0 %v2992
        %v6226 = vpop.f32.mrf.mxu0
        %v6227 = vadd.f32 %v6094, %v6226
        %v6228 = vpop.f32.mrf.mxu0
        %v6229 = vadd.f32 %v6096, %v6228
        %6230 = vmatmul.bf16.gmra.mxu0 %v3008
        %v6231 = vpop.f32.mrf.mxu0
        %v6232 = vadd.f32 %v6099, %v6231
        %v6233 = vpop.f32.mrf.mxu0
        %v6234 = vadd.f32 %v6101, %v6233
        %6235 = vmatmul.bf16.gmra.mxu0 %v3024
        %v6236 = vpop.f32.mrf.mxu0
        %v6237 = vadd.f32 %v6104, %v6236
        %v6238 = vpop.f32.mrf.mxu0
        %v6239 = vadd.f32 %v6106, %v6238
        %6240 = vmatmul.bf16.gmra.mxu0 %v3040
        %v6241 = vpop.f32.mrf.mxu0
        %v6242 = vadd.f32 %v6109, %v6241
        %v6243 = vpop.f32.mrf.mxu0
        %6244 = vdwg.mxu0
        %6245 = vmatpush.bf16.msra.mxu0 %v923
        %6246 = vmatpush.bf16.msra.mxu0 %v921
        %6247 = vmatpush.bf16.msra.mxu0 %v919
        %6248 = vmatpush.bf16.msra.mxu0 %v917
        %6249 = vmatpush.bf16.msra.mxu0 %v915
        %6250 = vmatpush.bf16.msra.mxu0 %v913
        %6251 = vmatpush.bf16.msra.mxu0 %v911
        %6252 = vmatpush.bf16.msra.mxu0 %v909
        %6253 = vmatmul.bf16.gmra.mxu0 %v2657
        %v6254 = vpop.f32.mrf.mxu0
        %v6255 = vadd.f32 %v6122, %v6254
        %v6256 = vpop.f32.mrf.mxu0
        %v6257 = vadd.f32 %v6124, %v6256
        %6258 = vmatmul.bf16.gmra.mxu0 %v2673
        %v6259 = vpop.f32.mrf.mxu0
        %v6260 = vadd.f32 %v6127, %v6259
        %v6261 = vpop.f32.mrf.mxu0
        %v6262 = vadd.f32 %v6129, %v6261
        %6263 = vmatmul.bf16.gmra.mxu0 %v2689
        %v6264 = vpop.f32.mrf.mxu0
        %v6265 = vadd.f32 %v6132, %v6264
        %v6266 = vpop.f32.mrf.mxu0
        %v6267 = vadd.f32 %v6134, %v6266
        %6268 = vmatmul.bf16.gmra.mxu0 %v2705
        %v6269 = vpop.f32.mrf.mxu0
        %v6270 = vadd.f32 %v6137, %v6269
        %v6271 = vpop.f32.mrf.mxu0
        %v6272 = vadd.f32 %v6139, %v6271
        %6273 = vmatmul.bf16.gmra.mxu0 %v2721
        %v6274 = vpop.f32.mrf.mxu0
        %v6275 = vadd.f32 %v6142, %v6274
        %v6276 = vpop.f32.mrf.mxu0
        %v6277 = vadd.f32 %v6144, %v6276
        %6278 = vmatmul.bf16.gmra.mxu0 %v2737
        %v6279 = vpop.f32.mrf.mxu0
        %v6280 = vadd.f32 %v6147, %v6279
        %v6281 = vpop.f32.mrf.mxu0
        %v6282 = vadd.f32 %v6149, %v6281
        %6283 = vmatmul.bf16.gmra.mxu0 %v2753
        %v6284 = vpop.f32.mrf.mxu0
        %v6285 = vadd.f32 %v6152, %v6284
        %v6286 = vpop.f32.mrf.mxu0
        %v6287 = vadd.f32 %v6154, %v6286
        %6288 = vmatmul.bf16.gmra.mxu0 %v2769
        %v6289 = vpop.f32.mrf.mxu0
        %v6290 = vadd.f32 %v6157, %v6289
        %v6291 = vpop.f32.mrf.mxu0
        %v6292 = vadd.f32 %v6159, %v6291
        %6293 = vmatmul.bf16.gmra.mxu0 %v2785
        %v6294 = vpop.f32.mrf.mxu0
        %v6295 = vadd.f32 %v6162, %v6294
        %v6296 = vpop.f32.mrf.mxu0
        %v6297 = vadd.f32 %v6164, %v6296
        %6298 = vmatmul.bf16.gmra.mxu0 %v2801
        %v6299 = vpop.f32.mrf.mxu0
        %v6300 = vadd.f32 %v6167, %v6299
        %v6301 = vpop.f32.mrf.mxu0
        %v6302 = vadd.f32 %v6169, %v6301
        %6303 = vmatmul.bf16.gmra.mxu0 %v2817
        %v6304 = vpop.f32.mrf.mxu0
        %v6305 = vadd.f32 %v6172, %v6304
        %v6306 = vpop.f32.mrf.mxu0
        %v6307 = vadd.f32 %v6174, %v6306
        %6308 = vmatmul.bf16.gmra.mxu0 %v2833
        %v6309 = vpop.f32.mrf.mxu0
        %v6310 = vadd.f32 %v6177, %v6309
        %v6311 = vpop.f32.mrf.mxu0
        %v6312 = vadd.f32 %v6179, %v6311
        %6313 = vmatmul.bf16.gmra.mxu0 %v2849
        %v6314 = vpop.f32.mrf.mxu0
        %v6315 = vadd.f32 %v6182, %v6314
        %v6316 = vpop.f32.mrf.mxu0
        %v6317 = vadd.f32 %v6184, %v6316
        %6318 = vmatmul.bf16.gmra.mxu0 %v2865
        %v6319 = vpop.f32.mrf.mxu0
        %v6320 = vadd.f32 %v6187, %v6319
        %v6321 = vpop.f32.mrf.mxu0
        %v6322 = vadd.f32 %v6189, %v6321
        %6323 = vmatmul.bf16.gmra.mxu0 %v2881
        %v6324 = vpop.f32.mrf.mxu0
        %v6325 = vadd.f32 %v6192, %v6324
        %v6326 = vpop.f32.mrf.mxu0
        %v6327 = vadd.f32 %v6194, %v6326
        %6328 = vmatmul.bf16.gmra.mxu0 %v2897
        %v6329 = vpop.f32.mrf.mxu0
        %v6330 = vadd.f32 %v6197, %v6329
        %v6331 = vpop.f32.mrf.mxu0
        %v6332 = vadd.f32 %v6199, %v6331
        %6333 = vmatmul.bf16.gmra.mxu0 %v2913
        %v6334 = vpop.f32.mrf.mxu0
        %v6335 = vadd.f32 %v6202, %v6334
        %v6336 = vpop.f32.mrf.mxu0
        %v6337 = vadd.f32 %v6204, %v6336
        %6338 = vmatmul.bf16.gmra.mxu0 %v2929
        %v6339 = vpop.f32.mrf.mxu0
        %v6340 = vadd.f32 %v6207, %v6339
        %v6341 = vpop.f32.mrf.mxu0
        %v6342 = vadd.f32 %v6209, %v6341
        %6343 = vmatmul.bf16.gmra.mxu0 %v2945
        %v6344 = vpop.f32.mrf.mxu0
        %v6345 = vadd.f32 %v6212, %v6344
        %v6346 = vpop.f32.mrf.mxu0
        %v6347 = vadd.f32 %v6214, %v6346
        %6348 = vmatmul.bf16.gmra.mxu0 %v2961
        %v6349 = vpop.f32.mrf.mxu0
        %v6350 = vadd.f32 %v6217, %v6349
        %v6351 = vpop.f32.mrf.mxu0
        %v6352 = vadd.f32 %v6219, %v6351
        %6353 = vmatmul.bf16.gmra.mxu0 %v2977
        %v6354 = vpop.f32.mrf.mxu0
        %v6355 = vadd.f32 %v6222, %v6354
        %v6356 = vpop.f32.mrf.mxu0
        %v6357 = vadd.f32 %v6224, %v6356
        %6358 = vmatmul.bf16.gmra.mxu0 %v2993
        %v6359 = vpop.f32.mrf.mxu0
        %v6360 = vadd.f32 %v6227, %v6359
        %v6361 = vpop.f32.mrf.mxu0
        %v6362 = vadd.f32 %v6229, %v6361
        %6363 = vmatmul.bf16.gmra.mxu0 %v3009
        %v6364 = vpop.f32.mrf.mxu0
        %v6365 = vadd.f32 %v6232, %v6364
        %v6366 = vpop.f32.mrf.mxu0
        %v6367 = vadd.f32 %v6234, %v6366
        %6368 = vmatmul.bf16.gmra.mxu0 %v3025
        %v6369 = vpop.f32.mrf.mxu0
        %v6370 = vadd.f32 %v6237, %v6369
        %v6371 = vpop.f32.mrf.mxu0
        %v6372 = vadd.f32 %v6239, %v6371
        %6373 = vmatmul.bf16.gmra.mxu0 %v3041
        %v6374 = vpop.f32.mrf.mxu0
        %v6375 = vadd.f32 %v6242, %v6374
        %v6376 = vpop.f32.mrf.mxu0
        %6377 = vdwg.mxu0
        %6378 = vmatpush.bf16.msra.mxu0 %v939
        %6379 = vmatpush.bf16.msra.mxu0 %v937
        %6380 = vmatpush.bf16.msra.mxu0 %v935
        %6381 = vmatpush.bf16.msra.mxu0 %v933
        %6382 = vmatpush.bf16.msra.mxu0 %v931
        %6383 = vmatpush.bf16.msra.mxu0 %v929
        %6384 = vmatpush.bf16.msra.mxu0 %v927
        %6385 = vmatpush.bf16.msra.mxu0 %v925
        %6386 = vmatmul.bf16.gmra.mxu0 %v2658
        %v6387 = vpop.f32.mrf.mxu0
        %v6388 = vadd.f32 %v6255, %v6387
        %v6389 = vpop.f32.mrf.mxu0
        %v6390 = vadd.f32 %v6257, %v6389
        %6391 = vmatmul.bf16.gmra.mxu0 %v2674
        %v6392 = vpop.f32.mrf.mxu0
        %v6393 = vadd.f32 %v6260, %v6392
        %v6394 = vpop.f32.mrf.mxu0
        %v6395 = vadd.f32 %v6262, %v6394
        %6396 = vmatmul.bf16.gmra.mxu0 %v2690
        %v6397 = vpop.f32.mrf.mxu0
        %v6398 = vadd.f32 %v6265, %v6397
        %v6399 = vpop.f32.mrf.mxu0
        %v6400 = vadd.f32 %v6267, %v6399
        %6401 = vmatmul.bf16.gmra.mxu0 %v2706
        %v6402 = vpop.f32.mrf.mxu0
        %v6403 = vadd.f32 %v6270, %v6402
        %v6404 = vpop.f32.mrf.mxu0
        %v6405 = vadd.f32 %v6272, %v6404
        %6406 = vmatmul.bf16.gmra.mxu0 %v2722
        %v6407 = vpop.f32.mrf.mxu0
        %v6408 = vadd.f32 %v6275, %v6407
        %v6409 = vpop.f32.mrf.mxu0
        %v6410 = vadd.f32 %v6277, %v6409
        %6411 = vmatmul.bf16.gmra.mxu0 %v2738
        %v6412 = vpop.f32.mrf.mxu0
        %v6413 = vadd.f32 %v6280, %v6412
        %v6414 = vpop.f32.mrf.mxu0
        %v6415 = vadd.f32 %v6282, %v6414
        %6416 = vmatmul.bf16.gmra.mxu0 %v2754
        %v6417 = vpop.f32.mrf.mxu0
        %v6418 = vadd.f32 %v6285, %v6417
        %v6419 = vpop.f32.mrf.mxu0
        %v6420 = vadd.f32 %v6287, %v6419
        %6421 = vmatmul.bf16.gmra.mxu0 %v2770
        %v6422 = vpop.f32.mrf.mxu0
        %v6423 = vadd.f32 %v6290, %v6422
        %v6424 = vpop.f32.mrf.mxu0
        %v6425 = vadd.f32 %v6292, %v6424
        %6426 = vmatmul.bf16.gmra.mxu0 %v2786
        %v6427 = vpop.f32.mrf.mxu0
        %v6428 = vadd.f32 %v6295, %v6427
        %v6429 = vpop.f32.mrf.mxu0
        %v6430 = vadd.f32 %v6297, %v6429
        %6431 = vmatmul.bf16.gmra.mxu0 %v2802
        %v6432 = vpop.f32.mrf.mxu0
        %v6433 = vadd.f32 %v6300, %v6432
        %v6434 = vpop.f32.mrf.mxu0
        %v6435 = vadd.f32 %v6302, %v6434
        %6436 = vmatmul.bf16.gmra.mxu0 %v2818
        %v6437 = vpop.f32.mrf.mxu0
        %v6438 = vadd.f32 %v6305, %v6437
        %v6439 = vpop.f32.mrf.mxu0
        %v6440 = vadd.f32 %v6307, %v6439
        %6441 = vmatmul.bf16.gmra.mxu0 %v2834
        %v6442 = vpop.f32.mrf.mxu0
        %v6443 = vadd.f32 %v6310, %v6442
        %v6444 = vpop.f32.mrf.mxu0
        %v6445 = vadd.f32 %v6312, %v6444
        %6446 = vmatmul.bf16.gmra.mxu0 %v2850
        %v6447 = vpop.f32.mrf.mxu0
        %v6448 = vadd.f32 %v6315, %v6447
        %v6449 = vpop.f32.mrf.mxu0
        %v6450 = vadd.f32 %v6317, %v6449
        %6451 = vmatmul.bf16.gmra.mxu0 %v2866
        %v6452 = vpop.f32.mrf.mxu0
        %v6453 = vadd.f32 %v6320, %v6452
        %v6454 = vpop.f32.mrf.mxu0
        %v6455 = vadd.f32 %v6322, %v6454
        %6456 = vmatmul.bf16.gmra.mxu0 %v2882
        %v6457 = vpop.f32.mrf.mxu0
        %v6458 = vadd.f32 %v6325, %v6457
        %v6459 = vpop.f32.mrf.mxu0
        %v6460 = vadd.f32 %v6327, %v6459
        %6461 = vmatmul.bf16.gmra.mxu0 %v2898
        %v6462 = vpop.f32.mrf.mxu0
        %v6463 = vadd.f32 %v6330, %v6462
        %v6464 = vpop.f32.mrf.mxu0
        %v6465 = vadd.f32 %v6332, %v6464
        %6466 = vmatmul.bf16.gmra.mxu0 %v2914
        %v6467 = vpop.f32.mrf.mxu0
        %v6468 = vadd.f32 %v6335, %v6467
        %v6469 = vpop.f32.mrf.mxu0
        %v6470 = vadd.f32 %v6337, %v6469
        %6471 = vmatmul.bf16.gmra.mxu0 %v2930
        %v6472 = vpop.f32.mrf.mxu0
        %v6473 = vadd.f32 %v6340, %v6472
        %v6474 = vpop.f32.mrf.mxu0
        %v6475 = vadd.f32 %v6342, %v6474
        %6476 = vmatmul.bf16.gmra.mxu0 %v2946
        %v6477 = vpop.f32.mrf.mxu0
        %v6478 = vadd.f32 %v6345, %v6477
        %v6479 = vpop.f32.mrf.mxu0
        %v6480 = vadd.f32 %v6347, %v6479
        %6481 = vmatmul.bf16.gmra.mxu0 %v2962
        %v6482 = vpop.f32.mrf.mxu0
        %v6483 = vadd.f32 %v6350, %v6482
        %v6484 = vpop.f32.mrf.mxu0
        %v6485 = vadd.f32 %v6352, %v6484
        %6486 = vmatmul.bf16.gmra.mxu0 %v2978
        %v6487 = vpop.f32.mrf.mxu0
        %v6488 = vadd.f32 %v6355, %v6487
        %v6489 = vpop.f32.mrf.mxu0
        %v6490 = vadd.f32 %v6357, %v6489
        %6491 = vmatmul.bf16.gmra.mxu0 %v2994
        %v6492 = vpop.f32.mrf.mxu0
        %v6493 = vadd.f32 %v6360, %v6492
        %v6494 = vpop.f32.mrf.mxu0
        %v6495 = vadd.f32 %v6362, %v6494
        %6496 = vmatmul.bf16.gmra.mxu0 %v3010
        %v6497 = vpop.f32.mrf.mxu0
        %v6498 = vadd.f32 %v6365, %v6497
        %v6499 = vpop.f32.mrf.mxu0
        %v6500 = vadd.f32 %v6367, %v6499
        %6501 = vmatmul.bf16.gmra.mxu0 %v3026
        %v6502 = vpop.f32.mrf.mxu0
        %v6503 = vadd.f32 %v6370, %v6502
        %v6504 = vpop.f32.mrf.mxu0
        %v6505 = vadd.f32 %v6372, %v6504
        %6506 = vmatmul.bf16.gmra.mxu0 %v3042
        %v6507 = vpop.f32.mrf.mxu0
        %v6508 = vadd.f32 %v6375, %v6507
        %v6509 = vpop.f32.mrf.mxu0
        %6510 = vdwg.mxu0
        %6511 = vmatpush.bf16.msra.mxu0 %v955
        %6512 = vmatpush.bf16.msra.mxu0 %v953
        %6513 = vmatpush.bf16.msra.mxu0 %v951
        %6514 = vmatpush.bf16.msra.mxu0 %v949
        %6515 = vmatpush.bf16.msra.mxu0 %v947
        %6516 = vmatpush.bf16.msra.mxu0 %v945
        %6517 = vmatpush.bf16.msra.mxu0 %v943
        %6518 = vmatpush.bf16.msra.mxu0 %v941
        %6519 = vmatmul.bf16.gmra.mxu0 %v2659
        %v6520 = vpop.f32.mrf.mxu0
        %v6521 = vadd.f32 %v6388, %v6520
        %v6522 = vpop.f32.mrf.mxu0
        %v6523 = vadd.f32 %v6390, %v6522
        %6524 = vmatmul.bf16.gmra.mxu0 %v2675
        %v6525 = vpop.f32.mrf.mxu0
        %v6526 = vadd.f32 %v6393, %v6525
        %v6527 = vpop.f32.mrf.mxu0
        %v6528 = vadd.f32 %v6395, %v6527
        %6529 = vmatmul.bf16.gmra.mxu0 %v2691
        %v6530 = vpop.f32.mrf.mxu0
        %v6531 = vadd.f32 %v6398, %v6530
        %v6532 = vpop.f32.mrf.mxu0
        %v6533 = vadd.f32 %v6400, %v6532
        %6534 = vmatmul.bf16.gmra.mxu0 %v2707
        %v6535 = vpop.f32.mrf.mxu0
        %v6536 = vadd.f32 %v6403, %v6535
        %v6537 = vpop.f32.mrf.mxu0
        %v6538 = vadd.f32 %v6405, %v6537
        %6539 = vmatmul.bf16.gmra.mxu0 %v2723
        %v6540 = vpop.f32.mrf.mxu0
        %v6541 = vadd.f32 %v6408, %v6540
        %v6542 = vpop.f32.mrf.mxu0
        %v6543 = vadd.f32 %v6410, %v6542
        %6544 = vmatmul.bf16.gmra.mxu0 %v2739
        %v6545 = vpop.f32.mrf.mxu0
        %v6546 = vadd.f32 %v6413, %v6545
        %v6547 = vpop.f32.mrf.mxu0
        %v6548 = vadd.f32 %v6415, %v6547
        %6549 = vmatmul.bf16.gmra.mxu0 %v2755
        %v6550 = vpop.f32.mrf.mxu0
        %v6551 = vadd.f32 %v6418, %v6550
        %v6552 = vpop.f32.mrf.mxu0
        %v6553 = vadd.f32 %v6420, %v6552
        %6554 = vmatmul.bf16.gmra.mxu0 %v2771
        %v6555 = vpop.f32.mrf.mxu0
        %v6556 = vadd.f32 %v6423, %v6555
        %v6557 = vpop.f32.mrf.mxu0
        %v6558 = vadd.f32 %v6425, %v6557
        %6559 = vmatmul.bf16.gmra.mxu0 %v2787
        %v6560 = vpop.f32.mrf.mxu0
        %v6561 = vadd.f32 %v6428, %v6560
        %v6562 = vpop.f32.mrf.mxu0
        %v6563 = vadd.f32 %v6430, %v6562
        %6564 = vmatmul.bf16.gmra.mxu0 %v2803
        %v6565 = vpop.f32.mrf.mxu0
        %v6566 = vadd.f32 %v6433, %v6565
        %v6567 = vpop.f32.mrf.mxu0
        %v6568 = vadd.f32 %v6435, %v6567
        %6569 = vmatmul.bf16.gmra.mxu0 %v2819
        %v6570 = vpop.f32.mrf.mxu0
        %v6571 = vadd.f32 %v6438, %v6570
        %v6572 = vpop.f32.mrf.mxu0
        %v6573 = vadd.f32 %v6440, %v6572
        %6574 = vmatmul.bf16.gmra.mxu0 %v2835
        %v6575 = vpop.f32.mrf.mxu0
        %v6576 = vadd.f32 %v6443, %v6575
        %v6577 = vpop.f32.mrf.mxu0
        %v6578 = vadd.f32 %v6445, %v6577
        %6579 = vmatmul.bf16.gmra.mxu0 %v2851
        %v6580 = vpop.f32.mrf.mxu0
        %v6581 = vadd.f32 %v6448, %v6580
        %v6582 = vpop.f32.mrf.mxu0
        %v6583 = vadd.f32 %v6450, %v6582
        %6584 = vmatmul.bf16.gmra.mxu0 %v2867
        %v6585 = vpop.f32.mrf.mxu0
        %v6586 = vadd.f32 %v6453, %v6585
        %v6587 = vpop.f32.mrf.mxu0
        %v6588 = vadd.f32 %v6455, %v6587
        %6589 = vmatmul.bf16.gmra.mxu0 %v2883
        %v6590 = vpop.f32.mrf.mxu0
        %v6591 = vadd.f32 %v6458, %v6590
        %v6592 = vpop.f32.mrf.mxu0
        %v6593 = vadd.f32 %v6460, %v6592
        %6594 = vmatmul.bf16.gmra.mxu0 %v2899
        %v6595 = vpop.f32.mrf.mxu0
        %v6596 = vadd.f32 %v6463, %v6595
        %v6597 = vpop.f32.mrf.mxu0
        %v6598 = vadd.f32 %v6465, %v6597
        %6599 = vmatmul.bf16.gmra.mxu0 %v2915
        %v6600 = vpop.f32.mrf.mxu0
        %v6601 = vadd.f32 %v6468, %v6600
        %v6602 = vpop.f32.mrf.mxu0
        %v6603 = vadd.f32 %v6470, %v6602
        %6604 = vmatmul.bf16.gmra.mxu0 %v2931
        %v6605 = vpop.f32.mrf.mxu0
        %v6606 = vadd.f32 %v6473, %v6605
        %v6607 = vpop.f32.mrf.mxu0
        %v6608 = vadd.f32 %v6475, %v6607
        %6609 = vmatmul.bf16.gmra.mxu0 %v2947
        %v6610 = vpop.f32.mrf.mxu0
        %v6611 = vadd.f32 %v6478, %v6610
        %v6612 = vpop.f32.mrf.mxu0
        %v6613 = vadd.f32 %v6480, %v6612
        %6614 = vmatmul.bf16.gmra.mxu0 %v2963
        %v6615 = vpop.f32.mrf.mxu0
        %v6616 = vadd.f32 %v6483, %v6615
        %v6617 = vpop.f32.mrf.mxu0
        %v6618 = vadd.f32 %v6485, %v6617
        %6619 = vmatmul.bf16.gmra.mxu0 %v2979
        %v6620 = vpop.f32.mrf.mxu0
        %v6621 = vadd.f32 %v6488, %v6620
        %v6622 = vpop.f32.mrf.mxu0
        %v6623 = vadd.f32 %v6490, %v6622
        %6624 = vmatmul.bf16.gmra.mxu0 %v2995
        %v6625 = vpop.f32.mrf.mxu0
        %v6626 = vadd.f32 %v6493, %v6625
        %v6627 = vpop.f32.mrf.mxu0
        %v6628 = vadd.f32 %v6495, %v6627
        %6629 = vmatmul.bf16.gmra.mxu0 %v3011
        %v6630 = vpop.f32.mrf.mxu0
        %v6631 = vadd.f32 %v6498, %v6630
        %v6632 = vpop.f32.mrf.mxu0
        %v6633 = vadd.f32 %v6500, %v6632
        %6634 = vmatmul.bf16.gmra.mxu0 %v3027
        %v6635 = vpop.f32.mrf.mxu0
        %v6636 = vadd.f32 %v6503, %v6635
        %v6637 = vpop.f32.mrf.mxu0
        %v6638 = vadd.f32 %v6505, %v6637
        %6639 = vmatmul.bf16.gmra.mxu0 %v3043
        %v6640 = vpop.f32.mrf.mxu0
        %v6641 = vadd.f32 %v6508, %v6640
        %v6642 = vpop.f32.mrf.mxu0
        %6643 = vdwg.mxu0
        %6644 = vmatpush.bf16.msra.mxu0 %v971
        %6645 = vmatpush.bf16.msra.mxu0 %v969
        %6646 = vmatpush.bf16.msra.mxu0 %v967
        %6647 = vmatpush.bf16.msra.mxu0 %v965
        %6648 = vmatpush.bf16.msra.mxu0 %v963
        %6649 = vmatpush.bf16.msra.mxu0 %v961
        %6650 = vmatpush.bf16.msra.mxu0 %v959
        %6651 = vmatpush.bf16.msra.mxu0 %v957
        %6652 = vmatmul.bf16.gmra.mxu0 %v2660
        %v6653 = vpop.f32.mrf.mxu0
        %v6654 = vadd.f32 %v6521, %v6653
        %v6655 = vpop.f32.mrf.mxu0
        %v6656 = vadd.f32 %v6523, %v6655
        %6657 = vmatmul.bf16.gmra.mxu0 %v2676
        %v6658 = vpop.f32.mrf.mxu0
        %v6659 = vadd.f32 %v6526, %v6658
        %v6660 = vpop.f32.mrf.mxu0
        %v6661 = vadd.f32 %v6528, %v6660
        %6662 = vmatmul.bf16.gmra.mxu0 %v2692
        %v6663 = vpop.f32.mrf.mxu0
        %v6664 = vadd.f32 %v6531, %v6663
        %v6665 = vpop.f32.mrf.mxu0
        %v6666 = vadd.f32 %v6533, %v6665
        %6667 = vmatmul.bf16.gmra.mxu0 %v2708
        %v6668 = vpop.f32.mrf.mxu0
        %v6669 = vadd.f32 %v6536, %v6668
        %v6670 = vpop.f32.mrf.mxu0
        %v6671 = vadd.f32 %v6538, %v6670
        %6672 = vmatmul.bf16.gmra.mxu0 %v2724
        %v6673 = vpop.f32.mrf.mxu0
        %v6674 = vadd.f32 %v6541, %v6673
        %v6675 = vpop.f32.mrf.mxu0
        %v6676 = vadd.f32 %v6543, %v6675
        %6677 = vmatmul.bf16.gmra.mxu0 %v2740
        %v6678 = vpop.f32.mrf.mxu0
        %v6679 = vadd.f32 %v6546, %v6678
        %v6680 = vpop.f32.mrf.mxu0
        %v6681 = vadd.f32 %v6548, %v6680
        %6682 = vmatmul.bf16.gmra.mxu0 %v2756
        %v6683 = vpop.f32.mrf.mxu0
        %v6684 = vadd.f32 %v6551, %v6683
        %v6685 = vpop.f32.mrf.mxu0
        %v6686 = vadd.f32 %v6553, %v6685
        %6687 = vmatmul.bf16.gmra.mxu0 %v2772
        %v6688 = vpop.f32.mrf.mxu0
        %v6689 = vadd.f32 %v6556, %v6688
        %v6690 = vpop.f32.mrf.mxu0
        %v6691 = vadd.f32 %v6558, %v6690
        %6692 = vmatmul.bf16.gmra.mxu0 %v2788
        %v6693 = vpop.f32.mrf.mxu0
        %v6694 = vadd.f32 %v6561, %v6693
        %v6695 = vpop.f32.mrf.mxu0
        %v6696 = vadd.f32 %v6563, %v6695
        %6697 = vmatmul.bf16.gmra.mxu0 %v2804
        %v6698 = vpop.f32.mrf.mxu0
        %v6699 = vadd.f32 %v6566, %v6698
        %v6700 = vpop.f32.mrf.mxu0
        %v6701 = vadd.f32 %v6568, %v6700
        %6702 = vmatmul.bf16.gmra.mxu0 %v2820
        %v6703 = vpop.f32.mrf.mxu0
        %v6704 = vadd.f32 %v6571, %v6703
        %v6705 = vpop.f32.mrf.mxu0
        %v6706 = vadd.f32 %v6573, %v6705
        %6707 = vmatmul.bf16.gmra.mxu0 %v2836
        %v6708 = vpop.f32.mrf.mxu0
        %v6709 = vadd.f32 %v6576, %v6708
        %v6710 = vpop.f32.mrf.mxu0
        %v6711 = vadd.f32 %v6578, %v6710
        %6712 = vmatmul.bf16.gmra.mxu0 %v2852
        %v6713 = vpop.f32.mrf.mxu0
        %v6714 = vadd.f32 %v6581, %v6713
        %v6715 = vpop.f32.mrf.mxu0
        %v6716 = vadd.f32 %v6583, %v6715
        %6717 = vmatmul.bf16.gmra.mxu0 %v2868
        %v6718 = vpop.f32.mrf.mxu0
        %v6719 = vadd.f32 %v6586, %v6718
        %v6720 = vpop.f32.mrf.mxu0
        %v6721 = vadd.f32 %v6588, %v6720
        %6722 = vmatmul.bf16.gmra.mxu0 %v2884
        %v6723 = vpop.f32.mrf.mxu0
        %v6724 = vadd.f32 %v6591, %v6723
        %v6725 = vpop.f32.mrf.mxu0
        %v6726 = vadd.f32 %v6593, %v6725
        %6727 = vmatmul.bf16.gmra.mxu0 %v2900
        %v6728 = vpop.f32.mrf.mxu0
        %v6729 = vadd.f32 %v6596, %v6728
        %v6730 = vpop.f32.mrf.mxu0
        %v6731 = vadd.f32 %v6598, %v6730
        %6732 = vmatmul.bf16.gmra.mxu0 %v2916
        %v6733 = vpop.f32.mrf.mxu0
        %v6734 = vadd.f32 %v6601, %v6733
        %v6735 = vpop.f32.mrf.mxu0
        %v6736 = vadd.f32 %v6603, %v6735
        %6737 = vmatmul.bf16.gmra.mxu0 %v2932
        %v6738 = vpop.f32.mrf.mxu0
        %v6739 = vadd.f32 %v6606, %v6738
        %v6740 = vpop.f32.mrf.mxu0
        %v6741 = vadd.f32 %v6608, %v6740
        %6742 = vmatmul.bf16.gmra.mxu0 %v2948
        %v6743 = vpop.f32.mrf.mxu0
        %v6744 = vadd.f32 %v6611, %v6743
        %v6745 = vpop.f32.mrf.mxu0
        %v6746 = vadd.f32 %v6613, %v6745
        %6747 = vmatmul.bf16.gmra.mxu0 %v2964
        %v6748 = vpop.f32.mrf.mxu0
        %v6749 = vadd.f32 %v6616, %v6748
        %v6750 = vpop.f32.mrf.mxu0
        %v6751 = vadd.f32 %v6618, %v6750
        %6752 = vmatmul.bf16.gmra.mxu0 %v2980
        %v6753 = vpop.f32.mrf.mxu0
        %v6754 = vadd.f32 %v6621, %v6753
        %v6755 = vpop.f32.mrf.mxu0
        %v6756 = vadd.f32 %v6623, %v6755
        %6757 = vmatmul.bf16.gmra.mxu0 %v2996
        %v6758 = vpop.f32.mrf.mxu0
        %v6759 = vadd.f32 %v6626, %v6758
        %v6760 = vpop.f32.mrf.mxu0
        %v6761 = vadd.f32 %v6628, %v6760
        %6762 = vmatmul.bf16.gmra.mxu0 %v3012
        %v6763 = vpop.f32.mrf.mxu0
        %v6764 = vadd.f32 %v6631, %v6763
        %v6765 = vpop.f32.mrf.mxu0
        %v6766 = vadd.f32 %v6633, %v6765
        %6767 = vmatmul.bf16.gmra.mxu0 %v3028
        %v6768 = vpop.f32.mrf.mxu0
        %v6769 = vadd.f32 %v6636, %v6768
        %v6770 = vpop.f32.mrf.mxu0
        %v6771 = vadd.f32 %v6638, %v6770
        %6772 = vmatmul.bf16.gmra.mxu0 %v3044
        %v6773 = vpop.f32.mrf.mxu0
        %v6774 = vadd.f32 %v6641, %v6773
        %v6775 = vpop.f32.mrf.mxu0
        %6776 = vdwg.mxu0
        %6777 = vmatpush.bf16.msra.mxu0 %v987
        %6778 = vmatpush.bf16.msra.mxu0 %v985
        %6779 = vmatpush.bf16.msra.mxu0 %v983
        %6780 = vmatpush.bf16.msra.mxu0 %v981
        %6781 = vmatpush.bf16.msra.mxu0 %v979
        %6782 = vmatpush.bf16.msra.mxu0 %v977
        %6783 = vmatpush.bf16.msra.mxu0 %v975
        %6784 = vmatpush.bf16.msra.mxu0 %v973
        %6785 = vmatmul.bf16.gmra.mxu0 %v2661
        %v6786 = vpop.f32.mrf.mxu0
        %v6787 = vadd.f32 %v6654, %v6786
        %v6788 = vpop.f32.mrf.mxu0
        %v6789 = vadd.f32 %v6656, %v6788
        %6790 = vmatmul.bf16.gmra.mxu0 %v2677
        %v6791 = vpop.f32.mrf.mxu0
        %v6792 = vadd.f32 %v6659, %v6791
        %v6793 = vpop.f32.mrf.mxu0
        %v6794 = vadd.f32 %v6661, %v6793
        %6795 = vmatmul.bf16.gmra.mxu0 %v2693
        %v6796 = vpop.f32.mrf.mxu0
        %v6797 = vadd.f32 %v6664, %v6796
        %v6798 = vpop.f32.mrf.mxu0
        %v6799 = vadd.f32 %v6666, %v6798
        %6800 = vmatmul.bf16.gmra.mxu0 %v2709
        %v6801 = vpop.f32.mrf.mxu0
        %v6802 = vadd.f32 %v6669, %v6801
        %v6803 = vpop.f32.mrf.mxu0
        %v6804 = vadd.f32 %v6671, %v6803
        %6805 = vmatmul.bf16.gmra.mxu0 %v2725
        %v6806 = vpop.f32.mrf.mxu0
        %v6807 = vadd.f32 %v6674, %v6806
        %v6808 = vpop.f32.mrf.mxu0
        %v6809 = vadd.f32 %v6676, %v6808
        %6810 = vmatmul.bf16.gmra.mxu0 %v2741
        %v6811 = vpop.f32.mrf.mxu0
        %v6812 = vadd.f32 %v6679, %v6811
        %v6813 = vpop.f32.mrf.mxu0
        %v6814 = vadd.f32 %v6681, %v6813
        %6815 = vmatmul.bf16.gmra.mxu0 %v2757
        %v6816 = vpop.f32.mrf.mxu0
        %v6817 = vadd.f32 %v6684, %v6816
        %v6818 = vpop.f32.mrf.mxu0
        %v6819 = vadd.f32 %v6686, %v6818
        %6820 = vmatmul.bf16.gmra.mxu0 %v2773
        %v6821 = vpop.f32.mrf.mxu0
        %v6822 = vadd.f32 %v6689, %v6821
        %v6823 = vpop.f32.mrf.mxu0
        %v6824 = vadd.f32 %v6691, %v6823
        %6825 = vmatmul.bf16.gmra.mxu0 %v2789
        %v6826 = vpop.f32.mrf.mxu0
        %v6827 = vadd.f32 %v6694, %v6826
        %v6828 = vpop.f32.mrf.mxu0
        %v6829 = vadd.f32 %v6696, %v6828
        %6830 = vmatmul.bf16.gmra.mxu0 %v2805
        %v6831 = vpop.f32.mrf.mxu0
        %v6832 = vadd.f32 %v6699, %v6831
        %v6833 = vpop.f32.mrf.mxu0
        %v6834 = vadd.f32 %v6701, %v6833
        %6835 = vmatmul.bf16.gmra.mxu0 %v2821
        %v6836 = vpop.f32.mrf.mxu0
        %v6837 = vadd.f32 %v6704, %v6836
        %v6838 = vpop.f32.mrf.mxu0
        %v6839 = vadd.f32 %v6706, %v6838
        %6840 = vmatmul.bf16.gmra.mxu0 %v2837
        %v6841 = vpop.f32.mrf.mxu0
        %v6842 = vadd.f32 %v6709, %v6841
        %v6843 = vpop.f32.mrf.mxu0
        %v6844 = vadd.f32 %v6711, %v6843
        %6845 = vmatmul.bf16.gmra.mxu0 %v2853
        %v6846 = vpop.f32.mrf.mxu0
        %v6847 = vadd.f32 %v6714, %v6846
        %v6848 = vpop.f32.mrf.mxu0
        %v6849 = vadd.f32 %v6716, %v6848
        %6850 = vmatmul.bf16.gmra.mxu0 %v2869
        %v6851 = vpop.f32.mrf.mxu0
        %v6852 = vadd.f32 %v6719, %v6851
        %v6853 = vpop.f32.mrf.mxu0
        %v6854 = vadd.f32 %v6721, %v6853
        %6855 = vmatmul.bf16.gmra.mxu0 %v2885
        %v6856 = vpop.f32.mrf.mxu0
        %v6857 = vadd.f32 %v6724, %v6856
        %v6858 = vpop.f32.mrf.mxu0
        %v6859 = vadd.f32 %v6726, %v6858
        %6860 = vmatmul.bf16.gmra.mxu0 %v2901
        %v6861 = vpop.f32.mrf.mxu0
        %v6862 = vadd.f32 %v6729, %v6861
        %v6863 = vpop.f32.mrf.mxu0
        %v6864 = vadd.f32 %v6731, %v6863
        %6865 = vmatmul.bf16.gmra.mxu0 %v2917
        %v6866 = vpop.f32.mrf.mxu0
        %v6867 = vadd.f32 %v6734, %v6866
        %v6868 = vpop.f32.mrf.mxu0
        %v6869 = vadd.f32 %v6736, %v6868
        %6870 = vmatmul.bf16.gmra.mxu0 %v2933
        %v6871 = vpop.f32.mrf.mxu0
        %v6872 = vadd.f32 %v6739, %v6871
        %v6873 = vpop.f32.mrf.mxu0
        %v6874 = vadd.f32 %v6741, %v6873
        %6875 = vmatmul.bf16.gmra.mxu0 %v2949
        %v6876 = vpop.f32.mrf.mxu0
        %v6877 = vadd.f32 %v6744, %v6876
        %v6878 = vpop.f32.mrf.mxu0
        %v6879 = vadd.f32 %v6746, %v6878
        %6880 = vmatmul.bf16.gmra.mxu0 %v2965
        %v6881 = vpop.f32.mrf.mxu0
        %v6882 = vadd.f32 %v6749, %v6881
        %v6883 = vpop.f32.mrf.mxu0
        %v6884 = vadd.f32 %v6751, %v6883
        %6885 = vmatmul.bf16.gmra.mxu0 %v2981
        %v6886 = vpop.f32.mrf.mxu0
        %v6887 = vadd.f32 %v6754, %v6886
        %v6888 = vpop.f32.mrf.mxu0
        %v6889 = vadd.f32 %v6756, %v6888
        %6890 = vmatmul.bf16.gmra.mxu0 %v2997
        %v6891 = vpop.f32.mrf.mxu0
        %v6892 = vadd.f32 %v6759, %v6891
        %v6893 = vpop.f32.mrf.mxu0
        %v6894 = vadd.f32 %v6761, %v6893
        %6895 = vmatmul.bf16.gmra.mxu0 %v3013
        %v6896 = vpop.f32.mrf.mxu0
        %v6897 = vadd.f32 %v6764, %v6896
        %v6898 = vpop.f32.mrf.mxu0
        %v6899 = vadd.f32 %v6766, %v6898
        %6900 = vmatmul.bf16.gmra.mxu0 %v3029
        %v6901 = vpop.f32.mrf.mxu0
        %v6902 = vadd.f32 %v6769, %v6901
        %v6903 = vpop.f32.mrf.mxu0
        %v6904 = vadd.f32 %v6771, %v6903
        %6905 = vmatmul.bf16.gmra.mxu0 %v3045
        %v6906 = vpop.f32.mrf.mxu0
        %v6907 = vadd.f32 %v6774, %v6906
        %v6908 = vpop.f32.mrf.mxu0
        %6909 = vdwg.mxu0
        %6910 = vmatpush.bf16.msra.mxu0 %v1003
        %6911 = vmatpush.bf16.msra.mxu0 %v1001
        %6912 = vmatpush.bf16.msra.mxu0 %v999
        %6913 = vmatpush.bf16.msra.mxu0 %v997
        %6914 = vmatpush.bf16.msra.mxu0 %v995
        %6915 = vmatpush.bf16.msra.mxu0 %v993
        %6916 = vmatpush.bf16.msra.mxu0 %v991
        %6917 = vmatpush.bf16.msra.mxu0 %v989
        %6918 = vmatmul.bf16.gmra.mxu0 %v2662
        %v6919 = vpop.f32.mrf.mxu0
        %v6920 = vadd.f32 %v6787, %v6919
        %v6921 = vpop.f32.mrf.mxu0
        %v6922 = vadd.f32 %v6789, %v6921
        %6923 = vmatmul.bf16.gmra.mxu0 %v2678
        %v6924 = vpop.f32.mrf.mxu0
        %v6925 = vadd.f32 %v6792, %v6924
        %v6926 = vpop.f32.mrf.mxu0
        %v6927 = vadd.f32 %v6794, %v6926
        %6928 = vmatmul.bf16.gmra.mxu0 %v2694
        %v6929 = vpop.f32.mrf.mxu0
        %v6930 = vadd.f32 %v6797, %v6929
        %v6931 = vpop.f32.mrf.mxu0
        %v6932 = vadd.f32 %v6799, %v6931
        %6933 = vmatmul.bf16.gmra.mxu0 %v2710
        %v6934 = vpop.f32.mrf.mxu0
        %v6935 = vadd.f32 %v6802, %v6934
        %v6936 = vpop.f32.mrf.mxu0
        %v6937 = vadd.f32 %v6804, %v6936
        %6938 = vmatmul.bf16.gmra.mxu0 %v2726
        %v6939 = vpop.f32.mrf.mxu0
        %v6940 = vadd.f32 %v6807, %v6939
        %v6941 = vpop.f32.mrf.mxu0
        %v6942 = vadd.f32 %v6809, %v6941
        %6943 = vmatmul.bf16.gmra.mxu0 %v2742
        %v6944 = vpop.f32.mrf.mxu0
        %v6945 = vadd.f32 %v6812, %v6944
        %v6946 = vpop.f32.mrf.mxu0
        %v6947 = vadd.f32 %v6814, %v6946
        %6948 = vmatmul.bf16.gmra.mxu0 %v2758
        %v6949 = vpop.f32.mrf.mxu0
        %v6950 = vadd.f32 %v6817, %v6949
        %v6951 = vpop.f32.mrf.mxu0
        %v6952 = vadd.f32 %v6819, %v6951
        %6953 = vmatmul.bf16.gmra.mxu0 %v2774
        %v6954 = vpop.f32.mrf.mxu0
        %v6955 = vadd.f32 %v6822, %v6954
        %v6956 = vpop.f32.mrf.mxu0
        %v6957 = vadd.f32 %v6824, %v6956
        %6958 = vmatmul.bf16.gmra.mxu0 %v2790
        %v6959 = vpop.f32.mrf.mxu0
        %v6960 = vadd.f32 %v6827, %v6959
        %v6961 = vpop.f32.mrf.mxu0
        %v6962 = vadd.f32 %v6829, %v6961
        %6963 = vmatmul.bf16.gmra.mxu0 %v2806
        %v6964 = vpop.f32.mrf.mxu0
        %v6965 = vadd.f32 %v6832, %v6964
        %v6966 = vpop.f32.mrf.mxu0
        %v6967 = vadd.f32 %v6834, %v6966
        %6968 = vmatmul.bf16.gmra.mxu0 %v2822
        %v6969 = vpop.f32.mrf.mxu0
        %v6970 = vadd.f32 %v6837, %v6969
        %v6971 = vpop.f32.mrf.mxu0
        %v6972 = vadd.f32 %v6839, %v6971
        %6973 = vmatmul.bf16.gmra.mxu0 %v2838
        %v6974 = vpop.f32.mrf.mxu0
        %v6975 = vadd.f32 %v6842, %v6974
        %v6976 = vpop.f32.mrf.mxu0
        %v6977 = vadd.f32 %v6844, %v6976
        %6978 = vmatmul.bf16.gmra.mxu0 %v2854
        %v6979 = vpop.f32.mrf.mxu0
        %v6980 = vadd.f32 %v6847, %v6979
        %v6981 = vpop.f32.mrf.mxu0
        %v6982 = vadd.f32 %v6849, %v6981
        %6983 = vmatmul.bf16.gmra.mxu0 %v2870
        %v6984 = vpop.f32.mrf.mxu0
        %v6985 = vadd.f32 %v6852, %v6984
        %v6986 = vpop.f32.mrf.mxu0
        %v6987 = vadd.f32 %v6854, %v6986
        %6988 = vmatmul.bf16.gmra.mxu0 %v2886
        %v6989 = vpop.f32.mrf.mxu0
        %v6990 = vadd.f32 %v6857, %v6989
        %v6991 = vpop.f32.mrf.mxu0
        %v6992 = vadd.f32 %v6859, %v6991
        %6993 = vmatmul.bf16.gmra.mxu0 %v2902
        %v6994 = vpop.f32.mrf.mxu0
        %v6995 = vadd.f32 %v6862, %v6994
        %v6996 = vpop.f32.mrf.mxu0
        %v6997 = vadd.f32 %v6864, %v6996
        %6998 = vmatmul.bf16.gmra.mxu0 %v2918
        %v6999 = vpop.f32.mrf.mxu0
        %v7000 = vadd.f32 %v6867, %v6999
        %v7001 = vpop.f32.mrf.mxu0
        %v7002 = vadd.f32 %v6869, %v7001
        %7003 = vmatmul.bf16.gmra.mxu0 %v2934
        %v7004 = vpop.f32.mrf.mxu0
        %v7005 = vadd.f32 %v6872, %v7004
        %v7006 = vpop.f32.mrf.mxu0
        %v7007 = vadd.f32 %v6874, %v7006
        %7008 = vmatmul.bf16.gmra.mxu0 %v2950
        %v7009 = vpop.f32.mrf.mxu0
        %v7010 = vadd.f32 %v6877, %v7009
        %v7011 = vpop.f32.mrf.mxu0
        %v7012 = vadd.f32 %v6879, %v7011
        %7013 = vmatmul.bf16.gmra.mxu0 %v2966
        %v7014 = vpop.f32.mrf.mxu0
        %v7015 = vadd.f32 %v6882, %v7014
        %v7016 = vpop.f32.mrf.mxu0
        %v7017 = vadd.f32 %v6884, %v7016
        %7018 = vmatmul.bf16.gmra.mxu0 %v2982
        %v7019 = vpop.f32.mrf.mxu0
        %v7020 = vadd.f32 %v6887, %v7019
        %v7021 = vpop.f32.mrf.mxu0
        %v7022 = vadd.f32 %v6889, %v7021
        %7023 = vmatmul.bf16.gmra.mxu0 %v2998
        %v7024 = vpop.f32.mrf.mxu0
        %v7025 = vadd.f32 %v6892, %v7024
        %v7026 = vpop.f32.mrf.mxu0
        %v7027 = vadd.f32 %v6894, %v7026
        %7028 = vmatmul.bf16.gmra.mxu0 %v3014
        %v7029 = vpop.f32.mrf.mxu0
        %v7030 = vadd.f32 %v6897, %v7029
        %v7031 = vpop.f32.mrf.mxu0
        %v7032 = vadd.f32 %v6899, %v7031
        %7033 = vmatmul.bf16.gmra.mxu0 %v3030
        %v7034 = vpop.f32.mrf.mxu0
        %v7035 = vadd.f32 %v6902, %v7034
        %v7036 = vpop.f32.mrf.mxu0
        %v7037 = vadd.f32 %v6904, %v7036
        %7038 = vmatmul.bf16.gmra.mxu0 %v3046
        %v7039 = vpop.f32.mrf.mxu0
        %v7040 = vadd.f32 %v6907, %v7039
        %v7041 = vpop.f32.mrf.mxu0
        %7042 = vdwg.mxu0
        %7043 = vmatpush.bf16.msra.mxu0 %v1019
        %7044 = vmatpush.bf16.msra.mxu0 %v1017
        %7045 = vmatpush.bf16.msra.mxu0 %v1015
        %7046 = vmatpush.bf16.msra.mxu0 %v1013
        %7047 = vmatpush.bf16.msra.mxu0 %v1011
        %7048 = vmatpush.bf16.msra.mxu0 %v1009
        %7049 = vmatpush.bf16.msra.mxu0 %v1007
        %7050 = vmatpush.bf16.msra.mxu0 %v1005
        %7051 = vmatmul.bf16.gmra.mxu0 %v2663
        %v7052 = vpop.f32.mrf.mxu0
        %v7053 = vadd.f32 %v6920, %v7052
        %v7054 = vpop.f32.mrf.mxu0
        %v7055 = vadd.f32 %v6922, %v7054
        %7056 = vmatmul.bf16.gmra.mxu0 %v2679
        %v7057 = vpop.f32.mrf.mxu0
        %v7058 = vadd.f32 %v6925, %v7057
        %v7059 = vpop.f32.mrf.mxu0
        %v7060 = vadd.f32 %v6927, %v7059
        %7061 = vmatmul.bf16.gmra.mxu0 %v2695
        %v7062 = vpop.f32.mrf.mxu0
        %v7063 = vadd.f32 %v6930, %v7062
        %v7064 = vpop.f32.mrf.mxu0
        %v7065 = vadd.f32 %v6932, %v7064
        %7066 = vmatmul.bf16.gmra.mxu0 %v2711
        %v7067 = vpop.f32.mrf.mxu0
        %v7068 = vadd.f32 %v6935, %v7067
        %v7069 = vpop.f32.mrf.mxu0
        %v7070 = vadd.f32 %v6937, %v7069
        %7071 = vmatmul.bf16.gmra.mxu0 %v2727
        %v7072 = vpop.f32.mrf.mxu0
        %v7073 = vadd.f32 %v6940, %v7072
        %v7074 = vpop.f32.mrf.mxu0
        %v7075 = vadd.f32 %v6942, %v7074
        %7076 = vmatmul.bf16.gmra.mxu0 %v2743
        %v7077 = vpop.f32.mrf.mxu0
        %v7078 = vadd.f32 %v6945, %v7077
        %v7079 = vpop.f32.mrf.mxu0
        %v7080 = vadd.f32 %v6947, %v7079
        %7081 = vmatmul.bf16.gmra.mxu0 %v2759
        %v7082 = vpop.f32.mrf.mxu0
        %v7083 = vadd.f32 %v6950, %v7082
        %v7084 = vpop.f32.mrf.mxu0
        %v7085 = vadd.f32 %v6952, %v7084
        %7086 = vmatmul.bf16.gmra.mxu0 %v2775
        %v7087 = vpop.f32.mrf.mxu0
        %v7088 = vadd.f32 %v6955, %v7087
        %v7089 = vpop.f32.mrf.mxu0
        %v7090 = vadd.f32 %v6957, %v7089
        %7091 = vmatmul.bf16.gmra.mxu0 %v2791
        %v7092 = vpop.f32.mrf.mxu0
        %v7093 = vadd.f32 %v6960, %v7092
        %v7094 = vpop.f32.mrf.mxu0
        %v7095 = vadd.f32 %v6962, %v7094
        %7096 = vmatmul.bf16.gmra.mxu0 %v2807
        %v7097 = vpop.f32.mrf.mxu0
        %v7098 = vadd.f32 %v6965, %v7097
        %v7099 = vpop.f32.mrf.mxu0
        %v7100 = vadd.f32 %v6967, %v7099
        %7101 = vmatmul.bf16.gmra.mxu0 %v2823
        %v7102 = vpop.f32.mrf.mxu0
        %v7103 = vadd.f32 %v6970, %v7102
        %v7104 = vpop.f32.mrf.mxu0
        %v7105 = vadd.f32 %v6972, %v7104
        %7106 = vmatmul.bf16.gmra.mxu0 %v2839
        %v7107 = vpop.f32.mrf.mxu0
        %v7108 = vadd.f32 %v6975, %v7107
        %v7109 = vpop.f32.mrf.mxu0
        %v7110 = vadd.f32 %v6977, %v7109
        %7111 = vmatmul.bf16.gmra.mxu0 %v2855
        %v7112 = vpop.f32.mrf.mxu0
        %v7113 = vadd.f32 %v6980, %v7112
        %v7114 = vpop.f32.mrf.mxu0
        %v7115 = vadd.f32 %v6982, %v7114
        %7116 = vmatmul.bf16.gmra.mxu0 %v2871
        %v7117 = vpop.f32.mrf.mxu0
        %v7118 = vadd.f32 %v6985, %v7117
        %v7119 = vpop.f32.mrf.mxu0
        %v7120 = vadd.f32 %v6987, %v7119
        %7121 = vmatmul.bf16.gmra.mxu0 %v2887
        %v7122 = vpop.f32.mrf.mxu0
        %v7123 = vadd.f32 %v6990, %v7122
        %v7124 = vpop.f32.mrf.mxu0
        %v7125 = vadd.f32 %v6992, %v7124
        %7126 = vmatmul.bf16.gmra.mxu0 %v2903
        %v7127 = vpop.f32.mrf.mxu0
        %v7128 = vadd.f32 %v6995, %v7127
        %v7129 = vpop.f32.mrf.mxu0
        %v7130 = vadd.f32 %v6997, %v7129
        %7131 = vmatmul.bf16.gmra.mxu0 %v2919
        %v7132 = vpop.f32.mrf.mxu0
        %v7133 = vadd.f32 %v7000, %v7132
        %v7134 = vpop.f32.mrf.mxu0
        %v7135 = vadd.f32 %v7002, %v7134
        %7136 = vmatmul.bf16.gmra.mxu0 %v2935
        %v7137 = vpop.f32.mrf.mxu0
        %v7138 = vadd.f32 %v7005, %v7137
        %v7139 = vpop.f32.mrf.mxu0
        %v7140 = vadd.f32 %v7007, %v7139
        %7141 = vmatmul.bf16.gmra.mxu0 %v2951
        %v7142 = vpop.f32.mrf.mxu0
        %v7143 = vadd.f32 %v7010, %v7142
        %v7144 = vpop.f32.mrf.mxu0
        %v7145 = vadd.f32 %v7012, %v7144
        %7146 = vmatmul.bf16.gmra.mxu0 %v2967
        %v7147 = vpop.f32.mrf.mxu0
        %v7148 = vadd.f32 %v7015, %v7147
        %v7149 = vpop.f32.mrf.mxu0
        %v7150 = vadd.f32 %v7017, %v7149
        %7151 = vmatmul.bf16.gmra.mxu0 %v2983
        %v7152 = vpop.f32.mrf.mxu0
        %v7153 = vadd.f32 %v7020, %v7152
        %v7154 = vpop.f32.mrf.mxu0
        %v7155 = vadd.f32 %v7022, %v7154
        %7156 = vmatmul.bf16.gmra.mxu0 %v2999
        %v7157 = vpop.f32.mrf.mxu0
        %v7158 = vadd.f32 %v7025, %v7157
        %v7159 = vpop.f32.mrf.mxu0
        %v7160 = vadd.f32 %v7027, %v7159
        %7161 = vmatmul.bf16.gmra.mxu0 %v3015
        %v7162 = vpop.f32.mrf.mxu0
        %v7163 = vadd.f32 %v7030, %v7162
        %v7164 = vpop.f32.mrf.mxu0
        %v7165 = vadd.f32 %v7032, %v7164
        %7166 = vmatmul.bf16.gmra.mxu0 %v3031
        %v7167 = vpop.f32.mrf.mxu0
        %v7168 = vadd.f32 %v7035, %v7167
        %v7169 = vpop.f32.mrf.mxu0
        %v7170 = vadd.f32 %v7037, %v7169
        %7171 = vmatmul.bf16.gmra.mxu0 %v3047
        %v7172 = vpop.f32.mrf.mxu0
        %v7173 = vadd.f32 %v7040, %v7172
        %v7174 = vpop.f32.mrf.mxu0
        %7175 = vdwg.mxu0
        %7176 = vmatpush.bf16.msra.mxu0 %v1035
        %7177 = vmatpush.bf16.msra.mxu0 %v1033
        %7178 = vmatpush.bf16.msra.mxu0 %v1031
        %7179 = vmatpush.bf16.msra.mxu0 %v1029
        %7180 = vmatpush.bf16.msra.mxu0 %v1027
        %7181 = vmatpush.bf16.msra.mxu0 %v1025
        %7182 = vmatpush.bf16.msra.mxu0 %v1023
        %7183 = vmatpush.bf16.msra.mxu0 %v1021
        %7184 = vmatmul.bf16.gmra.mxu0 %v2664
        %v7185 = vpop.f32.mrf.mxu0
        %v7186 = vadd.f32 %v7053, %v7185
        %v7187 = vpop.f32.mrf.mxu0
        %v7188 = vadd.f32 %v7055, %v7187
        %7189 = vmatmul.bf16.gmra.mxu0 %v2680
        %v7190 = vpop.f32.mrf.mxu0
        %v7191 = vadd.f32 %v7058, %v7190
        %v7192 = vpop.f32.mrf.mxu0
        %v7193 = vadd.f32 %v7060, %v7192
        %7194 = vmatmul.bf16.gmra.mxu0 %v2696
        %v7195 = vpop.f32.mrf.mxu0
        %v7196 = vadd.f32 %v7063, %v7195
        %v7197 = vpop.f32.mrf.mxu0
        %v7198 = vadd.f32 %v7065, %v7197
        %7199 = vmatmul.bf16.gmra.mxu0 %v2712
        %v7200 = vpop.f32.mrf.mxu0
        %v7201 = vadd.f32 %v7068, %v7200
        %v7202 = vpop.f32.mrf.mxu0
        %v7203 = vadd.f32 %v7070, %v7202
        %7204 = vmatmul.bf16.gmra.mxu0 %v2728
        %v7205 = vpop.f32.mrf.mxu0
        %v7206 = vadd.f32 %v7073, %v7205
        %v7207 = vpop.f32.mrf.mxu0
        %v7208 = vadd.f32 %v7075, %v7207
        %7209 = vmatmul.bf16.gmra.mxu0 %v2744
        %v7210 = vpop.f32.mrf.mxu0
        %v7211 = vadd.f32 %v7078, %v7210
        %v7212 = vpop.f32.mrf.mxu0
        %v7213 = vadd.f32 %v7080, %v7212
        %7214 = vmatmul.bf16.gmra.mxu0 %v2760
        %v7215 = vpop.f32.mrf.mxu0
        %v7216 = vadd.f32 %v7083, %v7215
        %v7217 = vpop.f32.mrf.mxu0
        %v7218 = vadd.f32 %v7085, %v7217
        %7219 = vmatmul.bf16.gmra.mxu0 %v2776
        %v7220 = vpop.f32.mrf.mxu0
        %v7221 = vadd.f32 %v7088, %v7220
        %v7222 = vpop.f32.mrf.mxu0
        %v7223 = vadd.f32 %v7090, %v7222
        %7224 = vmatmul.bf16.gmra.mxu0 %v2792
        %v7225 = vpop.f32.mrf.mxu0
        %v7226 = vadd.f32 %v7093, %v7225
        %v7227 = vpop.f32.mrf.mxu0
        %v7228 = vadd.f32 %v7095, %v7227
        %7229 = vmatmul.bf16.gmra.mxu0 %v2808
        %v7230 = vpop.f32.mrf.mxu0
        %v7231 = vadd.f32 %v7098, %v7230
        %v7232 = vpop.f32.mrf.mxu0
        %v7233 = vadd.f32 %v7100, %v7232
        %7234 = vmatmul.bf16.gmra.mxu0 %v2824
        %v7235 = vpop.f32.mrf.mxu0
        %v7236 = vadd.f32 %v7103, %v7235
        %v7237 = vpop.f32.mrf.mxu0
        %v7238 = vadd.f32 %v7105, %v7237
        %7239 = vmatmul.bf16.gmra.mxu0 %v2840
        %v7240 = vpop.f32.mrf.mxu0
        %v7241 = vadd.f32 %v7108, %v7240
        %v7242 = vpop.f32.mrf.mxu0
        %v7243 = vadd.f32 %v7110, %v7242
        %7244 = vmatmul.bf16.gmra.mxu0 %v2856
        %v7245 = vpop.f32.mrf.mxu0
        %v7246 = vadd.f32 %v7113, %v7245
        %v7247 = vpop.f32.mrf.mxu0
        %v7248 = vadd.f32 %v7115, %v7247
        %7249 = vmatmul.bf16.gmra.mxu0 %v2872
        %v7250 = vpop.f32.mrf.mxu0
        %v7251 = vadd.f32 %v7118, %v7250
        %v7252 = vpop.f32.mrf.mxu0
        %v7253 = vadd.f32 %v7120, %v7252
        %7254 = vmatmul.bf16.gmra.mxu0 %v2888
        %v7255 = vpop.f32.mrf.mxu0
        %v7256 = vadd.f32 %v7123, %v7255
        %v7257 = vpop.f32.mrf.mxu0
        %v7258 = vadd.f32 %v7125, %v7257
        %7259 = vmatmul.bf16.gmra.mxu0 %v2904
        %v7260 = vpop.f32.mrf.mxu0
        %v7261 = vadd.f32 %v7128, %v7260
        %v7262 = vpop.f32.mrf.mxu0
        %v7263 = vadd.f32 %v7130, %v7262
        %7264 = vmatmul.bf16.gmra.mxu0 %v2920
        %v7265 = vpop.f32.mrf.mxu0
        %v7266 = vadd.f32 %v7133, %v7265
        %v7267 = vpop.f32.mrf.mxu0
        %v7268 = vadd.f32 %v7135, %v7267
        %7269 = vmatmul.bf16.gmra.mxu0 %v2936
        %v7270 = vpop.f32.mrf.mxu0
        %v7271 = vadd.f32 %v7138, %v7270
        %v7272 = vpop.f32.mrf.mxu0
        %v7273 = vadd.f32 %v7140, %v7272
        %7274 = vmatmul.bf16.gmra.mxu0 %v2952
        %v7275 = vpop.f32.mrf.mxu0
        %v7276 = vadd.f32 %v7143, %v7275
        %v7277 = vpop.f32.mrf.mxu0
        %v7278 = vadd.f32 %v7145, %v7277
        %7279 = vmatmul.bf16.gmra.mxu0 %v2968
        %v7280 = vpop.f32.mrf.mxu0
        %v7281 = vadd.f32 %v7148, %v7280
        %v7282 = vpop.f32.mrf.mxu0
        %v7283 = vadd.f32 %v7150, %v7282
        %7284 = vmatmul.bf16.gmra.mxu0 %v2984
        %v7285 = vpop.f32.mrf.mxu0
        %v7286 = vadd.f32 %v7153, %v7285
        %v7287 = vpop.f32.mrf.mxu0
        %v7288 = vadd.f32 %v7155, %v7287
        %7289 = vmatmul.bf16.gmra.mxu0 %v3000
        %v7290 = vpop.f32.mrf.mxu0
        %v7291 = vadd.f32 %v7158, %v7290
        %v7292 = vpop.f32.mrf.mxu0
        %v7293 = vadd.f32 %v7160, %v7292
        %7294 = vmatmul.bf16.gmra.mxu0 %v3016
        %v7295 = vpop.f32.mrf.mxu0
        %v7296 = vadd.f32 %v7163, %v7295
        %v7297 = vpop.f32.mrf.mxu0
        %v7298 = vadd.f32 %v7165, %v7297
        %7299 = vmatmul.bf16.gmra.mxu0 %v3032
        %v7300 = vpop.f32.mrf.mxu0
        %v7301 = vadd.f32 %v7168, %v7300
        %v7302 = vpop.f32.mrf.mxu0
        %v7303 = vadd.f32 %v7170, %v7302
        %7304 = vmatmul.bf16.gmra.mxu0 %v3048
        %v7305 = vpop.f32.mrf.mxu0
        %v7306 = vadd.f32 %v7173, %v7305
        %v7307 = vpop.f32.mrf.mxu0
        %7308 = vdwg.mxu0
        %7309 = vmatpush.bf16.msra.mxu0 %v1051
        %7310 = vmatpush.bf16.msra.mxu0 %v1049
        %7311 = vmatpush.bf16.msra.mxu0 %v1047
        %7312 = vmatpush.bf16.msra.mxu0 %v1045
        %7313 = vmatpush.bf16.msra.mxu0 %v1043
        %7314 = vmatpush.bf16.msra.mxu0 %v1041
        %7315 = vmatpush.bf16.msra.mxu0 %v1039
        %7316 = vmatpush.bf16.msra.mxu0 %v1037
        %7317 = vmatmul.bf16.gmra.mxu0 %v2665
        %v7318 = vpop.f32.mrf.mxu0
        %v7319 = vadd.f32 %v7186, %v7318
        %v7320 = vpop.f32.mrf.mxu0
        %v7321 = vadd.f32 %v7188, %v7320
        %7322 = vmatmul.bf16.gmra.mxu0 %v2681
        %v7323 = vpop.f32.mrf.mxu0
        %v7324 = vadd.f32 %v7191, %v7323
        %v7325 = vpop.f32.mrf.mxu0
        %v7326 = vadd.f32 %v7193, %v7325
        %7327 = vmatmul.bf16.gmra.mxu0 %v2697
        %v7328 = vpop.f32.mrf.mxu0
        %v7329 = vadd.f32 %v7196, %v7328
        %v7330 = vpop.f32.mrf.mxu0
        %v7331 = vadd.f32 %v7198, %v7330
        %7332 = vmatmul.bf16.gmra.mxu0 %v2713
        %v7333 = vpop.f32.mrf.mxu0
        %v7334 = vadd.f32 %v7201, %v7333
        %v7335 = vpop.f32.mrf.mxu0
        %v7336 = vadd.f32 %v7203, %v7335
        %7337 = vmatmul.bf16.gmra.mxu0 %v2729
        %v7338 = vpop.f32.mrf.mxu0
        %v7339 = vadd.f32 %v7206, %v7338
        %v7340 = vpop.f32.mrf.mxu0
        %v7341 = vadd.f32 %v7208, %v7340
        %7342 = vmatmul.bf16.gmra.mxu0 %v2745
        %v7343 = vpop.f32.mrf.mxu0
        %v7344 = vadd.f32 %v7211, %v7343
        %v7345 = vpop.f32.mrf.mxu0
        %v7346 = vadd.f32 %v7213, %v7345
        %7347 = vmatmul.bf16.gmra.mxu0 %v2761
        %v7348 = vpop.f32.mrf.mxu0
        %v7349 = vadd.f32 %v7216, %v7348
        %v7350 = vpop.f32.mrf.mxu0
        %v7351 = vadd.f32 %v7218, %v7350
        %7352 = vmatmul.bf16.gmra.mxu0 %v2777
        %v7353 = vpop.f32.mrf.mxu0
        %v7354 = vadd.f32 %v7221, %v7353
        %v7355 = vpop.f32.mrf.mxu0
        %v7356 = vadd.f32 %v7223, %v7355
        %7357 = vmatmul.bf16.gmra.mxu0 %v2793
        %v7358 = vpop.f32.mrf.mxu0
        %v7359 = vadd.f32 %v7226, %v7358
        %v7360 = vpop.f32.mrf.mxu0
        %v7361 = vadd.f32 %v7228, %v7360
        %7362 = vmatmul.bf16.gmra.mxu0 %v2809
        %v7363 = vpop.f32.mrf.mxu0
        %v7364 = vadd.f32 %v7231, %v7363
        %v7365 = vpop.f32.mrf.mxu0
        %v7366 = vadd.f32 %v7233, %v7365
        %7367 = vmatmul.bf16.gmra.mxu0 %v2825
        %v7368 = vpop.f32.mrf.mxu0
        %v7369 = vadd.f32 %v7236, %v7368
        %v7370 = vpop.f32.mrf.mxu0
        %v7371 = vadd.f32 %v7238, %v7370
        %7372 = vmatmul.bf16.gmra.mxu0 %v2841
        %v7373 = vpop.f32.mrf.mxu0
        %v7374 = vadd.f32 %v7241, %v7373
        %v7375 = vpop.f32.mrf.mxu0
        %v7376 = vadd.f32 %v7243, %v7375
        %7377 = vmatmul.bf16.gmra.mxu0 %v2857
        %v7378 = vpop.f32.mrf.mxu0
        %v7379 = vadd.f32 %v7246, %v7378
        %v7380 = vpop.f32.mrf.mxu0
        %v7381 = vadd.f32 %v7248, %v7380
        %7382 = vmatmul.bf16.gmra.mxu0 %v2873
        %v7383 = vpop.f32.mrf.mxu0
        %v7384 = vadd.f32 %v7251, %v7383
        %v7385 = vpop.f32.mrf.mxu0
        %v7386 = vadd.f32 %v7253, %v7385
        %7387 = vmatmul.bf16.gmra.mxu0 %v2889
        %v7388 = vpop.f32.mrf.mxu0
        %v7389 = vadd.f32 %v7256, %v7388
        %v7390 = vpop.f32.mrf.mxu0
        %v7391 = vadd.f32 %v7258, %v7390
        %7392 = vmatmul.bf16.gmra.mxu0 %v2905
        %v7393 = vpop.f32.mrf.mxu0
        %v7394 = vadd.f32 %v7261, %v7393
        %v7395 = vpop.f32.mrf.mxu0
        %v7396 = vadd.f32 %v7263, %v7395
        %7397 = vmatmul.bf16.gmra.mxu0 %v2921
        %v7398 = vpop.f32.mrf.mxu0
        %v7399 = vadd.f32 %v7266, %v7398
        %v7400 = vpop.f32.mrf.mxu0
        %v7401 = vadd.f32 %v7268, %v7400
        %7402 = vmatmul.bf16.gmra.mxu0 %v2937
        %v7403 = vpop.f32.mrf.mxu0
        %v7404 = vadd.f32 %v7271, %v7403
        %v7405 = vpop.f32.mrf.mxu0
        %v7406 = vadd.f32 %v7273, %v7405
        %7407 = vmatmul.bf16.gmra.mxu0 %v2953
        %v7408 = vpop.f32.mrf.mxu0
        %v7409 = vadd.f32 %v7276, %v7408
        %v7410 = vpop.f32.mrf.mxu0
        %v7411 = vadd.f32 %v7278, %v7410
        %7412 = vmatmul.bf16.gmra.mxu0 %v2969
        %v7413 = vpop.f32.mrf.mxu0
        %v7414 = vadd.f32 %v7281, %v7413
        %v7415 = vpop.f32.mrf.mxu0
        %v7416 = vadd.f32 %v7283, %v7415
        %7417 = vmatmul.bf16.gmra.mxu0 %v2985
        %v7418 = vpop.f32.mrf.mxu0
        %v7419 = vadd.f32 %v7286, %v7418
        %v7420 = vpop.f32.mrf.mxu0
        %v7421 = vadd.f32 %v7288, %v7420
        %7422 = vmatmul.bf16.gmra.mxu0 %v3001
        %v7423 = vpop.f32.mrf.mxu0
        %v7424 = vadd.f32 %v7291, %v7423
        %v7425 = vpop.f32.mrf.mxu0
        %v7426 = vadd.f32 %v7293, %v7425
        %7427 = vmatmul.bf16.gmra.mxu0 %v3017
        %v7428 = vpop.f32.mrf.mxu0
        %v7429 = vadd.f32 %v7296, %v7428
        %v7430 = vpop.f32.mrf.mxu0
        %v7431 = vadd.f32 %v7298, %v7430
        %7432 = vmatmul.bf16.gmra.mxu0 %v3033
        %v7433 = vpop.f32.mrf.mxu0
        %v7434 = vadd.f32 %v7301, %v7433
        %v7435 = vpop.f32.mrf.mxu0
        %v7436 = vadd.f32 %v7303, %v7435
        %7437 = vmatmul.bf16.gmra.mxu0 %v3049
        %v7438 = vpop.f32.mrf.mxu0
        %v7439 = vadd.f32 %v7306, %v7438
        %v7440 = vpop.f32.mrf.mxu0
        %7441 = vdwg.mxu0
        %7442 = vmatpush.bf16.msra.mxu0 %v1067
        %7443 = vmatpush.bf16.msra.mxu0 %v1065
        %7444 = vmatpush.bf16.msra.mxu0 %v1063
        %7445 = vmatpush.bf16.msra.mxu0 %v1061
        %7446 = vmatpush.bf16.msra.mxu0 %v1059
        %7447 = vmatpush.bf16.msra.mxu0 %v1057
        %7448 = vmatpush.bf16.msra.mxu0 %v1055
        %7449 = vmatpush.bf16.msra.mxu0 %v1053
        %7450 = vmatmul.bf16.gmra.mxu0 %v2666
        %v7451 = vpop.f32.mrf.mxu0
        %v7452 = vadd.f32 %v7319, %v7451
        %v7453 = vpop.f32.mrf.mxu0
        %v7454 = vadd.f32 %v7321, %v7453
        %7455 = vmatmul.bf16.gmra.mxu0 %v2682
        %v7456 = vpop.f32.mrf.mxu0
        %v7457 = vadd.f32 %v7324, %v7456
        %v7458 = vpop.f32.mrf.mxu0
        %v7459 = vadd.f32 %v7326, %v7458
        %7460 = vmatmul.bf16.gmra.mxu0 %v2698
        %v7461 = vpop.f32.mrf.mxu0
        %v7462 = vadd.f32 %v7329, %v7461
        %v7463 = vpop.f32.mrf.mxu0
        %v7464 = vadd.f32 %v7331, %v7463
        %7465 = vmatmul.bf16.gmra.mxu0 %v2714
        %v7466 = vpop.f32.mrf.mxu0
        %v7467 = vadd.f32 %v7334, %v7466
        %v7468 = vpop.f32.mrf.mxu0
        %v7469 = vadd.f32 %v7336, %v7468
        %7470 = vmatmul.bf16.gmra.mxu0 %v2730
        %v7471 = vpop.f32.mrf.mxu0
        %v7472 = vadd.f32 %v7339, %v7471
        %v7473 = vpop.f32.mrf.mxu0
        %v7474 = vadd.f32 %v7341, %v7473
        %7475 = vmatmul.bf16.gmra.mxu0 %v2746
        %v7476 = vpop.f32.mrf.mxu0
        %v7477 = vadd.f32 %v7344, %v7476
        %v7478 = vpop.f32.mrf.mxu0
        %v7479 = vadd.f32 %v7346, %v7478
        %7480 = vmatmul.bf16.gmra.mxu0 %v2762
        %v7481 = vpop.f32.mrf.mxu0
        %v7482 = vadd.f32 %v7349, %v7481
        %v7483 = vpop.f32.mrf.mxu0
        %v7484 = vadd.f32 %v7351, %v7483
        %7485 = vmatmul.bf16.gmra.mxu0 %v2778
        %v7486 = vpop.f32.mrf.mxu0
        %v7487 = vadd.f32 %v7354, %v7486
        %v7488 = vpop.f32.mrf.mxu0
        %v7489 = vadd.f32 %v7356, %v7488
        %7490 = vmatmul.bf16.gmra.mxu0 %v2794
        %v7491 = vpop.f32.mrf.mxu0
        %v7492 = vadd.f32 %v7359, %v7491
        %v7493 = vpop.f32.mrf.mxu0
        %v7494 = vadd.f32 %v7361, %v7493
        %7495 = vmatmul.bf16.gmra.mxu0 %v2810
        %v7496 = vpop.f32.mrf.mxu0
        %v7497 = vadd.f32 %v7364, %v7496
        %v7498 = vpop.f32.mrf.mxu0
        %v7499 = vadd.f32 %v7366, %v7498
        %7500 = vmatmul.bf16.gmra.mxu0 %v2826
        %v7501 = vpop.f32.mrf.mxu0
        %v7502 = vadd.f32 %v7369, %v7501
        %v7503 = vpop.f32.mrf.mxu0
        %v7504 = vadd.f32 %v7371, %v7503
        %7505 = vmatmul.bf16.gmra.mxu0 %v2842
        %v7506 = vpop.f32.mrf.mxu0
        %v7507 = vadd.f32 %v7374, %v7506
        %v7508 = vpop.f32.mrf.mxu0
        %v7509 = vadd.f32 %v7376, %v7508
        %7510 = vmatmul.bf16.gmra.mxu0 %v2858
        %v7511 = vpop.f32.mrf.mxu0
        %v7512 = vadd.f32 %v7379, %v7511
        %v7513 = vpop.f32.mrf.mxu0
        %v7514 = vadd.f32 %v7381, %v7513
        %7515 = vmatmul.bf16.gmra.mxu0 %v2874
        %v7516 = vpop.f32.mrf.mxu0
        %v7517 = vadd.f32 %v7384, %v7516
        %v7518 = vpop.f32.mrf.mxu0
        %v7519 = vadd.f32 %v7386, %v7518
        %7520 = vmatmul.bf16.gmra.mxu0 %v2890
        %v7521 = vpop.f32.mrf.mxu0
        %v7522 = vadd.f32 %v7389, %v7521
        %v7523 = vpop.f32.mrf.mxu0
        %v7524 = vadd.f32 %v7391, %v7523
        %7525 = vmatmul.bf16.gmra.mxu0 %v2906
        %v7526 = vpop.f32.mrf.mxu0
        %v7527 = vadd.f32 %v7394, %v7526
        %v7528 = vpop.f32.mrf.mxu0
        %v7529 = vadd.f32 %v7396, %v7528
        %7530 = vmatmul.bf16.gmra.mxu0 %v2922
        %v7531 = vpop.f32.mrf.mxu0
        %v7532 = vadd.f32 %v7399, %v7531
        %v7533 = vpop.f32.mrf.mxu0
        %v7534 = vadd.f32 %v7401, %v7533
        %7535 = vmatmul.bf16.gmra.mxu0 %v2938
        %v7536 = vpop.f32.mrf.mxu0
        %v7537 = vadd.f32 %v7404, %v7536
        %v7538 = vpop.f32.mrf.mxu0
        %v7539 = vadd.f32 %v7406, %v7538
        %7540 = vmatmul.bf16.gmra.mxu0 %v2954
        %v7541 = vpop.f32.mrf.mxu0
        %v7542 = vadd.f32 %v7409, %v7541
        %v7543 = vpop.f32.mrf.mxu0
        %v7544 = vadd.f32 %v7411, %v7543
        %7545 = vmatmul.bf16.gmra.mxu0 %v2970
        %v7546 = vpop.f32.mrf.mxu0
        %v7547 = vadd.f32 %v7414, %v7546
        %v7548 = vpop.f32.mrf.mxu0
        %v7549 = vadd.f32 %v7416, %v7548
        %7550 = vmatmul.bf16.gmra.mxu0 %v2986
        %v7551 = vpop.f32.mrf.mxu0
        %v7552 = vadd.f32 %v7419, %v7551
        %v7553 = vpop.f32.mrf.mxu0
        %v7554 = vadd.f32 %v7421, %v7553
        %7555 = vmatmul.bf16.gmra.mxu0 %v3002
        %v7556 = vpop.f32.mrf.mxu0
        %v7557 = vadd.f32 %v7424, %v7556
        %v7558 = vpop.f32.mrf.mxu0
        %v7559 = vadd.f32 %v7426, %v7558
        %7560 = vmatmul.bf16.gmra.mxu0 %v3018
        %v7561 = vpop.f32.mrf.mxu0
        %v7562 = vadd.f32 %v7429, %v7561
        %v7563 = vpop.f32.mrf.mxu0
        %v7564 = vadd.f32 %v7431, %v7563
        %7565 = vmatmul.bf16.gmra.mxu0 %v3034
        %v7566 = vpop.f32.mrf.mxu0
        %v7567 = vadd.f32 %v7434, %v7566
        %v7568 = vpop.f32.mrf.mxu0
        %v7569 = vadd.f32 %v7436, %v7568
        %7570 = vmatmul.bf16.gmra.mxu0 %v3050
        %v7571 = vpop.f32.mrf.mxu0
        %v7572 = vadd.f32 %v7439, %v7571
        %v7573 = vpop.f32.mrf.mxu0
        %7574 = vdwg.mxu0
        %7575 = vmatpush.bf16.msra.mxu0 %v1083
        %7576 = vmatpush.bf16.msra.mxu0 %v1081
        %7577 = vmatpush.bf16.msra.mxu0 %v1079
        %7578 = vmatpush.bf16.msra.mxu0 %v1077
        %7579 = vmatpush.bf16.msra.mxu0 %v1075
        %7580 = vmatpush.bf16.msra.mxu0 %v1073
        %7581 = vmatpush.bf16.msra.mxu0 %v1071
        %7582 = vmatpush.bf16.msra.mxu0 %v1069
        %7583 = vmatmul.bf16.gmra.mxu0 %v2667
        %v7584 = vpop.f32.mrf.mxu0
        %v7585 = vadd.f32 %v7452, %v7584
        %v7586 = vpop.f32.mrf.mxu0
        %v7587 = vadd.f32 %v7454, %v7586
        %7588 = vmatmul.bf16.gmra.mxu0 %v2683
        %v7589 = vpop.f32.mrf.mxu0
        %v7590 = vadd.f32 %v7457, %v7589
        %v7591 = vpop.f32.mrf.mxu0
        %v7592 = vadd.f32 %v7459, %v7591
        %7593 = vmatmul.bf16.gmra.mxu0 %v2699
        %v7594 = vpop.f32.mrf.mxu0
        %v7595 = vadd.f32 %v7462, %v7594
        %v7596 = vpop.f32.mrf.mxu0
        %v7597 = vadd.f32 %v7464, %v7596
        %7598 = vmatmul.bf16.gmra.mxu0 %v2715
        %v7599 = vpop.f32.mrf.mxu0
        %v7600 = vadd.f32 %v7467, %v7599
        %v7601 = vpop.f32.mrf.mxu0
        %v7602 = vadd.f32 %v7469, %v7601
        %7603 = vmatmul.bf16.gmra.mxu0 %v2731
        %v7604 = vpop.f32.mrf.mxu0
        %v7605 = vadd.f32 %v7472, %v7604
        %v7606 = vpop.f32.mrf.mxu0
        %v7607 = vadd.f32 %v7474, %v7606
        %7608 = vmatmul.bf16.gmra.mxu0 %v2747
        %v7609 = vpop.f32.mrf.mxu0
        %v7610 = vadd.f32 %v7477, %v7609
        %v7611 = vpop.f32.mrf.mxu0
        %v7612 = vadd.f32 %v7479, %v7611
        %7613 = vmatmul.bf16.gmra.mxu0 %v2763
        %v7614 = vpop.f32.mrf.mxu0
        %v7615 = vadd.f32 %v7482, %v7614
        %v7616 = vpop.f32.mrf.mxu0
        %v7617 = vadd.f32 %v7484, %v7616
        %7618 = vmatmul.bf16.gmra.mxu0 %v2779
        %v7619 = vpop.f32.mrf.mxu0
        %v7620 = vadd.f32 %v7487, %v7619
        %v7621 = vpop.f32.mrf.mxu0
        %v7622 = vadd.f32 %v7489, %v7621
        %7623 = vmatmul.bf16.gmra.mxu0 %v2795
        %v7624 = vpop.f32.mrf.mxu0
        %v7625 = vadd.f32 %v7492, %v7624
        %v7626 = vpop.f32.mrf.mxu0
        %v7627 = vadd.f32 %v7494, %v7626
        %7628 = vmatmul.bf16.gmra.mxu0 %v2811
        %v7629 = vpop.f32.mrf.mxu0
        %v7630 = vadd.f32 %v7497, %v7629
        %v7631 = vpop.f32.mrf.mxu0
        %v7632 = vadd.f32 %v7499, %v7631
        %7633 = vmatmul.bf16.gmra.mxu0 %v2827
        %v7634 = vpop.f32.mrf.mxu0
        %v7635 = vadd.f32 %v7502, %v7634
        %v7636 = vpop.f32.mrf.mxu0
        %v7637 = vadd.f32 %v7504, %v7636
        %7638 = vmatmul.bf16.gmra.mxu0 %v2843
        %v7639 = vpop.f32.mrf.mxu0
        %v7640 = vadd.f32 %v7507, %v7639
        %v7641 = vpop.f32.mrf.mxu0
        %v7642 = vadd.f32 %v7509, %v7641
        %7643 = vmatmul.bf16.gmra.mxu0 %v2859
        %v7644 = vpop.f32.mrf.mxu0
        %v7645 = vadd.f32 %v7512, %v7644
        %v7646 = vpop.f32.mrf.mxu0
        %v7647 = vadd.f32 %v7514, %v7646
        %7648 = vmatmul.bf16.gmra.mxu0 %v2875
        %v7649 = vpop.f32.mrf.mxu0
        %v7650 = vadd.f32 %v7517, %v7649
        %v7651 = vpop.f32.mrf.mxu0
        %v7652 = vadd.f32 %v7519, %v7651
        %7653 = vmatmul.bf16.gmra.mxu0 %v2891
        %v7654 = vpop.f32.mrf.mxu0
        %v7655 = vadd.f32 %v7522, %v7654
        %v7656 = vpop.f32.mrf.mxu0
        %v7657 = vadd.f32 %v7524, %v7656
        %7658 = vmatmul.bf16.gmra.mxu0 %v2907
        %v7659 = vpop.f32.mrf.mxu0
        %v7660 = vadd.f32 %v7527, %v7659
        %v7661 = vpop.f32.mrf.mxu0
        %v7662 = vadd.f32 %v7529, %v7661
        %7663 = vmatmul.bf16.gmra.mxu0 %v2923
        %v7664 = vpop.f32.mrf.mxu0
        %v7665 = vadd.f32 %v7532, %v7664
        %v7666 = vpop.f32.mrf.mxu0
        %v7667 = vadd.f32 %v7534, %v7666
        %7668 = vmatmul.bf16.gmra.mxu0 %v2939
        %v7669 = vpop.f32.mrf.mxu0
        %v7670 = vadd.f32 %v7537, %v7669
        %v7671 = vpop.f32.mrf.mxu0
        %v7672 = vadd.f32 %v7539, %v7671
        %7673 = vmatmul.bf16.gmra.mxu0 %v2955
        %v7674 = vpop.f32.mrf.mxu0
        %v7675 = vadd.f32 %v7542, %v7674
        %v7676 = vpop.f32.mrf.mxu0
        %v7677 = vadd.f32 %v7544, %v7676
        %7678 = vmatmul.bf16.gmra.mxu0 %v2971
        %v7679 = vpop.f32.mrf.mxu0
        %v7680 = vadd.f32 %v7547, %v7679
        %v7681 = vpop.f32.mrf.mxu0
        %v7682 = vadd.f32 %v7549, %v7681
        %7683 = vmatmul.bf16.gmra.mxu0 %v2987
        %v7684 = vpop.f32.mrf.mxu0
        %v7685 = vadd.f32 %v7552, %v7684
        %v7686 = vpop.f32.mrf.mxu0
        %v7687 = vadd.f32 %v7554, %v7686
        %7688 = vmatmul.bf16.gmra.mxu0 %v3003
        %v7689 = vpop.f32.mrf.mxu0
        %v7690 = vadd.f32 %v7557, %v7689
        %v7691 = vpop.f32.mrf.mxu0
        %v7692 = vadd.f32 %v7559, %v7691
        %7693 = vmatmul.bf16.gmra.mxu0 %v3019
        %v7694 = vpop.f32.mrf.mxu0
        %v7695 = vadd.f32 %v7562, %v7694
        %v7696 = vpop.f32.mrf.mxu0
        %v7697 = vadd.f32 %v7564, %v7696
        %7698 = vmatmul.bf16.gmra.mxu0 %v3035
        %v7699 = vpop.f32.mrf.mxu0
        %v7700 = vadd.f32 %v7567, %v7699
        %v7701 = vpop.f32.mrf.mxu0
        %v7702 = vadd.f32 %v7569, %v7701
        %7703 = vmatmul.bf16.gmra.mxu0 %v3051
        %v7704 = vpop.f32.mrf.mxu0
        %v7705 = vadd.f32 %v7572, %v7704
        %v7706 = vpop.f32.mrf.mxu0
        %7707 = vdwg.mxu0
        %v7708 = vld [vmem:[%s2] sm:$0xff]
        %v7709 = vld [vmem:[%s2 + $0x8] sm:$0xff]
        %v7710 = vld [vmem:[%s2 + $0x10] sm:$0xff]
        %v7711 = vld [vmem:[%s2 + $0x18] sm:$0xff]
        %v7712 = vld [vmem:[%s2 + $0x20] sm:$0xff]
        %v7713 = vld [vmem:[%s2 + $0x28] sm:$0xff]
        %v7714 = vld [vmem:[%s2 + $0x30] sm:$0xff]
        %v7715 = vld [vmem:[%s2 + $0x38] sm:$0xff]
        %v7716 = vld [vmem:[%s2 + $0x40] sm:$0xff]
        %v7717 = vld [vmem:[%s2 + $0x48] sm:$0xff]
        %v7718 = vld [vmem:[%s2 + $0x50] sm:$0xff]
        %v7719 = vld [vmem:[%s2 + $0x58] sm:$0xff]
        %v7720 = vld [vmem:[%s2 + $0x60] sm:$0xff]
        %v7721 = vld [vmem:[%s2 + $0x68] sm:$0xff]
        %v7722 = vld [vmem:[%s2 + $0x70] sm:$0xff]
        %v7723 = vld [vmem:[%s2 + $0x78] sm:$0xff]
        %v7724 = vld [vmem:[%s2 + $0x80] sm:$0xff]
        %v7725 = vld [vmem:[%s2 + $0x88] sm:$0xff]
        %v7726 = vld [vmem:[%s2 + $0x90] sm:$0xff]
        %v7727 = vld [vmem:[%s2 + $0x98] sm:$0xff]
        %v7728 = vld [vmem:[%s2 + $0xa0] sm:$0xff]
        %v7729 = vld [vmem:[%s2 + $0xa8] sm:$0xff]
        %v7730 = vld [vmem:[%s2 + $0xb0] sm:$0xff]
        %v7731 = vld [vmem:[%s2 + $0xb8] sm:$0xff]
        %v7732 = vld [vmem:[%s2 + $0xc0] sm:$0xff]
        %v7733 = vld [vmem:[%s2 + $0xc8] sm:$0xff]
        %v7734 = vld [vmem:[%s2 + $0xd0] sm:$0xff]
        %v7735 = vld [vmem:[%s2 + $0xd8] sm:$0xff]
        %v7736 = vld [vmem:[%s2 + $0xe0] sm:$0xff]
        %v7737 = vld [vmem:[%s2 + $0xe8] sm:$0xff]
        %v7738 = vld [vmem:[%s2 + $0xf0] sm:$0xff]
        %v7739 = vld [vmem:[%s2 + $0xf8] sm:$0xff]
        %7741 = vset.pattern.permute.xlu0 0
        %7742 = vperm.xlu0 %7741, %v7708
        %v7743 = vpop.permute.xlu0 %7742
        %7746 = vset.pattern.permute.xlu0 0
        %7747 = vperm.xlu0 %7746, %v7709
        %v7748 = vpop.permute.xlu0 %7747
        %7751 = vset.pattern.permute.xlu0 0
        %7752 = vperm.xlu0 %7751, %v7710
        %v7753 = vpop.permute.xlu0 %7752
        %7756 = vset.pattern.permute.xlu0 0
        %7757 = vperm.xlu0 %7756, %v7711
        %v7758 = vpop.permute.xlu0 %7757
        %7761 = vset.pattern.permute.xlu0 0
        %7762 = vperm.xlu0 %7761, %v7712
        %v7763 = vpop.permute.xlu0 %7762
        %7766 = vset.pattern.permute.xlu0 0
        %7767 = vperm.xlu0 %7766, %v7713
        %v7768 = vpop.permute.xlu0 %7767
        %7771 = vset.pattern.permute.xlu0 0
        %7772 = vperm.xlu0 %7771, %v7714
        %v7773 = vpop.permute.xlu0 %7772
        %7776 = vset.pattern.permute.xlu0 0
        %7777 = vperm.xlu0 %7776, %v7715
        %v7778 = vpop.permute.xlu0 %7777
        %7781 = vset.pattern.permute.xlu0 0
        %7782 = vperm.xlu0 %7781, %v7716
        %v7783 = vpop.permute.xlu0 %7782
        %7786 = vset.pattern.permute.xlu0 0
        %7787 = vperm.xlu0 %7786, %v7717
        %v7788 = vpop.permute.xlu0 %7787
        %7791 = vset.pattern.permute.xlu0 0
        %7792 = vperm.xlu0 %7791, %v7718
        %v7793 = vpop.permute.xlu0 %7792
        %7796 = vset.pattern.permute.xlu0 0
        %7797 = vperm.xlu0 %7796, %v7719
        %v7798 = vpop.permute.xlu0 %7797
        %7801 = vset.pattern.permute.xlu0 0
        %7802 = vperm.xlu0 %7801, %v7720
        %v7803 = vpop.permute.xlu0 %7802
        %7806 = vset.pattern.permute.xlu0 0
        %7807 = vperm.xlu0 %7806, %v7721
        %v7808 = vpop.permute.xlu0 %7807
        %7811 = vset.pattern.permute.xlu0 0
        %7812 = vperm.xlu0 %7811, %v7722
        %v7813 = vpop.permute.xlu0 %7812
        %7816 = vset.pattern.permute.xlu0 0
        %7817 = vperm.xlu0 %7816, %v7723
        %v7818 = vpop.permute.xlu0 %7817
        %7821 = vset.pattern.permute.xlu0 0
        %7822 = vperm.xlu0 %7821, %v7724
        %v7823 = vpop.permute.xlu0 %7822
        %7826 = vset.pattern.permute.xlu0 0
        %7827 = vperm.xlu0 %7826, %v7725
        %v7828 = vpop.permute.xlu0 %7827
        %7831 = vset.pattern.permute.xlu0 0
        %7832 = vperm.xlu0 %7831, %v7726
        %v7833 = vpop.permute.xlu0 %7832
        %7836 = vset.pattern.permute.xlu0 0
        %7837 = vperm.xlu0 %7836, %v7727
        %v7838 = vpop.permute.xlu0 %7837
        %7841 = vset.pattern.permute.xlu0 0
        %7842 = vperm.xlu0 %7841, %v7728
        %v7843 = vpop.permute.xlu0 %7842
        %7846 = vset.pattern.permute.xlu0 0
        %7847 = vperm.xlu0 %7846, %v7729
        %v7848 = vpop.permute.xlu0 %7847
        %7851 = vset.pattern.permute.xlu0 0
        %7852 = vperm.xlu0 %7851, %v7730
        %v7853 = vpop.permute.xlu0 %7852
        %7856 = vset.pattern.permute.xlu0 0
        %7857 = vperm.xlu0 %7856, %v7731
        %v7858 = vpop.permute.xlu0 %7857
        %7861 = vset.pattern.permute.xlu0 0
        %7862 = vperm.xlu0 %7861, %v7732
        %v7863 = vpop.permute.xlu0 %7862
        %7866 = vset.pattern.permute.xlu0 0
        %7867 = vperm.xlu0 %7866, %v7733
        %v7868 = vpop.permute.xlu0 %7867
        %7871 = vset.pattern.permute.xlu0 0
        %7872 = vperm.xlu0 %7871, %v7734
        %v7873 = vpop.permute.xlu0 %7872
        %7876 = vset.pattern.permute.xlu0 0
        %7877 = vperm.xlu0 %7876, %v7735
        %v7878 = vpop.permute.xlu0 %7877
        %7881 = vset.pattern.permute.xlu0 0
        %7882 = vperm.xlu0 %7881, %v7736
        %v7883 = vpop.permute.xlu0 %7882
        %7886 = vset.pattern.permute.xlu0 0
        %7887 = vperm.xlu0 %7886, %v7737
        %v7888 = vpop.permute.xlu0 %7887
        %7891 = vset.pattern.permute.xlu0 0
        %7892 = vperm.xlu0 %7891, %v7738
        %v7893 = vpop.permute.xlu0 %7892
        %7896 = vset.pattern.permute.xlu0 0
        %7897 = vperm.xlu0 %7896, %v7739
        %v7898 = vpop.permute.xlu0 %7897
        %v7900 = vadd.f32 %v5457, %v7743
        %v7901 = vadd.f32 %v7585, %v7743
        %v7902 = vadd.f32 %v5459, %v7748
        %v7903 = vadd.f32 %v7587, %v7748
        %v7904 = vadd.f32 %v5462, %v7753
        %v7905 = vadd.f32 %v7590, %v7753
        %v7906 = vadd.f32 %v5464, %v7758
        %v7907 = vadd.f32 %v7592, %v7758
        %v7908 = vadd.f32 %v5467, %v7763
        %v7909 = vadd.f32 %v7595, %v7763
        %v7910 = vadd.f32 %v5469, %v7768
        %v7911 = vadd.f32 %v7597, %v7768
        %v7912 = vadd.f32 %v5472, %v7773
        %v7913 = vadd.f32 %v7600, %v7773
        %v7914 = vadd.f32 %v5474, %v7778
        %v7915 = vadd.f32 %v7602, %v7778
        %v7916 = vadd.f32 %v5477, %v7783
        %v7917 = vadd.f32 %v7605, %v7783
        %v7918 = vadd.f32 %v5479, %v7788
        %v7919 = vadd.f32 %v7607, %v7788
        %v7920 = vadd.f32 %v5482, %v7793
        %v7921 = vadd.f32 %v7610, %v7793
        %v7922 = vadd.f32 %v5484, %v7798
        %v7923 = vadd.f32 %v7612, %v7798
        %v7924 = vadd.f32 %v5487, %v7803
        %v7925 = vadd.f32 %v7615, %v7803
        %v7926 = vadd.f32 %v5489, %v7808
        %v7927 = vadd.f32 %v7617, %v7808
        %v7928 = vadd.f32 %v5492, %v7813
        %v7929 = vadd.f32 %v7620, %v7813
        %v7930 = vadd.f32 %v5494, %v7818
        %v7931 = vadd.f32 %v7622, %v7818
        %v7932 = vadd.f32 %v5497, %v7823
        %v7933 = vadd.f32 %v7625, %v7823
        %v7934 = vadd.f32 %v5499, %v7828
        %v7935 = vadd.f32 %v7627, %v7828
        %v7936 = vadd.f32 %v5502, %v7833
        %v7937 = vadd.f32 %v7630, %v7833
        %v7938 = vadd.f32 %v5504, %v7838
        %v7939 = vadd.f32 %v7632, %v7838
        %v7940 = vadd.f32 %v5507, %v7843
        %v7941 = vadd.f32 %v7635, %v7843
        %v7942 = vadd.f32 %v5509, %v7848
        %v7943 = vadd.f32 %v7637, %v7848
        %v7944 = vadd.f32 %v5512, %v7853
        %v7945 = vadd.f32 %v7640, %v7853
        %v7946 = vadd.f32 %v5514, %v7858
        %v7947 = vadd.f32 %v7642, %v7858
        %v7948 = vadd.f32 %v5517, %v7863
        %v7949 = vadd.f32 %v7645, %v7863
        %v7950 = vadd.f32 %v5519, %v7868
        %v7951 = vadd.f32 %v7647, %v7868
        %v7952 = vadd.f32 %v5522, %v7873
        %v7953 = vadd.f32 %v7650, %v7873
        %v7954 = vadd.f32 %v5524, %v7878
        %v7955 = vadd.f32 %v7652, %v7878
        %v7956 = vadd.f32 %v5527, %v7883
        %v7957 = vadd.f32 %v7655, %v7883
        %v7958 = vadd.f32 %v5529, %v7888
        %v7959 = vadd.f32 %v7657, %v7888
        %v7960 = vadd.f32 %v5532, %v7893
        %v7961 = vadd.f32 %v7660, %v7893
        %v7962 = vadd.f32 %v5534, %v7898
        %v7963 = vadd.f32 %v7662, %v7898
        %7964 = vst [vmem:[%s308] sm:$0xff] %v7900
        %7965 = vst [vmem:[%s308 + $0x8] sm:$0xff] %v7901
        %7966 = vst [vmem:[%s308 + $0x10] sm:$0xff] %v7902
        %7967 = vst [vmem:[%s308 + $0x18] sm:$0xff] %v7903
        %7968 = vst [vmem:[%s308 + $0x20] sm:$0xff] %v7904
        %7969 = vst [vmem:[%s308 + $0x28] sm:$0xff] %v7905
        %7970 = vst [vmem:[%s308 + $0x30] sm:$0xff] %v7906
        %7971 = vst [vmem:[%s308 + $0x38] sm:$0xff] %v7907
        %7972 = vst [vmem:[%s308 + $0x40] sm:$0xff] %v7908
        %7973 = vst [vmem:[%s308 + $0x48] sm:$0xff] %v7909
        %7974 = vst [vmem:[%s308 + $0x50] sm:$0xff] %v7910
        %7975 = vst [vmem:[%s308 + $0x58] sm:$0xff] %v7911
        %7976 = vst [vmem:[%s308 + $0x60] sm:$0xff] %v7912
        %7977 = vst [vmem:[%s308 + $0x68] sm:$0xff] %v7913
        %7978 = vst [vmem:[%s308 + $0x70] sm:$0xff] %v7914
        %7979 = vst [vmem:[%s308 + $0x78] sm:$0xff] %v7915
        %7980 = vst [vmem:[%s308 + $0x80] sm:$0xff] %v7916
        %7981 = vst [vmem:[%s308 + $0x88] sm:$0xff] %v7917
        %7982 = vst [vmem:[%s308 + $0x90] sm:$0xff] %v7918
        %7983 = vst [vmem:[%s308 + $0x98] sm:$0xff] %v7919
        %7984 = vst [vmem:[%s308 + $0xa0] sm:$0xff] %v7920
        %7985 = vst [vmem:[%s308 + $0xa8] sm:$0xff] %v7921
        %7986 = vst [vmem:[%s308 + $0xb0] sm:$0xff] %v7922
        %7987 = vst [vmem:[%s308 + $0xb8] sm:$0xff] %v7923
        %7988 = vst [vmem:[%s308 + $0xc0] sm:$0xff] %v7924
        %7989 = vst [vmem:[%s308 + $0xc8] sm:$0xff] %v7925
        %7990 = vst [vmem:[%s308 + $0xd0] sm:$0xff] %v7926
        %7991 = vst [vmem:[%s308 + $0xd8] sm:$0xff] %v7927
        %7992 = vst [vmem:[%s308 + $0xe0] sm:$0xff] %v7928
        %7993 = vst [vmem:[%s308 + $0xe8] sm:$0xff] %v7929
        %7994 = vst [vmem:[%s308 + $0xf0] sm:$0xff] %v7930
        %7995 = vst [vmem:[%s308 + $0xf8] sm:$0xff] %v7931
        %7996 = vst [vmem:[%s308 + $0x100] sm:$0xff] %v7932
        %7997 = vst [vmem:[%s308 + $0x108] sm:$0xff] %v7933
        %7998 = vst [vmem:[%s308 + $0x110] sm:$0xff] %v7934
        %7999 = vst [vmem:[%s308 + $0x118] sm:$0xff] %v7935
        %8000 = vst [vmem:[%s308 + $0x120] sm:$0xff] %v7936
        %8001 = vst [vmem:[%s308 + $0x128] sm:$0xff] %v7937
        %8002 = vst [vmem:[%s308 + $0x130] sm:$0xff] %v7938
        %8003 = vst [vmem:[%s308 + $0x138] sm:$0xff] %v7939
        %8004 = vst [vmem:[%s308 + $0x140] sm:$0xff] %v7940
        %8005 = vst [vmem:[%s308 + $0x148] sm:$0xff] %v7941
        %8006 = vst [vmem:[%s308 + $0x150] sm:$0xff] %v7942
        %8007 = vst [vmem:[%s308 + $0x158] sm:$0xff] %v7943
        %8008 = vst [vmem:[%s308 + $0x160] sm:$0xff] %v7944
        %8009 = vst [vmem:[%s308 + $0x168] sm:$0xff] %v7945
        %8010 = vst [vmem:[%s308 + $0x170] sm:$0xff] %v7946
        %8011 = vst [vmem:[%s308 + $0x178] sm:$0xff] %v7947
        %8012 = vst [vmem:[%s308 + $0x180] sm:$0xff] %v7948
        %8013 = vst [vmem:[%s308 + $0x188] sm:$0xff] %v7949
        %8014 = vst [vmem:[%s308 + $0x190] sm:$0xff] %v7950
        %8015 = vst [vmem:[%s308 + $0x198] sm:$0xff] %v7951
        %8016 = vst [vmem:[%s308 + $0x1a0] sm:$0xff] %v7952
        %8017 = vst [vmem:[%s308 + $0x1a8] sm:$0xff] %v7953
        %8018 = vst [vmem:[%s308 + $0x1b0] sm:$0xff] %v7954
        %8019 = vst [vmem:[%s308 + $0x1b8] sm:$0xff] %v7955
        %8020 = vst [vmem:[%s308 + $0x1c0] sm:$0xff] %v7956
        %8021 = vst [vmem:[%s308 + $0x1c8] sm:$0xff] %v7957
        %8022 = vst [vmem:[%s308 + $0x1d0] sm:$0xff] %v7958
        %8023 = vst [vmem:[%s308 + $0x1d8] sm:$0xff] %v7959
        %8024 = vst [vmem:[%s308 + $0x1e0] sm:$0xff] %v7960
        %8025 = vst [vmem:[%s308 + $0x1e8] sm:$0xff] %v7961
        %8026 = vst [vmem:[%s308 + $0x1f0] sm:$0xff] %v7962
        %8027 = vst [vmem:[%s308 + $0x1f8] sm:$0xff] %v7963
        %v8028 = vld [vmem:[%s3] sm:$0xff]
        %8030 = vset.pattern.permute.xlu0 0
        %8031 = vperm.xlu0 %8030, %v8028
        %v8032 = vpop.permute.xlu0 %8031
        %v8034 = vadd.f32 %v5537, %v8032
        %v8035 = vadd.f32 %v7665, %v8032
        %8036 = vrot.lane.b32.xlu0 %v5539, 102
        %v8037 = vpop.permute.xlu0 %8036
        %8038 = vrot.lane.b32.xlu0 %v7667, 102
        %v8039 = vpop.permute.xlu0 %8038
        %v8040 = vlaneseq
        %v8041 = vand.u32 %v8040, 127
        %vm8042 = vcmp.lt.s32.totalorder %v8041, 102
        %v8043 = vsel %vm8042, %v8037, %v8039
        %v8044 = vsel %vm8042, %v8039, %v8037
        %s8045 = scalar_lea.vmem [#allocation7], 1
        %v8046 = vld [vmem:[%s8045] ss:$8 sm:$0x3]
        %v8048 = vperm.slane %v8046, 0
        %v8049 = vperm.slane %v8046, 1
        %v8052 = vmul.f32 %v8044, %v8048
        %v8053 = vmul.f32 %v8043, %v8049
        %v8054 = vadd.f32 %v8034, %v8052
        %v8055 = vadd.f32 %v8035, %v8053
        %8056 = vrot.lane.b32.xlu0 %v5542, 96
        %v8057 = vpop.permute.xlu0 %8056
        %8058 = vrot.lane.b32.xlu0 %v7670, 96
        %v8059 = vpop.permute.xlu0 %8058
        %vm8060 = vcmp.lt.s32.totalorder %v8041, 96
        %v8061 = vsel %vm8060, %v8057, %v8059
        %v8062 = vsel %vm8060, %v8059, %v8057
        %s8063 = scalar_lea.vmem [#allocation7], 2
        %v8064 = vld [vmem:[%s8063] ss:$8 sm:$0x3]
        %v8066 = vperm.slane %v8064, 0
        %v8067 = vperm.slane %v8064, 1
        %v8070 = vmul.f32 %v8062, %v8066
        %v8071 = vmul.f32 %v8061, %v8067
        %v8072 = vadd.f32 %v8054, %v8070
        %v8073 = vadd.f32 %v8055, %v8071
        %8074 = vrot.lane.b32.xlu0 %v5544, 90
        %v8075 = vpop.permute.xlu0 %8074
        %8076 = vrot.lane.b32.xlu0 %v7672, 90
        %v8077 = vpop.permute.xlu0 %8076
        %vm8078 = vcmp.lt.s32.totalorder %v8041, 90
        %v8079 = vsel %vm8078, %v8075, %v8077
        %v8080 = vsel %vm8078, %v8077, %v8075
        %s8081 = scalar_lea.vmem [#allocation7], 3
        %v8082 = vld [vmem:[%s8081] ss:$8 sm:$0x3]
        %v8084 = vperm.slane %v8082, 0
        %v8085 = vperm.slane %v8082, 1
        %v8088 = vmul.f32 %v8080, %v8084
        %v8089 = vmul.f32 %v8079, %v8085
        %v8090 = vadd.f32 %v8072, %v8088
        %v8091 = vadd.f32 %v8073, %v8089
        %8092 = vrot.lane.b32.xlu0 %v5547, 6
        %v8093 = vpop.permute.xlu0 %8092
        %8094 = vrot.lane.b32.xlu0 %v7675, 6
        %v8095 = vpop.permute.xlu0 %8094
        %vm8096 = vcmp.lt.s32.totalorder %v8041, 6
        %v8097 = vsel %vm8096, %v8093, %v8095
        %v8098 = vsel %vm8096, %v8095, %v8093
        %s8099 = scalar_lea.vmem [#allocation7], 4
        %v8100 = vld [vmem:[%s8099] ss:$8 sm:$0x3]
        %v8102 = vperm.slane %v8100, 0
        %v8103 = vperm.slane %v8100, 1
        %v8106 = vmul.f32 %v8098, %v8102
        %v8107 = vmul.f32 %v8097, %v8103
        %v8108 = vadd.f32 %v8090, %v8106
        %v8109 = vadd.f32 %v8091, %v8107
        %8110 = vrot.lane.b32.xlu0 %v5549, 122
        %v8111 = vpop.permute.xlu0 %8110
        %8112 = vrot.lane.b32.xlu0 %v7677, 122
        %v8113 = vpop.permute.xlu0 %8112
        %vm8114 = vcmp.lt.s32.totalorder %v8041, 122
        %v8115 = vsel %vm8114, %v8111, %v8113
        %v8116 = vsel %vm8114, %v8113, %v8111
        %s8117 = scalar_lea.vmem [#allocation7], 5
        %v8118 = vld [vmem:[%s8117] ss:$8 sm:$0x3]
        %v8120 = vperm.slane %v8118, 0
        %v8121 = vperm.slane %v8118, 1
        %v8124 = vmul.f32 %v8115, %v8120
        %v8125 = vmul.f32 %v8116, %v8121
        %v8126 = vadd.f32 %v8108, %v8124
        %v8127 = vadd.f32 %v8109, %v8125
        %8128 = vrot.lane.b32.xlu0 %v5552, 38
        %v8129 = vpop.permute.xlu0 %8128
        %8130 = vrot.lane.b32.xlu0 %v7680, 38
        %v8131 = vpop.permute.xlu0 %8130
        %vm8132 = vcmp.lt.s32.totalorder %v8041, 38
        %v8133 = vsel %vm8132, %v8129, %v8131
        %v8134 = vsel %vm8132, %v8131, %v8129
        %s8135 = scalar_lea.vmem [#allocation7], 6
        %v8136 = vld [vmem:[%s8135] ss:$8 sm:$0x3]
        %v8138 = vperm.slane %v8136, 0
        %v8139 = vperm.slane %v8136, 1
        %v8142 = vmul.f32 %v8133, %v8138
        %v8143 = vmul.f32 %v8134, %v8139
        %v8144 = vadd.f32 %v8126, %v8142
        %v8145 = vadd.f32 %v8127, %v8143
        %8146 = vrot.lane.b32.xlu0 %v5554, 32
        %v8147 = vpop.permute.xlu0 %8146
        %8148 = vrot.lane.b32.xlu0 %v7682, 32
        %v8149 = vpop.permute.xlu0 %8148
        %vm8150 = vcmp.lt.s32.totalorder %v8041, 32
        %v8151 = vsel %vm8150, %v8147, %v8149
        %v8152 = vsel %vm8150, %v8149, %v8147
        %s8153 = scalar_lea.vmem [#allocation7], 7
        %v8154 = vld [vmem:[%s8153] ss:$8 sm:$0x3]
        %v8156 = vperm.slane %v8154, 0
        %v8157 = vperm.slane %v8154, 1
        %v8160 = vmul.f32 %v8151, %v8156
        %v8161 = vmul.f32 %v8152, %v8157
        %v8162 = vadd.f32 %v8144, %v8160
        %v8163 = vadd.f32 %v8145, %v8161
        %8164 = vrot.lane.b32.xlu0 %v5557, 26
        %v8165 = vpop.permute.xlu0 %8164
        %8166 = vrot.lane.b32.xlu0 %v7685, 26
        %v8167 = vpop.permute.xlu0 %8166
        %vm8168 = vcmp.lt.s32.totalorder %v8041, 26
        %v8169 = vsel %vm8168, %v8165, %v8167
        %v8170 = vsel %vm8168, %v8167, %v8165
        %s8171 = scalar_lea.vmem [#allocation7], 16
        %v8172 = vld [vmem:[%s8171] ss:$8 sm:$0x3]
        %v8174 = vperm.slane %v8172, 0
        %v8175 = vperm.slane %v8172, 1
        %v8178 = vmul.f32 %v8169, %v8174
        %v8179 = vmul.f32 %v8170, %v8175
        %v8180 = vadd.f32 %v8162, %v8178
        %v8181 = vadd.f32 %v8163, %v8179
        %8182 = vrot.lane.b32.xlu0 %v5559, 76
        %v8183 = vpop.permute.xlu0 %8182
        %8184 = vrot.lane.b32.xlu0 %v7687, 76
        %v8185 = vpop.permute.xlu0 %8184
        %vm8186 = vcmp.lt.s32.totalorder %v8041, 76
        %v8187 = vsel %vm8186, %v8183, %v8185
        %v8188 = vsel %vm8186, %v8185, %v8183
        %s8189 = scalar_lea.vmem [#allocation7], 17
        %v8190 = vld [vmem:[%s8189] ss:$8 sm:$0x3]
        %v8192 = vperm.slane %v8190, 0
        %v8193 = vperm.slane %v8190, 1
        %v8196 = vmul.f32 %v8187, %v8192
        %v8197 = vmul.f32 %v8188, %v8193
        %v8198 = vadd.f32 %v8180, %v8196
        %v8199 = vadd.f32 %v8181, %v8197
        %8200 = vrot.lane.b32.xlu0 %v5562, 64
        %v8201 = vpop.permute.xlu0 %8200
        %8202 = vrot.lane.b32.xlu0 %v7690, 64
        %v8203 = vpop.permute.xlu0 %8202
        %vm8204 = vcmp.lt.s32.totalorder %v8041, 64
        %v8205 = vsel %vm8204, %v8201, %v8203
        %v8206 = vsel %vm8204, %v8203, %v8201
        %s8207 = scalar_lea.vmem [#allocation7], 18
        %v8208 = vld [vmem:[%s8207] ss:$8 sm:$0x3]
        %v8210 = vperm.slane %v8208, 0
        %v8211 = vperm.slane %v8208, 1
        %v8214 = vmul.f32 %v8205, %v8210
        %v8215 = vmul.f32 %v8206, %v8211
        %v8216 = vadd.f32 %v8198, %v8214
        %v8217 = vadd.f32 %v8199, %v8215
        %8218 = vrot.lane.b32.xlu0 %v5564, 52
        %v8219 = vpop.permute.xlu0 %8218
        %8220 = vrot.lane.b32.xlu0 %v7692, 52
        %v8221 = vpop.permute.xlu0 %8220
        %vm8222 = vcmp.lt.s32.totalorder %v8041, 52
        %v8223 = vsel %vm8222, %v8219, %v8221
        %v8224 = vsel %vm8222, %v8221, %v8219
        %s8225 = scalar_lea.vmem [#allocation7], 19
        %v8226 = vld [vmem:[%s8225] ss:$8 sm:$0x3]
        %v8228 = vperm.slane %v8226, 0
        %v8229 = vperm.slane %v8226, 1
        %v8232 = vmul.f32 %v8223, %v8228
        %v8233 = vmul.f32 %v8224, %v8229
        %v8234 = vadd.f32 %v8216, %v8232
        %v8235 = vadd.f32 %v8217, %v8233
        %8236 = vrot.lane.b32.xlu0 %v5567, 12
        %v8237 = vpop.permute.xlu0 %8236
        %8238 = vrot.lane.b32.xlu0 %v7695, 12
        %v8239 = vpop.permute.xlu0 %8238
        %vm8240 = vcmp.lt.s32.totalorder %v8041, 12
        %v8241 = vsel %vm8240, %v8237, %v8239
        %v8242 = vsel %vm8240, %v8239, %v8237
        %s8243 = scalar_lea.vmem [#allocation7], 20
        %v8244 = vld [vmem:[%s8243] ss:$8 sm:$0x3]
        %v8246 = vperm.slane %v8244, 0
        %v8247 = vperm.slane %v8244, 1
        %v8250 = vmul.f32 %v8242, %v8246
        %v8251 = vmul.f32 %v8241, %v8247
        %v8252 = vadd.f32 %v8234, %v8250
        %v8253 = vadd.f32 %v8235, %v8251
        %8254 = vrot.lane.b32.xlu0 %v5569, 116
        %v8255 = vpop.permute.xlu0 %8254
        %8256 = vrot.lane.b32.xlu0 %v7697, 116
        %v8257 = vpop.permute.xlu0 %8256
        %vm8258 = vcmp.lt.s32.totalorder %v8041, 116
        %v8259 = vsel %vm8258, %v8255, %v8257
        %v8260 = vsel %vm8258, %v8257, %v8255
        %s8261 = scalar_lea.vmem [#allocation7], 21
        %v8262 = vld [vmem:[%s8261] ss:$8 sm:$0x3]
        %v8264 = vperm.slane %v8262, 0
        %v8265 = vperm.slane %v8262, 1
        %v8268 = vmul.f32 %v8259, %v8264
        %v8269 = vmul.f32 %v8260, %v8265
        %v8270 = vadd.f32 %v8252, %v8268
        %v8271 = vadd.f32 %v8253, %v8269
        %8272 = vrot.lane.b32.xlu0 %v5572, 76
        %v8273 = vpop.permute.xlu0 %8272
        %8274 = vrot.lane.b32.xlu0 %v7700, 76
        %v8275 = vpop.permute.xlu0 %8274
        %v8276 = vsel %vm8186, %v8273, %v8275
        %v8277 = vsel %vm8186, %v8275, %v8273
        %s8278 = scalar_lea.vmem [#allocation7], 22
        %v8279 = vld [vmem:[%s8278] ss:$8 sm:$0x3]
        %v8281 = vperm.slane %v8279, 0
        %v8282 = vperm.slane %v8279, 1
        %v8285 = vmul.f32 %v8277, %v8281
        %v8286 = vmul.f32 %v8276, %v8282
        %v8287 = vadd.f32 %v8270, %v8285
        %v8288 = vadd.f32 %v8271, %v8286
        %8289 = vrot.lane.b32.xlu0 %v5574, 64
        %v8290 = vpop.permute.xlu0 %8289
        %8291 = vrot.lane.b32.xlu0 %v7702, 64
        %v8292 = vpop.permute.xlu0 %8291
        %v8293 = vsel %vm8204, %v8290, %v8292
        %v8294 = vsel %vm8204, %v8292, %v8290
        %s8295 = scalar_lea.vmem [#allocation7], 23
        %v8296 = vld [vmem:[%s8295] ss:$8 sm:$0x3]
        %v8298 = vperm.slane %v8296, 0
        %v8299 = vperm.slane %v8296, 1
        %v8302 = vmul.f32 %v8294, %v8298
        %v8303 = vmul.f32 %v8293, %v8299
        %v8304 = vadd.f32 %v8287, %v8302
        %v8305 = vadd.f32 %v8288, %v8303
        %8306 = vrot.lane.b32.xlu0 %v5577, 52
        %v8307 = vpop.permute.xlu0 %8306
        %8308 = vrot.lane.b32.xlu0 %v7705, 52
        %v8309 = vpop.permute.xlu0 %8308
        %v8310 = vsel %vm8222, %v8307, %v8309
        %v8311 = vsel %vm8222, %v8309, %v8307
        %s8312 = scalar_lea.vmem [#allocation7], 32
        %v8313 = vld [vmem:[%s8312] ss:$8 sm:$0x3]
        %v8315 = vperm.slane %v8313, 0
        %v8316 = vperm.slane %v8313, 1
        %v8319 = vmul.f32 %v8311, %v8315
        %v8320 = vmul.f32 %v8310, %v8316
        %v8321 = vadd.f32 %v8304, %v8319
        %v8322 = vadd.f32 %v8305, %v8320
        %8323 = vst [vmem:[%s315] sm:$0xff] %v8321
        %8324 = vst [vmem:[%s315 + $0x8] sm:$0xff] %v8322
        %s8325 = sand.u32 %s146, 1
        %s8326 = scalar_lea.sflag [#allocation4], %s8325
        %s8327 = sand.u32 %s146, 1
        %s8328 = smul.addr %s8327, 512
        %s8329 = scalar_lea.vmem [#allocation8], %s8328
        %s8330 = sand.u32 %s172, 1
        %s8331 = scalar_lea.sflag [#allocation10], %s8330
        %s8332 = sand.u32 %s172, 1
        %s8333 = smul.addr %s8332, 16
        %s8334 = scalar_lea.vmem [#allocation9], %s8333
        // Predicated region
        $region53: #{tpu_custom_call.1} parent=39 // pred_check
          %p8335 = pneg %p156
        $region54: #{tpu_custom_call.1} parent=39 // pred_check_branch
          %8337 = sbr.rel (%p8335) target = $region56
        $region55: #{tpu_custom_call.1} parent=39 // pred_region
          %8339 = vsyncadd %s8326, 0
          %s8340 = smul.addr %s28, 64
          %s8341 = smul.addr %s8340, 8
          %s8342 = scalar_lea.hbm %s5, %s8341
          %s8343 = sshll.u32 %s8329, 4
          %s8344 = int_to_ptr.vmem [resolvable:$true] %s8343
          %s8345 = sshll.u32 %s8342, 4
          %s8346 = int_to_ptr.hbm [resolvable:$true] %s8345
          %8351 = dma.vmem_to_hbm [thread:$0]  %s8344, 8192, %s8346, %s8326, 256, 256, 16
        $region56: #{tpu_custom_call.1} parent=39 // pred_fallthru
          _
        // Predicated region
        $region57: #{tpu_custom_call.1} parent=39 // pred_check
          %p8352 = pneg %p182
        $region58: #{tpu_custom_call.1} parent=39 // pred_check_branch
          %8354 = sbr.rel (%p8352) target = $region60
        $region59: #{tpu_custom_call.1} parent=39 // pred_region
          %8356 = vsyncadd %s8331, 0
          %s8357 = smul.addr %s28, 2
          %s8358 = smul.addr %s8357, 8
          %s8359 = scalar_lea.hbm %s6, %s8358
          %s8361 = sshll.u32 %s8334, 4
          %s8362 = int_to_ptr.vmem [resolvable:$true] %s8361
          %s8363 = sshll.u32 %s8359, 4
          %s8364 = int_to_ptr.hbm [resolvable:$true] %s8363
          %8366 = dma.vmem_to_hbm [thread:$0]  %s8362, 256, %s8364, %s8331
        $region60: #{tpu_custom_call.1} parent=39 // pred_fallthru
          _
      $region40: #{tpu_custom_call.1} parent=5 // pred_fallthru
        _
      %p8367 = scmp.le.s32.totalorder 2, %s23
      // Predicated region
      $region61: #{tpu_custom_call.1} parent=5 // pred_check
        %p8368 = pneg %p8367
      $region62: #{tpu_custom_call.1} parent=5 // pred_check_branch
        %8370 = sbr.rel (%p8368) target = $region64
      $region63: #{tpu_custom_call.1} parent=5 // pred_region
        %s8371 = ssub.s32 %s23, 2
        // Predicated region
        $region65: #{tpu_custom_call.1} parent=63 // pred_check
          %p8372 = pneg %p162
        $region66: #{tpu_custom_call.1} parent=63 // pred_check_branch
          %8374 = sbr.rel (%p8372) target = $region68
        $region67: #{tpu_custom_call.1} parent=63 // pred_region
          %s8375 = sand.u32 %s147, 1
          %s8376 = scalar_lea.sflag [#allocation4], %s8375
          %s8377 = sand.u32 %s147, 1
          %s8378 = smul.addr %s8377, 512
          %s8379 = scalar_lea.vmem [#allocation8], %s8378
          %8381 = dma.done %s8376, 8192
        $region68: #{tpu_custom_call.1} parent=63 // pred_fallthru
          _
        // Predicated region
        $region69: #{tpu_custom_call.1} parent=63 // pred_check
          %p8382 = pneg %p188
        $region70: #{tpu_custom_call.1} parent=63 // pred_check_branch
          %8384 = sbr.rel (%p8382) target = $region72
        $region71: #{tpu_custom_call.1} parent=63 // pred_region
          %s8385 = sand.u32 %s173, 1
          %s8386 = scalar_lea.sflag [#allocation10], %s8385
          %s8387 = sand.u32 %s173, 1
          %s8388 = smul.addr %s8387, 16
          %s8389 = scalar_lea.vmem [#allocation9], %s8388
          %8391 = dma.done %s8386, 256
        $region72: #{tpu_custom_call.1} parent=63 // pred_fallthru
          _
      $region64: #{tpu_custom_call.1} parent=5 // pred_fallthru
        _
    $region6: #{tpu_custom_call.1} parent=1 // loop_footer
      %s27 = sadd.s32 1, %s23
    $region7: #{tpu_custom_call.1} parent=1 // loop_footer_branch
      %22 = sbr.rel target = $region3
    $region8: #{tpu_custom_call.1} parent=1 // loop_exit
      _
    %8392 = vsyncpa [#allocation3], 1
    %s8393 = scalar_lea.sflag [#allocation3], 1
    %8394 = vsyncpa %s8393, 1
    %8395 = vsyncpa [#allocation6], 1
    %8396 = vsyncpa [#allocation4], 1
    %s8397 = scalar_lea.sflag [#allocation4], 1
    %8398 = vsyncpa %s8397, 1
    %8399 = vsyncpa [#allocation10], 1
    %s8400 = scalar_lea.sflag [#allocation10], 1
    %8401 = vsyncpa %s8400, 1

</llo_original>
